<compile_context>
chip_gen: v6e
topology: v6e:2x2x1
jax: 0.10.0
libtpu: 0.0.40
codegen_flags: <defaults>
</compile_context>

<pallas_src>
import functools

import jax
import jax.numpy as jnp
from jax import lax
from jax.experimental import pallas as pl
from jax.experimental.pallas import tpu as pltpu


def _decouple_kernel(x_ref, w_in_ref, w_h1_ref, w_h2_ref, w_hth_ref,
                     w_lth_ref, w_l1_ref, w_out_ref, out_ref, big_ref,
                     *, TH, W, C2, dim):
    f32 = jnp.float32
    HB = TH + 8          # rows held per tile (4-row halo on each side)
    OX = 8               # interior column origin inside the big scratch

    t = pl.program_id(1)
    is_top = t == 0
    is_bot = t == pl.num_programs(1) - 1

    # Zero the two border columns the kx-shifted taps read as zero padding.
    big_ref[:, pl.ds(OX - 1, 1), :] = jnp.zeros((HB, 1, C2), f32)
    big_ref[:, pl.ds(OX + W, 1), :] = jnp.zeros((HB, 1, C2), f32)

    def store_rows(row0, val):
        big_ref[pl.ds(row0, val.shape[0]), pl.ds(OX, W), :] = val

    def zero_rows(row0, nrows):
        big_ref[pl.ds(row0, nrows), pl.ds(OX, W), :] = jnp.zeros((nrows, W, C2), f32)

    def dwconv3(w_ref, rout, rows_out):
        # Depthwise 3x3 (stride 1, dilation 1, zero pad) of whatever is stored in
        # big-scratch rows [rout-1, rout+rows_out+1).  One aligned full-width band
        # load per ky; +/-1 kx shifts are register slices across the zero border
        # columns (no extra loads); ky terms grouped per kx.
        bands = [big_ref[pl.ds(rout - 1 + ky, rows_out), :, :] for ky in range(3)]
        acc = None
        for kx in range(3):
            g = (bands[0] * w_ref[0, kx, :]
                 + bands[1] * w_ref[1, kx, :]
                 + bands[2] * w_ref[2, kx, :])
            g = g[:, OX - 1 + kx:OX - 1 + kx + W, :]
            acc = g if acc is None else acc + g
        return acc

    # ----------------- inconv: 1x1 conv == matmul over channels (MXU) ------------
    # w_in carries an extra column (sum_c w_in[:, c]), so lane C2 of the result is
    # the channel sum s needed by the analytic avgconv -- no lane reduction pass.
    x = x_ref[...].astype(f32)                                        # (HB, W, dim)
    z_ext = jnp.dot(x.reshape(HB * W, dim), w_in_ref[...],
                    preferred_element_type=f32).reshape(HB, W, C2 + 1)

    # -------- avgconv: dense 3x3 of ones/9 with replicate 'same' padding ---------
    # Every output channel equals (1/9) * box3x3_replicate(sum_c z); separable box
    # sum on the channel-sum map, entirely in registers (no masked VMEM stores).
    s = z_ext[:, :, C2:C2 + 1]                                        # (HB, W, 1)
    s_l = jnp.concatenate([s[:, :1, :], s[:, :W - 1, :]], axis=1)     # replicate left
    s_r = jnp.concatenate([s[:, 1:, :], s[:, W - 1:, :]], axis=1)     # replicate right
    hs = s_l + s + s_r                                                # horizontal 1x3

    # Vertical replicate padding only exists at the true image boundary: patch the
    # halo row adjacent to it (local row 3 above / row TH+4 below the tile).
    row_hs = lax.broadcasted_iota(jnp.int32, (HB, W, 1), 0)
    hs = jnp.where(jnp.logical_and(is_top, row_hs == 3), hs[4:5], hs)
    hs = jnp.where(jnp.logical_and(is_bot, row_hs == TH + 4), hs[TH + 3:TH + 4], hs)

    # l for local rows [1, TH+7); index k corresponds to local row k + 1.
    l = (hs[0:TH + 6] + hs[1:TH + 7] + hs[2:TH + 8]) * (1.0 / 9.0)    # (TH+6, W, 1)
    # Rows outside the image must read back as zero (the depthwise convs zero-pad).
    row_l = lax.broadcasted_iota(jnp.int32, (TH + 6, W, 1), 0)
    l = jnp.where(jnp.logical_and(is_top, row_l < 3), 0.0, l)
    l = jnp.where(jnp.logical_and(is_bot, row_l >= TH + 3), 0.0, l)

    # ------------------------------ high-frequency branch ------------------------
    hin = z_ext[1:TH + 7, :, :C2] - l                      # rows [1, TH+7)
    store_rows(1, hin)

    h1 = dwconv3(w_h1_ref, 2, TH + 4) + l[1:TH + 5]        # hconv1, then + l ; rows [2, TH+6)
    store_rows(2, h1)

    @pl.when(is_top)
    def _():
        zero_rows(2, 2)           # image rows -2, -1: zero padding for hconv2

    @pl.when(is_bot)
    def _():
        zero_rows(TH + 4, 2)      # image rows H, H+1

    h2 = dwconv3(w_h2_ref, 3, TH + 2)                      # hconv2 ; rows [3, TH+5)
    store_rows(3, h2)

    @pl.when(is_top)
    def _():
        zero_rows(3, 1)

    @pl.when(is_bot)
    def _():
        zero_rows(TH + 4, 1)

    acc = dwconv3(w_hth_ref, 4, TH)                        # hthconv ; rows [4, TH+4)

    # -------- lconv1: dilated (x2) depthwise 3x3 on the channel-uniform l --------
    # One MXU matmul: stack the 9 shifted taps into ((TH+2)*W, 9) and contract
    # against the (9, C2) weight (K = 9, MXU is otherwise idle here).
    taps = []
    zcol = jnp.zeros((TH + 2, 2, 1), f32)
    for ky in range(3):
        rows = l[2 * ky:2 * ky + TH + 2]                   # row offset 2*(ky-1)
        taps.append(jnp.concatenate([zcol, rows[:, :W - 2, :]], axis=1))   # col w-2
        taps.append(rows)                                                  # col w
        taps.append(jnp.concatenate([rows[:, 2:, :], zcol], axis=1))       # col w+2
    lhs = jnp.concatenate(taps, axis=2).reshape((TH + 2) * W, 9)
    l2 = jnp.dot(lhs, w_l1_ref[...],
                 preferred_element_type=f32).reshape(TH + 2, W, C2)        # rows [3, TH+5)

    store_rows(3, l2)

    @pl.when(is_top)
    def _():
        zero_rows(3, 1)

    @pl.when(is_bot)
    def _():
        zero_rows(TH + 4, 1)

    # ------------ feat = hthconv(h) + lthconv(l2) + l2, then outconv -------------
    acc = acc + dwconv3(w_lth_ref, 4, TH) + l2[1:TH + 1]   # "+ l2" reused from registers
    y = jnp.dot(acc.reshape(TH * W, C2), w_out_ref[...],
                preferred_element_type=f32).reshape(TH, W, dim)
    out_ref[...] = y.astype(out_ref.dtype)


def _ceil_to(v, m):
    return (v + m - 1) // m * m


def _vmem_capacity_bytes():
    try:
        return int(pltpu.get_tpu_info().vmem_capacity_bytes)
    except Exception:
        return 64 * 1024 * 1024          # conservative (v7x per-TensorCore VMEM)


def _estimate_vmem_bytes(TH, W, C2, dim):
    f = 4
    HB, WB = TH + 8, W + 16
    big = HB * WB * _ceil_to(C2, 128) * f                          # dw-conv scratch
    io = (2 * HB + 2 * TH) * _ceil_to(W, 8) * _ceil_to(dim, 128) * f
    live = 6 * HB * _ceil_to(W, 8) * _ceil_to(C2 + 1, 128) * f     # spilled big values
    small = 3 * HB * ((W + 7) // 8) * 4096                         # lane-sparse small maps
    wts = 2 * (dim * _ceil_to(C2 + 1, 128) + 5 * 9 * _ceil_to(C2, 128)
               + C2 * _ceil_to(dim, 128)) * f
    return big + io + live + small + wts


def _pick_tile_h(H, W, C2, dim):
    budget = 32 * 1024 * 1024
    divisors = [d for d in range(H, 0, -1) if H % d == 0 and (d >= 4 or d == H)]
    for d in divisors:                   # largest first
        if _estimate_vmem_bytes(d, W, C2, dim) <= budget:
            return d
    return divisors[-1]                  # best effort (smallest legal tile)


def decouple_conv_v5(x_nchw, params, tile_h=None):
    """Forward pass.  x_nchw: (N, dim, H, W) float32 -> (N, dim, H, W) float32."""
    N, dim, H, W = x_nchw.shape
    C2 = params["w_in"].shape[1]
    assert W % 8 == 0, "requires W % 8 == 0 (keeps in-kernel reshapes sublane-aligned)"

    if tile_h is None:
        tile_h = _pick_tile_h(H, W, C2, dim)
    TH = int(tile_h)
    if H % TH != 0:
        raise ValueError(f"tile_h={TH} must divide H={H}")
    if TH < 4 and TH != H:
        raise ValueError("tile_h must be >= 4 (4-row halo) unless it equals H")
    T = H // TH
    HB = TH + 8

    x_nhwc = jnp.transpose(x_nchw, (0, 2, 3, 1)).astype(jnp.float32)
    # 4-row zero halo (receptive field w.r.t. z is 4 rows), then overlapping row
    # tiles so plain BlockSpecs auto-pipeline the input (default Buffered(2)).
    x_pad = jnp.pad(x_nhwc, ((0, 0), (4, 4), (0, 0), (0, 0)))
    x_tiles = jnp.stack([x_pad[:, i * TH:i * TH + HB] for i in range(T)], axis=1)

    w_in = params["w_in"].astype(jnp.float32)
    w_in_ext = jnp.concatenate([w_in, jnp.sum(w_in, axis=1, keepdims=True)], axis=1)
    w_l1_mat = params["w_l1"].astype(jnp.float32).reshape(9, C2)

    kernel = functools.partial(_decouple_kernel, TH=TH, W=W, C2=C2, dim=dim)
    dw_spec = pl.BlockSpec((3, 3, C2), lambda n, t: (0, 0, 0))

    vmem_limit = min(_vmem_capacity_bytes() - 8 * 1024 * 1024,
                     max(32 * 1024 * 1024,
                         int(1.3 * _estimate_vmem_bytes(TH, W, C2, dim))))

    out_nhwc = pl.pallas_call(
        kernel,
        out_shape=jax.ShapeDtypeStruct((N, H, W, dim), jnp.float32),
        grid=(N, T),
        in_specs=[
            pl.BlockSpec((None, None, HB, W, dim), lambda n, t: (n, t, 0, 0, 0)),  # x tile (+halo)
            pl.BlockSpec((dim, C2 + 1), lambda n, t: (0, 0)),                      # inconv (+ sum col)
            dw_spec, dw_spec, dw_spec, dw_spec,                                    # hconv1, hconv2, hthconv, lthconv
            pl.BlockSpec((9, C2), lambda n, t: (0, 0)),                            # lconv1 (as matmul)
            pl.BlockSpec((C2, dim), lambda n, t: (0, 0)),                          # outconv
        ],
        out_specs=pl.BlockSpec((None, TH, W, dim), lambda n, t: (n, t, 0, 0)),
        scratch_shapes=[pltpu.VMEM((HB, W + 16, C2), jnp.float32)],
        compiler_params=pltpu.CompilerParams(
            dimension_semantics=("parallel", "parallel"),
            vmem_limit_bytes=vmem_limit),
    )(x_tiles, w_in_ext,
      params["w_h1"], params["w_h2"], params["w_hth"], params["w_lth"],
      w_l1_mat, params["w_out"])
    return jnp.transpose(out_nhwc, (0, 3, 1, 2))


def init_params(key, dim, ffn_expansion_factor=2.66):
    hidden = int(dim * ffn_expansion_factor)
    C2 = 2 * hidden
    ks = jax.random.split(key, 7)

    def rnd(k, shape, fan_in):
        return jax.random.normal(k, shape, jnp.float32) * (1.0 / jnp.sqrt(fan_in))

    # avgconv weight (ones/9, frozen, no bias) is folded analytically into the kernel.
    # Module default is bias=False, so there are no biases anywhere.
    return {
        "w_in":  rnd(ks[0], (dim, C2), dim),   # inconv 1x1:  [c_in, c_out]
        "w_h1":  rnd(ks[1], (3, 3, C2), 9.0),  # depthwise:   [ky, kx, c]
        "w_h2":  rnd(ks[2], (3, 3, C2), 9.0),
        "w_lth": rnd(ks[3], (3, 3, C2), 9.0),
        "w_hth": rnd(ks[4], (3, 3, C2), 9.0),
        "w_l1":  rnd(ks[5], (3, 3, C2), 9.0),  # dilated depthwise
        "w_out": rnd(ks[6], (C2, dim), C2),    # outconv 1x1: [c_in, c_out]
    }


def _reference(x_nchw, params):
    """Pure-JAX reference of DeCoupleConvv5.forward (NCHW in / NCHW out)."""
    x = jnp.transpose(x_nchw, (0, 2, 3, 1)).astype(jnp.float32)
    _, H, W, _ = x.shape

    def dw3(v, w, dilation):
        p = dilation
        vp = jnp.pad(v, ((0, 0), (p, p), (p, p), (0, 0)))
        out = 0.0
        for ky in range(3):
            for kx in range(3):
                out = out + w[ky, kx, :] * vp[:, ky * dilation:ky * dilation + H,
                                              kx * dilation:kx * dilation + W, :]
        return out

    z = jnp.einsum("nhwd,dc->nhwc", x, params["w_in"])
    s = jnp.sum(z, axis=-1, keepdims=True)
    sp = jnp.pad(s, ((0, 0), (1, 1), (1, 1), (0, 0)), mode="edge")
    l = 0.0
    for ky in range(3):
        for kx in range(3):
            l = l + sp[:, ky:ky + H, kx:kx + W, :]
    l = l * (1.0 / 9.0)

    h = z - l
    h = dw3(h, params["w_h1"], 1) + l
    h = dw3(h, params["w_h2"], 1)
    l2 = dw3(jnp.broadcast_to(l, z.shape), params["w_l1"], 2)
    feat = dw3(h, params["w_hth"], 1) + dw3(l2, params["w_lth"], 1) + l2
    y = jnp.einsum("nhwc,cd->nhwd", feat, params["w_out"])
    return jnp.transpose(y, (0, 3, 1, 2))


if __name__ == "__main__":
    dim, N, H, W = 4, 2, 16, 16
    key = jax.random.PRNGKey(0)
    kx, kp = jax.random.split(key)
    x = jax.random.normal(kx, (N, dim, H, W), jnp.float32)   # NCHW, like PyTorch
    params = init_params(kp, dim)

    y_ref = jax.block_until_ready(_reference(x, params))
    tol = 2e-3 * (float(jnp.max(jnp.abs(y_ref))) + 1.0)

    # Exercise single-tile, two-tile (boundary tiles only) and four-tile
    # (including interior tiles) configurations of the H-tiled kernel.
    for th in (None, 8, 4):
        y = jax.block_until_ready(decouple_conv_v5(x, params, tile_h=th))
        assert y.shape == (N, dim, H, W) and y.dtype == jnp.float32
        err = float(jnp.max(jnp.abs(y - y_ref)))
        assert err <= tol, f"tile_h={th}: max abs err {err} > tol {tol}"
    print("KERNEL_OK")
</pallas_src>

<mosaic_0001>
module attributes {stable_mosaic.version = 11 : i64} {
  func.func @_decouple_kernel(%arg0: i32, %arg1: i32, %arg2: memref<1x1x24x16x4xf32, #tpu.memory_space<vmem>>, %arg3: memref<4x21xf32, #tpu.memory_space<vmem>>, %arg4: memref<3x3x20xf32, #tpu.memory_space<vmem>>, %arg5: memref<3x3x20xf32, #tpu.memory_space<vmem>>, %arg6: memref<3x3x20xf32, #tpu.memory_space<vmem>>, %arg7: memref<3x3x20xf32, #tpu.memory_space<vmem>>, %arg8: memref<9x20xf32, #tpu.memory_space<vmem>>, %arg9: memref<20x4xf32, #tpu.memory_space<vmem>>, %arg10: memref<1x16x16x4xf32, #tpu.memory_space<vmem>>, %arg11: memref<24x32x20xf32, #tpu.memory_space<vmem>>) attributes {dimension_semantics = [#tpu.dimension_semantics<parallel>, #tpu.dimension_semantics<parallel>], iteration_bounds = array<i64: 2, 1>, scalar_prefetch = 0 : i64, scratch_operands = 1 : i64, tpu.core_type = #tpu.core_type<tc>, window_params = [{transform_indices = @transform_0, window_bounds = array<i64: 1, 1, 24, 16, 4>}, {pipeline_mode = #tpu.pipeline_mode<synchronous>, transform_indices = @transform_1, window_bounds = array<i64: 4, 21>}, {pipeline_mode = #tpu.pipeline_mode<synchronous>, transform_indices = @transform_2, window_bounds = array<i64: 3, 3, 20>}, {pipeline_mode = #tpu.pipeline_mode<synchronous>, transform_indices = @transform_3, window_bounds = array<i64: 3, 3, 20>}, {pipeline_mode = #tpu.pipeline_mode<synchronous>, transform_indices = @transform_4, window_bounds = array<i64: 3, 3, 20>}, {pipeline_mode = #tpu.pipeline_mode<synchronous>, transform_indices = @transform_5, window_bounds = array<i64: 3, 3, 20>}, {pipeline_mode = #tpu.pipeline_mode<synchronous>, transform_indices = @transform_6, window_bounds = array<i64: 9, 20>}, {pipeline_mode = #tpu.pipeline_mode<synchronous>, transform_indices = @transform_7, window_bounds = array<i64: 20, 4>}, {transform_indices = @transform_8, window_bounds = array<i64: 1, 16, 16, 4>}]} {
    %c0_i32 = arith.constant 0 : i32
    %0 = arith.cmpi eq, %arg1, %c0_i32 : i32
    %c0_i32_0 = arith.constant 0 : i32
    %1 = arith.cmpi eq, %arg1, %c0_i32_0 : i32
    %cst = arith.constant 0.000000e+00 : f32
    %2 = vector.broadcast %cst : f32 to vector<24x1x20xf32>
    %c0 = arith.constant 0 : index
    %c7 = arith.constant 7 : index
    %c0_1 = arith.constant 0 : index
    %3 = vector.load %arg11[%c0, %c7, %c0_1] : memref<24x32x20xf32, #tpu.memory_space<vmem>>, vector<24x1x20xf32>
    tpu.vector_store %arg11[%c0, %c7, %c0_1], %2 {strides = array<i32>} : memref<24x32x20xf32, #tpu.memory_space<vmem>>, vector<24x1x20xf32>,
    %cst_2 = arith.constant 0.000000e+00 : f32
    %4 = vector.broadcast %cst_2 : f32 to vector<24x1x20xf32>
    %c0_3 = arith.constant 0 : index
    %c24 = arith.constant 24 : index
    %c0_4 = arith.constant 0 : index
    %5 = vector.load %arg11[%c0_3, %c24, %c0_4] : memref<24x32x20xf32, #tpu.memory_space<vmem>>, vector<24x1x20xf32>
    tpu.vector_store %arg11[%c0_3, %c24, %c0_4], %4 {strides = array<i32>} : memref<24x32x20xf32, #tpu.memory_space<vmem>>, vector<24x1x20xf32>,
    %c0_5 = arith.constant 0 : index
    %c0_6 = arith.constant 0 : index
    %c0_7 = arith.constant 0 : index
    %c0_8 = arith.constant 0 : index
    %c0_9 = arith.constant 0 : index
    %6 = vector.load %arg2[%c0_5, %c0_6, %c0_7, %c0_8, %c0_9] : memref<1x1x24x16x4xf32, #tpu.memory_space<vmem>>, vector<1x1x24x16x4xf32>
    %7 = vector.shape_cast %6 : vector<1x1x24x16x4xf32> to vector<24x16x4xf32>
    %8 = vector.shape_cast %7 : vector<24x16x4xf32> to vector<384x4xf32>
    %c0_10 = arith.constant 0 : index
    %c0_11 = arith.constant 0 : index
    %9 = vector.load %arg3[%c0_10, %c0_11] : memref<4x21xf32, #tpu.memory_space<vmem>>, vector<4x21xf32>
    %cst_12 = arith.constant dense<0.000000e+00> : vector<384x21xf32>
    %10 = tpu.matmul %8, %9, %cst_12 {dimension_numbers = #tpu.dot_dimension_numbers<[1], [0], [0], [1], [0, 0, 1, 1], [], []>} : vector<384x4xf32>, vector<4x21xf32>, vector<384x21xf32> -> vector<384x21xf32>
    %11 = vector.shape_cast %10 : vector<384x21xf32> to vector<24x16x21xf32>
    %12 = vector.extract_strided_slice %11 {offsets = [0, 0, 20], sizes = [24, 16, 1], strides = [1, 1, 1]} : vector<24x16x21xf32> to vector<24x16x1xf32>
    %13 = vector.extract_strided_slice %12 {offsets = [0, 0, 0], sizes = [24, 1, 1], strides = [1, 1, 1]} : vector<24x16x1xf32> to vector<24x1x1xf32>
    %14 = vector.extract_strided_slice %12 {offsets = [0, 0, 0], sizes = [24, 15, 1], strides = [1, 1, 1]} : vector<24x16x1xf32> to vector<24x15x1xf32>
    %15 = tpu.concatenate %13, %14 in 1 : vector<24x1x1xf32>, vector<24x15x1xf32> -> vector<24x16x1xf32>
    %16 = vector.extract_strided_slice %12 {offsets = [0, 1, 0], sizes = [24, 15, 1], strides = [1, 1, 1]} : vector<24x16x1xf32> to vector<24x15x1xf32>
    %17 = vector.extract_strided_slice %12 {offsets = [0, 15, 0], sizes = [24, 1, 1], strides = [1, 1, 1]} : vector<24x16x1xf32> to vector<24x1x1xf32>
    %18 = tpu.concatenate %16, %17 in 1 : vector<24x15x1xf32>, vector<24x1x1xf32> -> vector<24x16x1xf32>
    %19 = arith.addf %15, %12 : vector<24x16x1xf32>
    %20 = arith.addf %19, %18 : vector<24x16x1xf32>
    %21 = tpu.iota {dimensions = array<i32: 0>} : vector<24x16x1xi32>
    %c3_i32 = arith.constant 3 : i32
    %22 = vector.broadcast %c3_i32 : i32 to vector<24x16x1xi32>
    %23 = arith.cmpi eq, %21, %22 : vector<24x16x1xi32>
    %24 = vector.broadcast %0 : i1 to vector<24x16x1xi1>
    %25 = arith.andi %24, %23 : vector<24x16x1xi1>
    %26 = vector.extract_strided_slice %20 {offsets = [4, 0, 0], sizes = [1, 16, 1], strides = [1, 1, 1]} : vector<24x16x1xf32> to vector<1x16x1xf32>
    %27 = vector.shape_cast %26 : vector<1x16x1xf32> to vector<1x16x1xf32>
    %28 = vector.broadcast %27 : vector<1x16x1xf32> to vector<24x16x1xf32>
    %29 = arith.select %25, %28, %20 : vector<24x16x1xi1>, vector<24x16x1xf32>
    %c20_i32 = arith.constant 20 : i32
    %30 = vector.broadcast %c20_i32 : i32 to vector<24x16x1xi32>
    %31 = arith.cmpi eq, %21, %30 : vector<24x16x1xi32>
    %32 = vector.broadcast %1 : i1 to vector<24x16x1xi1>
    %33 = arith.andi %32, %31 : vector<24x16x1xi1>
    %34 = vector.extract_strided_slice %29 {offsets = [19, 0, 0], sizes = [1, 16, 1], strides = [1, 1, 1]} : vector<24x16x1xf32> to vector<1x16x1xf32>
    %35 = vector.shape_cast %34 : vector<1x16x1xf32> to vector<1x16x1xf32>
    %36 = vector.broadcast %35 : vector<1x16x1xf32> to vector<24x16x1xf32>
    %37 = arith.select %33, %36, %29 : vector<24x16x1xi1>, vector<24x16x1xf32>
    %38 = vector.extract_strided_slice %37 {offsets = [0, 0, 0], sizes = [22, 16, 1], strides = [1, 1, 1]} : vector<24x16x1xf32> to vector<22x16x1xf32>
    %39 = vector.extract_strided_slice %37 {offsets = [1, 0, 0], sizes = [22, 16, 1], strides = [1, 1, 1]} : vector<24x16x1xf32> to vector<22x16x1xf32>
    %40 = arith.addf %38, %39 : vector<22x16x1xf32>
    %41 = vector.extract_strided_slice %37 {offsets = [2, 0, 0], sizes = [22, 16, 1], strides = [1, 1, 1]} : vector<24x16x1xf32> to vector<22x16x1xf32>
    %42 = arith.addf %40, %41 : vector<22x16x1xf32>
    %cst_13 = arith.constant 0.111111112 : f32
    %43 = vector.broadcast %cst_13 : f32 to vector<22x16x1xf32>
    %44 = arith.mulf %42, %43 : vector<22x16x1xf32>
    %45 = tpu.iota {dimensions = array<i32: 0>} : vector<22x16x1xi32>
    %c3_i32_14 = arith.constant 3 : i32
    %46 = vector.broadcast %c3_i32_14 : i32 to vector<22x16x1xi32>
    %47 = arith.cmpi slt, %45, %46 : vector<22x16x1xi32>
    %48 = vector.broadcast %0 : i1 to vector<22x16x1xi1>
    %49 = arith.andi %48, %47 : vector<22x16x1xi1>
    %cst_15 = arith.constant 0.000000e+00 : f32
    %50 = vector.broadcast %cst_15 : f32 to vector<22x16x1xf32>
    %51 = arith.select %49, %50, %44 : vector<22x16x1xi1>, vector<22x16x1xf32>
    %c19_i32 = arith.constant 19 : i32
    %52 = vector.broadcast %c19_i32 : i32 to vector<22x16x1xi32>
    %53 = arith.cmpi sge, %45, %52 : vector<22x16x1xi32>
    %54 = vector.broadcast %1 : i1 to vector<22x16x1xi1>
    %55 = arith.andi %54, %53 : vector<22x16x1xi1>
    %cst_16 = arith.constant 0.000000e+00 : f32
    %56 = vector.broadcast %cst_16 : f32 to vector<22x16x1xf32>
    %57 = arith.select %55, %56, %51 : vector<22x16x1xi1>, vector<22x16x1xf32>
    %58 = vector.extract_strided_slice %11 {offsets = [1, 0, 0], sizes = [22, 16, 20], strides = [1, 1, 1]} : vector<24x16x21xf32> to vector<22x16x20xf32>
    %59 = vector.broadcast %57 : vector<22x16x1xf32> to vector<22x16x20xf32>
    %60 = arith.subf %58, %59 : vector<22x16x20xf32>
    %c1 = arith.constant 1 : index
    %c8 = arith.constant 8 : index
    %c0_17 = arith.constant 0 : index
    %61 = vector.load %arg11[%c1, %c8, %c0_17] : memref<24x32x20xf32, #tpu.memory_space<vmem>>, vector<22x16x20xf32>
    tpu.vector_store %arg11[%c1, %c8, %c0_17], %60 {strides = array<i32>} : memref<24x32x20xf32, #tpu.memory_space<vmem>>, vector<22x16x20xf32>,
    %c1_18 = arith.constant 1 : index
    %c0_19 = arith.constant 0 : index
    %c0_20 = arith.constant 0 : index
    %62 = vector.load %arg11[%c1_18, %c0_19, %c0_20] : memref<24x32x20xf32, #tpu.memory_space<vmem>>, vector<20x32x20xf32>
    %c2 = arith.constant 2 : index
    %c0_21 = arith.constant 0 : index
    %c0_22 = arith.constant 0 : index
    %63 = vector.load %arg11[%c2, %c0_21, %c0_22] : memref<24x32x20xf32, #tpu.memory_space<vmem>>, vector<20x32x20xf32>
    %c3 = arith.constant 3 : index
    %c0_23 = arith.constant 0 : index
    %c0_24 = arith.constant 0 : index
    %64 = vector.load %arg11[%c3, %c0_23, %c0_24] : memref<24x32x20xf32, #tpu.memory_space<vmem>>, vector<20x32x20xf32>
    %c0_25 = arith.constant 0 : index
    %c0_26 = arith.constant 0 : index
    %c0_27 = arith.constant 0 : index
    %65 = vector.load %arg4[%c0_25, %c0_26, %c0_27] : memref<3x3x20xf32, #tpu.memory_space<vmem>>, vector<1x1x20xf32>
    %66 = vector.shape_cast %65 : vector<1x1x20xf32> to vector<20xf32>
    %67 = vector.shape_cast %66 : vector<20xf32> to vector<1x1x20xf32>
    %68 = vector.broadcast %67 : vector<1x1x20xf32> to vector<20x32x20xf32>
    %69 = arith.mulf %62, %68 : vector<20x32x20xf32>
    %c1_28 = arith.constant 1 : index
    %c0_29 = arith.constant 0 : index
    %c0_30 = arith.constant 0 : index
    %70 = vector.load %arg4[%c1_28, %c0_29, %c0_30] : memref<3x3x20xf32, #tpu.memory_space<vmem>>, vector<1x1x20xf32>
    %71 = vector.shape_cast %70 : vector<1x1x20xf32> to vector<20xf32>
    %72 = vector.shape_cast %71 : vector<20xf32> to vector<1x1x20xf32>
    %73 = vector.broadcast %72 : vector<1x1x20xf32> to vector<20x32x20xf32>
    %74 = arith.mulf %63, %73 : vector<20x32x20xf32>
    %75 = arith.addf %69, %74 : vector<20x32x20xf32>
    %c2_31 = arith.constant 2 : index
    %c0_32 = arith.constant 0 : index
    %c0_33 = arith.constant 0 : index
    %76 = vector.load %arg4[%c2_31, %c0_32, %c0_33] : memref<3x3x20xf32, #tpu.memory_space<vmem>>, vector<1x1x20xf32>
    %77 = vector.shape_cast %76 : vector<1x1x20xf32> to vector<20xf32>
    %78 = vector.shape_cast %77 : vector<20xf32> to vector<1x1x20xf32>
    %79 = vector.broadcast %78 : vector<1x1x20xf32> to vector<20x32x20xf32>
    %80 = arith.mulf %64, %79 : vector<20x32x20xf32>
    %81 = arith.addf %75, %80 : vector<20x32x20xf32>
    %82 = vector.extract_strided_slice %81 {offsets = [0, 7, 0], sizes = [20, 16, 20], strides = [1, 1, 1]} : vector<20x32x20xf32> to vector<20x16x20xf32>
    %c0_34 = arith.constant 0 : index
    %c1_35 = arith.constant 1 : index
    %c0_36 = arith.constant 0 : index
    %83 = vector.load %arg4[%c0_34, %c1_35, %c0_36] : memref<3x3x20xf32, #tpu.memory_space<vmem>>, vector<1x1x20xf32>
    %84 = vector.shape_cast %83 : vector<1x1x20xf32> to vector<20xf32>
    %85 = vector.shape_cast %84 : vector<20xf32> to vector<1x1x20xf32>
    %86 = vector.broadcast %85 : vector<1x1x20xf32> to vector<20x32x20xf32>
    %87 = arith.mulf %62, %86 : vector<20x32x20xf32>
    %c1_37 = arith.constant 1 : index
    %c1_38 = arith.constant 1 : index
    %c0_39 = arith.constant 0 : index
    %88 = vector.load %arg4[%c1_37, %c1_38, %c0_39] : memref<3x3x20xf32, #tpu.memory_space<vmem>>, vector<1x1x20xf32>
    %89 = vector.shape_cast %88 : vector<1x1x20xf32> to vector<20xf32>
    %90 = vector.shape_cast %89 : vector<20xf32> to vector<1x1x20xf32>
    %91 = vector.broadcast %90 : vector<1x1x20xf32> to vector<20x32x20xf32>
    %92 = arith.mulf %63, %91 : vector<20x32x20xf32>
    %93 = arith.addf %87, %92 : vector<20x32x20xf32>
    %c2_40 = arith.constant 2 : index
    %c1_41 = arith.constant 1 : index
    %c0_42 = arith.constant 0 : index
    %94 = vector.load %arg4[%c2_40, %c1_41, %c0_42] : memref<3x3x20xf32, #tpu.memory_space<vmem>>, vector<1x1x20xf32>
    %95 = vector.shape_cast %94 : vector<1x1x20xf32> to vector<20xf32>
    %96 = vector.shape_cast %95 : vector<20xf32> to vector<1x1x20xf32>
    %97 = vector.broadcast %96 : vector<1x1x20xf32> to vector<20x32x20xf32>
    %98 = arith.mulf %64, %97 : vector<20x32x20xf32>
    %99 = arith.addf %93, %98 : vector<20x32x20xf32>
    %100 = vector.extract_strided_slice %99 {offsets = [0, 8, 0], sizes = [20, 16, 20], strides = [1, 1, 1]} : vector<20x32x20xf32> to vector<20x16x20xf32>
    %101 = arith.addf %82, %100 : vector<20x16x20xf32>
    %c0_43 = arith.constant 0 : index
    %c2_44 = arith.constant 2 : index
    %c0_45 = arith.constant 0 : index
    %102 = vector.load %arg4[%c0_43, %c2_44, %c0_45] : memref<3x3x20xf32, #tpu.memory_space<vmem>>, vector<1x1x20xf32>
    %103 = vector.shape_cast %102 : vector<1x1x20xf32> to vector<20xf32>
    %104 = vector.shape_cast %103 : vector<20xf32> to vector<1x1x20xf32>
    %105 = vector.broadcast %104 : vector<1x1x20xf32> to vector<20x32x20xf32>
    %106 = arith.mulf %62, %105 : vector<20x32x20xf32>
    %c1_46 = arith.constant 1 : index
    %c2_47 = arith.constant 2 : index
    %c0_48 = arith.constant 0 : index
    %107 = vector.load %arg4[%c1_46, %c2_47, %c0_48] : memref<3x3x20xf32, #tpu.memory_space<vmem>>, vector<1x1x20xf32>
    %108 = vector.shape_cast %107 : vector<1x1x20xf32> to vector<20xf32>
    %109 = vector.shape_cast %108 : vector<20xf32> to vector<1x1x20xf32>
    %110 = vector.broadcast %109 : vector<1x1x20xf32> to vector<20x32x20xf32>
    %111 = arith.mulf %63, %110 : vector<20x32x20xf32>
    %112 = arith.addf %106, %111 : vector<20x32x20xf32>
    %c2_49 = arith.constant 2 : index
    %c2_50 = arith.constant 2 : index
    %c0_51 = arith.constant 0 : index
    %113 = vector.load %arg4[%c2_49, %c2_50, %c0_51] : memref<3x3x20xf32, #tpu.memory_space<vmem>>, vector<1x1x20xf32>
    %114 = vector.shape_cast %113 : vector<1x1x20xf32> to vector<20xf32>
    %115 = vector.shape_cast %114 : vector<20xf32> to vector<1x1x20xf32>
    %116 = vector.broadcast %115 : vector<1x1x20xf32> to vector<20x32x20xf32>
    %117 = arith.mulf %64, %116 : vector<20x32x20xf32>
    %118 = arith.addf %112, %117 : vector<20x32x20xf32>
    %119 = vector.extract_strided_slice %118 {offsets = [0, 9, 0], sizes = [20, 16, 20], strides = [1, 1, 1]} : vector<20x32x20xf32> to vector<20x16x20xf32>
    %120 = arith.addf %101, %119 : vector<20x16x20xf32>
    %121 = vector.extract_strided_slice %57 {offsets = [1, 0, 0], sizes = [20, 16, 1], strides = [1, 1, 1]} : vector<22x16x1xf32> to vector<20x16x1xf32>
    %122 = vector.broadcast %121 : vector<20x16x1xf32> to vector<20x16x20xf32>
    %123 = arith.addf %120, %122 : vector<20x16x20xf32>
    %c2_52 = arith.constant 2 : index
    %c8_53 = arith.constant 8 : index
    %c0_54 = arith.constant 0 : index
    %124 = vector.load %arg11[%c2_52, %c8_53, %c0_54] : memref<24x32x20xf32, #tpu.memory_space<vmem>>, vector<20x16x20xf32>
    tpu.vector_store %arg11[%c2_52, %c8_53, %c0_54], %123 {strides = array<i32>} : memref<24x32x20xf32, #tpu.memory_space<vmem>>, vector<20x16x20xf32>,
    %125 = arith.extui %0 : i1 to i32
    %c0_i32_55 = arith.constant 0 : i32
    %126 = arith.cmpi ne, %125, %c0_i32_55 : i32
    scf.if %126 {
      %cst_184 = arith.constant 0.000000e+00 : f32
      %347 = vector.broadcast %cst_184 : f32 to vector<2x16x20xf32>
      %c2_185 = arith.constant 2 : index
      %c8_186 = arith.constant 8 : index
      %c0_187 = arith.constant 0 : index
      %348 = vector.load %arg11[%c2_185, %c8_186, %c0_187] : memref<24x32x20xf32, #tpu.memory_space<vmem>>, vector<2x16x20xf32>
      tpu.vector_store %arg11[%c2_185, %c8_186, %c0_187], %347 {strides = array<i32>} : memref<24x32x20xf32, #tpu.memory_space<vmem>>, vector<2x16x20xf32>,
    } else {
    }
    %127 = arith.extui %1 : i1 to i32
    %c0_i32_56 = arith.constant 0 : i32
    %128 = arith.cmpi ne, %127, %c0_i32_56 : i32
    scf.if %128 {
      %cst_184 = arith.constant 0.000000e+00 : f32
      %347 = vector.broadcast %cst_184 : f32 to vector<2x16x20xf32>
      %c20 = arith.constant 20 : index
      %c8_185 = arith.constant 8 : index
      %c0_186 = arith.constant 0 : index
      %348 = vector.load %arg11[%c20, %c8_185, %c0_186] : memref<24x32x20xf32, #tpu.memory_space<vmem>>, vector<2x16x20xf32>
      tpu.vector_store %arg11[%c20, %c8_185, %c0_186], %347 {strides = array<i32>} : memref<24x32x20xf32, #tpu.memory_space<vmem>>, vector<2x16x20xf32>,
    } else {
    }
    %c2_57 = arith.constant 2 : index
    %c0_58 = arith.constant 0 : index
    %c0_59 = arith.constant 0 : index
    %129 = vector.load %arg11[%c2_57, %c0_58, %c0_59] : memref<24x32x20xf32, #tpu.memory_space<vmem>>, vector<18x32x20xf32>
    %c3_60 = arith.constant 3 : index
    %c0_61 = arith.constant 0 : index
    %c0_62 = arith.constant 0 : index
    %130 = vector.load %arg11[%c3_60, %c0_61, %c0_62] : memref<24x32x20xf32, #tpu.memory_space<vmem>>, vector<18x32x20xf32>
    %c4 = arith.constant 4 : index
    %c0_63 = arith.constant 0 : index
    %c0_64 = arith.constant 0 : index
    %131 = vector.load %arg11[%c4, %c0_63, %c0_64] : memref<24x32x20xf32, #tpu.memory_space<vmem>>, vector<18x32x20xf32>
    %c0_65 = arith.constant 0 : index
    %c0_66 = arith.constant 0 : index
    %c0_67 = arith.constant 0 : index
    %132 = vector.load %arg5[%c0_65, %c0_66, %c0_67] : memref<3x3x20xf32, #tpu.memory_space<vmem>>, vector<1x1x20xf32>
    %133 = vector.shape_cast %132 : vector<1x1x20xf32> to vector<20xf32>
    %134 = vector.shape_cast %133 : vector<20xf32> to vector<1x1x20xf32>
    %135 = vector.broadcast %134 : vector<1x1x20xf32> to vector<18x32x20xf32>
    %136 = arith.mulf %129, %135 : vector<18x32x20xf32>
    %c1_68 = arith.constant 1 : index
    %c0_69 = arith.constant 0 : index
    %c0_70 = arith.constant 0 : index
    %137 = vector.load %arg5[%c1_68, %c0_69, %c0_70] : memref<3x3x20xf32, #tpu.memory_space<vmem>>, vector<1x1x20xf32>
    %138 = vector.shape_cast %137 : vector<1x1x20xf32> to vector<20xf32>
    %139 = vector.shape_cast %138 : vector<20xf32> to vector<1x1x20xf32>
    %140 = vector.broadcast %139 : vector<1x1x20xf32> to vector<18x32x20xf32>
    %141 = arith.mulf %130, %140 : vector<18x32x20xf32>
    %142 = arith.addf %136, %141 : vector<18x32x20xf32>
    %c2_71 = arith.constant 2 : index
    %c0_72 = arith.constant 0 : index
    %c0_73 = arith.constant 0 : index
    %143 = vector.load %arg5[%c2_71, %c0_72, %c0_73] : memref<3x3x20xf32, #tpu.memory_space<vmem>>, vector<1x1x20xf32>
    %144 = vector.shape_cast %143 : vector<1x1x20xf32> to vector<20xf32>
    %145 = vector.shape_cast %144 : vector<20xf32> to vector<1x1x20xf32>
    %146 = vector.broadcast %145 : vector<1x1x20xf32> to vector<18x32x20xf32>
    %147 = arith.mulf %131, %146 : vector<18x32x20xf32>
    %148 = arith.addf %142, %147 : vector<18x32x20xf32>
    %149 = vector.extract_strided_slice %148 {offsets = [0, 7, 0], sizes = [18, 16, 20], strides = [1, 1, 1]} : vector<18x32x20xf32> to vector<18x16x20xf32>
    %c0_74 = arith.constant 0 : index
    %c1_75 = arith.constant 1 : index
    %c0_76 = arith.constant 0 : index
    %150 = vector.load %arg5[%c0_74, %c1_75, %c0_76] : memref<3x3x20xf32, #tpu.memory_space<vmem>>, vector<1x1x20xf32>
    %151 = vector.shape_cast %150 : vector<1x1x20xf32> to vector<20xf32>
    %152 = vector.shape_cast %151 : vector<20xf32> to vector<1x1x20xf32>
    %153 = vector.broadcast %152 : vector<1x1x20xf32> to vector<18x32x20xf32>
    %154 = arith.mulf %129, %153 : vector<18x32x20xf32>
    %c1_77 = arith.constant 1 : index
    %c1_78 = arith.constant 1 : index
    %c0_79 = arith.constant 0 : index
    %155 = vector.load %arg5[%c1_77, %c1_78, %c0_79] : memref<3x3x20xf32, #tpu.memory_space<vmem>>, vector<1x1x20xf32>
    %156 = vector.shape_cast %155 : vector<1x1x20xf32> to vector<20xf32>
    %157 = vector.shape_cast %156 : vector<20xf32> to vector<1x1x20xf32>
    %158 = vector.broadcast %157 : vector<1x1x20xf32> to vector<18x32x20xf32>
    %159 = arith.mulf %130, %158 : vector<18x32x20xf32>
    %160 = arith.addf %154, %159 : vector<18x32x20xf32>
    %c2_80 = arith.constant 2 : index
    %c1_81 = arith.constant 1 : index
    %c0_82 = arith.constant 0 : index
    %161 = vector.load %arg5[%c2_80, %c1_81, %c0_82] : memref<3x3x20xf32, #tpu.memory_space<vmem>>, vector<1x1x20xf32>
    %162 = vector.shape_cast %161 : vector<1x1x20xf32> to vector<20xf32>
    %163 = vector.shape_cast %162 : vector<20xf32> to vector<1x1x20xf32>
    %164 = vector.broadcast %163 : vector<1x1x20xf32> to vector<18x32x20xf32>
    %165 = arith.mulf %131, %164 : vector<18x32x20xf32>
    %166 = arith.addf %160, %165 : vector<18x32x20xf32>
    %167 = vector.extract_strided_slice %166 {offsets = [0, 8, 0], sizes = [18, 16, 20], strides = [1, 1, 1]} : vector<18x32x20xf32> to vector<18x16x20xf32>
    %168 = arith.addf %149, %167 : vector<18x16x20xf32>
    %c0_83 = arith.constant 0 : index
    %c2_84 = arith.constant 2 : index
    %c0_85 = arith.constant 0 : index
    %169 = vector.load %arg5[%c0_83, %c2_84, %c0_85] : memref<3x3x20xf32, #tpu.memory_space<vmem>>, vector<1x1x20xf32>
    %170 = vector.shape_cast %169 : vector<1x1x20xf32> to vector<20xf32>
    %171 = vector.shape_cast %170 : vector<20xf32> to vector<1x1x20xf32>
    %172 = vector.broadcast %171 : vector<1x1x20xf32> to vector<18x32x20xf32>
    %173 = arith.mulf %129, %172 : vector<18x32x20xf32>
    %c1_86 = arith.constant 1 : index
    %c2_87 = arith.constant 2 : index
    %c0_88 = arith.constant 0 : index
    %174 = vector.load %arg5[%c1_86, %c2_87, %c0_88] : memref<3x3x20xf32, #tpu.memory_space<vmem>>, vector<1x1x20xf32>
    %175 = vector.shape_cast %174 : vector<1x1x20xf32> to vector<20xf32>
    %176 = vector.shape_cast %175 : vector<20xf32> to vector<1x1x20xf32>
    %177 = vector.broadcast %176 : vector<1x1x20xf32> to vector<18x32x20xf32>
    %178 = arith.mulf %130, %177 : vector<18x32x20xf32>
    %179 = arith.addf %173, %178 : vector<18x32x20xf32>
    %c2_89 = arith.constant 2 : index
    %c2_90 = arith.constant 2 : index
    %c0_91 = arith.constant 0 : index
    %180 = vector.load %arg5[%c2_89, %c2_90, %c0_91] : memref<3x3x20xf32, #tpu.memory_space<vmem>>, vector<1x1x20xf32>
    %181 = vector.shape_cast %180 : vector<1x1x20xf32> to vector<20xf32>
    %182 = vector.shape_cast %181 : vector<20xf32> to vector<1x1x20xf32>
    %183 = vector.broadcast %182 : vector<1x1x20xf32> to vector<18x32x20xf32>
    %184 = arith.mulf %131, %183 : vector<18x32x20xf32>
    %185 = arith.addf %179, %184 : vector<18x32x20xf32>
    %186 = vector.extract_strided_slice %185 {offsets = [0, 9, 0], sizes = [18, 16, 20], strides = [1, 1, 1]} : vector<18x32x20xf32> to vector<18x16x20xf32>
    %187 = arith.addf %168, %186 : vector<18x16x20xf32>
    %c3_92 = arith.constant 3 : index
    %c8_93 = arith.constant 8 : index
    %c0_94 = arith.constant 0 : index
    %188 = vector.load %arg11[%c3_92, %c8_93, %c0_94] : memref<24x32x20xf32, #tpu.memory_space<vmem>>, vector<18x16x20xf32>
    tpu.vector_store %arg11[%c3_92, %c8_93, %c0_94], %187 {strides = array<i32>} : memref<24x32x20xf32, #tpu.memory_space<vmem>>, vector<18x16x20xf32>,
    %189 = arith.extui %0 : i1 to i32
    %c0_i32_95 = arith.constant 0 : i32
    %190 = arith.cmpi ne, %189, %c0_i32_95 : i32
    scf.if %190 {
      %cst_184 = arith.constant 0.000000e+00 : f32
      %347 = vector.broadcast %cst_184 : f32 to vector<1x16x20xf32>
      %c3_185 = arith.constant 3 : index
      %c8_186 = arith.constant 8 : index
      %c0_187 = arith.constant 0 : index
      %348 = vector.load %arg11[%c3_185, %c8_186, %c0_187] : memref<24x32x20xf32, #tpu.memory_space<vmem>>, vector<1x16x20xf32>
      tpu.vector_store %arg11[%c3_185, %c8_186, %c0_187], %347 {strides = array<i32>} : memref<24x32x20xf32, #tpu.memory_space<vmem>>, vector<1x16x20xf32>,
    } else {
    }
    %191 = arith.extui %1 : i1 to i32
    %c0_i32_96 = arith.constant 0 : i32
    %192 = arith.cmpi ne, %191, %c0_i32_96 : i32
    scf.if %192 {
      %cst_184 = arith.constant 0.000000e+00 : f32
      %347 = vector.broadcast %cst_184 : f32 to vector<1x16x20xf32>
      %c20 = arith.constant 20 : index
      %c8_185 = arith.constant 8 : index
      %c0_186 = arith.constant 0 : index
      %348 = vector.load %arg11[%c20, %c8_185, %c0_186] : memref<24x32x20xf32, #tpu.memory_space<vmem>>, vector<1x16x20xf32>
      tpu.vector_store %arg11[%c20, %c8_185, %c0_186], %347 {strides = array<i32>} : memref<24x32x20xf32, #tpu.memory_space<vmem>>, vector<1x16x20xf32>,
    } else {
    }
    %c3_97 = arith.constant 3 : index
    %c0_98 = arith.constant 0 : index
    %c0_99 = arith.constant 0 : index
    %193 = vector.load %arg11[%c3_97, %c0_98, %c0_99] : memref<24x32x20xf32, #tpu.memory_space<vmem>>, vector<16x32x20xf32>
    %c4_100 = arith.constant 4 : index
    %c0_101 = arith.constant 0 : index
    %c0_102 = arith.constant 0 : index
    %194 = vector.load %arg11[%c4_100, %c0_101, %c0_102] : memref<24x32x20xf32, #tpu.memory_space<vmem>>, vector<16x32x20xf32>
    %c5 = arith.constant 5 : index
    %c0_103 = arith.constant 0 : index
    %c0_104 = arith.constant 0 : index
    %195 = vector.load %arg11[%c5, %c0_103, %c0_104] : memref<24x32x20xf32, #tpu.memory_space<vmem>>, vector<16x32x20xf32>
    %c0_105 = arith.constant 0 : index
    %c0_106 = arith.constant 0 : index
    %c0_107 = arith.constant 0 : index
    %196 = vector.load %arg6[%c0_105, %c0_106, %c0_107] : memref<3x3x20xf32, #tpu.memory_space<vmem>>, vector<1x1x20xf32>
    %197 = vector.shape_cast %196 : vector<1x1x20xf32> to vector<20xf32>
    %198 = vector.shape_cast %197 : vector<20xf32> to vector<1x1x20xf32>
    %199 = vector.broadcast %198 : vector<1x1x20xf32> to vector<16x32x20xf32>
    %200 = arith.mulf %193, %199 : vector<16x32x20xf32>
    %c1_108 = arith.constant 1 : index
    %c0_109 = arith.constant 0 : index
    %c0_110 = arith.constant 0 : index
    %201 = vector.load %arg6[%c1_108, %c0_109, %c0_110] : memref<3x3x20xf32, #tpu.memory_space<vmem>>, vector<1x1x20xf32>
    %202 = vector.shape_cast %201 : vector<1x1x20xf32> to vector<20xf32>
    %203 = vector.shape_cast %202 : vector<20xf32> to vector<1x1x20xf32>
    %204 = vector.broadcast %203 : vector<1x1x20xf32> to vector<16x32x20xf32>
    %205 = arith.mulf %194, %204 : vector<16x32x20xf32>
    %206 = arith.addf %200, %205 : vector<16x32x20xf32>
    %c2_111 = arith.constant 2 : index
    %c0_112 = arith.constant 0 : index
    %c0_113 = arith.constant 0 : index
    %207 = vector.load %arg6[%c2_111, %c0_112, %c0_113] : memref<3x3x20xf32, #tpu.memory_space<vmem>>, vector<1x1x20xf32>
    %208 = vector.shape_cast %207 : vector<1x1x20xf32> to vector<20xf32>
    %209 = vector.shape_cast %208 : vector<20xf32> to vector<1x1x20xf32>
    %210 = vector.broadcast %209 : vector<1x1x20xf32> to vector<16x32x20xf32>
    %211 = arith.mulf %195, %210 : vector<16x32x20xf32>
    %212 = arith.addf %206, %211 : vector<16x32x20xf32>
    %213 = vector.extract_strided_slice %212 {offsets = [0, 7, 0], sizes = [16, 16, 20], strides = [1, 1, 1]} : vector<16x32x20xf32> to vector<16x16x20xf32>
    %c0_114 = arith.constant 0 : index
    %c1_115 = arith.constant 1 : index
    %c0_116 = arith.constant 0 : index
    %214 = vector.load %arg6[%c0_114, %c1_115, %c0_116] : memref<3x3x20xf32, #tpu.memory_space<vmem>>, vector<1x1x20xf32>
    %215 = vector.shape_cast %214 : vector<1x1x20xf32> to vector<20xf32>
    %216 = vector.shape_cast %215 : vector<20xf32> to vector<1x1x20xf32>
    %217 = vector.broadcast %216 : vector<1x1x20xf32> to vector<16x32x20xf32>
    %218 = arith.mulf %193, %217 : vector<16x32x20xf32>
    %c1_117 = arith.constant 1 : index
    %c1_118 = arith.constant 1 : index
    %c0_119 = arith.constant 0 : index
    %219 = vector.load %arg6[%c1_117, %c1_118, %c0_119] : memref<3x3x20xf32, #tpu.memory_space<vmem>>, vector<1x1x20xf32>
    %220 = vector.shape_cast %219 : vector<1x1x20xf32> to vector<20xf32>
    %221 = vector.shape_cast %220 : vector<20xf32> to vector<1x1x20xf32>
    %222 = vector.broadcast %221 : vector<1x1x20xf32> to vector<16x32x20xf32>
    %223 = arith.mulf %194, %222 : vector<16x32x20xf32>
    %224 = arith.addf %218, %223 : vector<16x32x20xf32>
    %c2_120 = arith.constant 2 : index
    %c1_121 = arith.constant 1 : index
    %c0_122 = arith.constant 0 : index
    %225 = vector.load %arg6[%c2_120, %c1_121, %c0_122] : memref<3x3x20xf32, #tpu.memory_space<vmem>>, vector<1x1x20xf32>
    %226 = vector.shape_cast %225 : vector<1x1x20xf32> to vector<20xf32>
    %227 = vector.shape_cast %226 : vector<20xf32> to vector<1x1x20xf32>
    %228 = vector.broadcast %227 : vector<1x1x20xf32> to vector<16x32x20xf32>
    %229 = arith.mulf %195, %228 : vector<16x32x20xf32>
    %230 = arith.addf %224, %229 : vector<16x32x20xf32>
    %231 = vector.extract_strided_slice %230 {offsets = [0, 8, 0], sizes = [16, 16, 20], strides = [1, 1, 1]} : vector<16x32x20xf32> to vector<16x16x20xf32>
    %232 = arith.addf %213, %231 : vector<16x16x20xf32>
    %c0_123 = arith.constant 0 : index
    %c2_124 = arith.constant 2 : index
    %c0_125 = arith.constant 0 : index
    %233 = vector.load %arg6[%c0_123, %c2_124, %c0_125] : memref<3x3x20xf32, #tpu.memory_space<vmem>>, vector<1x1x20xf32>
    %234 = vector.shape_cast %233 : vector<1x1x20xf32> to vector<20xf32>
    %235 = vector.shape_cast %234 : vector<20xf32> to vector<1x1x20xf32>
    %236 = vector.broadcast %235 : vector<1x1x20xf32> to vector<16x32x20xf32>
    %237 = arith.mulf %193, %236 : vector<16x32x20xf32>
    %c1_126 = arith.constant 1 : index
    %c2_127 = arith.constant 2 : index
    %c0_128 = arith.constant 0 : index
    %238 = vector.load %arg6[%c1_126, %c2_127, %c0_128] : memref<3x3x20xf32, #tpu.memory_space<vmem>>, vector<1x1x20xf32>
    %239 = vector.shape_cast %238 : vector<1x1x20xf32> to vector<20xf32>
    %240 = vector.shape_cast %239 : vector<20xf32> to vector<1x1x20xf32>
    %241 = vector.broadcast %240 : vector<1x1x20xf32> to vector<16x32x20xf32>
    %242 = arith.mulf %194, %241 : vector<16x32x20xf32>
    %243 = arith.addf %237, %242 : vector<16x32x20xf32>
    %c2_129 = arith.constant 2 : index
    %c2_130 = arith.constant 2 : index
    %c0_131 = arith.constant 0 : index
    %244 = vector.load %arg6[%c2_129, %c2_130, %c0_131] : memref<3x3x20xf32, #tpu.memory_space<vmem>>, vector<1x1x20xf32>
    %245 = vector.shape_cast %244 : vector<1x1x20xf32> to vector<20xf32>
    %246 = vector.shape_cast %245 : vector<20xf32> to vector<1x1x20xf32>
    %247 = vector.broadcast %246 : vector<1x1x20xf32> to vector<16x32x20xf32>
    %248 = arith.mulf %195, %247 : vector<16x32x20xf32>
    %249 = arith.addf %243, %248 : vector<16x32x20xf32>
    %250 = vector.extract_strided_slice %249 {offsets = [0, 9, 0], sizes = [16, 16, 20], strides = [1, 1, 1]} : vector<16x32x20xf32> to vector<16x16x20xf32>
    %251 = arith.addf %232, %250 : vector<16x16x20xf32>
    %cst_132 = arith.constant 0.000000e+00 : f32
    %252 = vector.broadcast %cst_132 : f32 to vector<18x2x1xf32>
    %253 = vector.extract_strided_slice %57 {offsets = [0, 0, 0], sizes = [18, 16, 1], strides = [1, 1, 1]} : vector<22x16x1xf32> to vector<18x16x1xf32>
    %254 = vector.extract_strided_slice %253 {offsets = [0, 0, 0], sizes = [18, 14, 1], strides = [1, 1, 1]} : vector<18x16x1xf32> to vector<18x14x1xf32>
    %255 = tpu.concatenate %252, %254 in 1 : vector<18x2x1xf32>, vector<18x14x1xf32> -> vector<18x16x1xf32>
    %256 = vector.extract_strided_slice %253 {offsets = [0, 2, 0], sizes = [18, 14, 1], strides = [1, 1, 1]} : vector<18x16x1xf32> to vector<18x14x1xf32>
    %257 = tpu.concatenate %256, %252 in 1 : vector<18x14x1xf32>, vector<18x2x1xf32> -> vector<18x16x1xf32>
    %258 = vector.extract_strided_slice %57 {offsets = [2, 0, 0], sizes = [18, 16, 1], strides = [1, 1, 1]} : vector<22x16x1xf32> to vector<18x16x1xf32>
    %259 = vector.extract_strided_slice %258 {offsets = [0, 0, 0], sizes = [18, 14, 1], strides = [1, 1, 1]} : vector<18x16x1xf32> to vector<18x14x1xf32>
    %260 = tpu.concatenate %252, %259 in 1 : vector<18x2x1xf32>, vector<18x14x1xf32> -> vector<18x16x1xf32>
    %261 = vector.extract_strided_slice %258 {offsets = [0, 2, 0], sizes = [18, 14, 1], strides = [1, 1, 1]} : vector<18x16x1xf32> to vector<18x14x1xf32>
    %262 = tpu.concatenate %261, %252 in 1 : vector<18x14x1xf32>, vector<18x2x1xf32> -> vector<18x16x1xf32>
    %263 = vector.extract_strided_slice %57 {offsets = [4, 0, 0], sizes = [18, 16, 1], strides = [1, 1, 1]} : vector<22x16x1xf32> to vector<18x16x1xf32>
    %264 = vector.extract_strided_slice %263 {offsets = [0, 0, 0], sizes = [18, 14, 1], strides = [1, 1, 1]} : vector<18x16x1xf32> to vector<18x14x1xf32>
    %265 = tpu.concatenate %252, %264 in 1 : vector<18x2x1xf32>, vector<18x14x1xf32> -> vector<18x16x1xf32>
    %266 = vector.extract_strided_slice %263 {offsets = [0, 2, 0], sizes = [18, 14, 1], strides = [1, 1, 1]} : vector<18x16x1xf32> to vector<18x14x1xf32>
    %267 = tpu.concatenate %266, %252 in 1 : vector<18x14x1xf32>, vector<18x2x1xf32> -> vector<18x16x1xf32>
    %268 = tpu.concatenate %255, %253, %257, %260, %258, %262, %265, %263, %267 in 2 : vector<18x16x1xf32>, vector<18x16x1xf32>, vector<18x16x1xf32>, vector<18x16x1xf32>, vector<18x16x1xf32>, vector<18x16x1xf32>, vector<18x16x1xf32>, vector<18x16x1xf32>, vector<18x16x1xf32> -> vector<18x16x9xf32>
    %269 = vector.shape_cast %268 : vector<18x16x9xf32> to vector<288x9xf32>
    %c0_133 = arith.constant 0 : index
    %c0_134 = arith.constant 0 : index
    %270 = vector.load %arg8[%c0_133, %c0_134] : memref<9x20xf32, #tpu.memory_space<vmem>>, vector<9x20xf32>
    %cst_135 = arith.constant dense<0.000000e+00> : vector<288x20xf32>
    %271 = tpu.matmul %269, %270, %cst_135 {dimension_numbers = #tpu.dot_dimension_numbers<[1], [0], [0], [1], [0, 0, 1, 1], [], []>} : vector<288x9xf32>, vector<9x20xf32>, vector<288x20xf32> -> vector<288x20xf32>
    %272 = vector.shape_cast %271 : vector<288x20xf32> to vector<18x16x20xf32>
    %c3_136 = arith.constant 3 : index
    %c8_137 = arith.constant 8 : index
    %c0_138 = arith.constant 0 : index
    %273 = vector.load %arg11[%c3_136, %c8_137, %c0_138] : memref<24x32x20xf32, #tpu.memory_space<vmem>>, vector<18x16x20xf32>
    tpu.vector_store %arg11[%c3_136, %c8_137, %c0_138], %272 {strides = array<i32>} : memref<24x32x20xf32, #tpu.memory_space<vmem>>, vector<18x16x20xf32>,
    %274 = arith.extui %0 : i1 to i32
    %c0_i32_139 = arith.constant 0 : i32
    %275 = arith.cmpi ne, %274, %c0_i32_139 : i32
    scf.if %275 {
      %cst_184 = arith.constant 0.000000e+00 : f32
      %347 = vector.broadcast %cst_184 : f32 to vector<1x16x20xf32>
      %c3_185 = arith.constant 3 : index
      %c8_186 = arith.constant 8 : index
      %c0_187 = arith.constant 0 : index
      %348 = vector.load %arg11[%c3_185, %c8_186, %c0_187] : memref<24x32x20xf32, #tpu.memory_space<vmem>>, vector<1x16x20xf32>
      tpu.vector_store %arg11[%c3_185, %c8_186, %c0_187], %347 {strides = array<i32>} : memref<24x32x20xf32, #tpu.memory_space<vmem>>, vector<1x16x20xf32>,
    } else {
    }
    %276 = arith.extui %1 : i1 to i32
    %c0_i32_140 = arith.constant 0 : i32
    %277 = arith.cmpi ne, %276, %c0_i32_140 : i32
    scf.if %277 {
      %cst_184 = arith.constant 0.000000e+00 : f32
      %347 = vector.broadcast %cst_184 : f32 to vector<1x16x20xf32>
      %c20 = arith.constant 20 : index
      %c8_185 = arith.constant 8 : index
      %c0_186 = arith.constant 0 : index
      %348 = vector.load %arg11[%c20, %c8_185, %c0_186] : memref<24x32x20xf32, #tpu.memory_space<vmem>>, vector<1x16x20xf32>
      tpu.vector_store %arg11[%c20, %c8_185, %c0_186], %347 {strides = array<i32>} : memref<24x32x20xf32, #tpu.memory_space<vmem>>, vector<1x16x20xf32>,
    } else {
    }
    %c3_141 = arith.constant 3 : index
    %c0_142 = arith.constant 0 : index
    %c0_143 = arith.constant 0 : index
    %278 = vector.load %arg11[%c3_141, %c0_142, %c0_143] : memref<24x32x20xf32, #tpu.memory_space<vmem>>, vector<16x32x20xf32>
    %c4_144 = arith.constant 4 : index
    %c0_145 = arith.constant 0 : index
    %c0_146 = arith.constant 0 : index
    %279 = vector.load %arg11[%c4_144, %c0_145, %c0_146] : memref<24x32x20xf32, #tpu.memory_space<vmem>>, vector<16x32x20xf32>
    %c5_147 = arith.constant 5 : index
    %c0_148 = arith.constant 0 : index
    %c0_149 = arith.constant 0 : index
    %280 = vector.load %arg11[%c5_147, %c0_148, %c0_149] : memref<24x32x20xf32, #tpu.memory_space<vmem>>, vector<16x32x20xf32>
    %c0_150 = arith.constant 0 : index
    %c0_151 = arith.constant 0 : index
    %c0_152 = arith.constant 0 : index
    %281 = vector.load %arg7[%c0_150, %c0_151, %c0_152] : memref<3x3x20xf32, #tpu.memory_space<vmem>>, vector<1x1x20xf32>
    %282 = vector.shape_cast %281 : vector<1x1x20xf32> to vector<20xf32>
    %283 = vector.shape_cast %282 : vector<20xf32> to vector<1x1x20xf32>
    %284 = vector.broadcast %283 : vector<1x1x20xf32> to vector<16x32x20xf32>
    %285 = arith.mulf %278, %284 : vector<16x32x20xf32>
    %c1_153 = arith.constant 1 : index
    %c0_154 = arith.constant 0 : index
    %c0_155 = arith.constant 0 : index
    %286 = vector.load %arg7[%c1_153, %c0_154, %c0_155] : memref<3x3x20xf32, #tpu.memory_space<vmem>>, vector<1x1x20xf32>
    %287 = vector.shape_cast %286 : vector<1x1x20xf32> to vector<20xf32>
    %288 = vector.shape_cast %287 : vector<20xf32> to vector<1x1x20xf32>
    %289 = vector.broadcast %288 : vector<1x1x20xf32> to vector<16x32x20xf32>
    %290 = arith.mulf %279, %289 : vector<16x32x20xf32>
    %291 = arith.addf %285, %290 : vector<16x32x20xf32>
    %c2_156 = arith.constant 2 : index
    %c0_157 = arith.constant 0 : index
    %c0_158 = arith.constant 0 : index
    %292 = vector.load %arg7[%c2_156, %c0_157, %c0_158] : memref<3x3x20xf32, #tpu.memory_space<vmem>>, vector<1x1x20xf32>
    %293 = vector.shape_cast %292 : vector<1x1x20xf32> to vector<20xf32>
    %294 = vector.shape_cast %293 : vector<20xf32> to vector<1x1x20xf32>
    %295 = vector.broadcast %294 : vector<1x1x20xf32> to vector<16x32x20xf32>
    %296 = arith.mulf %280, %295 : vector<16x32x20xf32>
    %297 = arith.addf %291, %296 : vector<16x32x20xf32>
    %298 = vector.extract_strided_slice %297 {offsets = [0, 7, 0], sizes = [16, 16, 20], strides = [1, 1, 1]} : vector<16x32x20xf32> to vector<16x16x20xf32>
    %c0_159 = arith.constant 0 : index
    %c1_160 = arith.constant 1 : index
    %c0_161 = arith.constant 0 : index
    %299 = vector.load %arg7[%c0_159, %c1_160, %c0_161] : memref<3x3x20xf32, #tpu.memory_space<vmem>>, vector<1x1x20xf32>
    %300 = vector.shape_cast %299 : vector<1x1x20xf32> to vector<20xf32>
    %301 = vector.shape_cast %300 : vector<20xf32> to vector<1x1x20xf32>
    %302 = vector.broadcast %301 : vector<1x1x20xf32> to vector<16x32x20xf32>
    %303 = arith.mulf %278, %302 : vector<16x32x20xf32>
    %c1_162 = arith.constant 1 : index
    %c1_163 = arith.constant 1 : index
    %c0_164 = arith.constant 0 : index
    %304 = vector.load %arg7[%c1_162, %c1_163, %c0_164] : memref<3x3x20xf32, #tpu.memory_space<vmem>>, vector<1x1x20xf32>
    %305 = vector.shape_cast %304 : vector<1x1x20xf32> to vector<20xf32>
    %306 = vector.shape_cast %305 : vector<20xf32> to vector<1x1x20xf32>
    %307 = vector.broadcast %306 : vector<1x1x20xf32> to vector<16x32x20xf32>
    %308 = arith.mulf %279, %307 : vector<16x32x20xf32>
    %309 = arith.addf %303, %308 : vector<16x32x20xf32>
    %c2_165 = arith.constant 2 : index
    %c1_166 = arith.constant 1 : index
    %c0_167 = arith.constant 0 : index
    %310 = vector.load %arg7[%c2_165, %c1_166, %c0_167] : memref<3x3x20xf32, #tpu.memory_space<vmem>>, vector<1x1x20xf32>
    %311 = vector.shape_cast %310 : vector<1x1x20xf32> to vector<20xf32>
    %312 = vector.shape_cast %311 : vector<20xf32> to vector<1x1x20xf32>
    %313 = vector.broadcast %312 : vector<1x1x20xf32> to vector<16x32x20xf32>
    %314 = arith.mulf %280, %313 : vector<16x32x20xf32>
    %315 = arith.addf %309, %314 : vector<16x32x20xf32>
    %316 = vector.extract_strided_slice %315 {offsets = [0, 8, 0], sizes = [16, 16, 20], strides = [1, 1, 1]} : vector<16x32x20xf32> to vector<16x16x20xf32>
    %317 = arith.addf %298, %316 : vector<16x16x20xf32>
    %c0_168 = arith.constant 0 : index
    %c2_169 = arith.constant 2 : index
    %c0_170 = arith.constant 0 : index
    %318 = vector.load %arg7[%c0_168, %c2_169, %c0_170] : memref<3x3x20xf32, #tpu.memory_space<vmem>>, vector<1x1x20xf32>
    %319 = vector.shape_cast %318 : vector<1x1x20xf32> to vector<20xf32>
    %320 = vector.shape_cast %319 : vector<20xf32> to vector<1x1x20xf32>
    %321 = vector.broadcast %320 : vector<1x1x20xf32> to vector<16x32x20xf32>
    %322 = arith.mulf %278, %321 : vector<16x32x20xf32>
    %c1_171 = arith.constant 1 : index
    %c2_172 = arith.constant 2 : index
    %c0_173 = arith.constant 0 : index
    %323 = vector.load %arg7[%c1_171, %c2_172, %c0_173] : memref<3x3x20xf32, #tpu.memory_space<vmem>>, vector<1x1x20xf32>
    %324 = vector.shape_cast %323 : vector<1x1x20xf32> to vector<20xf32>
    %325 = vector.shape_cast %324 : vector<20xf32> to vector<1x1x20xf32>
    %326 = vector.broadcast %325 : vector<1x1x20xf32> to vector<16x32x20xf32>
    %327 = arith.mulf %279, %326 : vector<16x32x20xf32>
    %328 = arith.addf %322, %327 : vector<16x32x20xf32>
    %c2_174 = arith.constant 2 : index
    %c2_175 = arith.constant 2 : index
    %c0_176 = arith.constant 0 : index
    %329 = vector.load %arg7[%c2_174, %c2_175, %c0_176] : memref<3x3x20xf32, #tpu.memory_space<vmem>>, vector<1x1x20xf32>
    %330 = vector.shape_cast %329 : vector<1x1x20xf32> to vector<20xf32>
    %331 = vector.shape_cast %330 : vector<20xf32> to vector<1x1x20xf32>
    %332 = vector.broadcast %331 : vector<1x1x20xf32> to vector<16x32x20xf32>
    %333 = arith.mulf %280, %332 : vector<16x32x20xf32>
    %334 = arith.addf %328, %333 : vector<16x32x20xf32>
    %335 = vector.extract_strided_slice %334 {offsets = [0, 9, 0], sizes = [16, 16, 20], strides = [1, 1, 1]} : vector<16x32x20xf32> to vector<16x16x20xf32>
    %336 = arith.addf %317, %335 : vector<16x16x20xf32>
    %337 = arith.addf %251, %336 : vector<16x16x20xf32>
    %338 = vector.extract_strided_slice %272 {offsets = [1, 0, 0], sizes = [16, 16, 20], strides = [1, 1, 1]} : vector<18x16x20xf32> to vector<16x16x20xf32>
    %339 = arith.addf %337, %338 : vector<16x16x20xf32>
    %340 = vector.shape_cast %339 : vector<16x16x20xf32> to vector<256x20xf32>
    %c0_177 = arith.constant 0 : index
    %c0_178 = arith.constant 0 : index
    %341 = vector.load %arg9[%c0_177, %c0_178] : memref<20x4xf32, #tpu.memory_space<vmem>>, vector<20x4xf32>
    %cst_179 = arith.constant dense<0.000000e+00> : vector<256x4xf32>
    %342 = tpu.matmul %340, %341, %cst_179 {dimension_numbers = #tpu.dot_dimension_numbers<[1], [0], [0], [1], [0, 0, 1, 1], [], []>} : vector<256x20xf32>, vector<20x4xf32>, vector<256x4xf32> -> vector<256x4xf32>
    %343 = vector.shape_cast %342 : vector<256x4xf32> to vector<16x16x4xf32>
    %c0_180 = arith.constant 0 : index
    %c0_181 = arith.constant 0 : index
    %c0_182 = arith.constant 0 : index
    %c0_183 = arith.constant 0 : index
    %344 = vector.load %arg10[%c0_180, %c0_181, %c0_182, %c0_183] : memref<1x16x16x4xf32, #tpu.memory_space<vmem>>, vector<1x16x16x4xf32>
    %345 = vector.shape_cast %344 : vector<1x16x16x4xf32> to vector<16x16x4xf32>
    %346 = vector.shape_cast %343 : vector<16x16x4xf32> to vector<1x16x16x4xf32>
    tpu.vector_store %arg10[%c0_180, %c0_181, %c0_182, %c0_183], %346 {strides = array<i32>} : memref<1x16x16x4xf32, #tpu.memory_space<vmem>>, vector<1x16x16x4xf32>,
    return
  }
  func.func @transform_0(%arg0: i32, %arg1: i32) -> (i32, i32, i32, i32, i32) {
    %c0_i32 = arith.constant 0 : i32
    %c0_i32_0 = arith.constant 0 : i32
    %c0_i32_1 = arith.constant 0 : i32
    %c0_i32_2 = arith.constant 0 : i32
    return %arg0, %arg1, %c0_i32, %c0_i32_0, %c0_i32_1 : i32, i32, i32, i32, i32
  }
  func.func @transform_1(%arg0: i32, %arg1: i32) -> (i32, i32) {
    %c0_i32 = arith.constant 0 : i32
    %c0_i32_0 = arith.constant 0 : i32
    %c0_i32_1 = arith.constant 0 : i32
    return %c0_i32, %c0_i32_0 : i32, i32
  }
  func.func @transform_2(%arg0: i32, %arg1: i32) -> (i32, i32, i32) {
    %c0_i32 = arith.constant 0 : i32
    %c0_i32_0 = arith.constant 0 : i32
    %c0_i32_1 = arith.constant 0 : i32
    %c0_i32_2 = arith.constant 0 : i32
    return %c0_i32, %c0_i32_0, %c0_i32_1 : i32, i32, i32
  }
  func.func @transform_3(%arg0: i32, %arg1: i32) -> (i32, i32, i32) {
    %c0_i32 = arith.constant 0 : i32
    %c0_i32_0 = arith.constant 0 : i32
    %c0_i32_1 = arith.constant 0 : i32
    %c0_i32_2 = arith.constant 0 : i32
    return %c0_i32, %c0_i32_0, %c0_i32_1 : i32, i32, i32
  }
  func.func @transform_4(%arg0: i32, %arg1: i32) -> (i32, i32, i32) {
    %c0_i32 = arith.constant 0 : i32
    %c0_i32_0 = arith.constant 0 : i32
    %c0_i32_1 = arith.constant 0 : i32
    %c0_i32_2 = arith.constant 0 : i32
    return %c0_i32, %c0_i32_0, %c0_i32_1 : i32, i32, i32
  }
  func.func @transform_5(%arg0: i32, %arg1: i32) -> (i32, i32, i32) {
    %c0_i32 = arith.constant 0 : i32
    %c0_i32_0 = arith.constant 0 : i32
    %c0_i32_1 = arith.constant 0 : i32
    %c0_i32_2 = arith.constant 0 : i32
    return %c0_i32, %c0_i32_0, %c0_i32_1 : i32, i32, i32
  }
  func.func @transform_6(%arg0: i32, %arg1: i32) -> (i32, i32) {
    %c0_i32 = arith.constant 0 : i32
    %c0_i32_0 = arith.constant 0 : i32
    %c0_i32_1 = arith.constant 0 : i32
    return %c0_i32, %c0_i32_0 : i32, i32
  }
  func.func @transform_7(%arg0: i32, %arg1: i32) -> (i32, i32) {
    %c0_i32 = arith.constant 0 : i32
    %c0_i32_0 = arith.constant 0 : i32
    %c0_i32_1 = arith.constant 0 : i32
    return %c0_i32, %c0_i32_0 : i32, i32
  }
  func.func @transform_8(%arg0: i32, %arg1: i32) -> (i32, i32, i32, i32) {
    %c0_i32 = arith.constant 0 : i32
    %c0_i32_0 = arith.constant 0 : i32
    %c0_i32_1 = arith.constant 0 : i32
    return %arg0, %arg1, %c0_i32, %c0_i32_0 : i32, i32, i32, i32
  }
}

</mosaic_0001>

<llo_original>
// kernel: tpu_custom_call.1
$region0: #{tpu_custom_call.1}
  #allocation0 [shape = 'u32[]', space=smem, size = 0x4, offset = 0x4, fixed_abs, tag = 'smem constant byte address 0x4 - core index']
  #allocation1 [shape = 'u32[144,128]{1,0:T(1,128)}', space=vmem, size = 0x12000, scoped, tag = 'internal scratch']
  #allocation2 [shape = 'f32[24,32,20]{2,1,0:T(8,128)}', space=vmem, size = 0x60000, scoped, tag = 'scratch operand']
  %s0 = inlined_call_operand.vmem [shape: f32[2,1,24,16,4], index: 0, kind: input, shape index: {}]
  %s1 = inlined_call_operand.vmem [shape: f32[4,21], index: 1, kind: input, shape index: {}]
  %s2 = inlined_call_operand.vmem [shape: f32[3,3,20], index: 2, kind: input, shape index: {}]
  %s3 = inlined_call_operand.vmem [shape: f32[3,3,20], index: 3, kind: input, shape index: {}]
  %s4 = inlined_call_operand.vmem [shape: f32[3,3,20], index: 4, kind: input, shape index: {}]
  %s5 = inlined_call_operand.vmem [shape: f32[3,3,20], index: 5, kind: input, shape index: {}]
  %s6 = inlined_call_operand.vmem [shape: f32[9,20], index: 6, kind: input, shape index: {}]
  %s7 = inlined_call_operand.vmem [shape: f32[20,4], index: 7, kind: input, shape index: {}]
  %s8 = inlined_call_operand.vmem [shape: f32[2,16,16,4], index: 8, kind: output, shape index: {}]
  %s9 = sld [smem:[#allocation0]]
  $region77: #{tpu_custom_call.1} parent=0
    _
  %s11 = ssub.s32 1, %s9
  %s12 = scalar_select 0, %s11, %s9
  loop: start=0, step=1, limit=4
  $region2: #{tpu_custom_call.1} parent=0 // loop_pre_header
    _
  $region3: #{tpu_custom_call.1} parent=0 // loop_header
    %s14 = sphi 0, %s18
    %p15 = scmp.ge.s32.totalorder %s14, 4
    %s21 = sphi 0, %s33
    %s22 = sphi 0, %s29
    %s23 = sphi 0, %s21
    %s24 = sphi 0, %s22
    %s25 = sphi 0, %s23
    %s26 = sphi 0, %s24
    %s38 = sphi 0, %s40
    %s41 = sphi 0, %s38
    %s42 = sphi 0, %s41
    %s58 = sphi 0, %s42
    %s62 = sphi 0, %s62
    %s64 = sphi 0, %s62
    %s65 = sphi 0, %s64
    %s79 = sphi 0, %s65
    %s83 = sphi 0, %s83
    %s85 = sphi 0, %s83
    %s86 = sphi 0, %s85
    %s100 = sphi 0, %s86
    %s104 = sphi 0, %s104
    %s106 = sphi 0, %s104
    %s107 = sphi 0, %s106
    %s121 = sphi 0, %s107
    %s125 = sphi 0, %s125
    %s127 = sphi 0, %s125
    %s128 = sphi 0, %s127
    %s142 = sphi 0, %s128
    %s146 = sphi 0, %s146
    %s148 = sphi 0, %s146
    %s149 = sphi 0, %s148
    %s163 = sphi 0, %s149
    %s167 = sphi 0, %s167
    %s169 = sphi 0, %s167
    %s170 = sphi 0, %s169
    %s184 = sphi 0, %s170
    %s188 = sphi 0, %s188
    %s190 = sphi 0, %s188
    %s191 = sphi 0, %s190
    %s205 = sphi 0, %s191
    %s213 = sphi 0, %s215
    %s216 = sphi 0, %s213
    %s217 = sphi 0, %s216
    %s233 = sphi 0, %s217
  $region4: #{tpu_custom_call.1} parent=0 // loop_header_branch
    %17 = sbr.rel (%p15) target = $region8
  $region5: #{tpu_custom_call.1} parent=0 // loop_body
    %s19 = ssub.s32 %s14, 1
    %s20 = ssub.s32 %s14, 2
    %s27 = sadd.s32 1, %s22
    %p28 = scmp.ge.s32.totalorder %s27, 1
    %s29 = scalar_select %p28, 0, %s27
    %s30 = sadd.s32 1, %s21
    %s31 = scalar_select %p28, %s30, %s21
    %p32 = scmp.ge.s32.totalorder %s31, 2
    %s33 = scalar_select %p32, 0, %s31
    %s34 = ssub.s32 %s21, %s33
    %s35 = ssub.s32 %s22, %s29
    %s36 = sor.u32 %s34, %s35
    %p37 = scmp.eq.s32.totalorder %s36, 0
    %s39 = sadd.s32 %s38, 1
    %s40 = scalar_select %p37, %s38, %s39
    %p43 = pneg %p37
    %p44 = scmp.eq.s32.totalorder %s14, 1
    %p45 = por %p43, %p44
    %p46 = scmp.ne.s32.totalorder %s38, %s41
    %p47 = scmp.eq.s32.totalorder %s14, 0
    %p48 = por %p46, %p47
    %p49 = scmp.ne.s32.totalorder %s38, %s41
    %p50 = scmp.eq.s32.totalorder %s19, 1
    %p51 = por %p49, %p50
    %p52 = scmp.ne.s32.totalorder %s41, %s42
    %p53 = scmp.eq.s32.totalorder %s19, 0
    %p54 = por %p52, %p53
    %p55 = scmp.ne.s32.totalorder %s41, %s42
    %p56 = scmp.eq.s32.totalorder %s20, 1
    %p57 = por %p55, %p56
    %p59 = scmp.ne.s32.totalorder %s42, %s58
    %p60 = scmp.eq.s32.totalorder %s20, 0
    %p61 = por %p59, %p60
    %s63 = sadd.s32 %s62, 1
    %p66 = scmp.eq.s32.totalorder %s14, 1
    %p67 = scmp.ne.s32.totalorder %s62, %s64
    %p68 = scmp.eq.s32.totalorder %s14, 0
    %p69 = por %p67, %p68
    %p70 = scmp.ne.s32.totalorder %s62, %s64
    %p71 = scmp.eq.s32.totalorder %s19, 1
    %p72 = por %p70, %p71
    %p73 = scmp.ne.s32.totalorder %s64, %s65
    %p74 = scmp.eq.s32.totalorder %s19, 0
    %p75 = por %p73, %p74
    %p76 = scmp.ne.s32.totalorder %s64, %s65
    %p77 = scmp.eq.s32.totalorder %s20, 1
    %p78 = por %p76, %p77
    %p80 = scmp.ne.s32.totalorder %s65, %s79
    %p81 = scmp.eq.s32.totalorder %s20, 0
    %p82 = por %p80, %p81
    %s84 = sadd.s32 %s83, 1
    %p87 = scmp.eq.s32.totalorder %s14, 1
    %p88 = scmp.ne.s32.totalorder %s83, %s85
    %p89 = scmp.eq.s32.totalorder %s14, 0
    %p90 = por %p88, %p89
    %p91 = scmp.ne.s32.totalorder %s83, %s85
    %p92 = scmp.eq.s32.totalorder %s19, 1
    %p93 = por %p91, %p92
    %p94 = scmp.ne.s32.totalorder %s85, %s86
    %p95 = scmp.eq.s32.totalorder %s19, 0
    %p96 = por %p94, %p95
    %p97 = scmp.ne.s32.totalorder %s85, %s86
    %p98 = scmp.eq.s32.totalorder %s20, 1
    %p99 = por %p97, %p98
    %p101 = scmp.ne.s32.totalorder %s86, %s100
    %p102 = scmp.eq.s32.totalorder %s20, 0
    %p103 = por %p101, %p102
    %s105 = sadd.s32 %s104, 1
    %p108 = scmp.eq.s32.totalorder %s14, 1
    %p109 = scmp.ne.s32.totalorder %s104, %s106
    %p110 = scmp.eq.s32.totalorder %s14, 0
    %p111 = por %p109, %p110
    %p112 = scmp.ne.s32.totalorder %s104, %s106
    %p113 = scmp.eq.s32.totalorder %s19, 1
    %p114 = por %p112, %p113
    %p115 = scmp.ne.s32.totalorder %s106, %s107
    %p116 = scmp.eq.s32.totalorder %s19, 0
    %p117 = por %p115, %p116
    %p118 = scmp.ne.s32.totalorder %s106, %s107
    %p119 = scmp.eq.s32.totalorder %s20, 1
    %p120 = por %p118, %p119
    %p122 = scmp.ne.s32.totalorder %s107, %s121
    %p123 = scmp.eq.s32.totalorder %s20, 0
    %p124 = por %p122, %p123
    %s126 = sadd.s32 %s125, 1
    %p129 = scmp.eq.s32.totalorder %s14, 1
    %p130 = scmp.ne.s32.totalorder %s125, %s127
    %p131 = scmp.eq.s32.totalorder %s14, 0
    %p132 = por %p130, %p131
    %p133 = scmp.ne.s32.totalorder %s125, %s127
    %p134 = scmp.eq.s32.totalorder %s19, 1
    %p135 = por %p133, %p134
    %p136 = scmp.ne.s32.totalorder %s127, %s128
    %p137 = scmp.eq.s32.totalorder %s19, 0
    %p138 = por %p136, %p137
    %p139 = scmp.ne.s32.totalorder %s127, %s128
    %p140 = scmp.eq.s32.totalorder %s20, 1
    %p141 = por %p139, %p140
    %p143 = scmp.ne.s32.totalorder %s128, %s142
    %p144 = scmp.eq.s32.totalorder %s20, 0
    %p145 = por %p143, %p144
    %s147 = sadd.s32 %s146, 1
    %p150 = scmp.eq.s32.totalorder %s14, 1
    %p151 = scmp.ne.s32.totalorder %s146, %s148
    %p152 = scmp.eq.s32.totalorder %s14, 0
    %p153 = por %p151, %p152
    %p154 = scmp.ne.s32.totalorder %s146, %s148
    %p155 = scmp.eq.s32.totalorder %s19, 1
    %p156 = por %p154, %p155
    %p157 = scmp.ne.s32.totalorder %s148, %s149
    %p158 = scmp.eq.s32.totalorder %s19, 0
    %p159 = por %p157, %p158
    %p160 = scmp.ne.s32.totalorder %s148, %s149
    %p161 = scmp.eq.s32.totalorder %s20, 1
    %p162 = por %p160, %p161
    %p164 = scmp.ne.s32.totalorder %s149, %s163
    %p165 = scmp.eq.s32.totalorder %s20, 0
    %p166 = por %p164, %p165
    %s168 = sadd.s32 %s167, 1
    %p171 = scmp.eq.s32.totalorder %s14, 1
    %p172 = scmp.ne.s32.totalorder %s167, %s169
    %p173 = scmp.eq.s32.totalorder %s14, 0
    %p174 = por %p172, %p173
    %p175 = scmp.ne.s32.totalorder %s167, %s169
    %p176 = scmp.eq.s32.totalorder %s19, 1
    %p177 = por %p175, %p176
    %p178 = scmp.ne.s32.totalorder %s169, %s170
    %p179 = scmp.eq.s32.totalorder %s19, 0
    %p180 = por %p178, %p179
    %p181 = scmp.ne.s32.totalorder %s169, %s170
    %p182 = scmp.eq.s32.totalorder %s20, 1
    %p183 = por %p181, %p182
    %p185 = scmp.ne.s32.totalorder %s170, %s184
    %p186 = scmp.eq.s32.totalorder %s20, 0
    %p187 = por %p185, %p186
    %s189 = sadd.s32 %s188, 1
    %p192 = scmp.eq.s32.totalorder %s14, 1
    %p193 = scmp.ne.s32.totalorder %s188, %s190
    %p194 = scmp.eq.s32.totalorder %s14, 0
    %p195 = por %p193, %p194
    %p196 = scmp.ne.s32.totalorder %s188, %s190
    %p197 = scmp.eq.s32.totalorder %s19, 1
    %p198 = por %p196, %p197
    %p199 = scmp.ne.s32.totalorder %s190, %s191
    %p200 = scmp.eq.s32.totalorder %s19, 0
    %p201 = por %p199, %p200
    %p202 = scmp.ne.s32.totalorder %s190, %s191
    %p203 = scmp.eq.s32.totalorder %s20, 1
    %p204 = por %p202, %p203
    %p206 = scmp.ne.s32.totalorder %s191, %s205
    %p207 = scmp.eq.s32.totalorder %s20, 0
    %p208 = por %p206, %p207
    %s209 = ssub.s32 %s21, %s33
    %s210 = ssub.s32 %s22, %s29
    %s211 = sor.u32 %s209, %s210
    %p212 = scmp.eq.s32.totalorder %s211, 0
    %s214 = sadd.s32 %s213, 1
    %s215 = scalar_select %p212, %s213, %s214
    %p218 = pneg %p212
    %p219 = scmp.eq.s32.totalorder %s14, 1
    %p220 = por %p218, %p219
    %p221 = scmp.ne.s32.totalorder %s213, %s216
    %p222 = scmp.eq.s32.totalorder %s14, 0
    %p223 = por %p221, %p222
    %p224 = scmp.ne.s32.totalorder %s213, %s216
    %p225 = scmp.eq.s32.totalorder %s19, 1
    %p226 = por %p224, %p225
    %p227 = scmp.ne.s32.totalorder %s216, %s217
    %p228 = scmp.eq.s32.totalorder %s19, 0
    %p229 = por %p227, %p228
    %p230 = scmp.ne.s32.totalorder %s216, %s217
    %p231 = scmp.eq.s32.totalorder %s20, 1
    %p232 = por %p230, %p231
    %p234 = scmp.ne.s32.totalorder %s217, %s233
    %p235 = scmp.eq.s32.totalorder %s20, 0
    %p236 = por %p234, %p235
    %p237 = scmp.le.s32.totalorder 1, %s14
    %p238 = scmp.lt.s32.totalorder %s14, 3
    %p239 = pnand %p237, %p238
    %p240 = pneg %p239
    // Predicated region
    $region9: #{tpu_custom_call.1} parent=5 // pred_check
      _
    $region10: #{tpu_custom_call.1} parent=5 // pred_check_branch
      %242 = sbr.rel (%p239) target = $region12
    $region11: #{tpu_custom_call.1} parent=5 // pred_region
      %s243 = ssub.s32 %s14, 1
      // Predicated region
      $region13: #{tpu_custom_call.1} parent=11 // pred_check
        %p244 = pneg %p75
      $region14: #{tpu_custom_call.1} parent=11 // pred_check_branch
        %246 = sbr.rel (%p244) target = $region16
      $region15: #{tpu_custom_call.1} parent=11 // pred_region
        _
      $region16: #{tpu_custom_call.1} parent=11 // pred_fallthru
        _
      // Predicated region
      $region17: #{tpu_custom_call.1} parent=11 // pred_check
        %p247 = pneg %p96
      $region18: #{tpu_custom_call.1} parent=11 // pred_check_branch
        %249 = sbr.rel (%p247) target = $region20
      $region19: #{tpu_custom_call.1} parent=11 // pred_region
        _
      $region20: #{tpu_custom_call.1} parent=11 // pred_fallthru
        _
      // Predicated region
      $region21: #{tpu_custom_call.1} parent=11 // pred_check
        %p250 = pneg %p117
      $region22: #{tpu_custom_call.1} parent=11 // pred_check_branch
        %252 = sbr.rel (%p250) target = $region24
      $region23: #{tpu_custom_call.1} parent=11 // pred_region
        _
      $region24: #{tpu_custom_call.1} parent=11 // pred_fallthru
        _
      // Predicated region
      $region25: #{tpu_custom_call.1} parent=11 // pred_check
        %p253 = pneg %p138
      $region26: #{tpu_custom_call.1} parent=11 // pred_check_branch
        %255 = sbr.rel (%p253) target = $region28
      $region27: #{tpu_custom_call.1} parent=11 // pred_region
        _
      $region28: #{tpu_custom_call.1} parent=11 // pred_fallthru
        _
      // Predicated region
      $region29: #{tpu_custom_call.1} parent=11 // pred_check
        %p256 = pneg %p159
      $region30: #{tpu_custom_call.1} parent=11 // pred_check_branch
        %258 = sbr.rel (%p256) target = $region32
      $region31: #{tpu_custom_call.1} parent=11 // pred_region
        _
      $region32: #{tpu_custom_call.1} parent=11 // pred_fallthru
        _
      // Predicated region
      $region33: #{tpu_custom_call.1} parent=11 // pred_check
        %p259 = pneg %p180
      $region34: #{tpu_custom_call.1} parent=11 // pred_check_branch
        %261 = sbr.rel (%p259) target = $region36
      $region35: #{tpu_custom_call.1} parent=11 // pred_region
        _
      $region36: #{tpu_custom_call.1} parent=11 // pred_fallthru
        _
      // Predicated region
      $region37: #{tpu_custom_call.1} parent=11 // pred_check
        %p262 = pneg %p201
      $region38: #{tpu_custom_call.1} parent=11 // pred_check_branch
        %264 = sbr.rel (%p262) target = $region40
      $region39: #{tpu_custom_call.1} parent=11 // pred_region
        _
      $region40: #{tpu_custom_call.1} parent=11 // pred_fallthru
        _
    $region12: #{tpu_custom_call.1} parent=5 // pred_fallthru
      _
    %p265 = scmp.lt.s32.totalorder %s14, 2
    // Predicated region
    $region41: #{tpu_custom_call.1} parent=5 // pred_check
      %p266 = pneg %p265
    $region42: #{tpu_custom_call.1} parent=5 // pred_check_branch
      %268 = sbr.rel (%p266) target = $region44
    $region43: #{tpu_custom_call.1} parent=5 // pred_region
      // Predicated region
      $region45: #{tpu_custom_call.1} parent=43 // pred_check
        %p269 = pneg %p48
      $region46: #{tpu_custom_call.1} parent=43 // pred_check_branch
        %271 = sbr.rel (%p269) target = $region48
      $region47: #{tpu_custom_call.1} parent=43 // pred_region
        %p272 = scmp.lt.s32.totalorder %s21, 1
        %s273 = scalar_select %p272, %s21, 1
        %p274 = scmp.lt.s32.totalorder %s22, 0
        %s275 = scalar_select %p274, %s22, 0
        %s276 = smul.addr %s275, 48
        %s277 = smul.addr %s273, 48
        %s278 = sadd.s32 %s276, %s277
        %s279 = smul.addr %s278, 8
        %s280 = scalar_lea.vmem %s0, %s279
      $region48: #{tpu_custom_call.1} parent=43 // pred_fallthru
        _
    $region44: #{tpu_custom_call.1} parent=5 // pred_fallthru
      _
    %p281 = scmp.le.s32.totalorder 1, %s14
    %p282 = scmp.lt.s32.totalorder %s14, 3
    %p283 = pnand %p281, %p282
    %p284 = pneg %p283
    // Predicated region
    $region49: #{tpu_custom_call.1} parent=5 // pred_check
      _
    $region50: #{tpu_custom_call.1} parent=5 // pred_check_branch
      %286 = sbr.rel (%p283) target = $region52
    $region51: #{tpu_custom_call.1} parent=5 // pred_region
      %s287 = ssub.s32 %s14, 1
      %p288 = scmp.lt.s32.totalorder %s23, 1
      %s289 = scalar_select %p288, %s23, 1
      %p290 = scmp.lt.s32.totalorder %s24, 0
      %s291 = scalar_select %p290, %s24, 0
      %s292 = smul.addr %s291, 48
      %s293 = smul.addr %s289, 48
      %s294 = sadd.s32 %s292, %s293
      %s295 = smul.addr %s294, 8
      %s296 = scalar_lea.vmem %s0, %s295
      %p297 = pneg %p54
      %p298 = pneg %p51
      %p299 = pneg %p75
      %p300 = pneg %p72
      %p301 = pneg %p96
      %p302 = pneg %p93
      %p303 = pneg %p117
      %p304 = pneg %p114
      %p305 = pneg %p138
      %p306 = pneg %p135
      %p307 = pneg %p159
      %p308 = pneg %p156
      %p309 = pneg %p180
      %p310 = pneg %p177
      %p311 = pneg %p201
      %p312 = pneg %p198
      %p313 = pneg %p229
      %p314 = pneg %p226
      %s315 = smul.u32 16, %s24
      %p316 = scmp.lt.s32.totalorder %s23, 1
      %s317 = scalar_select %p316, %s23, 1
      %p318 = scmp.lt.s32.totalorder %s315, 15
      %s319 = scalar_select %p318, %s315, 15
      %s320 = smul.addr %s319, 2
      %s321 = smul.addr %s317, 32
      %s322 = sadd.s32 %s320, %s321
      %s323 = smul.addr %s322, 8
      %s324 = scalar_lea.vmem %s8, %s323
      %p325 = scmp.lt.s32.totalorder %s23, 1
      %s326 = scalar_select %p325, %s23, 1
      %p327 = scmp.lt.s32.totalorder %s24, 0
      %s328 = scalar_select %p327, %s24, 0
      %s329 = smul.addr %s328, 48
      %s330 = smul.addr %s326, 48
      %s331 = sadd.s32 %s329, %s330
      %s332 = smul.addr %s331, 8
      %s333 = scalar_lea.vmem %s0, %s332
      %s334 = smul.u32 16, %s24
      %p335 = scmp.lt.s32.totalorder %s23, 1
      %s336 = scalar_select %p335, %s23, 1
      %p337 = scmp.lt.s32.totalorder %s334, 15
      %s338 = scalar_select %p337, %s334, 15
      %s339 = smul.addr %s338, 2
      %s340 = smul.addr %s336, 32
      %s341 = sadd.s32 %s339, %s340
      %s342 = smul.addr %s341, 8
      %s343 = scalar_lea.vmem %s8, %s342
      %s344 = smul.u32 16, %s24
      %p345 = scmp.eq.s32.totalorder %s24, 0
      %vm346 = vcmask 155648
      %347 = vst.msk [vmem:[#allocation2 + $0x7] sm:$0x1] %vm346, 0.0
      %348 = vst.msk [vmem:[#allocation2 + $0x27] sm:$0x1] %vm346, 0.0
      %349 = vst.msk [vmem:[#allocation2 + $0x47] sm:$0x1] %vm346, 0.0
      %350 = vst.msk [vmem:[#allocation2 + $0x67] sm:$0x1] %vm346, 0.0
      %351 = vst.msk [vmem:[#allocation2 + $0x87] sm:$0x1] %vm346, 0.0
      %352 = vst.msk [vmem:[#allocation2 + $0xa7] sm:$0x1] %vm346, 0.0
      %353 = vst.msk [vmem:[#allocation2 + $0xc7] sm:$0x1] %vm346, 0.0
      %354 = vst.msk [vmem:[#allocation2 + $0xe7] sm:$0x1] %vm346, 0.0
      %355 = vst.msk [vmem:[#allocation2 + $0x107] sm:$0x1] %vm346, 0.0
      %356 = vst.msk [vmem:[#allocation2 + $0x127] sm:$0x1] %vm346, 0.0
      %357 = vst.msk [vmem:[#allocation2 + $0x147] sm:$0x1] %vm346, 0.0
      %358 = vst.msk [vmem:[#allocation2 + $0x167] sm:$0x1] %vm346, 0.0
      %359 = vst.msk [vmem:[#allocation2 + $0x187] sm:$0x1] %vm346, 0.0
      %360 = vst.msk [vmem:[#allocation2 + $0x1a7] sm:$0x1] %vm346, 0.0
      %361 = vst.msk [vmem:[#allocation2 + $0x1c7] sm:$0x1] %vm346, 0.0
      %362 = vst.msk [vmem:[#allocation2 + $0x1e7] sm:$0x1] %vm346, 0.0
      %363 = vst.msk [vmem:[#allocation2 + $0x207] sm:$0x1] %vm346, 0.0
      %364 = vst.msk [vmem:[#allocation2 + $0x227] sm:$0x1] %vm346, 0.0
      %365 = vst.msk [vmem:[#allocation2 + $0x247] sm:$0x1] %vm346, 0.0
      %366 = vst.msk [vmem:[#allocation2 + $0x267] sm:$0x1] %vm346, 0.0
      %367 = vst.msk [vmem:[#allocation2 + $0x287] sm:$0x1] %vm346, 0.0
      %368 = vst.msk [vmem:[#allocation2 + $0x2a7] sm:$0x1] %vm346, 0.0
      %369 = vst.msk [vmem:[#allocation2 + $0x2c7] sm:$0x1] %vm346, 0.0
      %370 = vst.msk [vmem:[#allocation2 + $0x2e7] sm:$0x1] %vm346, 0.0
      %371 = vst.msk [vmem:[#allocation2 + $0x18] sm:$0x1] %vm346, 0.0
      %372 = vst.msk [vmem:[#allocation2 + $0x38] sm:$0x1] %vm346, 0.0
      %373 = vst.msk [vmem:[#allocation2 + $0x58] sm:$0x1] %vm346, 0.0
      %374 = vst.msk [vmem:[#allocation2 + $0x78] sm:$0x1] %vm346, 0.0
      %375 = vst.msk [vmem:[#allocation2 + $0x98] sm:$0x1] %vm346, 0.0
      %376 = vst.msk [vmem:[#allocation2 + $0xb8] sm:$0x1] %vm346, 0.0
      %377 = vst.msk [vmem:[#allocation2 + $0xd8] sm:$0x1] %vm346, 0.0
      %378 = vst.msk [vmem:[#allocation2 + $0xf8] sm:$0x1] %vm346, 0.0
      %379 = vst.msk [vmem:[#allocation2 + $0x118] sm:$0x1] %vm346, 0.0
      %380 = vst.msk [vmem:[#allocation2 + $0x138] sm:$0x1] %vm346, 0.0
      %381 = vst.msk [vmem:[#allocation2 + $0x158] sm:$0x1] %vm346, 0.0
      %382 = vst.msk [vmem:[#allocation2 + $0x178] sm:$0x1] %vm346, 0.0
      %383 = vst.msk [vmem:[#allocation2 + $0x198] sm:$0x1] %vm346, 0.0
      %384 = vst.msk [vmem:[#allocation2 + $0x1b8] sm:$0x1] %vm346, 0.0
      %385 = vst.msk [vmem:[#allocation2 + $0x1d8] sm:$0x1] %vm346, 0.0
      %386 = vst.msk [vmem:[#allocation2 + $0x1f8] sm:$0x1] %vm346, 0.0
      %387 = vst.msk [vmem:[#allocation2 + $0x218] sm:$0x1] %vm346, 0.0
      %388 = vst.msk [vmem:[#allocation2 + $0x238] sm:$0x1] %vm346, 0.0
      %389 = vst.msk [vmem:[#allocation2 + $0x258] sm:$0x1] %vm346, 0.0
      %390 = vst.msk [vmem:[#allocation2 + $0x278] sm:$0x1] %vm346, 0.0
      %391 = vst.msk [vmem:[#allocation2 + $0x298] sm:$0x1] %vm346, 0.0
      %392 = vst.msk [vmem:[#allocation2 + $0x2b8] sm:$0x1] %vm346, 0.0
      %393 = vst.msk [vmem:[#allocation2 + $0x2d8] sm:$0x1] %vm346, 0.0
      %394 = vst.msk [vmem:[#allocation2 + $0x2f8] sm:$0x1] %vm346, 0.0
      %v395 = vld [vmem:[%s333] sm:$0xff]
      %v396 = vld [vmem:[%s333 + $0x8] sm:$0xff]
      %v397 = vld [vmem:[%s333 + $0x10] sm:$0xff]
      %v398 = vld [vmem:[%s333 + $0x18] sm:$0xff]
      %v399 = vld [vmem:[%s333 + $0x20] sm:$0xff]
      %v400 = vld [vmem:[%s333 + $0x28] sm:$0xff]
      %v401 = vld [vmem:[%s333 + $0x30] sm:$0xff]
      %v402 = vld [vmem:[%s333 + $0x38] sm:$0xff]
      %v403 = vld [vmem:[%s333 + $0x40] sm:$0xff]
      %v404 = vld [vmem:[%s333 + $0x48] sm:$0xff]
      %v405 = vld [vmem:[%s333 + $0x50] sm:$0xff]
      %v406 = vld [vmem:[%s333 + $0x58] sm:$0xff]
      %v407 = vld [vmem:[%s333 + $0x60] sm:$0xff]
      %v408 = vld [vmem:[%s333 + $0x68] sm:$0xff]
      %v409 = vld [vmem:[%s333 + $0x70] sm:$0xff]
      %v410 = vld [vmem:[%s333 + $0x78] sm:$0xff]
      %v411 = vld [vmem:[%s333 + $0x80] sm:$0xff]
      %v412 = vld [vmem:[%s333 + $0x88] sm:$0xff]
      %v413 = vld [vmem:[%s333 + $0x90] sm:$0xff]
      %v414 = vld [vmem:[%s333 + $0x98] sm:$0xff]
      %v415 = vld [vmem:[%s333 + $0xa0] sm:$0xff]
      %v416 = vld [vmem:[%s333 + $0xa8] sm:$0xff]
      %v417 = vld [vmem:[%s333 + $0xb0] sm:$0xff]
      %v418 = vld [vmem:[%s333 + $0xb8] sm:$0xff]
      %v419 = vld [vmem:[%s333 + $0xc0] sm:$0xff]
      %v420 = vld [vmem:[%s333 + $0xc8] sm:$0xff]
      %v421 = vld [vmem:[%s333 + $0xd0] sm:$0xff]
      %v422 = vld [vmem:[%s333 + $0xd8] sm:$0xff]
      %v423 = vld [vmem:[%s333 + $0xe0] sm:$0xff]
      %v424 = vld [vmem:[%s333 + $0xe8] sm:$0xff]
      %v425 = vld [vmem:[%s333 + $0xf0] sm:$0xff]
      %v426 = vld [vmem:[%s333 + $0xf8] sm:$0xff]
      %v427 = vld [vmem:[%s333 + $0x100] sm:$0xff]
      %v428 = vld [vmem:[%s333 + $0x108] sm:$0xff]
      %v429 = vld [vmem:[%s333 + $0x110] sm:$0xff]
      %v430 = vld [vmem:[%s333 + $0x118] sm:$0xff]
      %v431 = vld [vmem:[%s333 + $0x120] sm:$0xff]
      %v432 = vld [vmem:[%s333 + $0x128] sm:$0xff]
      %v433 = vld [vmem:[%s333 + $0x130] sm:$0xff]
      %v434 = vld [vmem:[%s333 + $0x138] sm:$0xff]
      %v435 = vld [vmem:[%s333 + $0x140] sm:$0xff]
      %v436 = vld [vmem:[%s333 + $0x148] sm:$0xff]
      %v437 = vld [vmem:[%s333 + $0x150] sm:$0xff]
      %v438 = vld [vmem:[%s333 + $0x158] sm:$0xff]
      %v439 = vld [vmem:[%s333 + $0x160] sm:$0xff]
      %v440 = vld [vmem:[%s333 + $0x168] sm:$0xff]
      %v441 = vld [vmem:[%s333 + $0x170] sm:$0xff]
      %v442 = vld [vmem:[%s333 + $0x178] sm:$0xff]
      %v443 = vld [vmem:[%s1] sm:$0xf]
      %vm444 = vcmask 31744
      %v446 = vsel %vm444, %v395, 0
      %v449 = vsel %vm444, %v396, 0
      %v452 = vsel %vm444, %v397, 0
      %v455 = vsel %vm444, %v398, 0
      %v458 = vsel %vm444, %v399, 0
      %v461 = vsel %vm444, %v400, 0
      %v464 = vsel %vm444, %v401, 0
      %v467 = vsel %vm444, %v402, 0
      %v470 = vsel %vm444, %v403, 0
      %v473 = vsel %vm444, %v404, 0
      %v476 = vsel %vm444, %v405, 0
      %v479 = vsel %vm444, %v406, 0
      %v482 = vsel %vm444, %v407, 0
      %v485 = vsel %vm444, %v408, 0
      %v488 = vsel %vm444, %v409, 0
      %v491 = vsel %vm444, %v410, 0
      %v494 = vsel %vm444, %v411, 0
      %v497 = vsel %vm444, %v412, 0
      %v500 = vsel %vm444, %v413, 0
      %v503 = vsel %vm444, %v414, 0
      %v506 = vsel %vm444, %v415, 0
      %v509 = vsel %vm444, %v416, 0
      %v512 = vsel %vm444, %v417, 0
      %v515 = vsel %vm444, %v418, 0
      %v518 = vsel %vm444, %v419, 0
      %v521 = vsel %vm444, %v420, 0
      %v524 = vsel %vm444, %v421, 0
      %v527 = vsel %vm444, %v422, 0
      %v530 = vsel %vm444, %v423, 0
      %v533 = vsel %vm444, %v424, 0
      %v536 = vsel %vm444, %v425, 0
      %v539 = vsel %vm444, %v426, 0
      %v542 = vsel %vm444, %v427, 0
      %v545 = vsel %vm444, %v428, 0
      %v548 = vsel %vm444, %v429, 0
      %v551 = vsel %vm444, %v430, 0
      %v554 = vsel %vm444, %v431, 0
      %v557 = vsel %vm444, %v432, 0
      %v560 = vsel %vm444, %v433, 0
      %v563 = vsel %vm444, %v434, 0
      %v566 = vsel %vm444, %v435, 0
      %v569 = vsel %vm444, %v436, 0
      %v572 = vsel %vm444, %v437, 0
      %v575 = vsel %vm444, %v438, 0
      %v578 = vsel %vm444, %v439, 0
      %v581 = vsel %vm444, %v440, 0
      %v584 = vsel %vm444, %v441, 0
      %v587 = vsel %vm444, %v442, 0
      %vm589 = vcmask 1043456
      %v591 = vsel %vm589, %v443, 0
      %593 = vmatprep.subr.mxu0 0.0
      %594 = vmatpush1.msra.mxu0 0.0
      %595 = vmatprep.subr.mxu0 0.0
      %596 = vmatpush1.msra.mxu0 0.0
      %597 = vmatprep.subr.mxu0 0.0
      %598 = vmatpush1.msra.mxu0 0.0
      %599 = vmatprep.subr.mxu0 0.0
      %600 = vmatpush1.msra.mxu0 0.0
      %601 = vmatprep.subr.mxu0 0.0
      %602 = vmatpush1.msra.mxu0 0.0
      %603 = vmatprep.subr.mxu0 0.0
      %604 = vmatpush1.msra.mxu0 0.0
      %605 = vmatprep.subr.mxu0 0.0
      %606 = vmatpush1.msra.mxu0 0.0
      %607 = vmatprep.subr.mxu0 0.0
      %608 = vmatpush1.msra.mxu0 0.0
      %609 = vmatprep.subr.mxu0 0.0
      %610 = vmatpush1.msra.mxu0 0.0
      %611 = vmatprep.subr.mxu0 0.0
      %612 = vmatpush1.msra.mxu0 0.0
      %613 = vmatprep.subr.mxu0 0.0
      %614 = vmatpush1.msra.mxu0 0.0
      %615 = vmatprep.subr.mxu0 0.0
      %616 = vmatpush1.msra.mxu0 0.0
      %617 = vmatprep.subr.mxu0 0.0
      %618 = vmatpush1.msra.mxu0 0.0
      %619 = vmatprep.subr.mxu0 0.0
      %620 = vmatpush1.msra.mxu0 0.0
      %621 = vmatprep.subr.mxu0 0.0
      %622 = vmatpush1.msra.mxu0 0.0
      %623 = vmatprep.subr.mxu0 0.0
      %624 = vmatpush1.msra.mxu0 %v591
      %625 = vmatprep.subr.mxu0 0.0
      %626 = vmatpush2.msra.mxu0 0.0
      %627 = vmatprep.subr.mxu0 0.0
      %628 = vmatpush2.msra.mxu0 0.0
      %629 = vmatprep.subr.mxu0 0.0
      %630 = vmatpush2.msra.mxu0 0.0
      %631 = vmatprep.subr.mxu0 0.0
      %632 = vmatpush2.msra.mxu0 0.0
      %633 = vmatprep.subr.mxu0 0.0
      %634 = vmatpush2.msra.mxu0 0.0
      %635 = vmatprep.subr.mxu0 0.0
      %636 = vmatpush2.msra.mxu0 0.0
      %637 = vmatprep.subr.mxu0 0.0
      %638 = vmatpush2.msra.mxu0 0.0
      %639 = vmatprep.subr.mxu0 0.0
      %640 = vmatpush2.msra.mxu0 0.0
      %641 = vmatprep.subr.mxu0 0.0
      %642 = vmatpush2.msra.mxu0 0.0
      %643 = vmatprep.subr.mxu0 0.0
      %644 = vmatpush2.msra.mxu0 0.0
      %645 = vmatprep.subr.mxu0 0.0
      %646 = vmatpush2.msra.mxu0 0.0
      %647 = vmatprep.subr.mxu0 0.0
      %648 = vmatpush2.msra.mxu0 0.0
      %649 = vmatprep.subr.mxu0 0.0
      %650 = vmatpush2.msra.mxu0 0.0
      %651 = vmatprep.subr.mxu0 0.0
      %652 = vmatpush2.msra.mxu0 0.0
      %653 = vmatprep.subr.mxu0 0.0
      %654 = vmatpush2.msra.mxu0 0.0
      %655 = vmatprep.subr.mxu0 0.0
      %656 = vmatpush2.msra.mxu0 0.0
      %657 = vmatprep.mubr.f32.mxu0 0.0
      %658 = vmatmul.mubr.f32.gmra.mxu0 %v446
      %v659 = vpop.f32.mrf.mxu0
      %v660 = vadd.f32 0.0, %v659
      %v661 = vpop.f32.mrf.mxu0
      %662 = vmatprep.mubr.f32.mxu0 0.0
      %663 = vmatmul.mubr.f32.gmra.mxu0 %v449
      %v664 = vpop.f32.mrf.mxu0
      %v665 = vadd.f32 0.0, %v664
      %v666 = vpop.f32.mrf.mxu0
      %667 = vmatprep.mubr.f32.mxu0 0.0
      %668 = vmatmul.mubr.f32.gmra.mxu0 %v452
      %v669 = vpop.f32.mrf.mxu0
      %v670 = vadd.f32 0.0, %v669
      %v671 = vpop.f32.mrf.mxu0
      %672 = vmatprep.mubr.f32.mxu0 0.0
      %673 = vmatmul.mubr.f32.gmra.mxu0 %v455
      %v674 = vpop.f32.mrf.mxu0
      %v675 = vadd.f32 0.0, %v674
      %v676 = vpop.f32.mrf.mxu0
      %677 = vmatprep.mubr.f32.mxu0 0.0
      %678 = vmatmul.mubr.f32.gmra.mxu0 %v458
      %v679 = vpop.f32.mrf.mxu0
      %v680 = vadd.f32 0.0, %v679
      %v681 = vpop.f32.mrf.mxu0
      %682 = vmatprep.mubr.f32.mxu0 0.0
      %683 = vmatmul.mubr.f32.gmra.mxu0 %v461
      %v684 = vpop.f32.mrf.mxu0
      %v685 = vadd.f32 0.0, %v684
      %v686 = vpop.f32.mrf.mxu0
      %687 = vmatprep.mubr.f32.mxu0 0.0
      %688 = vmatmul.mubr.f32.gmra.mxu0 %v464
      %v689 = vpop.f32.mrf.mxu0
      %v690 = vadd.f32 0.0, %v689
      %v691 = vpop.f32.mrf.mxu0
      %692 = vmatprep.mubr.f32.mxu0 0.0
      %693 = vmatmul.mubr.f32.gmra.mxu0 %v467
      %v694 = vpop.f32.mrf.mxu0
      %v695 = vadd.f32 0.0, %v694
      %v696 = vpop.f32.mrf.mxu0
      %697 = vmatprep.mubr.f32.mxu0 0.0
      %698 = vmatmul.mubr.f32.gmra.mxu0 %v470
      %v699 = vpop.f32.mrf.mxu0
      %v700 = vadd.f32 0.0, %v699
      %v701 = vpop.f32.mrf.mxu0
      %702 = vmatprep.mubr.f32.mxu0 0.0
      %703 = vmatmul.mubr.f32.gmra.mxu0 %v473
      %v704 = vpop.f32.mrf.mxu0
      %v705 = vadd.f32 0.0, %v704
      %v706 = vpop.f32.mrf.mxu0
      %707 = vmatprep.mubr.f32.mxu0 0.0
      %708 = vmatmul.mubr.f32.gmra.mxu0 %v476
      %v709 = vpop.f32.mrf.mxu0
      %v710 = vadd.f32 0.0, %v709
      %v711 = vpop.f32.mrf.mxu0
      %712 = vmatprep.mubr.f32.mxu0 0.0
      %713 = vmatmul.mubr.f32.gmra.mxu0 %v479
      %v714 = vpop.f32.mrf.mxu0
      %v715 = vadd.f32 0.0, %v714
      %v716 = vpop.f32.mrf.mxu0
      %717 = vmatprep.mubr.f32.mxu0 0.0
      %718 = vmatmul.mubr.f32.gmra.mxu0 %v482
      %v719 = vpop.f32.mrf.mxu0
      %v720 = vadd.f32 0.0, %v719
      %v721 = vpop.f32.mrf.mxu0
      %722 = vmatprep.mubr.f32.mxu0 0.0
      %723 = vmatmul.mubr.f32.gmra.mxu0 %v485
      %v724 = vpop.f32.mrf.mxu0
      %v725 = vadd.f32 0.0, %v724
      %v726 = vpop.f32.mrf.mxu0
      %727 = vmatprep.mubr.f32.mxu0 0.0
      %728 = vmatmul.mubr.f32.gmra.mxu0 %v488
      %v729 = vpop.f32.mrf.mxu0
      %v730 = vadd.f32 0.0, %v729
      %v731 = vpop.f32.mrf.mxu0
      %732 = vmatprep.mubr.f32.mxu0 0.0
      %733 = vmatmul.mubr.f32.gmra.mxu0 %v491
      %v734 = vpop.f32.mrf.mxu0
      %v735 = vadd.f32 0.0, %v734
      %v736 = vpop.f32.mrf.mxu0
      %737 = vmatprep.mubr.f32.mxu0 0.0
      %738 = vmatmul.mubr.f32.gmra.mxu0 %v494
      %v739 = vpop.f32.mrf.mxu0
      %v740 = vadd.f32 0.0, %v739
      %v741 = vpop.f32.mrf.mxu0
      %742 = vmatprep.mubr.f32.mxu0 0.0
      %743 = vmatmul.mubr.f32.gmra.mxu0 %v497
      %v744 = vpop.f32.mrf.mxu0
      %v745 = vadd.f32 0.0, %v744
      %v746 = vpop.f32.mrf.mxu0
      %747 = vmatprep.mubr.f32.mxu0 0.0
      %748 = vmatmul.mubr.f32.gmra.mxu0 %v500
      %v749 = vpop.f32.mrf.mxu0
      %v750 = vadd.f32 0.0, %v749
      %v751 = vpop.f32.mrf.mxu0
      %752 = vmatprep.mubr.f32.mxu0 0.0
      %753 = vmatmul.mubr.f32.gmra.mxu0 %v503
      %v754 = vpop.f32.mrf.mxu0
      %v755 = vadd.f32 0.0, %v754
      %v756 = vpop.f32.mrf.mxu0
      %757 = vmatprep.mubr.f32.mxu0 0.0
      %758 = vmatmul.mubr.f32.gmra.mxu0 %v506
      %v759 = vpop.f32.mrf.mxu0
      %v760 = vadd.f32 0.0, %v759
      %v761 = vpop.f32.mrf.mxu0
      %762 = vmatprep.mubr.f32.mxu0 0.0
      %763 = vmatmul.mubr.f32.gmra.mxu0 %v509
      %v764 = vpop.f32.mrf.mxu0
      %v765 = vadd.f32 0.0, %v764
      %v766 = vpop.f32.mrf.mxu0
      %767 = vmatprep.mubr.f32.mxu0 0.0
      %768 = vmatmul.mubr.f32.gmra.mxu0 %v512
      %v769 = vpop.f32.mrf.mxu0
      %v770 = vadd.f32 0.0, %v769
      %v771 = vpop.f32.mrf.mxu0
      %772 = vmatprep.mubr.f32.mxu0 0.0
      %773 = vmatmul.mubr.f32.gmra.mxu0 %v515
      %v774 = vpop.f32.mrf.mxu0
      %v775 = vadd.f32 0.0, %v774
      %v776 = vpop.f32.mrf.mxu0
      %777 = vmatprep.mubr.f32.mxu0 0.0
      %778 = vmatmul.mubr.f32.gmra.mxu0 %v518
      %v779 = vpop.f32.mrf.mxu0
      %v780 = vadd.f32 0.0, %v779
      %v781 = vpop.f32.mrf.mxu0
      %782 = vmatprep.mubr.f32.mxu0 0.0
      %783 = vmatmul.mubr.f32.gmra.mxu0 %v521
      %v784 = vpop.f32.mrf.mxu0
      %v785 = vadd.f32 0.0, %v784
      %v786 = vpop.f32.mrf.mxu0
      %787 = vmatprep.mubr.f32.mxu0 0.0
      %788 = vmatmul.mubr.f32.gmra.mxu0 %v524
      %v789 = vpop.f32.mrf.mxu0
      %v790 = vadd.f32 0.0, %v789
      %v791 = vpop.f32.mrf.mxu0
      %792 = vmatprep.mubr.f32.mxu0 0.0
      %793 = vmatmul.mubr.f32.gmra.mxu0 %v527
      %v794 = vpop.f32.mrf.mxu0
      %v795 = vadd.f32 0.0, %v794
      %v796 = vpop.f32.mrf.mxu0
      %797 = vmatprep.mubr.f32.mxu0 0.0
      %798 = vmatmul.mubr.f32.gmra.mxu0 %v530
      %v799 = vpop.f32.mrf.mxu0
      %v800 = vadd.f32 0.0, %v799
      %v801 = vpop.f32.mrf.mxu0
      %802 = vmatprep.mubr.f32.mxu0 0.0
      %803 = vmatmul.mubr.f32.gmra.mxu0 %v533
      %v804 = vpop.f32.mrf.mxu0
      %v805 = vadd.f32 0.0, %v804
      %v806 = vpop.f32.mrf.mxu0
      %807 = vmatprep.mubr.f32.mxu0 0.0
      %808 = vmatmul.mubr.f32.gmra.mxu0 %v536
      %v809 = vpop.f32.mrf.mxu0
      %v810 = vadd.f32 0.0, %v809
      %v811 = vpop.f32.mrf.mxu0
      %812 = vmatprep.mubr.f32.mxu0 0.0
      %813 = vmatmul.mubr.f32.gmra.mxu0 %v539
      %v814 = vpop.f32.mrf.mxu0
      %v815 = vadd.f32 0.0, %v814
      %v816 = vpop.f32.mrf.mxu0
      %817 = vmatprep.mubr.f32.mxu0 0.0
      %818 = vmatmul.mubr.f32.gmra.mxu0 %v542
      %v819 = vpop.f32.mrf.mxu0
      %v820 = vadd.f32 0.0, %v819
      %v821 = vpop.f32.mrf.mxu0
      %822 = vmatprep.mubr.f32.mxu0 0.0
      %823 = vmatmul.mubr.f32.gmra.mxu0 %v545
      %v824 = vpop.f32.mrf.mxu0
      %v825 = vadd.f32 0.0, %v824
      %v826 = vpop.f32.mrf.mxu0
      %827 = vmatprep.mubr.f32.mxu0 0.0
      %828 = vmatmul.mubr.f32.gmra.mxu0 %v548
      %v829 = vpop.f32.mrf.mxu0
      %v830 = vadd.f32 0.0, %v829
      %v831 = vpop.f32.mrf.mxu0
      %832 = vmatprep.mubr.f32.mxu0 0.0
      %833 = vmatmul.mubr.f32.gmra.mxu0 %v551
      %v834 = vpop.f32.mrf.mxu0
      %v835 = vadd.f32 0.0, %v834
      %v836 = vpop.f32.mrf.mxu0
      %837 = vmatprep.mubr.f32.mxu0 0.0
      %838 = vmatmul.mubr.f32.gmra.mxu0 %v554
      %v839 = vpop.f32.mrf.mxu0
      %v840 = vadd.f32 0.0, %v839
      %v841 = vpop.f32.mrf.mxu0
      %842 = vmatprep.mubr.f32.mxu0 0.0
      %843 = vmatmul.mubr.f32.gmra.mxu0 %v557
      %v844 = vpop.f32.mrf.mxu0
      %v845 = vadd.f32 0.0, %v844
      %v846 = vpop.f32.mrf.mxu0
      %847 = vmatprep.mubr.f32.mxu0 0.0
      %848 = vmatmul.mubr.f32.gmra.mxu0 %v560
      %v849 = vpop.f32.mrf.mxu0
      %v850 = vadd.f32 0.0, %v849
      %v851 = vpop.f32.mrf.mxu0
      %852 = vmatprep.mubr.f32.mxu0 0.0
      %853 = vmatmul.mubr.f32.gmra.mxu0 %v563
      %v854 = vpop.f32.mrf.mxu0
      %v855 = vadd.f32 0.0, %v854
      %v856 = vpop.f32.mrf.mxu0
      %857 = vmatprep.mubr.f32.mxu0 0.0
      %858 = vmatmul.mubr.f32.gmra.mxu0 %v566
      %v859 = vpop.f32.mrf.mxu0
      %v860 = vadd.f32 0.0, %v859
      %v861 = vpop.f32.mrf.mxu0
      %862 = vmatprep.mubr.f32.mxu0 0.0
      %863 = vmatmul.mubr.f32.gmra.mxu0 %v569
      %v864 = vpop.f32.mrf.mxu0
      %v865 = vadd.f32 0.0, %v864
      %v866 = vpop.f32.mrf.mxu0
      %867 = vmatprep.mubr.f32.mxu0 0.0
      %868 = vmatmul.mubr.f32.gmra.mxu0 %v572
      %v869 = vpop.f32.mrf.mxu0
      %v870 = vadd.f32 0.0, %v869
      %v871 = vpop.f32.mrf.mxu0
      %872 = vmatprep.mubr.f32.mxu0 0.0
      %873 = vmatmul.mubr.f32.gmra.mxu0 %v575
      %v874 = vpop.f32.mrf.mxu0
      %v875 = vadd.f32 0.0, %v874
      %v876 = vpop.f32.mrf.mxu0
      %877 = vmatprep.mubr.f32.mxu0 0.0
      %878 = vmatmul.mubr.f32.gmra.mxu0 %v578
      %v879 = vpop.f32.mrf.mxu0
      %v880 = vadd.f32 0.0, %v879
      %v881 = vpop.f32.mrf.mxu0
      %882 = vmatprep.mubr.f32.mxu0 0.0
      %883 = vmatmul.mubr.f32.gmra.mxu0 %v581
      %v884 = vpop.f32.mrf.mxu0
      %v885 = vadd.f32 0.0, %v884
      %v886 = vpop.f32.mrf.mxu0
      %887 = vmatprep.mubr.f32.mxu0 0.0
      %888 = vmatmul.mubr.f32.gmra.mxu0 %v584
      %v889 = vpop.f32.mrf.mxu0
      %v890 = vadd.f32 0.0, %v889
      %v891 = vpop.f32.mrf.mxu0
      %892 = vmatprep.mubr.f32.mxu0 0.0
      %893 = vmatmul.mubr.f32.gmra.mxu0 %v587
      %v894 = vpop.f32.mrf.mxu0
      %v895 = vadd.f32 0.0, %v894
      %v896 = vpop.f32.mrf.mxu0
      %897 = vdwg.mxu0
      %vm946 = vcmask 1040384
      %v947 = vrot.slane %v660, 7
      %v948 = vrot.slane %v665, 7
      %v949 = vsel %vm946, %v947, %v948
      %v950 = vrot.slane %v670, 7
      %v951 = vrot.slane %v675, 7
      %v952 = vsel %vm946, %v950, %v951
      %v953 = vrot.slane %v680, 7
      %v954 = vrot.slane %v685, 7
      %v955 = vsel %vm946, %v953, %v954
      %v956 = vrot.slane %v690, 7
      %v957 = vrot.slane %v695, 7
      %v958 = vsel %vm946, %v956, %v957
      %v959 = vrot.slane %v700, 7
      %v960 = vrot.slane %v705, 7
      %v961 = vsel %vm946, %v959, %v960
      %v962 = vrot.slane %v710, 7
      %v963 = vrot.slane %v715, 7
      %v964 = vsel %vm946, %v962, %v963
      %v965 = vrot.slane %v720, 7
      %v966 = vrot.slane %v725, 7
      %v967 = vsel %vm946, %v965, %v966
      %v968 = vrot.slane %v730, 7
      %v969 = vrot.slane %v735, 7
      %v970 = vsel %vm946, %v968, %v969
      %v971 = vrot.slane %v740, 7
      %v972 = vrot.slane %v745, 7
      %v973 = vsel %vm946, %v971, %v972
      %v974 = vrot.slane %v750, 7
      %v975 = vrot.slane %v755, 7
      %v976 = vsel %vm946, %v974, %v975
      %v977 = vrot.slane %v760, 7
      %v978 = vrot.slane %v765, 7
      %v979 = vsel %vm946, %v977, %v978
      %v980 = vrot.slane %v770, 7
      %v981 = vrot.slane %v775, 7
      %v982 = vsel %vm946, %v980, %v981
      %v983 = vrot.slane %v780, 7
      %v984 = vrot.slane %v785, 7
      %v985 = vsel %vm946, %v983, %v984
      %v986 = vrot.slane %v790, 7
      %v987 = vrot.slane %v795, 7
      %v988 = vsel %vm946, %v986, %v987
      %v989 = vrot.slane %v800, 7
      %v990 = vrot.slane %v805, 7
      %v991 = vsel %vm946, %v989, %v990
      %v992 = vrot.slane %v810, 7
      %v993 = vrot.slane %v815, 7
      %v994 = vsel %vm946, %v992, %v993
      %v995 = vrot.slane %v820, 7
      %v996 = vrot.slane %v825, 7
      %v997 = vsel %vm946, %v995, %v996
      %v998 = vrot.slane %v830, 7
      %v999 = vrot.slane %v835, 7
      %v1000 = vsel %vm946, %v998, %v999
      %v1001 = vrot.slane %v840, 7
      %v1002 = vrot.slane %v845, 7
      %v1003 = vsel %vm946, %v1001, %v1002
      %v1004 = vrot.slane %v850, 7
      %v1005 = vrot.slane %v855, 7
      %v1006 = vsel %vm946, %v1004, %v1005
      %v1007 = vrot.slane %v860, 7
      %v1008 = vrot.slane %v865, 7
      %v1009 = vsel %vm946, %v1007, %v1008
      %v1010 = vrot.slane %v870, 7
      %v1011 = vrot.slane %v875, 7
      %v1012 = vsel %vm946, %v1010, %v1011
      %v1013 = vrot.slane %v880, 7
      %v1014 = vrot.slane %v885, 7
      %v1015 = vsel %vm946, %v1013, %v1014
      %v1016 = vrot.slane %v890, 7
      %v1017 = vrot.slane %v895, 7
      %v1018 = vsel %vm946, %v1016, %v1017
      %v1067 = vsel %vm946, %v660, %v947
      %v1068 = vsel %vm946, %v670, %v950
      %v1069 = vsel %vm946, %v680, %v953
      %v1070 = vsel %vm946, %v690, %v956
      %v1071 = vsel %vm946, %v700, %v959
      %v1072 = vsel %vm946, %v710, %v962
      %v1073 = vsel %vm946, %v720, %v965
      %v1074 = vsel %vm946, %v730, %v968
      %v1075 = vsel %vm946, %v740, %v971
      %v1076 = vsel %vm946, %v750, %v974
      %v1077 = vsel %vm946, %v760, %v977
      %v1078 = vsel %vm946, %v770, %v980
      %v1079 = vsel %vm946, %v780, %v983
      %v1080 = vsel %vm946, %v790, %v986
      %v1081 = vsel %vm946, %v800, %v989
      %v1082 = vsel %vm946, %v810, %v992
      %v1083 = vsel %vm946, %v820, %v995
      %v1084 = vsel %vm946, %v830, %v998
      %v1085 = vsel %vm946, %v840, %v1001
      %v1086 = vsel %vm946, %v850, %v1004
      %v1087 = vsel %vm946, %v860, %v1007
      %v1088 = vsel %vm946, %v870, %v1010
      %v1089 = vsel %vm946, %v880, %v1013
      %v1090 = vsel %vm946, %v890, %v1016
      %vm1091 = vcmask 1046528
      %v1092 = vrot.slane %v660, 1
      %v1093 = vrot.slane %v665, 1
      %v1094 = vsel %vm1091, %v1092, %v1093
      %v1095 = vrot.slane %v670, 1
      %v1096 = vrot.slane %v675, 1
      %v1097 = vsel %vm1091, %v1095, %v1096
      %v1098 = vrot.slane %v680, 1
      %v1099 = vrot.slane %v685, 1
      %v1100 = vsel %vm1091, %v1098, %v1099
      %v1101 = vrot.slane %v690, 1
      %v1102 = vrot.slane %v695, 1
      %v1103 = vsel %vm1091, %v1101, %v1102
      %v1104 = vrot.slane %v700, 1
      %v1105 = vrot.slane %v705, 1
      %v1106 = vsel %vm1091, %v1104, %v1105
      %v1107 = vrot.slane %v710, 1
      %v1108 = vrot.slane %v715, 1
      %v1109 = vsel %vm1091, %v1107, %v1108
      %v1110 = vrot.slane %v720, 1
      %v1111 = vrot.slane %v725, 1
      %v1112 = vsel %vm1091, %v1110, %v1111
      %v1113 = vrot.slane %v730, 1
      %v1114 = vrot.slane %v735, 1
      %v1115 = vsel %vm1091, %v1113, %v1114
      %v1116 = vrot.slane %v740, 1
      %v1117 = vrot.slane %v745, 1
      %v1118 = vsel %vm1091, %v1116, %v1117
      %v1119 = vrot.slane %v750, 1
      %v1120 = vrot.slane %v755, 1
      %v1121 = vsel %vm1091, %v1119, %v1120
      %v1122 = vrot.slane %v760, 1
      %v1123 = vrot.slane %v765, 1
      %v1124 = vsel %vm1091, %v1122, %v1123
      %v1125 = vrot.slane %v770, 1
      %v1126 = vrot.slane %v775, 1
      %v1127 = vsel %vm1091, %v1125, %v1126
      %v1128 = vrot.slane %v780, 1
      %v1129 = vrot.slane %v785, 1
      %v1130 = vsel %vm1091, %v1128, %v1129
      %v1131 = vrot.slane %v790, 1
      %v1132 = vrot.slane %v795, 1
      %v1133 = vsel %vm1091, %v1131, %v1132
      %v1134 = vrot.slane %v800, 1
      %v1135 = vrot.slane %v805, 1
      %v1136 = vsel %vm1091, %v1134, %v1135
      %v1137 = vrot.slane %v810, 1
      %v1138 = vrot.slane %v815, 1
      %v1139 = vsel %vm1091, %v1137, %v1138
      %v1140 = vrot.slane %v820, 1
      %v1141 = vrot.slane %v825, 1
      %v1142 = vsel %vm1091, %v1140, %v1141
      %v1143 = vrot.slane %v830, 1
      %v1144 = vrot.slane %v835, 1
      %v1145 = vsel %vm1091, %v1143, %v1144
      %v1146 = vrot.slane %v840, 1
      %v1147 = vrot.slane %v845, 1
      %v1148 = vsel %vm1091, %v1146, %v1147
      %v1149 = vrot.slane %v850, 1
      %v1150 = vrot.slane %v855, 1
      %v1151 = vsel %vm1091, %v1149, %v1150
      %v1152 = vrot.slane %v860, 1
      %v1153 = vrot.slane %v865, 1
      %v1154 = vsel %vm1091, %v1152, %v1153
      %v1155 = vrot.slane %v870, 1
      %v1156 = vrot.slane %v875, 1
      %v1157 = vsel %vm1091, %v1155, %v1156
      %v1158 = vrot.slane %v880, 1
      %v1159 = vrot.slane %v885, 1
      %v1160 = vsel %vm1091, %v1158, %v1159
      %v1161 = vrot.slane %v890, 1
      %v1162 = vrot.slane %v895, 1
      %v1163 = vsel %vm1091, %v1161, %v1162
      %v1212 = vsel %vm1091, %v1093, %v665
      %v1213 = vsel %vm1091, %v1096, %v675
      %v1214 = vsel %vm1091, %v1099, %v685
      %v1215 = vsel %vm1091, %v1102, %v695
      %v1216 = vsel %vm1091, %v1105, %v705
      %v1217 = vsel %vm1091, %v1108, %v715
      %v1218 = vsel %vm1091, %v1111, %v725
      %v1219 = vsel %vm1091, %v1114, %v735
      %v1220 = vsel %vm1091, %v1117, %v745
      %v1221 = vsel %vm1091, %v1120, %v755
      %v1222 = vsel %vm1091, %v1123, %v765
      %v1223 = vsel %vm1091, %v1126, %v775
      %v1224 = vsel %vm1091, %v1129, %v785
      %v1225 = vsel %vm1091, %v1132, %v795
      %v1226 = vsel %vm1091, %v1135, %v805
      %v1227 = vsel %vm1091, %v1138, %v815
      %v1228 = vsel %vm1091, %v1141, %v825
      %v1229 = vsel %vm1091, %v1144, %v835
      %v1230 = vsel %vm1091, %v1147, %v845
      %v1231 = vsel %vm1091, %v1150, %v855
      %v1232 = vsel %vm1091, %v1153, %v865
      %v1233 = vsel %vm1091, %v1156, %v875
      %v1234 = vsel %vm1091, %v1159, %v885
      %v1235 = vsel %vm1091, %v1162, %v895
      %v1236 = vadd.f32 %v1067, %v660
      %v1237 = vadd.f32 %v949, %v665
      %v1238 = vadd.f32 %v1068, %v670
      %v1239 = vadd.f32 %v952, %v675
      %v1240 = vadd.f32 %v1069, %v680
      %v1241 = vadd.f32 %v955, %v685
      %v1242 = vadd.f32 %v1070, %v690
      %v1243 = vadd.f32 %v958, %v695
      %v1244 = vadd.f32 %v1071, %v700
      %v1245 = vadd.f32 %v961, %v705
      %v1246 = vadd.f32 %v1072, %v710
      %v1247 = vadd.f32 %v964, %v715
      %v1248 = vadd.f32 %v1073, %v720
      %v1249 = vadd.f32 %v967, %v725
      %v1250 = vadd.f32 %v1074, %v730
      %v1251 = vadd.f32 %v970, %v735
      %v1252 = vadd.f32 %v1075, %v740
      %v1253 = vadd.f32 %v973, %v745
      %v1254 = vadd.f32 %v1076, %v750
      %v1255 = vadd.f32 %v976, %v755
      %v1256 = vadd.f32 %v1077, %v760
      %v1257 = vadd.f32 %v979, %v765
      %v1258 = vadd.f32 %v1078, %v770
      %v1259 = vadd.f32 %v982, %v775
      %v1260 = vadd.f32 %v1079, %v780
      %v1261 = vadd.f32 %v985, %v785
      %v1262 = vadd.f32 %v1080, %v790
      %v1263 = vadd.f32 %v988, %v795
      %v1264 = vadd.f32 %v1081, %v800
      %v1265 = vadd.f32 %v991, %v805
      %v1266 = vadd.f32 %v1082, %v810
      %v1267 = vadd.f32 %v994, %v815
      %v1268 = vadd.f32 %v1083, %v820
      %v1269 = vadd.f32 %v997, %v825
      %v1270 = vadd.f32 %v1084, %v830
      %v1271 = vadd.f32 %v1000, %v835
      %v1272 = vadd.f32 %v1085, %v840
      %v1273 = vadd.f32 %v1003, %v845
      %v1274 = vadd.f32 %v1086, %v850
      %v1275 = vadd.f32 %v1006, %v855
      %v1276 = vadd.f32 %v1087, %v860
      %v1277 = vadd.f32 %v1009, %v865
      %v1278 = vadd.f32 %v1088, %v870
      %v1279 = vadd.f32 %v1012, %v875
      %v1280 = vadd.f32 %v1089, %v880
      %v1281 = vadd.f32 %v1015, %v885
      %v1282 = vadd.f32 %v1090, %v890
      %v1283 = vadd.f32 %v1018, %v895
      %v1284 = vadd.f32 %v1236, %v1094
      %v1285 = vadd.f32 %v1237, %v1212
      %v1286 = vadd.f32 %v1238, %v1097
      %v1287 = vadd.f32 %v1239, %v1213
      %v1288 = vadd.f32 %v1240, %v1100
      %v1289 = vadd.f32 %v1241, %v1214
      %v1290 = vadd.f32 %v1242, %v1103
      %v1291 = vadd.f32 %v1243, %v1215
      %v1292 = vadd.f32 %v1244, %v1106
      %v1293 = vadd.f32 %v1245, %v1216
      %v1294 = vadd.f32 %v1246, %v1109
      %v1295 = vadd.f32 %v1247, %v1217
      %v1296 = vadd.f32 %v1248, %v1112
      %v1297 = vadd.f32 %v1249, %v1218
      %v1298 = vadd.f32 %v1250, %v1115
      %v1299 = vadd.f32 %v1251, %v1219
      %v1300 = vadd.f32 %v1252, %v1118
      %v1301 = vadd.f32 %v1253, %v1220
      %v1302 = vadd.f32 %v1254, %v1121
      %v1303 = vadd.f32 %v1255, %v1221
      %v1304 = vadd.f32 %v1256, %v1124
      %v1305 = vadd.f32 %v1257, %v1222
      %v1306 = vadd.f32 %v1258, %v1127
      %v1307 = vadd.f32 %v1259, %v1223
      %v1308 = vadd.f32 %v1260, %v1130
      %v1309 = vadd.f32 %v1261, %v1224
      %v1310 = vadd.f32 %v1262, %v1133
      %v1311 = vadd.f32 %v1263, %v1225
      %v1312 = vadd.f32 %v1264, %v1136
      %v1313 = vadd.f32 %v1265, %v1226
      %v1314 = vadd.f32 %v1266, %v1139
      %v1315 = vadd.f32 %v1267, %v1227
      %v1316 = vadd.f32 %v1268, %v1142
      %v1317 = vadd.f32 %v1269, %v1228
      %v1318 = vadd.f32 %v1270, %v1145
      %v1319 = vadd.f32 %v1271, %v1229
      %v1320 = vadd.f32 %v1272, %v1148
      %v1321 = vadd.f32 %v1273, %v1230
      %v1322 = vadd.f32 %v1274, %v1151
      %v1323 = vadd.f32 %v1275, %v1231
      %v1324 = vadd.f32 %v1276, %v1154
      %v1325 = vadd.f32 %v1277, %v1232
      %v1326 = vadd.f32 %v1278, %v1157
      %v1327 = vadd.f32 %v1279, %v1233
      %v1328 = vadd.f32 %v1280, %v1160
      %v1329 = vadd.f32 %v1281, %v1234
      %v1330 = vadd.f32 %v1282, %v1163
      %v1331 = vadd.f32 %v1283, %v1235
      %s1332 = scalar_select %p345, 1, 0
      %v1333 = vstv %s1332
      %vm1334 = vcmp.eq.s32.totalorder %v1333, 1
      %v1335 = vsel 0, %v1292, %v1284
      %v1336 = vsel 0, %v1293, %v1285
      %v1337 = vsel 0, %v1292, %v1286
      %v1338 = vsel 0, %v1293, %v1287
      %v1339 = vsel 0, %v1292, %v1288
      %v1340 = vsel 0, %v1293, %v1289
      %v1341 = vsel %vm1334, %v1292, %v1290
      %v1342 = vsel %vm1334, %v1293, %v1291
      %v1343 = vsel 0, %v1292, %v1294
      %v1344 = vsel 0, %v1293, %v1295
      %v1345 = vsel 0, %v1292, %v1296
      %v1346 = vsel 0, %v1293, %v1297
      %v1347 = vsel 0, %v1292, %v1298
      %v1348 = vsel 0, %v1293, %v1299
      %v1349 = vsel 0, %v1292, %v1300
      %v1350 = vsel 0, %v1293, %v1301
      %v1351 = vsel 0, %v1292, %v1302
      %v1352 = vsel 0, %v1293, %v1303
      %v1353 = vsel 0, %v1292, %v1304
      %v1354 = vsel 0, %v1293, %v1305
      %v1355 = vsel 0, %v1292, %v1306
      %v1356 = vsel 0, %v1293, %v1307
      %v1357 = vsel 0, %v1292, %v1308
      %v1358 = vsel 0, %v1293, %v1309
      %v1359 = vsel 0, %v1292, %v1310
      %v1360 = vsel 0, %v1293, %v1311
      %v1361 = vsel 0, %v1292, %v1312
      %v1362 = vsel 0, %v1293, %v1313
      %v1363 = vsel 0, %v1292, %v1314
      %v1364 = vsel 0, %v1293, %v1315
      %v1365 = vsel 0, %v1292, %v1316
      %v1366 = vsel 0, %v1293, %v1317
      %v1367 = vsel 0, %v1292, %v1318
      %v1368 = vsel 0, %v1293, %v1319
      %v1369 = vsel 0, %v1292, %v1320
      %v1370 = vsel 0, %v1293, %v1321
      %v1371 = vsel 0, %v1292, %v1322
      %v1372 = vsel 0, %v1293, %v1323
      %v1373 = vsel 0, %v1292, %v1324
      %v1374 = vsel 0, %v1293, %v1325
      %v1375 = vsel 0, %v1292, %v1326
      %v1376 = vsel 0, %v1293, %v1327
      %v1377 = vsel 0, %v1292, %v1328
      %v1378 = vsel 0, %v1293, %v1329
      %v1379 = vsel 0, %v1292, %v1330
      %v1380 = vsel 0, %v1293, %v1331
      %v1381 = vsel 0, %v1371, %v1335
      %v1382 = vsel 0, %v1372, %v1336
      %v1383 = vsel 0, %v1371, %v1337
      %v1384 = vsel 0, %v1372, %v1338
      %v1385 = vsel 0, %v1371, %v1339
      %v1386 = vsel 0, %v1372, %v1340
      %v1387 = vsel 0, %v1371, %v1341
      %v1388 = vsel 0, %v1372, %v1342
      %v1389 = vsel 0, %v1371, %v1292
      %v1390 = vsel 0, %v1372, %v1293
      %v1391 = vsel 0, %v1371, %v1343
      %v1392 = vsel 0, %v1372, %v1344
      %v1393 = vsel 0, %v1371, %v1345
      %v1394 = vsel 0, %v1372, %v1346
      %v1395 = vsel 0, %v1371, %v1347
      %v1396 = vsel 0, %v1372, %v1348
      %v1397 = vsel 0, %v1371, %v1349
      %v1398 = vsel 0, %v1372, %v1350
      %v1399 = vsel 0, %v1371, %v1351
      %v1400 = vsel 0, %v1372, %v1352
      %v1401 = vsel 0, %v1371, %v1353
      %v1402 = vsel 0, %v1372, %v1354
      %v1403 = vsel 0, %v1371, %v1355
      %v1404 = vsel 0, %v1372, %v1356
      %v1405 = vsel 0, %v1371, %v1357
      %v1406 = vsel 0, %v1372, %v1358
      %v1407 = vsel 0, %v1371, %v1359
      %v1408 = vsel 0, %v1372, %v1360
      %v1409 = vsel 0, %v1371, %v1361
      %v1410 = vsel 0, %v1372, %v1362
      %v1411 = vsel 0, %v1371, %v1363
      %v1412 = vsel 0, %v1372, %v1364
      %v1413 = vsel 0, %v1371, %v1365
      %v1414 = vsel 0, %v1372, %v1366
      %v1415 = vsel 0, %v1371, %v1367
      %v1416 = vsel 0, %v1372, %v1368
      %v1417 = vsel 0, %v1371, %v1369
      %v1418 = vsel 0, %v1372, %v1370
      %v1419 = vsel %vm1334, %v1371, %v1373
      %v1420 = vsel %vm1334, %v1372, %v1374
      %v1421 = vsel 0, %v1371, %v1375
      %v1422 = vsel 0, %v1372, %v1376
      %v1423 = vsel 0, %v1371, %v1377
      %v1424 = vsel 0, %v1372, %v1378
      %v1425 = vsel 0, %v1371, %v1379
      %v1426 = vsel 0, %v1372, %v1380
      %v1427 = vadd.f32 %v1381, %v1383
      %v1428 = vadd.f32 %v1382, %v1384
      %v1429 = vadd.f32 %v1383, %v1385
      %v1430 = vadd.f32 %v1384, %v1386
      %v1431 = vadd.f32 %v1385, %v1387
      %v1432 = vadd.f32 %v1386, %v1388
      %v1433 = vadd.f32 %v1387, %v1389
      %v1434 = vadd.f32 %v1388, %v1390
      %v1435 = vadd.f32 %v1389, %v1391
      %v1436 = vadd.f32 %v1390, %v1392
      %v1437 = vadd.f32 %v1391, %v1393
      %v1438 = vadd.f32 %v1392, %v1394
      %v1439 = vadd.f32 %v1393, %v1395
      %v1440 = vadd.f32 %v1394, %v1396
      %v1441 = vadd.f32 %v1395, %v1397
      %v1442 = vadd.f32 %v1396, %v1398
      %v1443 = vadd.f32 %v1397, %v1399
      %v1444 = vadd.f32 %v1398, %v1400
      %v1445 = vadd.f32 %v1399, %v1401
      %v1446 = vadd.f32 %v1400, %v1402
      %v1447 = vadd.f32 %v1401, %v1403
      %v1448 = vadd.f32 %v1402, %v1404
      %v1449 = vadd.f32 %v1403, %v1405
      %v1450 = vadd.f32 %v1404, %v1406
      %v1451 = vadd.f32 %v1405, %v1407
      %v1452 = vadd.f32 %v1406, %v1408
      %v1453 = vadd.f32 %v1407, %v1409
      %v1454 = vadd.f32 %v1408, %v1410
      %v1455 = vadd.f32 %v1409, %v1411
      %v1456 = vadd.f32 %v1410, %v1412
      %v1457 = vadd.f32 %v1411, %v1413
      %v1458 = vadd.f32 %v1412, %v1414
      %v1459 = vadd.f32 %v1413, %v1415
      %v1460 = vadd.f32 %v1414, %v1416
      %v1461 = vadd.f32 %v1415, %v1417
      %v1462 = vadd.f32 %v1416, %v1418
      %v1463 = vadd.f32 %v1417, %v1371
      %v1464 = vadd.f32 %v1418, %v1372
      %v1465 = vadd.f32 %v1371, %v1419
      %v1466 = vadd.f32 %v1372, %v1420
      %v1467 = vadd.f32 %v1419, %v1421
      %v1468 = vadd.f32 %v1420, %v1422
      %v1469 = vadd.f32 %v1421, %v1423
      %v1470 = vadd.f32 %v1422, %v1424
      %v1471 = vadd.f32 %v1427, %v1385
      %v1472 = vadd.f32 %v1428, %v1386
      %v1473 = vadd.f32 %v1429, %v1387
      %v1474 = vadd.f32 %v1430, %v1388
      %v1475 = vadd.f32 %v1431, %v1389
      %v1476 = vadd.f32 %v1432, %v1390
      %v1477 = vadd.f32 %v1433, %v1391
      %v1478 = vadd.f32 %v1434, %v1392
      %v1479 = vadd.f32 %v1435, %v1393
      %v1480 = vadd.f32 %v1436, %v1394
      %v1481 = vadd.f32 %v1437, %v1395
      %v1482 = vadd.f32 %v1438, %v1396
      %v1483 = vadd.f32 %v1439, %v1397
      %v1484 = vadd.f32 %v1440, %v1398
      %v1485 = vadd.f32 %v1441, %v1399
      %v1486 = vadd.f32 %v1442, %v1400
      %v1487 = vadd.f32 %v1443, %v1401
      %v1488 = vadd.f32 %v1444, %v1402
      %v1489 = vadd.f32 %v1445, %v1403
      %v1490 = vadd.f32 %v1446, %v1404
      %v1491 = vadd.f32 %v1447, %v1405
      %v1492 = vadd.f32 %v1448, %v1406
      %v1493 = vadd.f32 %v1449, %v1407
      %v1494 = vadd.f32 %v1450, %v1408
      %v1495 = vadd.f32 %v1451, %v1409
      %v1496 = vadd.f32 %v1452, %v1410
      %v1497 = vadd.f32 %v1453, %v1411
      %v1498 = vadd.f32 %v1454, %v1412
      %v1499 = vadd.f32 %v1455, %v1413
      %v1500 = vadd.f32 %v1456, %v1414
      %v1501 = vadd.f32 %v1457, %v1415
      %v1502 = vadd.f32 %v1458, %v1416
      %v1503 = vadd.f32 %v1459, %v1417
      %v1504 = vadd.f32 %v1460, %v1418
      %v1505 = vadd.f32 %v1461, %v1371
      %v1506 = vadd.f32 %v1462, %v1372
      %v1507 = vadd.f32 %v1463, %v1419
      %v1508 = vadd.f32 %v1464, %v1420
      %v1509 = vadd.f32 %v1465, %v1421
      %v1510 = vadd.f32 %v1466, %v1422
      %v1511 = vadd.f32 %v1467, %v1423
      %v1512 = vadd.f32 %v1468, %v1424
      %v1513 = vadd.f32 %v1469, %v1425
      %v1514 = vadd.f32 %v1470, %v1426
      %v1515 = vmul.f32 %v1471, 0.11111111
      %v1516 = vmul.f32 %v1472, 0.11111111
      %v1517 = vmul.f32 %v1473, 0.11111111
      %v1518 = vmul.f32 %v1474, 0.11111111
      %v1519 = vmul.f32 %v1475, 0.11111111
      %v1520 = vmul.f32 %v1476, 0.11111111
      %v1521 = vmul.f32 %v1477, 0.11111111
      %v1522 = vmul.f32 %v1478, 0.11111111
      %v1523 = vmul.f32 %v1479, 0.11111111
      %v1524 = vmul.f32 %v1480, 0.11111111
      %v1525 = vmul.f32 %v1481, 0.11111111
      %v1526 = vmul.f32 %v1482, 0.11111111
      %v1527 = vmul.f32 %v1483, 0.11111111
      %v1528 = vmul.f32 %v1484, 0.11111111
      %v1529 = vmul.f32 %v1485, 0.11111111
      %v1530 = vmul.f32 %v1486, 0.11111111
      %v1531 = vmul.f32 %v1487, 0.11111111
      %v1532 = vmul.f32 %v1488, 0.11111111
      %v1533 = vmul.f32 %v1489, 0.11111111
      %v1534 = vmul.f32 %v1490, 0.11111111
      %v1535 = vmul.f32 %v1491, 0.11111111
      %v1536 = vmul.f32 %v1492, 0.11111111
      %v1537 = vmul.f32 %v1493, 0.11111111
      %v1538 = vmul.f32 %v1494, 0.11111111
      %v1539 = vmul.f32 %v1495, 0.11111111
      %v1540 = vmul.f32 %v1496, 0.11111111
      %v1541 = vmul.f32 %v1497, 0.11111111
      %v1542 = vmul.f32 %v1498, 0.11111111
      %v1543 = vmul.f32 %v1499, 0.11111111
      %v1544 = vmul.f32 %v1500, 0.11111111
      %v1545 = vmul.f32 %v1501, 0.11111111
      %v1546 = vmul.f32 %v1502, 0.11111111
      %v1547 = vmul.f32 %v1503, 0.11111111
      %v1548 = vmul.f32 %v1504, 0.11111111
      %v1549 = vmul.f32 %v1505, 0.11111111
      %v1550 = vmul.f32 %v1506, 0.11111111
      %v1551 = vmul.f32 %v1507, 0.11111111
      %v1552 = vmul.f32 %v1508, 0.11111111
      %v1553 = vmul.f32 %v1509, 0.11111111
      %v1554 = vmul.f32 %v1510, 0.11111111
      %v1555 = vmul.f32 %v1511, 0.11111111
      %v1556 = vmul.f32 %v1512, 0.11111111
      %v1557 = vmul.f32 %v1513, 0.11111111
      %v1558 = vmul.f32 %v1514, 0.11111111
      %v1559 = vsel %vm1334, 0.0, %v1515
      %v1560 = vsel %vm1334, 0.0, %v1516
      %v1561 = vsel %vm1334, 0.0, %v1517
      %v1562 = vsel %vm1334, 0.0, %v1518
      %v1563 = vsel %vm1334, 0.0, %v1519
      %v1564 = vsel %vm1334, 0.0, %v1520
      %v1565 = vsel 0, 0.0, %v1521
      %v1566 = vsel 0, 0.0, %v1522
      %v1567 = vsel 0, 0.0, %v1523
      %v1568 = vsel 0, 0.0, %v1524
      %v1569 = vsel 0, 0.0, %v1525
      %v1570 = vsel 0, 0.0, %v1526
      %v1571 = vsel 0, 0.0, %v1527
      %v1572 = vsel 0, 0.0, %v1528
      %v1573 = vsel 0, 0.0, %v1529
      %v1574 = vsel 0, 0.0, %v1530
      %v1575 = vsel 0, 0.0, %v1531
      %v1576 = vsel 0, 0.0, %v1532
      %v1577 = vsel 0, 0.0, %v1533
      %v1578 = vsel 0, 0.0, %v1534
      %v1579 = vsel 0, 0.0, %v1535
      %v1580 = vsel 0, 0.0, %v1536
      %v1581 = vsel 0, 0.0, %v1537
      %v1582 = vsel 0, 0.0, %v1538
      %v1583 = vsel 0, 0.0, %v1539
      %v1584 = vsel 0, 0.0, %v1540
      %v1585 = vsel 0, 0.0, %v1541
      %v1586 = vsel 0, 0.0, %v1542
      %v1587 = vsel 0, 0.0, %v1543
      %v1588 = vsel 0, 0.0, %v1544
      %v1589 = vsel 0, 0.0, %v1545
      %v1590 = vsel 0, 0.0, %v1546
      %v1591 = vsel 0, 0.0, %v1547
      %v1592 = vsel 0, 0.0, %v1548
      %v1593 = vsel 0, 0.0, %v1549
      %v1594 = vsel 0, 0.0, %v1550
      %v1595 = vsel 0, 0.0, %v1551
      %v1596 = vsel 0, 0.0, %v1552
      %v1597 = vsel 0, 0.0, %v1553
      %v1598 = vsel 0, 0.0, %v1554
      %v1599 = vsel 0, 0.0, %v1555
      %v1600 = vsel 0, 0.0, %v1556
      %v1601 = vsel 0, 0.0, %v1557
      %v1602 = vsel 0, 0.0, %v1558
      %v1603 = vsel 0, 0.0, %v1559
      %v1604 = vsel 0, 0.0, %v1560
      %v1605 = vsel 0, 0.0, %v1561
      %v1606 = vsel 0, 0.0, %v1562
      %v1607 = vsel 0, 0.0, %v1563
      %v1608 = vsel 0, 0.0, %v1564
      %v1609 = vsel 0, 0.0, %v1565
      %v1610 = vsel 0, 0.0, %v1566
      %v1611 = vsel 0, 0.0, %v1567
      %v1612 = vsel 0, 0.0, %v1568
      %v1613 = vsel 0, 0.0, %v1569
      %v1614 = vsel 0, 0.0, %v1570
      %v1615 = vsel 0, 0.0, %v1571
      %v1616 = vsel 0, 0.0, %v1572
      %v1617 = vsel 0, 0.0, %v1573
      %v1618 = vsel 0, 0.0, %v1574
      %v1619 = vsel 0, 0.0, %v1575
      %v1620 = vsel 0, 0.0, %v1576
      %v1621 = vsel 0, 0.0, %v1577
      %v1622 = vsel 0, 0.0, %v1578
      %v1623 = vsel 0, 0.0, %v1579
      %v1624 = vsel 0, 0.0, %v1580
      %v1625 = vsel 0, 0.0, %v1581
      %v1626 = vsel 0, 0.0, %v1582
      %v1627 = vsel 0, 0.0, %v1583
      %v1628 = vsel 0, 0.0, %v1584
      %v1629 = vsel 0, 0.0, %v1585
      %v1630 = vsel 0, 0.0, %v1586
      %v1631 = vsel 0, 0.0, %v1587
      %v1632 = vsel 0, 0.0, %v1588
      %v1633 = vsel 0, 0.0, %v1589
      %v1634 = vsel 0, 0.0, %v1590
      %v1635 = vsel 0, 0.0, %v1591
      %v1636 = vsel 0, 0.0, %v1592
      %v1637 = vsel 0, 0.0, %v1593
      %v1638 = vsel 0, 0.0, %v1594
      %v1639 = vsel 0, 0.0, %v1595
      %v1640 = vsel 0, 0.0, %v1596
      %v1641 = vsel %vm1334, 0.0, %v1597
      %v1642 = vsel %vm1334, 0.0, %v1598
      %v1643 = vsel %vm1334, 0.0, %v1599
      %v1644 = vsel %vm1334, 0.0, %v1600
      %v1645 = vsel %vm1334, 0.0, %v1601
      %v1646 = vsel %vm1334, 0.0, %v1602
      %1648 = vset.pattern.permute.xlu0 20
      %1649 = vperm.xlu0 %1648, %v1603
      %v1650 = vpop.permute.xlu0 %1649
      %1653 = vset.pattern.permute.xlu0 20
      %1654 = vperm.xlu0 %1653, %v1604
      %v1655 = vpop.permute.xlu0 %1654
      %1658 = vset.pattern.permute.xlu0 20
      %1659 = vperm.xlu0 %1658, %v1605
      %v1660 = vpop.permute.xlu0 %1659
      %1663 = vset.pattern.permute.xlu0 20
      %1664 = vperm.xlu0 %1663, %v1606
      %v1665 = vpop.permute.xlu0 %1664
      %1668 = vset.pattern.permute.xlu0 20
      %1669 = vperm.xlu0 %1668, %v1607
      %v1670 = vpop.permute.xlu0 %1669
      %1673 = vset.pattern.permute.xlu0 20
      %1674 = vperm.xlu0 %1673, %v1608
      %v1675 = vpop.permute.xlu0 %1674
      %1678 = vset.pattern.permute.xlu0 20
      %1679 = vperm.xlu0 %1678, %v1609
      %v1680 = vpop.permute.xlu0 %1679
      %1683 = vset.pattern.permute.xlu0 20
      %1684 = vperm.xlu0 %1683, %v1610
      %v1685 = vpop.permute.xlu0 %1684
      %1688 = vset.pattern.permute.xlu0 20
      %1689 = vperm.xlu0 %1688, %v1611
      %v1690 = vpop.permute.xlu0 %1689
      %1693 = vset.pattern.permute.xlu0 20
      %1694 = vperm.xlu0 %1693, %v1612
      %v1695 = vpop.permute.xlu0 %1694
      %1698 = vset.pattern.permute.xlu0 20
      %1699 = vperm.xlu0 %1698, %v1613
      %v1700 = vpop.permute.xlu0 %1699
      %1703 = vset.pattern.permute.xlu0 20
      %1704 = vperm.xlu0 %1703, %v1614
      %v1705 = vpop.permute.xlu0 %1704
      %1708 = vset.pattern.permute.xlu0 20
      %1709 = vperm.xlu0 %1708, %v1615
      %v1710 = vpop.permute.xlu0 %1709
      %1713 = vset.pattern.permute.xlu0 20
      %1714 = vperm.xlu0 %1713, %v1616
      %v1715 = vpop.permute.xlu0 %1714
      %1718 = vset.pattern.permute.xlu0 20
      %1719 = vperm.xlu0 %1718, %v1617
      %v1720 = vpop.permute.xlu0 %1719
      %1723 = vset.pattern.permute.xlu0 20
      %1724 = vperm.xlu0 %1723, %v1618
      %v1725 = vpop.permute.xlu0 %1724
      %1728 = vset.pattern.permute.xlu0 20
      %1729 = vperm.xlu0 %1728, %v1619
      %v1730 = vpop.permute.xlu0 %1729
      %1733 = vset.pattern.permute.xlu0 20
      %1734 = vperm.xlu0 %1733, %v1620
      %v1735 = vpop.permute.xlu0 %1734
      %1738 = vset.pattern.permute.xlu0 20
      %1739 = vperm.xlu0 %1738, %v1621
      %v1740 = vpop.permute.xlu0 %1739
      %1743 = vset.pattern.permute.xlu0 20
      %1744 = vperm.xlu0 %1743, %v1622
      %v1745 = vpop.permute.xlu0 %1744
      %1748 = vset.pattern.permute.xlu0 20
      %1749 = vperm.xlu0 %1748, %v1623
      %v1750 = vpop.permute.xlu0 %1749
      %1753 = vset.pattern.permute.xlu0 20
      %1754 = vperm.xlu0 %1753, %v1624
      %v1755 = vpop.permute.xlu0 %1754
      %1758 = vset.pattern.permute.xlu0 20
      %1759 = vperm.xlu0 %1758, %v1625
      %v1760 = vpop.permute.xlu0 %1759
      %1763 = vset.pattern.permute.xlu0 20
      %1764 = vperm.xlu0 %1763, %v1626
      %v1765 = vpop.permute.xlu0 %1764
      %1768 = vset.pattern.permute.xlu0 20
      %1769 = vperm.xlu0 %1768, %v1627
      %v1770 = vpop.permute.xlu0 %1769
      %1773 = vset.pattern.permute.xlu0 20
      %1774 = vperm.xlu0 %1773, %v1628
      %v1775 = vpop.permute.xlu0 %1774
      %1778 = vset.pattern.permute.xlu0 20
      %1779 = vperm.xlu0 %1778, %v1629
      %v1780 = vpop.permute.xlu0 %1779
      %1783 = vset.pattern.permute.xlu0 20
      %1784 = vperm.xlu0 %1783, %v1630
      %v1785 = vpop.permute.xlu0 %1784
      %1788 = vset.pattern.permute.xlu0 20
      %1789 = vperm.xlu0 %1788, %v1631
      %v1790 = vpop.permute.xlu0 %1789
      %1793 = vset.pattern.permute.xlu0 20
      %1794 = vperm.xlu0 %1793, %v1632
      %v1795 = vpop.permute.xlu0 %1794
      %1798 = vset.pattern.permute.xlu0 20
      %1799 = vperm.xlu0 %1798, %v1633
      %v1800 = vpop.permute.xlu0 %1799
      %1803 = vset.pattern.permute.xlu0 20
      %1804 = vperm.xlu0 %1803, %v1634
      %v1805 = vpop.permute.xlu0 %1804
      %1808 = vset.pattern.permute.xlu0 20
      %1809 = vperm.xlu0 %1808, %v1635
      %v1810 = vpop.permute.xlu0 %1809
      %1813 = vset.pattern.permute.xlu0 20
      %1814 = vperm.xlu0 %1813, %v1636
      %v1815 = vpop.permute.xlu0 %1814
      %1818 = vset.pattern.permute.xlu0 20
      %1819 = vperm.xlu0 %1818, %v1637
      %v1820 = vpop.permute.xlu0 %1819
      %1823 = vset.pattern.permute.xlu0 20
      %1824 = vperm.xlu0 %1823, %v1638
      %v1825 = vpop.permute.xlu0 %1824
      %1828 = vset.pattern.permute.xlu0 20
      %1829 = vperm.xlu0 %1828, %v1639
      %v1830 = vpop.permute.xlu0 %1829
      %1833 = vset.pattern.permute.xlu0 20
      %1834 = vperm.xlu0 %1833, %v1640
      %v1835 = vpop.permute.xlu0 %1834
      %1838 = vset.pattern.permute.xlu0 20
      %1839 = vperm.xlu0 %1838, %v1641
      %v1840 = vpop.permute.xlu0 %1839
      %1843 = vset.pattern.permute.xlu0 20
      %1844 = vperm.xlu0 %1843, %v1642
      %v1845 = vpop.permute.xlu0 %1844
      %1848 = vset.pattern.permute.xlu0 20
      %1849 = vperm.xlu0 %1848, %v1643
      %v1850 = vpop.permute.xlu0 %1849
      %1853 = vset.pattern.permute.xlu0 20
      %1854 = vperm.xlu0 %1853, %v1644
      %v1855 = vpop.permute.xlu0 %1854
      %1858 = vset.pattern.permute.xlu0 20
      %1859 = vperm.xlu0 %1858, %v1645
      %v1860 = vpop.permute.xlu0 %1859
      %1863 = vset.pattern.permute.xlu0 20
      %1864 = vperm.xlu0 %1863, %v1646
      %v1865 = vpop.permute.xlu0 %1864
      %v1867 = vsub.f32 %v670, %v1650
      %v1868 = vsub.f32 %v675, %v1655
      %v1869 = vsub.f32 %v680, %v1660
      %v1870 = vsub.f32 %v685, %v1665
      %v1871 = vsub.f32 %v690, %v1670
      %v1872 = vsub.f32 %v695, %v1675
      %v1873 = vsub.f32 %v700, %v1680
      %v1874 = vsub.f32 %v705, %v1685
      %v1875 = vsub.f32 %v710, %v1690
      %v1876 = vsub.f32 %v715, %v1695
      %v1877 = vsub.f32 %v720, %v1700
      %v1878 = vsub.f32 %v725, %v1705
      %v1879 = vsub.f32 %v730, %v1710
      %v1880 = vsub.f32 %v735, %v1715
      %v1881 = vsub.f32 %v740, %v1720
      %v1882 = vsub.f32 %v745, %v1725
      %v1883 = vsub.f32 %v750, %v1730
      %v1884 = vsub.f32 %v755, %v1735
      %v1885 = vsub.f32 %v760, %v1740
      %v1886 = vsub.f32 %v765, %v1745
      %v1887 = vsub.f32 %v770, %v1750
      %v1888 = vsub.f32 %v775, %v1755
      %v1889 = vsub.f32 %v780, %v1760
      %v1890 = vsub.f32 %v785, %v1765
      %v1891 = vsub.f32 %v790, %v1770
      %v1892 = vsub.f32 %v795, %v1775
      %v1893 = vsub.f32 %v800, %v1780
      %v1894 = vsub.f32 %v805, %v1785
      %v1895 = vsub.f32 %v810, %v1790
      %v1896 = vsub.f32 %v815, %v1795
      %v1897 = vsub.f32 %v820, %v1800
      %v1898 = vsub.f32 %v825, %v1805
      %v1899 = vsub.f32 %v830, %v1810
      %v1900 = vsub.f32 %v835, %v1815
      %v1901 = vsub.f32 %v840, %v1820
      %v1902 = vsub.f32 %v845, %v1825
      %v1903 = vsub.f32 %v850, %v1830
      %v1904 = vsub.f32 %v855, %v1835
      %v1905 = vsub.f32 %v860, %v1840
      %v1906 = vsub.f32 %v865, %v1845
      %v1907 = vsub.f32 %v870, %v1850
      %v1908 = vsub.f32 %v875, %v1855
      %v1909 = vsub.f32 %v880, %v1860
      %v1910 = vsub.f32 %v885, %v1865
      %s1911 = scalar_lea.vmem [#allocation2], 32
      %vm1912 = vcmask 162816
      %1913 = vst.msk [vmem:[%s1911 + $0x8] sm:$0xff] %vm1912, %v1867
      %1914 = vst.msk [vmem:[%s1911 + $0x10] sm:$0xff] %vm1912, %v1868
      %1915 = vst.msk [vmem:[%s1911 + $0x28] sm:$0xff] %vm1912, %v1869
      %1916 = vst.msk [vmem:[%s1911 + $0x30] sm:$0xff] %vm1912, %v1870
      %1917 = vst.msk [vmem:[%s1911 + $0x48] sm:$0xff] %vm1912, %v1871
      %1918 = vst.msk [vmem:[%s1911 + $0x50] sm:$0xff] %vm1912, %v1872
      %1919 = vst.msk [vmem:[%s1911 + $0x68] sm:$0xff] %vm1912, %v1873
      %1920 = vst.msk [vmem:[%s1911 + $0x70] sm:$0xff] %vm1912, %v1874
      %1921 = vst.msk [vmem:[%s1911 + $0x88] sm:$0xff] %vm1912, %v1875
      %1922 = vst.msk [vmem:[%s1911 + $0x90] sm:$0xff] %vm1912, %v1876
      %1923 = vst.msk [vmem:[%s1911 + $0xa8] sm:$0xff] %vm1912, %v1877
      %1924 = vst.msk [vmem:[%s1911 + $0xb0] sm:$0xff] %vm1912, %v1878
      %1925 = vst.msk [vmem:[%s1911 + $0xc8] sm:$0xff] %vm1912, %v1879
      %1926 = vst.msk [vmem:[%s1911 + $0xd0] sm:$0xff] %vm1912, %v1880
      %1927 = vst.msk [vmem:[%s1911 + $0xe8] sm:$0xff] %vm1912, %v1881
      %1928 = vst.msk [vmem:[%s1911 + $0xf0] sm:$0xff] %vm1912, %v1882
      %1929 = vst.msk [vmem:[%s1911 + $0x108] sm:$0xff] %vm1912, %v1883
      %1930 = vst.msk [vmem:[%s1911 + $0x110] sm:$0xff] %vm1912, %v1884
      %1931 = vst.msk [vmem:[%s1911 + $0x128] sm:$0xff] %vm1912, %v1885
      %1932 = vst.msk [vmem:[%s1911 + $0x130] sm:$0xff] %vm1912, %v1886
      %1933 = vst.msk [vmem:[%s1911 + $0x148] sm:$0xff] %vm1912, %v1887
      %1934 = vst.msk [vmem:[%s1911 + $0x150] sm:$0xff] %vm1912, %v1888
      %1935 = vst.msk [vmem:[%s1911 + $0x168] sm:$0xff] %vm1912, %v1889
      %1936 = vst.msk [vmem:[%s1911 + $0x170] sm:$0xff] %vm1912, %v1890
      %1937 = vst.msk [vmem:[%s1911 + $0x188] sm:$0xff] %vm1912, %v1891
      %1938 = vst.msk [vmem:[%s1911 + $0x190] sm:$0xff] %vm1912, %v1892
      %1939 = vst.msk [vmem:[%s1911 + $0x1a8] sm:$0xff] %vm1912, %v1893
      %1940 = vst.msk [vmem:[%s1911 + $0x1b0] sm:$0xff] %vm1912, %v1894
      %1941 = vst.msk [vmem:[%s1911 + $0x1c8] sm:$0xff] %vm1912, %v1895
      %1942 = vst.msk [vmem:[%s1911 + $0x1d0] sm:$0xff] %vm1912, %v1896
      %1943 = vst.msk [vmem:[%s1911 + $0x1e8] sm:$0xff] %vm1912, %v1897
      %1944 = vst.msk [vmem:[%s1911 + $0x1f0] sm:$0xff] %vm1912, %v1898
      %1945 = vst.msk [vmem:[%s1911 + $0x208] sm:$0xff] %vm1912, %v1899
      %1946 = vst.msk [vmem:[%s1911 + $0x210] sm:$0xff] %vm1912, %v1900
      %1947 = vst.msk [vmem:[%s1911 + $0x228] sm:$0xff] %vm1912, %v1901
      %1948 = vst.msk [vmem:[%s1911 + $0x230] sm:$0xff] %vm1912, %v1902
      %1949 = vst.msk [vmem:[%s1911 + $0x248] sm:$0xff] %vm1912, %v1903
      %1950 = vst.msk [vmem:[%s1911 + $0x250] sm:$0xff] %vm1912, %v1904
      %1951 = vst.msk [vmem:[%s1911 + $0x268] sm:$0xff] %vm1912, %v1905
      %1952 = vst.msk [vmem:[%s1911 + $0x270] sm:$0xff] %vm1912, %v1906
      %1953 = vst.msk [vmem:[%s1911 + $0x288] sm:$0xff] %vm1912, %v1907
      %1954 = vst.msk [vmem:[%s1911 + $0x290] sm:$0xff] %vm1912, %v1908
      %1955 = vst.msk [vmem:[%s1911 + $0x2a8] sm:$0xff] %vm1912, %v1909
      %1956 = vst.msk [vmem:[%s1911 + $0x2b0] sm:$0xff] %vm1912, %v1910
      %v1957 = vld [vmem:[%s1911] sm:$0xff]
      %v1958 = vld [vmem:[%s1911 + $0x8] sm:$0xff]
      %v1959 = vld [vmem:[%s1911 + $0x10] sm:$0xff]
      %v1960 = vld [vmem:[%s1911 + $0x18] sm:$0xff]
      %v1961 = vld [vmem:[%s1911 + $0x20] sm:$0xff]
      %v1962 = vld [vmem:[%s1911 + $0x28] sm:$0xff]
      %v1963 = vld [vmem:[%s1911 + $0x30] sm:$0xff]
      %v1964 = vld [vmem:[%s1911 + $0x38] sm:$0xff]
      %v1965 = vld [vmem:[%s1911 + $0x40] sm:$0xff]
      %v1966 = vld [vmem:[%s1911 + $0x48] sm:$0xff]
      %v1967 = vld [vmem:[%s1911 + $0x50] sm:$0xff]
      %v1968 = vld [vmem:[%s1911 + $0x58] sm:$0xff]
      %v1969 = vld [vmem:[%s1911 + $0x60] sm:$0xff]
      %v1970 = vld [vmem:[%s1911 + $0x68] sm:$0xff]
      %v1971 = vld [vmem:[%s1911 + $0x70] sm:$0xff]
      %v1972 = vld [vmem:[%s1911 + $0x78] sm:$0xff]
      %v1973 = vld [vmem:[%s1911 + $0x80] sm:$0xff]
      %v1974 = vld [vmem:[%s1911 + $0x88] sm:$0xff]
      %v1975 = vld [vmem:[%s1911 + $0x90] sm:$0xff]
      %v1976 = vld [vmem:[%s1911 + $0x98] sm:$0xff]
      %v1977 = vld [vmem:[%s1911 + $0xa0] sm:$0xff]
      %v1978 = vld [vmem:[%s1911 + $0xa8] sm:$0xff]
      %v1979 = vld [vmem:[%s1911 + $0xb0] sm:$0xff]
      %v1980 = vld [vmem:[%s1911 + $0xb8] sm:$0xff]
      %v1981 = vld [vmem:[%s1911 + $0xc0] sm:$0xff]
      %v1982 = vld [vmem:[%s1911 + $0xc8] sm:$0xff]
      %v1983 = vld [vmem:[%s1911 + $0xd0] sm:$0xff]
      %v1984 = vld [vmem:[%s1911 + $0xd8] sm:$0xff]
      %v1985 = vld [vmem:[%s1911 + $0xe0] sm:$0xff]
      %v1986 = vld [vmem:[%s1911 + $0xe8] sm:$0xff]
      %v1987 = vld [vmem:[%s1911 + $0xf0] sm:$0xff]
      %v1988 = vld [vmem:[%s1911 + $0xf8] sm:$0xff]
      %v1989 = vld [vmem:[%s1911 + $0x100] sm:$0xff]
      %v1990 = vld [vmem:[%s1911 + $0x108] sm:$0xff]
      %v1991 = vld [vmem:[%s1911 + $0x110] sm:$0xff]
      %v1992 = vld [vmem:[%s1911 + $0x118] sm:$0xff]
      %v1993 = vld [vmem:[%s1911 + $0x120] sm:$0xff]
      %v1994 = vld [vmem:[%s1911 + $0x128] sm:$0xff]
      %v1995 = vld [vmem:[%s1911 + $0x130] sm:$0xff]
      %v1996 = vld [vmem:[%s1911 + $0x138] sm:$0xff]
      %v1997 = vld [vmem:[%s1911 + $0x140] sm:$0xff]
      %v1998 = vld [vmem:[%s1911 + $0x148] sm:$0xff]
      %v1999 = vld [vmem:[%s1911 + $0x150] sm:$0xff]
      %v2000 = vld [vmem:[%s1911 + $0x158] sm:$0xff]
      %v2001 = vld [vmem:[%s1911 + $0x160] sm:$0xff]
      %v2002 = vld [vmem:[%s1911 + $0x168] sm:$0xff]
      %v2003 = vld [vmem:[%s1911 + $0x170] sm:$0xff]
      %v2004 = vld [vmem:[%s1911 + $0x178] sm:$0xff]
      %v2005 = vld [vmem:[%s1911 + $0x180] sm:$0xff]
      %v2006 = vld [vmem:[%s1911 + $0x188] sm:$0xff]
      %v2007 = vld [vmem:[%s1911 + $0x190] sm:$0xff]
      %v2008 = vld [vmem:[%s1911 + $0x198] sm:$0xff]
      %v2009 = vld [vmem:[%s1911 + $0x1a0] sm:$0xff]
      %v2010 = vld [vmem:[%s1911 + $0x1a8] sm:$0xff]
      %v2011 = vld [vmem:[%s1911 + $0x1b0] sm:$0xff]
      %v2012 = vld [vmem:[%s1911 + $0x1b8] sm:$0xff]
      %v2013 = vld [vmem:[%s1911 + $0x1c0] sm:$0xff]
      %v2014 = vld [vmem:[%s1911 + $0x1c8] sm:$0xff]
      %v2015 = vld [vmem:[%s1911 + $0x1d0] sm:$0xff]
      %v2016 = vld [vmem:[%s1911 + $0x1d8] sm:$0xff]
      %v2017 = vld [vmem:[%s1911 + $0x1e0] sm:$0xff]
      %v2018 = vld [vmem:[%s1911 + $0x1e8] sm:$0xff]
      %v2019 = vld [vmem:[%s1911 + $0x1f0] sm:$0xff]
      %v2020 = vld [vmem:[%s1911 + $0x1f8] sm:$0xff]
      %v2021 = vld [vmem:[%s1911 + $0x200] sm:$0xff]
      %v2022 = vld [vmem:[%s1911 + $0x208] sm:$0xff]
      %v2023 = vld [vmem:[%s1911 + $0x210] sm:$0xff]
      %v2024 = vld [vmem:[%s1911 + $0x218] sm:$0xff]
      %v2025 = vld [vmem:[%s1911 + $0x220] sm:$0xff]
      %v2026 = vld [vmem:[%s1911 + $0x228] sm:$0xff]
      %v2027 = vld [vmem:[%s1911 + $0x230] sm:$0xff]
      %v2028 = vld [vmem:[%s1911 + $0x238] sm:$0xff]
      %v2029 = vld [vmem:[%s1911 + $0x240] sm:$0xff]
      %v2030 = vld [vmem:[%s1911 + $0x248] sm:$0xff]
      %v2031 = vld [vmem:[%s1911 + $0x250] sm:$0xff]
      %v2032 = vld [vmem:[%s1911 + $0x258] sm:$0xff]
      %v2033 = vld [vmem:[%s1911 + $0x260] sm:$0xff]
      %v2034 = vld [vmem:[%s1911 + $0x268] sm:$0xff]
      %v2035 = vld [vmem:[%s1911 + $0x270] sm:$0xff]
      %v2036 = vld [vmem:[%s1911 + $0x278] sm:$0xff]
      %s2037 = scalar_lea.vmem [#allocation2], 64
      %v2038 = vld [vmem:[%s2037] sm:$0xff]
      %v2039 = vld [vmem:[%s2037 + $0x8] sm:$0xff]
      %v2040 = vld [vmem:[%s2037 + $0x10] sm:$0xff]
      %v2041 = vld [vmem:[%s2037 + $0x18] sm:$0xff]
      %v2042 = vld [vmem:[%s2037 + $0x20] sm:$0xff]
      %v2043 = vld [vmem:[%s2037 + $0x28] sm:$0xff]
      %v2044 = vld [vmem:[%s2037 + $0x30] sm:$0xff]
      %v2045 = vld [vmem:[%s2037 + $0x38] sm:$0xff]
      %v2046 = vld [vmem:[%s2037 + $0x40] sm:$0xff]
      %v2047 = vld [vmem:[%s2037 + $0x48] sm:$0xff]
      %v2048 = vld [vmem:[%s2037 + $0x50] sm:$0xff]
      %v2049 = vld [vmem:[%s2037 + $0x58] sm:$0xff]
      %v2050 = vld [vmem:[%s2037 + $0x60] sm:$0xff]
      %v2051 = vld [vmem:[%s2037 + $0x68] sm:$0xff]
      %v2052 = vld [vmem:[%s2037 + $0x70] sm:$0xff]
      %v2053 = vld [vmem:[%s2037 + $0x78] sm:$0xff]
      %v2054 = vld [vmem:[%s2037 + $0x80] sm:$0xff]
      %v2055 = vld [vmem:[%s2037 + $0x88] sm:$0xff]
      %v2056 = vld [vmem:[%s2037 + $0x90] sm:$0xff]
      %v2057 = vld [vmem:[%s2037 + $0x98] sm:$0xff]
      %v2058 = vld [vmem:[%s2037 + $0xa0] sm:$0xff]
      %v2059 = vld [vmem:[%s2037 + $0xa8] sm:$0xff]
      %v2060 = vld [vmem:[%s2037 + $0xb0] sm:$0xff]
      %v2061 = vld [vmem:[%s2037 + $0xb8] sm:$0xff]
      %v2062 = vld [vmem:[%s2037 + $0xc0] sm:$0xff]
      %v2063 = vld [vmem:[%s2037 + $0xc8] sm:$0xff]
      %v2064 = vld [vmem:[%s2037 + $0xd0] sm:$0xff]
      %v2065 = vld [vmem:[%s2037 + $0xd8] sm:$0xff]
      %v2066 = vld [vmem:[%s2037 + $0xe0] sm:$0xff]
      %v2067 = vld [vmem:[%s2037 + $0xe8] sm:$0xff]
      %v2068 = vld [vmem:[%s2037 + $0xf0] sm:$0xff]
      %v2069 = vld [vmem:[%s2037 + $0xf8] sm:$0xff]
      %v2070 = vld [vmem:[%s2037 + $0x100] sm:$0xff]
      %v2071 = vld [vmem:[%s2037 + $0x108] sm:$0xff]
      %v2072 = vld [vmem:[%s2037 + $0x110] sm:$0xff]
      %v2073 = vld [vmem:[%s2037 + $0x118] sm:$0xff]
      %v2074 = vld [vmem:[%s2037 + $0x120] sm:$0xff]
      %v2075 = vld [vmem:[%s2037 + $0x128] sm:$0xff]
      %v2076 = vld [vmem:[%s2037 + $0x130] sm:$0xff]
      %v2077 = vld [vmem:[%s2037 + $0x138] sm:$0xff]
      %v2078 = vld [vmem:[%s2037 + $0x140] sm:$0xff]
      %v2079 = vld [vmem:[%s2037 + $0x148] sm:$0xff]
      %v2080 = vld [vmem:[%s2037 + $0x150] sm:$0xff]
      %v2081 = vld [vmem:[%s2037 + $0x158] sm:$0xff]
      %v2082 = vld [vmem:[%s2037 + $0x160] sm:$0xff]
      %v2083 = vld [vmem:[%s2037 + $0x168] sm:$0xff]
      %v2084 = vld [vmem:[%s2037 + $0x170] sm:$0xff]
      %v2085 = vld [vmem:[%s2037 + $0x178] sm:$0xff]
      %v2086 = vld [vmem:[%s2037 + $0x180] sm:$0xff]
      %v2087 = vld [vmem:[%s2037 + $0x188] sm:$0xff]
      %v2088 = vld [vmem:[%s2037 + $0x190] sm:$0xff]
      %v2089 = vld [vmem:[%s2037 + $0x198] sm:$0xff]
      %v2090 = vld [vmem:[%s2037 + $0x1a0] sm:$0xff]
      %v2091 = vld [vmem:[%s2037 + $0x1a8] sm:$0xff]
      %v2092 = vld [vmem:[%s2037 + $0x1b0] sm:$0xff]
      %v2093 = vld [vmem:[%s2037 + $0x1b8] sm:$0xff]
      %v2094 = vld [vmem:[%s2037 + $0x1c0] sm:$0xff]
      %v2095 = vld [vmem:[%s2037 + $0x1c8] sm:$0xff]
      %v2096 = vld [vmem:[%s2037 + $0x1d0] sm:$0xff]
      %v2097 = vld [vmem:[%s2037 + $0x1d8] sm:$0xff]
      %v2098 = vld [vmem:[%s2037 + $0x1e0] sm:$0xff]
      %v2099 = vld [vmem:[%s2037 + $0x1e8] sm:$0xff]
      %v2100 = vld [vmem:[%s2037 + $0x1f0] sm:$0xff]
      %v2101 = vld [vmem:[%s2037 + $0x1f8] sm:$0xff]
      %v2102 = vld [vmem:[%s2037 + $0x200] sm:$0xff]
      %v2103 = vld [vmem:[%s2037 + $0x208] sm:$0xff]
      %v2104 = vld [vmem:[%s2037 + $0x210] sm:$0xff]
      %v2105 = vld [vmem:[%s2037 + $0x218] sm:$0xff]
      %v2106 = vld [vmem:[%s2037 + $0x220] sm:$0xff]
      %v2107 = vld [vmem:[%s2037 + $0x228] sm:$0xff]
      %v2108 = vld [vmem:[%s2037 + $0x230] sm:$0xff]
      %v2109 = vld [vmem:[%s2037 + $0x238] sm:$0xff]
      %v2110 = vld [vmem:[%s2037 + $0x240] sm:$0xff]
      %v2111 = vld [vmem:[%s2037 + $0x248] sm:$0xff]
      %v2112 = vld [vmem:[%s2037 + $0x250] sm:$0xff]
      %v2113 = vld [vmem:[%s2037 + $0x258] sm:$0xff]
      %v2114 = vld [vmem:[%s2037 + $0x260] sm:$0xff]
      %v2115 = vld [vmem:[%s2037 + $0x268] sm:$0xff]
      %v2116 = vld [vmem:[%s2037 + $0x270] sm:$0xff]
      %v2117 = vld [vmem:[%s2037 + $0x278] sm:$0xff]
      %s2118 = scalar_lea.vmem [#allocation2], 96
      %v2119 = vld [vmem:[%s2118] sm:$0xff]
      %v2120 = vld [vmem:[%s2118 + $0x8] sm:$0xff]
      %v2121 = vld [vmem:[%s2118 + $0x10] sm:$0xff]
      %v2122 = vld [vmem:[%s2118 + $0x18] sm:$0xff]
      %v2123 = vld [vmem:[%s2118 + $0x20] sm:$0xff]
      %v2124 = vld [vmem:[%s2118 + $0x28] sm:$0xff]
      %v2125 = vld [vmem:[%s2118 + $0x30] sm:$0xff]
      %v2126 = vld [vmem:[%s2118 + $0x38] sm:$0xff]
      %v2127 = vld [vmem:[%s2118 + $0x40] sm:$0xff]
      %v2128 = vld [vmem:[%s2118 + $0x48] sm:$0xff]
      %v2129 = vld [vmem:[%s2118 + $0x50] sm:$0xff]
      %v2130 = vld [vmem:[%s2118 + $0x58] sm:$0xff]
      %v2131 = vld [vmem:[%s2118 + $0x60] sm:$0xff]
      %v2132 = vld [vmem:[%s2118 + $0x68] sm:$0xff]
      %v2133 = vld [vmem:[%s2118 + $0x70] sm:$0xff]
      %v2134 = vld [vmem:[%s2118 + $0x78] sm:$0xff]
      %v2135 = vld [vmem:[%s2118 + $0x80] sm:$0xff]
      %v2136 = vld [vmem:[%s2118 + $0x88] sm:$0xff]
      %v2137 = vld [vmem:[%s2118 + $0x90] sm:$0xff]
      %v2138 = vld [vmem:[%s2118 + $0x98] sm:$0xff]
      %v2139 = vld [vmem:[%s2118 + $0xa0] sm:$0xff]
      %v2140 = vld [vmem:[%s2118 + $0xa8] sm:$0xff]
      %v2141 = vld [vmem:[%s2118 + $0xb0] sm:$0xff]
      %v2142 = vld [vmem:[%s2118 + $0xb8] sm:$0xff]
      %v2143 = vld [vmem:[%s2118 + $0xc0] sm:$0xff]
      %v2144 = vld [vmem:[%s2118 + $0xc8] sm:$0xff]
      %v2145 = vld [vmem:[%s2118 + $0xd0] sm:$0xff]
      %v2146 = vld [vmem:[%s2118 + $0xd8] sm:$0xff]
      %v2147 = vld [vmem:[%s2118 + $0xe0] sm:$0xff]
      %v2148 = vld [vmem:[%s2118 + $0xe8] sm:$0xff]
      %v2149 = vld [vmem:[%s2118 + $0xf0] sm:$0xff]
      %v2150 = vld [vmem:[%s2118 + $0xf8] sm:$0xff]
      %v2151 = vld [vmem:[%s2118 + $0x100] sm:$0xff]
      %v2152 = vld [vmem:[%s2118 + $0x108] sm:$0xff]
      %v2153 = vld [vmem:[%s2118 + $0x110] sm:$0xff]
      %v2154 = vld [vmem:[%s2118 + $0x118] sm:$0xff]
      %v2155 = vld [vmem:[%s2118 + $0x120] sm:$0xff]
      %v2156 = vld [vmem:[%s2118 + $0x128] sm:$0xff]
      %v2157 = vld [vmem:[%s2118 + $0x130] sm:$0xff]
      %v2158 = vld [vmem:[%s2118 + $0x138] sm:$0xff]
      %v2159 = vld [vmem:[%s2118 + $0x140] sm:$0xff]
      %v2160 = vld [vmem:[%s2118 + $0x148] sm:$0xff]
      %v2161 = vld [vmem:[%s2118 + $0x150] sm:$0xff]
      %v2162 = vld [vmem:[%s2118 + $0x158] sm:$0xff]
      %v2163 = vld [vmem:[%s2118 + $0x160] sm:$0xff]
      %v2164 = vld [vmem:[%s2118 + $0x168] sm:$0xff]
      %v2165 = vld [vmem:[%s2118 + $0x170] sm:$0xff]
      %v2166 = vld [vmem:[%s2118 + $0x178] sm:$0xff]
      %v2167 = vld [vmem:[%s2118 + $0x180] sm:$0xff]
      %v2168 = vld [vmem:[%s2118 + $0x188] sm:$0xff]
      %v2169 = vld [vmem:[%s2118 + $0x190] sm:$0xff]
      %v2170 = vld [vmem:[%s2118 + $0x198] sm:$0xff]
      %v2171 = vld [vmem:[%s2118 + $0x1a0] sm:$0xff]
      %v2172 = vld [vmem:[%s2118 + $0x1a8] sm:$0xff]
      %v2173 = vld [vmem:[%s2118 + $0x1b0] sm:$0xff]
      %v2174 = vld [vmem:[%s2118 + $0x1b8] sm:$0xff]
      %v2175 = vld [vmem:[%s2118 + $0x1c0] sm:$0xff]
      %v2176 = vld [vmem:[%s2118 + $0x1c8] sm:$0xff]
      %v2177 = vld [vmem:[%s2118 + $0x1d0] sm:$0xff]
      %v2178 = vld [vmem:[%s2118 + $0x1d8] sm:$0xff]
      %v2179 = vld [vmem:[%s2118 + $0x1e0] sm:$0xff]
      %v2180 = vld [vmem:[%s2118 + $0x1e8] sm:$0xff]
      %v2181 = vld [vmem:[%s2118 + $0x1f0] sm:$0xff]
      %v2182 = vld [vmem:[%s2118 + $0x1f8] sm:$0xff]
      %v2183 = vld [vmem:[%s2118 + $0x200] sm:$0xff]
      %v2184 = vld [vmem:[%s2118 + $0x208] sm:$0xff]
      %v2185 = vld [vmem:[%s2118 + $0x210] sm:$0xff]
      %v2186 = vld [vmem:[%s2118 + $0x218] sm:$0xff]
      %v2187 = vld [vmem:[%s2118 + $0x220] sm:$0xff]
      %v2188 = vld [vmem:[%s2118 + $0x228] sm:$0xff]
      %v2189 = vld [vmem:[%s2118 + $0x230] sm:$0xff]
      %v2190 = vld [vmem:[%s2118 + $0x238] sm:$0xff]
      %v2191 = vld [vmem:[%s2118 + $0x240] sm:$0xff]
      %v2192 = vld [vmem:[%s2118 + $0x248] sm:$0xff]
      %v2193 = vld [vmem:[%s2118 + $0x250] sm:$0xff]
      %v2194 = vld [vmem:[%s2118 + $0x258] sm:$0xff]
      %v2195 = vld [vmem:[%s2118 + $0x260] sm:$0xff]
      %v2196 = vld [vmem:[%s2118 + $0x268] sm:$0xff]
      %v2197 = vld [vmem:[%s2118 + $0x270] sm:$0xff]
      %v2198 = vld [vmem:[%s2118 + $0x278] sm:$0xff]
      %v2199 = vld [vmem:[%s2] sm:$0x1]
      %v2200 = vlaneseq
      %v2201 = vshrl.u32 %v2200, 7
      %v2202 = vsub.s32 0, %v2201
      %v2203 = vrot.slane %v2199, %v2202
      %v2204 = vmul.f32 %v1957, %v2203
      %v2205 = vmul.f32 %v1958, %v2203
      %v2206 = vmul.f32 %v1959, %v2203
      %v2207 = vmul.f32 %v1961, %v2203
      %v2208 = vmul.f32 %v1962, %v2203
      %v2209 = vmul.f32 %v1963, %v2203
      %v2210 = vmul.f32 %v1965, %v2203
      %v2211 = vmul.f32 %v1966, %v2203
      %v2212 = vmul.f32 %v1967, %v2203
      %v2213 = vmul.f32 %v1969, %v2203
      %v2214 = vmul.f32 %v1970, %v2203
      %v2215 = vmul.f32 %v1971, %v2203
      %v2216 = vmul.f32 %v1973, %v2203
      %v2217 = vmul.f32 %v1974, %v2203
      %v2218 = vmul.f32 %v1975, %v2203
      %v2219 = vmul.f32 %v1977, %v2203
      %v2220 = vmul.f32 %v1978, %v2203
      %v2221 = vmul.f32 %v1979, %v2203
      %v2222 = vmul.f32 %v1981, %v2203
      %v2223 = vmul.f32 %v1982, %v2203
      %v2224 = vmul.f32 %v1983, %v2203
      %v2225 = vmul.f32 %v1985, %v2203
      %v2226 = vmul.f32 %v1986, %v2203
      %v2227 = vmul.f32 %v1987, %v2203
      %v2228 = vmul.f32 %v1989, %v2203
      %v2229 = vmul.f32 %v1990, %v2203
      %v2230 = vmul.f32 %v1991, %v2203
      %v2231 = vmul.f32 %v1993, %v2203
      %v2232 = vmul.f32 %v1994, %v2203
      %v2233 = vmul.f32 %v1995, %v2203
      %v2234 = vmul.f32 %v1997, %v2203
      %v2235 = vmul.f32 %v1998, %v2203
      %v2236 = vmul.f32 %v1999, %v2203
      %v2237 = vmul.f32 %v2001, %v2203
      %v2238 = vmul.f32 %v2002, %v2203
      %v2239 = vmul.f32 %v2003, %v2203
      %v2240 = vmul.f32 %v2005, %v2203
      %v2241 = vmul.f32 %v2006, %v2203
      %v2242 = vmul.f32 %v2007, %v2203
      %v2243 = vmul.f32 %v2009, %v2203
      %v2244 = vmul.f32 %v2010, %v2203
      %v2245 = vmul.f32 %v2011, %v2203
      %v2246 = vmul.f32 %v2013, %v2203
      %v2247 = vmul.f32 %v2014, %v2203
      %v2248 = vmul.f32 %v2015, %v2203
      %v2249 = vmul.f32 %v2017, %v2203
      %v2250 = vmul.f32 %v2018, %v2203
      %v2251 = vmul.f32 %v2019, %v2203
      %v2252 = vmul.f32 %v2021, %v2203
      %v2253 = vmul.f32 %v2022, %v2203
      %v2254 = vmul.f32 %v2023, %v2203
      %v2255 = vmul.f32 %v2025, %v2203
      %v2256 = vmul.f32 %v2026, %v2203
      %v2257 = vmul.f32 %v2027, %v2203
      %v2258 = vmul.f32 %v2029, %v2203
      %v2259 = vmul.f32 %v2030, %v2203
      %v2260 = vmul.f32 %v2031, %v2203
      %v2261 = vmul.f32 %v2033, %v2203
      %v2262 = vmul.f32 %v2034, %v2203
      %v2263 = vmul.f32 %v2035, %v2203
      %s2264 = scalar_lea.vmem %s2, 4
      %v2265 = vld [vmem:[%s2264] sm:$0x1]
      %v2266 = vlaneseq
      %v2267 = vshrl.u32 %v2266, 7
      %v2268 = vsub.s32 0, %v2267
      %v2269 = vrot.slane %v2265, %v2268
      %v2270 = vmul.f32 %v2038, %v2269
      %v2271 = vmul.f32 %v2039, %v2269
      %v2272 = vmul.f32 %v2040, %v2269
      %v2273 = vmul.f32 %v2042, %v2269
      %v2274 = vmul.f32 %v2043, %v2269
      %v2275 = vmul.f32 %v2044, %v2269
      %v2276 = vmul.f32 %v2046, %v2269
      %v2277 = vmul.f32 %v2047, %v2269
      %v2278 = vmul.f32 %v2048, %v2269
      %v2279 = vmul.f32 %v2050, %v2269
      %v2280 = vmul.f32 %v2051, %v2269
      %v2281 = vmul.f32 %v2052, %v2269
      %v2282 = vmul.f32 %v2054, %v2269
      %v2283 = vmul.f32 %v2055, %v2269
      %v2284 = vmul.f32 %v2056, %v2269
      %v2285 = vmul.f32 %v2058, %v2269
      %v2286 = vmul.f32 %v2059, %v2269
      %v2287 = vmul.f32 %v2060, %v2269
      %v2288 = vmul.f32 %v2062, %v2269
      %v2289 = vmul.f32 %v2063, %v2269
      %v2290 = vmul.f32 %v2064, %v2269
      %v2291 = vmul.f32 %v2066, %v2269
      %v2292 = vmul.f32 %v2067, %v2269
      %v2293 = vmul.f32 %v2068, %v2269
      %v2294 = vmul.f32 %v2070, %v2269
      %v2295 = vmul.f32 %v2071, %v2269
      %v2296 = vmul.f32 %v2072, %v2269
      %v2297 = vmul.f32 %v2074, %v2269
      %v2298 = vmul.f32 %v2075, %v2269
      %v2299 = vmul.f32 %v2076, %v2269
      %v2300 = vmul.f32 %v2078, %v2269
      %v2301 = vmul.f32 %v2079, %v2269
      %v2302 = vmul.f32 %v2080, %v2269
      %v2303 = vmul.f32 %v2082, %v2269
      %v2304 = vmul.f32 %v2083, %v2269
      %v2305 = vmul.f32 %v2084, %v2269
      %v2306 = vmul.f32 %v2086, %v2269
      %v2307 = vmul.f32 %v2087, %v2269
      %v2308 = vmul.f32 %v2088, %v2269
      %v2309 = vmul.f32 %v2090, %v2269
      %v2310 = vmul.f32 %v2091, %v2269
      %v2311 = vmul.f32 %v2092, %v2269
      %v2312 = vmul.f32 %v2094, %v2269
      %v2313 = vmul.f32 %v2095, %v2269
      %v2314 = vmul.f32 %v2096, %v2269
      %v2315 = vmul.f32 %v2098, %v2269
      %v2316 = vmul.f32 %v2099, %v2269
      %v2317 = vmul.f32 %v2100, %v2269
      %v2318 = vmul.f32 %v2102, %v2269
      %v2319 = vmul.f32 %v2103, %v2269
      %v2320 = vmul.f32 %v2104, %v2269
      %v2321 = vmul.f32 %v2106, %v2269
      %v2322 = vmul.f32 %v2107, %v2269
      %v2323 = vmul.f32 %v2108, %v2269
      %v2324 = vmul.f32 %v2110, %v2269
      %v2325 = vmul.f32 %v2111, %v2269
      %v2326 = vmul.f32 %v2112, %v2269
      %v2327 = vmul.f32 %v2114, %v2269
      %v2328 = vmul.f32 %v2115, %v2269
      %v2329 = vmul.f32 %v2116, %v2269
      %v2330 = vadd.f32 %v2204, %v2270
      %v2331 = vadd.f32 %v2205, %v2271
      %v2332 = vadd.f32 %v2206, %v2272
      %v2333 = vadd.f32 %v2207, %v2273
      %v2334 = vadd.f32 %v2208, %v2274
      %v2335 = vadd.f32 %v2209, %v2275
      %v2336 = vadd.f32 %v2210, %v2276
      %v2337 = vadd.f32 %v2211, %v2277
      %v2338 = vadd.f32 %v2212, %v2278
      %v2339 = vadd.f32 %v2213, %v2279
      %v2340 = vadd.f32 %v2214, %v2280
      %v2341 = vadd.f32 %v2215, %v2281
      %v2342 = vadd.f32 %v2216, %v2282
      %v2343 = vadd.f32 %v2217, %v2283
      %v2344 = vadd.f32 %v2218, %v2284
      %v2345 = vadd.f32 %v2219, %v2285
      %v2346 = vadd.f32 %v2220, %v2286
      %v2347 = vadd.f32 %v2221, %v2287
      %v2348 = vadd.f32 %v2222, %v2288
      %v2349 = vadd.f32 %v2223, %v2289
      %v2350 = vadd.f32 %v2224, %v2290
      %v2351 = vadd.f32 %v2225, %v2291
      %v2352 = vadd.f32 %v2226, %v2292
      %v2353 = vadd.f32 %v2227, %v2293
      %v2354 = vadd.f32 %v2228, %v2294
      %v2355 = vadd.f32 %v2229, %v2295
      %v2356 = vadd.f32 %v2230, %v2296
      %v2357 = vadd.f32 %v2231, %v2297
      %v2358 = vadd.f32 %v2232, %v2298
      %v2359 = vadd.f32 %v2233, %v2299
      %v2360 = vadd.f32 %v2234, %v2300
      %v2361 = vadd.f32 %v2235, %v2301
      %v2362 = vadd.f32 %v2236, %v2302
      %v2363 = vadd.f32 %v2237, %v2303
      %v2364 = vadd.f32 %v2238, %v2304
      %v2365 = vadd.f32 %v2239, %v2305
      %v2366 = vadd.f32 %v2240, %v2306
      %v2367 = vadd.f32 %v2241, %v2307
      %v2368 = vadd.f32 %v2242, %v2308
      %v2369 = vadd.f32 %v2243, %v2309
      %v2370 = vadd.f32 %v2244, %v2310
      %v2371 = vadd.f32 %v2245, %v2311
      %v2372 = vadd.f32 %v2246, %v2312
      %v2373 = vadd.f32 %v2247, %v2313
      %v2374 = vadd.f32 %v2248, %v2314
      %v2375 = vadd.f32 %v2249, %v2315
      %v2376 = vadd.f32 %v2250, %v2316
      %v2377 = vadd.f32 %v2251, %v2317
      %v2378 = vadd.f32 %v2252, %v2318
      %v2379 = vadd.f32 %v2253, %v2319
      %v2380 = vadd.f32 %v2254, %v2320
      %v2381 = vadd.f32 %v2255, %v2321
      %v2382 = vadd.f32 %v2256, %v2322
      %v2383 = vadd.f32 %v2257, %v2323
      %v2384 = vadd.f32 %v2258, %v2324
      %v2385 = vadd.f32 %v2259, %v2325
      %v2386 = vadd.f32 %v2260, %v2326
      %v2387 = vadd.f32 %v2261, %v2327
      %v2388 = vadd.f32 %v2262, %v2328
      %v2389 = vadd.f32 %v2263, %v2329
      %s2390 = scalar_lea.vmem %s2, 8
      %v2391 = vld [vmem:[%s2390] sm:$0x1]
      %v2392 = vlaneseq
      %v2393 = vshrl.u32 %v2392, 7
      %v2394 = vsub.s32 0, %v2393
      %v2395 = vrot.slane %v2391, %v2394
      %v2396 = vmul.f32 %v2119, %v2395
      %v2397 = vmul.f32 %v2120, %v2395
      %v2398 = vmul.f32 %v2121, %v2395
      %v2399 = vmul.f32 %v2123, %v2395
      %v2400 = vmul.f32 %v2124, %v2395
      %v2401 = vmul.f32 %v2125, %v2395
      %v2402 = vmul.f32 %v2127, %v2395
      %v2403 = vmul.f32 %v2128, %v2395
      %v2404 = vmul.f32 %v2129, %v2395
      %v2405 = vmul.f32 %v2131, %v2395
      %v2406 = vmul.f32 %v2132, %v2395
      %v2407 = vmul.f32 %v2133, %v2395
      %v2408 = vmul.f32 %v2135, %v2395
      %v2409 = vmul.f32 %v2136, %v2395
      %v2410 = vmul.f32 %v2137, %v2395
      %v2411 = vmul.f32 %v2139, %v2395
      %v2412 = vmul.f32 %v2140, %v2395
      %v2413 = vmul.f32 %v2141, %v2395
      %v2414 = vmul.f32 %v2143, %v2395
      %v2415 = vmul.f32 %v2144, %v2395
      %v2416 = vmul.f32 %v2145, %v2395
      %v2417 = vmul.f32 %v2147, %v2395
      %v2418 = vmul.f32 %v2148, %v2395
      %v2419 = vmul.f32 %v2149, %v2395
      %v2420 = vmul.f32 %v2151, %v2395
      %v2421 = vmul.f32 %v2152, %v2395
      %v2422 = vmul.f32 %v2153, %v2395
      %v2423 = vmul.f32 %v2155, %v2395
      %v2424 = vmul.f32 %v2156, %v2395
      %v2425 = vmul.f32 %v2157, %v2395
      %v2426 = vmul.f32 %v2159, %v2395
      %v2427 = vmul.f32 %v2160, %v2395
      %v2428 = vmul.f32 %v2161, %v2395
      %v2429 = vmul.f32 %v2163, %v2395
      %v2430 = vmul.f32 %v2164, %v2395
      %v2431 = vmul.f32 %v2165, %v2395
      %v2432 = vmul.f32 %v2167, %v2395
      %v2433 = vmul.f32 %v2168, %v2395
      %v2434 = vmul.f32 %v2169, %v2395
      %v2435 = vmul.f32 %v2171, %v2395
      %v2436 = vmul.f32 %v2172, %v2395
      %v2437 = vmul.f32 %v2173, %v2395
      %v2438 = vmul.f32 %v2175, %v2395
      %v2439 = vmul.f32 %v2176, %v2395
      %v2440 = vmul.f32 %v2177, %v2395
      %v2441 = vmul.f32 %v2179, %v2395
      %v2442 = vmul.f32 %v2180, %v2395
      %v2443 = vmul.f32 %v2181, %v2395
      %v2444 = vmul.f32 %v2183, %v2395
      %v2445 = vmul.f32 %v2184, %v2395
      %v2446 = vmul.f32 %v2185, %v2395
      %v2447 = vmul.f32 %v2187, %v2395
      %v2448 = vmul.f32 %v2188, %v2395
      %v2449 = vmul.f32 %v2189, %v2395
      %v2450 = vmul.f32 %v2191, %v2395
      %v2451 = vmul.f32 %v2192, %v2395
      %v2452 = vmul.f32 %v2193, %v2395
      %v2453 = vmul.f32 %v2195, %v2395
      %v2454 = vmul.f32 %v2196, %v2395
      %v2455 = vmul.f32 %v2197, %v2395
      %v2456 = vadd.f32 %v2330, %v2396
      %v2457 = vadd.f32 %v2331, %v2397
      %v2458 = vadd.f32 %v2332, %v2398
      %v2459 = vadd.f32 %v2333, %v2399
      %v2460 = vadd.f32 %v2334, %v2400
      %v2461 = vadd.f32 %v2335, %v2401
      %v2462 = vadd.f32 %v2336, %v2402
      %v2463 = vadd.f32 %v2337, %v2403
      %v2464 = vadd.f32 %v2338, %v2404
      %v2465 = vadd.f32 %v2339, %v2405
      %v2466 = vadd.f32 %v2340, %v2406
      %v2467 = vadd.f32 %v2341, %v2407
      %v2468 = vadd.f32 %v2342, %v2408
      %v2469 = vadd.f32 %v2343, %v2409
      %v2470 = vadd.f32 %v2344, %v2410
      %v2471 = vadd.f32 %v2345, %v2411
      %v2472 = vadd.f32 %v2346, %v2412
      %v2473 = vadd.f32 %v2347, %v2413
      %v2474 = vadd.f32 %v2348, %v2414
      %v2475 = vadd.f32 %v2349, %v2415
      %v2476 = vadd.f32 %v2350, %v2416
      %v2477 = vadd.f32 %v2351, %v2417
      %v2478 = vadd.f32 %v2352, %v2418
      %v2479 = vadd.f32 %v2353, %v2419
      %v2480 = vadd.f32 %v2354, %v2420
      %v2481 = vadd.f32 %v2355, %v2421
      %v2482 = vadd.f32 %v2356, %v2422
      %v2483 = vadd.f32 %v2357, %v2423
      %v2484 = vadd.f32 %v2358, %v2424
      %v2485 = vadd.f32 %v2359, %v2425
      %v2486 = vadd.f32 %v2360, %v2426
      %v2487 = vadd.f32 %v2361, %v2427
      %v2488 = vadd.f32 %v2362, %v2428
      %v2489 = vadd.f32 %v2363, %v2429
      %v2490 = vadd.f32 %v2364, %v2430
      %v2491 = vadd.f32 %v2365, %v2431
      %v2492 = vadd.f32 %v2366, %v2432
      %v2493 = vadd.f32 %v2367, %v2433
      %v2494 = vadd.f32 %v2368, %v2434
      %v2495 = vadd.f32 %v2369, %v2435
      %v2496 = vadd.f32 %v2370, %v2436
      %v2497 = vadd.f32 %v2371, %v2437
      %v2498 = vadd.f32 %v2372, %v2438
      %v2499 = vadd.f32 %v2373, %v2439
      %v2500 = vadd.f32 %v2374, %v2440
      %v2501 = vadd.f32 %v2375, %v2441
      %v2502 = vadd.f32 %v2376, %v2442
      %v2503 = vadd.f32 %v2377, %v2443
      %v2504 = vadd.f32 %v2378, %v2444
      %v2505 = vadd.f32 %v2379, %v2445
      %v2506 = vadd.f32 %v2380, %v2446
      %v2507 = vadd.f32 %v2381, %v2447
      %v2508 = vadd.f32 %v2382, %v2448
      %v2509 = vadd.f32 %v2383, %v2449
      %v2510 = vadd.f32 %v2384, %v2450
      %v2511 = vadd.f32 %v2385, %v2451
      %v2512 = vadd.f32 %v2386, %v2452
      %v2513 = vadd.f32 %v2387, %v2453
      %v2514 = vadd.f32 %v2388, %v2454
      %v2515 = vadd.f32 %v2389, %v2455
      %v2516 = vld [vmem:[%s2 + $0x1] sm:$0x1]
      %v2517 = vlaneseq
      %v2518 = vshrl.u32 %v2517, 7
      %v2519 = vsub.s32 0, %v2518
      %v2520 = vrot.slane %v2516, %v2519
      %v2521 = vmul.f32 %v1958, %v2520
      %v2522 = vmul.f32 %v1959, %v2520
      %v2523 = vmul.f32 %v1962, %v2520
      %v2524 = vmul.f32 %v1963, %v2520
      %v2525 = vmul.f32 %v1966, %v2520
      %v2526 = vmul.f32 %v1967, %v2520
      %v2527 = vmul.f32 %v1970, %v2520
      %v2528 = vmul.f32 %v1971, %v2520
      %v2529 = vmul.f32 %v1974, %v2520
      %v2530 = vmul.f32 %v1975, %v2520
      %v2531 = vmul.f32 %v1978, %v2520
      %v2532 = vmul.f32 %v1979, %v2520
      %v2533 = vmul.f32 %v1982, %v2520
      %v2534 = vmul.f32 %v1983, %v2520
      %v2535 = vmul.f32 %v1986, %v2520
      %v2536 = vmul.f32 %v1987, %v2520
      %v2537 = vmul.f32 %v1990, %v2520
      %v2538 = vmul.f32 %v1991, %v2520
      %v2539 = vmul.f32 %v1994, %v2520
      %v2540 = vmul.f32 %v1995, %v2520
      %v2541 = vmul.f32 %v1998, %v2520
      %v2542 = vmul.f32 %v1999, %v2520
      %v2543 = vmul.f32 %v2002, %v2520
      %v2544 = vmul.f32 %v2003, %v2520
      %v2545 = vmul.f32 %v2006, %v2520
      %v2546 = vmul.f32 %v2007, %v2520
      %v2547 = vmul.f32 %v2010, %v2520
      %v2548 = vmul.f32 %v2011, %v2520
      %v2549 = vmul.f32 %v2014, %v2520
      %v2550 = vmul.f32 %v2015, %v2520
      %v2551 = vmul.f32 %v2018, %v2520
      %v2552 = vmul.f32 %v2019, %v2520
      %v2553 = vmul.f32 %v2022, %v2520
      %v2554 = vmul.f32 %v2023, %v2520
      %v2555 = vmul.f32 %v2026, %v2520
      %v2556 = vmul.f32 %v2027, %v2520
      %v2557 = vmul.f32 %v2030, %v2520
      %v2558 = vmul.f32 %v2031, %v2520
      %v2559 = vmul.f32 %v2034, %v2520
      %v2560 = vmul.f32 %v2035, %v2520
      %v2561 = vld [vmem:[%s2264 + $0x1] sm:$0x1]
      %v2562 = vlaneseq
      %v2563 = vshrl.u32 %v2562, 7
      %v2564 = vsub.s32 0, %v2563
      %v2565 = vrot.slane %v2561, %v2564
      %v2566 = vmul.f32 %v2039, %v2565
      %v2567 = vmul.f32 %v2040, %v2565
      %v2568 = vmul.f32 %v2043, %v2565
      %v2569 = vmul.f32 %v2044, %v2565
      %v2570 = vmul.f32 %v2047, %v2565
      %v2571 = vmul.f32 %v2048, %v2565
      %v2572 = vmul.f32 %v2051, %v2565
      %v2573 = vmul.f32 %v2052, %v2565
      %v2574 = vmul.f32 %v2055, %v2565
      %v2575 = vmul.f32 %v2056, %v2565
      %v2576 = vmul.f32 %v2059, %v2565
      %v2577 = vmul.f32 %v2060, %v2565
      %v2578 = vmul.f32 %v2063, %v2565
      %v2579 = vmul.f32 %v2064, %v2565
      %v2580 = vmul.f32 %v2067, %v2565
      %v2581 = vmul.f32 %v2068, %v2565
      %v2582 = vmul.f32 %v2071, %v2565
      %v2583 = vmul.f32 %v2072, %v2565
      %v2584 = vmul.f32 %v2075, %v2565
      %v2585 = vmul.f32 %v2076, %v2565
      %v2586 = vmul.f32 %v2079, %v2565
      %v2587 = vmul.f32 %v2080, %v2565
      %v2588 = vmul.f32 %v2083, %v2565
      %v2589 = vmul.f32 %v2084, %v2565
      %v2590 = vmul.f32 %v2087, %v2565
      %v2591 = vmul.f32 %v2088, %v2565
      %v2592 = vmul.f32 %v2091, %v2565
      %v2593 = vmul.f32 %v2092, %v2565
      %v2594 = vmul.f32 %v2095, %v2565
      %v2595 = vmul.f32 %v2096, %v2565
      %v2596 = vmul.f32 %v2099, %v2565
      %v2597 = vmul.f32 %v2100, %v2565
      %v2598 = vmul.f32 %v2103, %v2565
      %v2599 = vmul.f32 %v2104, %v2565
      %v2600 = vmul.f32 %v2107, %v2565
      %v2601 = vmul.f32 %v2108, %v2565
      %v2602 = vmul.f32 %v2111, %v2565
      %v2603 = vmul.f32 %v2112, %v2565
      %v2604 = vmul.f32 %v2115, %v2565
      %v2605 = vmul.f32 %v2116, %v2565
      %v2606 = vadd.f32 %v2521, %v2566
      %v2607 = vadd.f32 %v2522, %v2567
      %v2608 = vadd.f32 %v2523, %v2568
      %v2609 = vadd.f32 %v2524, %v2569
      %v2610 = vadd.f32 %v2525, %v2570
      %v2611 = vadd.f32 %v2526, %v2571
      %v2612 = vadd.f32 %v2527, %v2572
      %v2613 = vadd.f32 %v2528, %v2573
      %v2614 = vadd.f32 %v2529, %v2574
      %v2615 = vadd.f32 %v2530, %v2575
      %v2616 = vadd.f32 %v2531, %v2576
      %v2617 = vadd.f32 %v2532, %v2577
      %v2618 = vadd.f32 %v2533, %v2578
      %v2619 = vadd.f32 %v2534, %v2579
      %v2620 = vadd.f32 %v2535, %v2580
      %v2621 = vadd.f32 %v2536, %v2581
      %v2622 = vadd.f32 %v2537, %v2582
      %v2623 = vadd.f32 %v2538, %v2583
      %v2624 = vadd.f32 %v2539, %v2584
      %v2625 = vadd.f32 %v2540, %v2585
      %v2626 = vadd.f32 %v2541, %v2586
      %v2627 = vadd.f32 %v2542, %v2587
      %v2628 = vadd.f32 %v2543, %v2588
      %v2629 = vadd.f32 %v2544, %v2589
      %v2630 = vadd.f32 %v2545, %v2590
      %v2631 = vadd.f32 %v2546, %v2591
      %v2632 = vadd.f32 %v2547, %v2592
      %v2633 = vadd.f32 %v2548, %v2593
      %v2634 = vadd.f32 %v2549, %v2594
      %v2635 = vadd.f32 %v2550, %v2595
      %v2636 = vadd.f32 %v2551, %v2596
      %v2637 = vadd.f32 %v2552, %v2597
      %v2638 = vadd.f32 %v2553, %v2598
      %v2639 = vadd.f32 %v2554, %v2599
      %v2640 = vadd.f32 %v2555, %v2600
      %v2641 = vadd.f32 %v2556, %v2601
      %v2642 = vadd.f32 %v2557, %v2602
      %v2643 = vadd.f32 %v2558, %v2603
      %v2644 = vadd.f32 %v2559, %v2604
      %v2645 = vadd.f32 %v2560, %v2605
      %v2646 = vld [vmem:[%s2390 + $0x1] sm:$0x1]
      %v2647 = vlaneseq
      %v2648 = vshrl.u32 %v2647, 7
      %v2649 = vsub.s32 0, %v2648
      %v2650 = vrot.slane %v2646, %v2649
      %v2651 = vmul.f32 %v2120, %v2650
      %v2652 = vmul.f32 %v2121, %v2650
      %v2653 = vmul.f32 %v2124, %v2650
      %v2654 = vmul.f32 %v2125, %v2650
      %v2655 = vmul.f32 %v2128, %v2650
      %v2656 = vmul.f32 %v2129, %v2650
      %v2657 = vmul.f32 %v2132, %v2650
      %v2658 = vmul.f32 %v2133, %v2650
      %v2659 = vmul.f32 %v2136, %v2650
      %v2660 = vmul.f32 %v2137, %v2650
      %v2661 = vmul.f32 %v2140, %v2650
      %v2662 = vmul.f32 %v2141, %v2650
      %v2663 = vmul.f32 %v2144, %v2650
      %v2664 = vmul.f32 %v2145, %v2650
      %v2665 = vmul.f32 %v2148, %v2650
      %v2666 = vmul.f32 %v2149, %v2650
      %v2667 = vmul.f32 %v2152, %v2650
      %v2668 = vmul.f32 %v2153, %v2650
      %v2669 = vmul.f32 %v2156, %v2650
      %v2670 = vmul.f32 %v2157, %v2650
      %v2671 = vmul.f32 %v2160, %v2650
      %v2672 = vmul.f32 %v2161, %v2650
      %v2673 = vmul.f32 %v2164, %v2650
      %v2674 = vmul.f32 %v2165, %v2650
      %v2675 = vmul.f32 %v2168, %v2650
      %v2676 = vmul.f32 %v2169, %v2650
      %v2677 = vmul.f32 %v2172, %v2650
      %v2678 = vmul.f32 %v2173, %v2650
      %v2679 = vmul.f32 %v2176, %v2650
      %v2680 = vmul.f32 %v2177, %v2650
      %v2681 = vmul.f32 %v2180, %v2650
      %v2682 = vmul.f32 %v2181, %v2650
      %v2683 = vmul.f32 %v2184, %v2650
      %v2684 = vmul.f32 %v2185, %v2650
      %v2685 = vmul.f32 %v2188, %v2650
      %v2686 = vmul.f32 %v2189, %v2650
      %v2687 = vmul.f32 %v2192, %v2650
      %v2688 = vmul.f32 %v2193, %v2650
      %v2689 = vmul.f32 %v2196, %v2650
      %v2690 = vmul.f32 %v2197, %v2650
      %v2691 = vadd.f32 %v2606, %v2651
      %v2692 = vadd.f32 %v2607, %v2652
      %v2693 = vadd.f32 %v2608, %v2653
      %v2694 = vadd.f32 %v2609, %v2654
      %v2695 = vadd.f32 %v2610, %v2655
      %v2696 = vadd.f32 %v2611, %v2656
      %v2697 = vadd.f32 %v2612, %v2657
      %v2698 = vadd.f32 %v2613, %v2658
      %v2699 = vadd.f32 %v2614, %v2659
      %v2700 = vadd.f32 %v2615, %v2660
      %v2701 = vadd.f32 %v2616, %v2661
      %v2702 = vadd.f32 %v2617, %v2662
      %v2703 = vadd.f32 %v2618, %v2663
      %v2704 = vadd.f32 %v2619, %v2664
      %v2705 = vadd.f32 %v2620, %v2665
      %v2706 = vadd.f32 %v2621, %v2666
      %v2707 = vadd.f32 %v2622, %v2667
      %v2708 = vadd.f32 %v2623, %v2668
      %v2709 = vadd.f32 %v2624, %v2669
      %v2710 = vadd.f32 %v2625, %v2670
      %v2711 = vadd.f32 %v2626, %v2671
      %v2712 = vadd.f32 %v2627, %v2672
      %v2713 = vadd.f32 %v2628, %v2673
      %v2714 = vadd.f32 %v2629, %v2674
      %v2715 = vadd.f32 %v2630, %v2675
      %v2716 = vadd.f32 %v2631, %v2676
      %v2717 = vadd.f32 %v2632, %v2677
      %v2718 = vadd.f32 %v2633, %v2678
      %v2719 = vadd.f32 %v2634, %v2679
      %v2720 = vadd.f32 %v2635, %v2680
      %v2721 = vadd.f32 %v2636, %v2681
      %v2722 = vadd.f32 %v2637, %v2682
      %v2723 = vadd.f32 %v2638, %v2683
      %v2724 = vadd.f32 %v2639, %v2684
      %v2725 = vadd.f32 %v2640, %v2685
      %v2726 = vadd.f32 %v2641, %v2686
      %v2727 = vadd.f32 %v2642, %v2687
      %v2728 = vadd.f32 %v2643, %v2688
      %v2729 = vadd.f32 %v2644, %v2689
      %v2730 = vadd.f32 %v2645, %v2690
      %v2771 = vrot.slane %v2691, 1
      %v2772 = vrot.slane %v2692, 1
      %v2773 = vsel %vm1091, %v2771, %v2772
      %v2774 = vrot.slane %v2693, 1
      %v2775 = vrot.slane %v2694, 1
      %v2776 = vsel %vm1091, %v2774, %v2775
      %v2777 = vrot.slane %v2695, 1
      %v2778 = vrot.slane %v2696, 1
      %v2779 = vsel %vm1091, %v2777, %v2778
      %v2780 = vrot.slane %v2697, 1
      %v2781 = vrot.slane %v2698, 1
      %v2782 = vsel %vm1091, %v2780, %v2781
      %v2783 = vrot.slane %v2699, 1
      %v2784 = vrot.slane %v2700, 1
      %v2785 = vsel %vm1091, %v2783, %v2784
      %v2786 = vrot.slane %v2701, 1
      %v2787 = vrot.slane %v2702, 1
      %v2788 = vsel %vm1091, %v2786, %v2787
      %v2789 = vrot.slane %v2703, 1
      %v2790 = vrot.slane %v2704, 1
      %v2791 = vsel %vm1091, %v2789, %v2790
      %v2792 = vrot.slane %v2705, 1
      %v2793 = vrot.slane %v2706, 1
      %v2794 = vsel %vm1091, %v2792, %v2793
      %v2795 = vrot.slane %v2707, 1
      %v2796 = vrot.slane %v2708, 1
      %v2797 = vsel %vm1091, %v2795, %v2796
      %v2798 = vrot.slane %v2709, 1
      %v2799 = vrot.slane %v2710, 1
      %v2800 = vsel %vm1091, %v2798, %v2799
      %v2801 = vrot.slane %v2711, 1
      %v2802 = vrot.slane %v2712, 1
      %v2803 = vsel %vm1091, %v2801, %v2802
      %v2804 = vrot.slane %v2713, 1
      %v2805 = vrot.slane %v2714, 1
      %v2806 = vsel %vm1091, %v2804, %v2805
      %v2807 = vrot.slane %v2715, 1
      %v2808 = vrot.slane %v2716, 1
      %v2809 = vsel %vm1091, %v2807, %v2808
      %v2810 = vrot.slane %v2717, 1
      %v2811 = vrot.slane %v2718, 1
      %v2812 = vsel %vm1091, %v2810, %v2811
      %v2813 = vrot.slane %v2719, 1
      %v2814 = vrot.slane %v2720, 1
      %v2815 = vsel %vm1091, %v2813, %v2814
      %v2816 = vrot.slane %v2721, 1
      %v2817 = vrot.slane %v2722, 1
      %v2818 = vsel %vm1091, %v2816, %v2817
      %v2819 = vrot.slane %v2723, 1
      %v2820 = vrot.slane %v2724, 1
      %v2821 = vsel %vm1091, %v2819, %v2820
      %v2822 = vrot.slane %v2725, 1
      %v2823 = vrot.slane %v2726, 1
      %v2824 = vsel %vm1091, %v2822, %v2823
      %v2825 = vrot.slane %v2727, 1
      %v2826 = vrot.slane %v2728, 1
      %v2827 = vsel %vm1091, %v2825, %v2826
      %v2828 = vrot.slane %v2729, 1
      %v2829 = vrot.slane %v2730, 1
      %v2830 = vsel %vm1091, %v2828, %v2829
      %v2891 = vadd.f32 %v2456, %v2771
      %v2892 = vadd.f32 %v2457, %v2773
      %v2893 = vadd.f32 %v2458, %v2772
      %v2894 = vadd.f32 %v2459, %v2774
      %v2895 = vadd.f32 %v2460, %v2776
      %v2896 = vadd.f32 %v2461, %v2775
      %v2897 = vadd.f32 %v2462, %v2777
      %v2898 = vadd.f32 %v2463, %v2779
      %v2899 = vadd.f32 %v2464, %v2778
      %v2900 = vadd.f32 %v2465, %v2780
      %v2901 = vadd.f32 %v2466, %v2782
      %v2902 = vadd.f32 %v2467, %v2781
      %v2903 = vadd.f32 %v2468, %v2783
      %v2904 = vadd.f32 %v2469, %v2785
      %v2905 = vadd.f32 %v2470, %v2784
      %v2906 = vadd.f32 %v2471, %v2786
      %v2907 = vadd.f32 %v2472, %v2788
      %v2908 = vadd.f32 %v2473, %v2787
      %v2909 = vadd.f32 %v2474, %v2789
      %v2910 = vadd.f32 %v2475, %v2791
      %v2911 = vadd.f32 %v2476, %v2790
      %v2912 = vadd.f32 %v2477, %v2792
      %v2913 = vadd.f32 %v2478, %v2794
      %v2914 = vadd.f32 %v2479, %v2793
      %v2915 = vadd.f32 %v2480, %v2795
      %v2916 = vadd.f32 %v2481, %v2797
      %v2917 = vadd.f32 %v2482, %v2796
      %v2918 = vadd.f32 %v2483, %v2798
      %v2919 = vadd.f32 %v2484, %v2800
      %v2920 = vadd.f32 %v2485, %v2799
      %v2921 = vadd.f32 %v2486, %v2801
      %v2922 = vadd.f32 %v2487, %v2803
      %v2923 = vadd.f32 %v2488, %v2802
      %v2924 = vadd.f32 %v2489, %v2804
      %v2925 = vadd.f32 %v2490, %v2806
      %v2926 = vadd.f32 %v2491, %v2805
      %v2927 = vadd.f32 %v2492, %v2807
      %v2928 = vadd.f32 %v2493, %v2809
      %v2929 = vadd.f32 %v2494, %v2808
      %v2930 = vadd.f32 %v2495, %v2810
      %v2931 = vadd.f32 %v2496, %v2812
      %v2932 = vadd.f32 %v2497, %v2811
      %v2933 = vadd.f32 %v2498, %v2813
      %v2934 = vadd.f32 %v2499, %v2815
      %v2935 = vadd.f32 %v2500, %v2814
      %v2936 = vadd.f32 %v2501, %v2816
      %v2937 = vadd.f32 %v2502, %v2818
      %v2938 = vadd.f32 %v2503, %v2817
      %v2939 = vadd.f32 %v2504, %v2819
      %v2940 = vadd.f32 %v2505, %v2821
      %v2941 = vadd.f32 %v2506, %v2820
      %v2942 = vadd.f32 %v2507, %v2822
      %v2943 = vadd.f32 %v2508, %v2824
      %v2944 = vadd.f32 %v2509, %v2823
      %v2945 = vadd.f32 %v2510, %v2825
      %v2946 = vadd.f32 %v2511, %v2827
      %v2947 = vadd.f32 %v2512, %v2826
      %v2948 = vadd.f32 %v2513, %v2828
      %v2949 = vadd.f32 %v2514, %v2830
      %v2950 = vadd.f32 %v2515, %v2829
      %v2951 = vld [vmem:[%s2 + $0x2] sm:$0x1]
      %v2952 = vlaneseq
      %v2953 = vshrl.u32 %v2952, 7
      %v2954 = vsub.s32 0, %v2953
      %v2955 = vrot.slane %v2951, %v2954
      %v2956 = vmul.f32 %v1958, %v2955
      %v2957 = vmul.f32 %v1959, %v2955
      %v2958 = vmul.f32 %v1960, %v2955
      %v2959 = vmul.f32 %v1962, %v2955
      %v2960 = vmul.f32 %v1963, %v2955
      %v2961 = vmul.f32 %v1964, %v2955
      %v2962 = vmul.f32 %v1966, %v2955
      %v2963 = vmul.f32 %v1967, %v2955
      %v2964 = vmul.f32 %v1968, %v2955
      %v2965 = vmul.f32 %v1970, %v2955
      %v2966 = vmul.f32 %v1971, %v2955
      %v2967 = vmul.f32 %v1972, %v2955
      %v2968 = vmul.f32 %v1974, %v2955
      %v2969 = vmul.f32 %v1975, %v2955
      %v2970 = vmul.f32 %v1976, %v2955
      %v2971 = vmul.f32 %v1978, %v2955
      %v2972 = vmul.f32 %v1979, %v2955
      %v2973 = vmul.f32 %v1980, %v2955
      %v2974 = vmul.f32 %v1982, %v2955
      %v2975 = vmul.f32 %v1983, %v2955
      %v2976 = vmul.f32 %v1984, %v2955
      %v2977 = vmul.f32 %v1986, %v2955
      %v2978 = vmul.f32 %v1987, %v2955
      %v2979 = vmul.f32 %v1988, %v2955
      %v2980 = vmul.f32 %v1990, %v2955
      %v2981 = vmul.f32 %v1991, %v2955
      %v2982 = vmul.f32 %v1992, %v2955
      %v2983 = vmul.f32 %v1994, %v2955
      %v2984 = vmul.f32 %v1995, %v2955
      %v2985 = vmul.f32 %v1996, %v2955
      %v2986 = vmul.f32 %v1998, %v2955
      %v2987 = vmul.f32 %v1999, %v2955
      %v2988 = vmul.f32 %v2000, %v2955
      %v2989 = vmul.f32 %v2002, %v2955
      %v2990 = vmul.f32 %v2003, %v2955
      %v2991 = vmul.f32 %v2004, %v2955
      %v2992 = vmul.f32 %v2006, %v2955
      %v2993 = vmul.f32 %v2007, %v2955
      %v2994 = vmul.f32 %v2008, %v2955
      %v2995 = vmul.f32 %v2010, %v2955
      %v2996 = vmul.f32 %v2011, %v2955
      %v2997 = vmul.f32 %v2012, %v2955
      %v2998 = vmul.f32 %v2014, %v2955
      %v2999 = vmul.f32 %v2015, %v2955
      %v3000 = vmul.f32 %v2016, %v2955
      %v3001 = vmul.f32 %v2018, %v2955
      %v3002 = vmul.f32 %v2019, %v2955
      %v3003 = vmul.f32 %v2020, %v2955
      %v3004 = vmul.f32 %v2022, %v2955
      %v3005 = vmul.f32 %v2023, %v2955
      %v3006 = vmul.f32 %v2024, %v2955
      %v3007 = vmul.f32 %v2026, %v2955
      %v3008 = vmul.f32 %v2027, %v2955
      %v3009 = vmul.f32 %v2028, %v2955
      %v3010 = vmul.f32 %v2030, %v2955
      %v3011 = vmul.f32 %v2031, %v2955
      %v3012 = vmul.f32 %v2032, %v2955
      %v3013 = vmul.f32 %v2034, %v2955
      %v3014 = vmul.f32 %v2035, %v2955
      %v3015 = vmul.f32 %v2036, %v2955
      %v3016 = vld [vmem:[%s2264 + $0x2] sm:$0x1]
      %v3017 = vlaneseq
      %v3018 = vshrl.u32 %v3017, 7
      %v3019 = vsub.s32 0, %v3018
      %v3020 = vrot.slane %v3016, %v3019
      %v3021 = vmul.f32 %v2039, %v3020
      %v3022 = vmul.f32 %v2040, %v3020
      %v3023 = vmul.f32 %v2041, %v3020
      %v3024 = vmul.f32 %v2043, %v3020
      %v3025 = vmul.f32 %v2044, %v3020
      %v3026 = vmul.f32 %v2045, %v3020
      %v3027 = vmul.f32 %v2047, %v3020
      %v3028 = vmul.f32 %v2048, %v3020
      %v3029 = vmul.f32 %v2049, %v3020
      %v3030 = vmul.f32 %v2051, %v3020
      %v3031 = vmul.f32 %v2052, %v3020
      %v3032 = vmul.f32 %v2053, %v3020
      %v3033 = vmul.f32 %v2055, %v3020
      %v3034 = vmul.f32 %v2056, %v3020
      %v3035 = vmul.f32 %v2057, %v3020
      %v3036 = vmul.f32 %v2059, %v3020
      %v3037 = vmul.f32 %v2060, %v3020
      %v3038 = vmul.f32 %v2061, %v3020
      %v3039 = vmul.f32 %v2063, %v3020
      %v3040 = vmul.f32 %v2064, %v3020
      %v3041 = vmul.f32 %v2065, %v3020
      %v3042 = vmul.f32 %v2067, %v3020
      %v3043 = vmul.f32 %v2068, %v3020
      %v3044 = vmul.f32 %v2069, %v3020
      %v3045 = vmul.f32 %v2071, %v3020
      %v3046 = vmul.f32 %v2072, %v3020
      %v3047 = vmul.f32 %v2073, %v3020
      %v3048 = vmul.f32 %v2075, %v3020
      %v3049 = vmul.f32 %v2076, %v3020
      %v3050 = vmul.f32 %v2077, %v3020
      %v3051 = vmul.f32 %v2079, %v3020
      %v3052 = vmul.f32 %v2080, %v3020
      %v3053 = vmul.f32 %v2081, %v3020
      %v3054 = vmul.f32 %v2083, %v3020
      %v3055 = vmul.f32 %v2084, %v3020
      %v3056 = vmul.f32 %v2085, %v3020
      %v3057 = vmul.f32 %v2087, %v3020
      %v3058 = vmul.f32 %v2088, %v3020
      %v3059 = vmul.f32 %v2089, %v3020
      %v3060 = vmul.f32 %v2091, %v3020
      %v3061 = vmul.f32 %v2092, %v3020
      %v3062 = vmul.f32 %v2093, %v3020
      %v3063 = vmul.f32 %v2095, %v3020
      %v3064 = vmul.f32 %v2096, %v3020
      %v3065 = vmul.f32 %v2097, %v3020
      %v3066 = vmul.f32 %v2099, %v3020
      %v3067 = vmul.f32 %v2100, %v3020
      %v3068 = vmul.f32 %v2101, %v3020
      %v3069 = vmul.f32 %v2103, %v3020
      %v3070 = vmul.f32 %v2104, %v3020
      %v3071 = vmul.f32 %v2105, %v3020
      %v3072 = vmul.f32 %v2107, %v3020
      %v3073 = vmul.f32 %v2108, %v3020
      %v3074 = vmul.f32 %v2109, %v3020
      %v3075 = vmul.f32 %v2111, %v3020
      %v3076 = vmul.f32 %v2112, %v3020
      %v3077 = vmul.f32 %v2113, %v3020
      %v3078 = vmul.f32 %v2115, %v3020
      %v3079 = vmul.f32 %v2116, %v3020
      %v3080 = vmul.f32 %v2117, %v3020
      %v3081 = vadd.f32 %v2956, %v3021
      %v3082 = vadd.f32 %v2957, %v3022
      %v3083 = vadd.f32 %v2958, %v3023
      %v3084 = vadd.f32 %v2959, %v3024
      %v3085 = vadd.f32 %v2960, %v3025
      %v3086 = vadd.f32 %v2961, %v3026
      %v3087 = vadd.f32 %v2962, %v3027
      %v3088 = vadd.f32 %v2963, %v3028
      %v3089 = vadd.f32 %v2964, %v3029
      %v3090 = vadd.f32 %v2965, %v3030
      %v3091 = vadd.f32 %v2966, %v3031
      %v3092 = vadd.f32 %v2967, %v3032
      %v3093 = vadd.f32 %v2968, %v3033
      %v3094 = vadd.f32 %v2969, %v3034
      %v3095 = vadd.f32 %v2970, %v3035
      %v3096 = vadd.f32 %v2971, %v3036
      %v3097 = vadd.f32 %v2972, %v3037
      %v3098 = vadd.f32 %v2973, %v3038
      %v3099 = vadd.f32 %v2974, %v3039
      %v3100 = vadd.f32 %v2975, %v3040
      %v3101 = vadd.f32 %v2976, %v3041
      %v3102 = vadd.f32 %v2977, %v3042
      %v3103 = vadd.f32 %v2978, %v3043
      %v3104 = vadd.f32 %v2979, %v3044
      %v3105 = vadd.f32 %v2980, %v3045
      %v3106 = vadd.f32 %v2981, %v3046
      %v3107 = vadd.f32 %v2982, %v3047
      %v3108 = vadd.f32 %v2983, %v3048
      %v3109 = vadd.f32 %v2984, %v3049
      %v3110 = vadd.f32 %v2985, %v3050
      %v3111 = vadd.f32 %v2986, %v3051
      %v3112 = vadd.f32 %v2987, %v3052
      %v3113 = vadd.f32 %v2988, %v3053
      %v3114 = vadd.f32 %v2989, %v3054
      %v3115 = vadd.f32 %v2990, %v3055
      %v3116 = vadd.f32 %v2991, %v3056
      %v3117 = vadd.f32 %v2992, %v3057
      %v3118 = vadd.f32 %v2993, %v3058
      %v3119 = vadd.f32 %v2994, %v3059
      %v3120 = vadd.f32 %v2995, %v3060
      %v3121 = vadd.f32 %v2996, %v3061
      %v3122 = vadd.f32 %v2997, %v3062
      %v3123 = vadd.f32 %v2998, %v3063
      %v3124 = vadd.f32 %v2999, %v3064
      %v3125 = vadd.f32 %v3000, %v3065
      %v3126 = vadd.f32 %v3001, %v3066
      %v3127 = vadd.f32 %v3002, %v3067
      %v3128 = vadd.f32 %v3003, %v3068
      %v3129 = vadd.f32 %v3004, %v3069
      %v3130 = vadd.f32 %v3005, %v3070
      %v3131 = vadd.f32 %v3006, %v3071
      %v3132 = vadd.f32 %v3007, %v3072
      %v3133 = vadd.f32 %v3008, %v3073
      %v3134 = vadd.f32 %v3009, %v3074
      %v3135 = vadd.f32 %v3010, %v3075
      %v3136 = vadd.f32 %v3011, %v3076
      %v3137 = vadd.f32 %v3012, %v3077
      %v3138 = vadd.f32 %v3013, %v3078
      %v3139 = vadd.f32 %v3014, %v3079
      %v3140 = vadd.f32 %v3015, %v3080
      %v3141 = vld [vmem:[%s2390 + $0x2] sm:$0x1]
      %v3142 = vlaneseq
      %v3143 = vshrl.u32 %v3142, 7
      %v3144 = vsub.s32 0, %v3143
      %v3145 = vrot.slane %v3141, %v3144
      %v3146 = vmul.f32 %v2120, %v3145
      %v3147 = vmul.f32 %v2121, %v3145
      %v3148 = vmul.f32 %v2122, %v3145
      %v3149 = vmul.f32 %v2124, %v3145
      %v3150 = vmul.f32 %v2125, %v3145
      %v3151 = vmul.f32 %v2126, %v3145
      %v3152 = vmul.f32 %v2128, %v3145
      %v3153 = vmul.f32 %v2129, %v3145
      %v3154 = vmul.f32 %v2130, %v3145
      %v3155 = vmul.f32 %v2132, %v3145
      %v3156 = vmul.f32 %v2133, %v3145
      %v3157 = vmul.f32 %v2134, %v3145
      %v3158 = vmul.f32 %v2136, %v3145
      %v3159 = vmul.f32 %v2137, %v3145
      %v3160 = vmul.f32 %v2138, %v3145
      %v3161 = vmul.f32 %v2140, %v3145
      %v3162 = vmul.f32 %v2141, %v3145
      %v3163 = vmul.f32 %v2142, %v3145
      %v3164 = vmul.f32 %v2144, %v3145
      %v3165 = vmul.f32 %v2145, %v3145
      %v3166 = vmul.f32 %v2146, %v3145
      %v3167 = vmul.f32 %v2148, %v3145
      %v3168 = vmul.f32 %v2149, %v3145
      %v3169 = vmul.f32 %v2150, %v3145
      %v3170 = vmul.f32 %v2152, %v3145
      %v3171 = vmul.f32 %v2153, %v3145
      %v3172 = vmul.f32 %v2154, %v3145
      %v3173 = vmul.f32 %v2156, %v3145
      %v3174 = vmul.f32 %v2157, %v3145
      %v3175 = vmul.f32 %v2158, %v3145
      %v3176 = vmul.f32 %v2160, %v3145
      %v3177 = vmul.f32 %v2161, %v3145
      %v3178 = vmul.f32 %v2162, %v3145
      %v3179 = vmul.f32 %v2164, %v3145
      %v3180 = vmul.f32 %v2165, %v3145
      %v3181 = vmul.f32 %v2166, %v3145
      %v3182 = vmul.f32 %v2168, %v3145
      %v3183 = vmul.f32 %v2169, %v3145
      %v3184 = vmul.f32 %v2170, %v3145
      %v3185 = vmul.f32 %v2172, %v3145
      %v3186 = vmul.f32 %v2173, %v3145
      %v3187 = vmul.f32 %v2174, %v3145
      %v3188 = vmul.f32 %v2176, %v3145
      %v3189 = vmul.f32 %v2177, %v3145
      %v3190 = vmul.f32 %v2178, %v3145
      %v3191 = vmul.f32 %v2180, %v3145
      %v3192 = vmul.f32 %v2181, %v3145
      %v3193 = vmul.f32 %v2182, %v3145
      %v3194 = vmul.f32 %v2184, %v3145
      %v3195 = vmul.f32 %v2185, %v3145
      %v3196 = vmul.f32 %v2186, %v3145
      %v3197 = vmul.f32 %v2188, %v3145
      %v3198 = vmul.f32 %v2189, %v3145
      %v3199 = vmul.f32 %v2190, %v3145
      %v3200 = vmul.f32 %v2192, %v3145
      %v3201 = vmul.f32 %v2193, %v3145
      %v3202 = vmul.f32 %v2194, %v3145
      %v3203 = vmul.f32 %v2196, %v3145
      %v3204 = vmul.f32 %v2197, %v3145
      %v3205 = vmul.f32 %v2198, %v3145
      %v3206 = vadd.f32 %v3081, %v3146
      %v3207 = vadd.f32 %v3082, %v3147
      %v3208 = vadd.f32 %v3083, %v3148
      %v3209 = vadd.f32 %v3084, %v3149
      %v3210 = vadd.f32 %v3085, %v3150
      %v3211 = vadd.f32 %v3086, %v3151
      %v3212 = vadd.f32 %v3087, %v3152
      %v3213 = vadd.f32 %v3088, %v3153
      %v3214 = vadd.f32 %v3089, %v3154
      %v3215 = vadd.f32 %v3090, %v3155
      %v3216 = vadd.f32 %v3091, %v3156
      %v3217 = vadd.f32 %v3092, %v3157
      %v3218 = vadd.f32 %v3093, %v3158
      %v3219 = vadd.f32 %v3094, %v3159
      %v3220 = vadd.f32 %v3095, %v3160
      %v3221 = vadd.f32 %v3096, %v3161
      %v3222 = vadd.f32 %v3097, %v3162
      %v3223 = vadd.f32 %v3098, %v3163
      %v3224 = vadd.f32 %v3099, %v3164
      %v3225 = vadd.f32 %v3100, %v3165
      %v3226 = vadd.f32 %v3101, %v3166
      %v3227 = vadd.f32 %v3102, %v3167
      %v3228 = vadd.f32 %v3103, %v3168
      %v3229 = vadd.f32 %v3104, %v3169
      %v3230 = vadd.f32 %v3105, %v3170
      %v3231 = vadd.f32 %v3106, %v3171
      %v3232 = vadd.f32 %v3107, %v3172
      %v3233 = vadd.f32 %v3108, %v3173
      %v3234 = vadd.f32 %v3109, %v3174
      %v3235 = vadd.f32 %v3110, %v3175
      %v3236 = vadd.f32 %v3111, %v3176
      %v3237 = vadd.f32 %v3112, %v3177
      %v3238 = vadd.f32 %v3113, %v3178
      %v3239 = vadd.f32 %v3114, %v3179
      %v3240 = vadd.f32 %v3115, %v3180
      %v3241 = vadd.f32 %v3116, %v3181
      %v3242 = vadd.f32 %v3117, %v3182
      %v3243 = vadd.f32 %v3118, %v3183
      %v3244 = vadd.f32 %v3119, %v3184
      %v3245 = vadd.f32 %v3120, %v3185
      %v3246 = vadd.f32 %v3121, %v3186
      %v3247 = vadd.f32 %v3122, %v3187
      %v3248 = vadd.f32 %v3123, %v3188
      %v3249 = vadd.f32 %v3124, %v3189
      %v3250 = vadd.f32 %v3125, %v3190
      %v3251 = vadd.f32 %v3126, %v3191
      %v3252 = vadd.f32 %v3127, %v3192
      %v3253 = vadd.f32 %v3128, %v3193
      %v3254 = vadd.f32 %v3129, %v3194
      %v3255 = vadd.f32 %v3130, %v3195
      %v3256 = vadd.f32 %v3131, %v3196
      %v3257 = vadd.f32 %v3132, %v3197
      %v3258 = vadd.f32 %v3133, %v3198
      %v3259 = vadd.f32 %v3134, %v3199
      %v3260 = vadd.f32 %v3135, %v3200
      %v3261 = vadd.f32 %v3136, %v3201
      %v3262 = vadd.f32 %v3137, %v3202
      %v3263 = vadd.f32 %v3138, %v3203
      %v3264 = vadd.f32 %v3139, %v3204
      %v3265 = vadd.f32 %v3140, %v3205
      %vm3326 = vcmask 1045504
      %v3327 = vrot.slane %v3206, 2
      %v3328 = vrot.slane %v3207, 2
      %v3329 = vsel %vm3326, %v3327, %v3328
      %v3330 = vrot.slane %v3208, 2
      %v3331 = vsel %vm3326, %v3328, %v3330
      %v3332 = vrot.slane %v3209, 2
      %v3333 = vrot.slane %v3210, 2
      %v3334 = vsel %vm3326, %v3332, %v3333
      %v3335 = vrot.slane %v3211, 2
      %v3336 = vsel %vm3326, %v3333, %v3335
      %v3337 = vrot.slane %v3212, 2
      %v3338 = vrot.slane %v3213, 2
      %v3339 = vsel %vm3326, %v3337, %v3338
      %v3340 = vrot.slane %v3214, 2
      %v3341 = vsel %vm3326, %v3338, %v3340
      %v3342 = vrot.slane %v3215, 2
      %v3343 = vrot.slane %v3216, 2
      %v3344 = vsel %vm3326, %v3342, %v3343
      %v3345 = vrot.slane %v3217, 2
      %v3346 = vsel %vm3326, %v3343, %v3345
      %v3347 = vrot.slane %v3218, 2
      %v3348 = vrot.slane %v3219, 2
      %v3349 = vsel %vm3326, %v3347, %v3348
      %v3350 = vrot.slane %v3220, 2
      %v3351 = vsel %vm3326, %v3348, %v3350
      %v3352 = vrot.slane %v3221, 2
      %v3353 = vrot.slane %v3222, 2
      %v3354 = vsel %vm3326, %v3352, %v3353
      %v3355 = vrot.slane %v3223, 2
      %v3356 = vsel %vm3326, %v3353, %v3355
      %v3357 = vrot.slane %v3224, 2
      %v3358 = vrot.slane %v3225, 2
      %v3359 = vsel %vm3326, %v3357, %v3358
      %v3360 = vrot.slane %v3226, 2
      %v3361 = vsel %vm3326, %v3358, %v3360
      %v3362 = vrot.slane %v3227, 2
      %v3363 = vrot.slane %v3228, 2
      %v3364 = vsel %vm3326, %v3362, %v3363
      %v3365 = vrot.slane %v3229, 2
      %v3366 = vsel %vm3326, %v3363, %v3365
      %v3367 = vrot.slane %v3230, 2
      %v3368 = vrot.slane %v3231, 2
      %v3369 = vsel %vm3326, %v3367, %v3368
      %v3370 = vrot.slane %v3232, 2
      %v3371 = vsel %vm3326, %v3368, %v3370
      %v3372 = vrot.slane %v3233, 2
      %v3373 = vrot.slane %v3234, 2
      %v3374 = vsel %vm3326, %v3372, %v3373
      %v3375 = vrot.slane %v3235, 2
      %v3376 = vsel %vm3326, %v3373, %v3375
      %v3377 = vrot.slane %v3236, 2
      %v3378 = vrot.slane %v3237, 2
      %v3379 = vsel %vm3326, %v3377, %v3378
      %v3380 = vrot.slane %v3238, 2
      %v3381 = vsel %vm3326, %v3378, %v3380
      %v3382 = vrot.slane %v3239, 2
      %v3383 = vrot.slane %v3240, 2
      %v3384 = vsel %vm3326, %v3382, %v3383
      %v3385 = vrot.slane %v3241, 2
      %v3386 = vsel %vm3326, %v3383, %v3385
      %v3387 = vrot.slane %v3242, 2
      %v3388 = vrot.slane %v3243, 2
      %v3389 = vsel %vm3326, %v3387, %v3388
      %v3390 = vrot.slane %v3244, 2
      %v3391 = vsel %vm3326, %v3388, %v3390
      %v3392 = vrot.slane %v3245, 2
      %v3393 = vrot.slane %v3246, 2
      %v3394 = vsel %vm3326, %v3392, %v3393
      %v3395 = vrot.slane %v3247, 2
      %v3396 = vsel %vm3326, %v3393, %v3395
      %v3397 = vrot.slane %v3248, 2
      %v3398 = vrot.slane %v3249, 2
      %v3399 = vsel %vm3326, %v3397, %v3398
      %v3400 = vrot.slane %v3250, 2
      %v3401 = vsel %vm3326, %v3398, %v3400
      %v3402 = vrot.slane %v3251, 2
      %v3403 = vrot.slane %v3252, 2
      %v3404 = vsel %vm3326, %v3402, %v3403
      %v3405 = vrot.slane %v3253, 2
      %v3406 = vsel %vm3326, %v3403, %v3405
      %v3407 = vrot.slane %v3254, 2
      %v3408 = vrot.slane %v3255, 2
      %v3409 = vsel %vm3326, %v3407, %v3408
      %v3410 = vrot.slane %v3256, 2
      %v3411 = vsel %vm3326, %v3408, %v3410
      %v3412 = vrot.slane %v3257, 2
      %v3413 = vrot.slane %v3258, 2
      %v3414 = vsel %vm3326, %v3412, %v3413
      %v3415 = vrot.slane %v3259, 2
      %v3416 = vsel %vm3326, %v3413, %v3415
      %v3417 = vrot.slane %v3260, 2
      %v3418 = vrot.slane %v3261, 2
      %v3419 = vsel %vm3326, %v3417, %v3418
      %v3420 = vrot.slane %v3262, 2
      %v3421 = vsel %vm3326, %v3418, %v3420
      %v3422 = vrot.slane %v3263, 2
      %v3423 = vrot.slane %v3264, 2
      %v3424 = vsel %vm3326, %v3422, %v3423
      %v3425 = vrot.slane %v3265, 2
      %v3426 = vsel %vm3326, %v3423, %v3425
      %v3487 = vadd.f32 %v2891, %v3327
      %v3488 = vadd.f32 %v2892, %v3329
      %v3489 = vadd.f32 %v2893, %v3331
      %v3490 = vadd.f32 %v2894, %v3332
      %v3491 = vadd.f32 %v2895, %v3334
      %v3492 = vadd.f32 %v2896, %v3336
      %v3493 = vadd.f32 %v2897, %v3337
      %v3494 = vadd.f32 %v2898, %v3339
      %v3495 = vadd.f32 %v2899, %v3341
      %v3496 = vadd.f32 %v2900, %v3342
      %v3497 = vadd.f32 %v2901, %v3344
      %v3498 = vadd.f32 %v2902, %v3346
      %v3499 = vadd.f32 %v2903, %v3347
      %v3500 = vadd.f32 %v2904, %v3349
      %v3501 = vadd.f32 %v2905, %v3351
      %v3502 = vadd.f32 %v2906, %v3352
      %v3503 = vadd.f32 %v2907, %v3354
      %v3504 = vadd.f32 %v2908, %v3356
      %v3505 = vadd.f32 %v2909, %v3357
      %v3506 = vadd.f32 %v2910, %v3359
      %v3507 = vadd.f32 %v2911, %v3361
      %v3508 = vadd.f32 %v2912, %v3362
      %v3509 = vadd.f32 %v2913, %v3364
      %v3510 = vadd.f32 %v2914, %v3366
      %v3511 = vadd.f32 %v2915, %v3367
      %v3512 = vadd.f32 %v2916, %v3369
      %v3513 = vadd.f32 %v2917, %v3371
      %v3514 = vadd.f32 %v2918, %v3372
      %v3515 = vadd.f32 %v2919, %v3374
      %v3516 = vadd.f32 %v2920, %v3376
      %v3517 = vadd.f32 %v2921, %v3377
      %v3518 = vadd.f32 %v2922, %v3379
      %v3519 = vadd.f32 %v2923, %v3381
      %v3520 = vadd.f32 %v2924, %v3382
      %v3521 = vadd.f32 %v2925, %v3384
      %v3522 = vadd.f32 %v2926, %v3386
      %v3523 = vadd.f32 %v2927, %v3387
      %v3524 = vadd.f32 %v2928, %v3389
      %v3525 = vadd.f32 %v2929, %v3391
      %v3526 = vadd.f32 %v2930, %v3392
      %v3527 = vadd.f32 %v2931, %v3394
      %v3528 = vadd.f32 %v2932, %v3396
      %v3529 = vadd.f32 %v2933, %v3397
      %v3530 = vadd.f32 %v2934, %v3399
      %v3531 = vadd.f32 %v2935, %v3401
      %v3532 = vadd.f32 %v2936, %v3402
      %v3533 = vadd.f32 %v2937, %v3404
      %v3534 = vadd.f32 %v2938, %v3406
      %v3535 = vadd.f32 %v2939, %v3407
      %v3536 = vadd.f32 %v2940, %v3409
      %v3537 = vadd.f32 %v2941, %v3411
      %v3538 = vadd.f32 %v2942, %v3412
      %v3539 = vadd.f32 %v2943, %v3414
      %v3540 = vadd.f32 %v2944, %v3416
      %v3541 = vadd.f32 %v2945, %v3417
      %v3542 = vadd.f32 %v2946, %v3419
      %v3543 = vadd.f32 %v2947, %v3421
      %v3544 = vadd.f32 %v2948, %v3422
      %v3545 = vadd.f32 %v2949, %v3424
      %v3546 = vadd.f32 %v2950, %v3426
      %v3547 = vrot.slane %v1660, 1
      %v3548 = vrot.slane %v1665, 1
      %v3549 = vsel %vm1091, %v3547, %v3548
      %v3550 = vrot.slane %v1670, 1
      %v3551 = vrot.slane %v1675, 1
      %v3552 = vsel %vm1091, %v3550, %v3551
      %v3553 = vrot.slane %v1680, 1
      %v3554 = vrot.slane %v1685, 1
      %v3555 = vsel %vm1091, %v3553, %v3554
      %v3556 = vrot.slane %v1690, 1
      %v3557 = vrot.slane %v1695, 1
      %v3558 = vsel %vm1091, %v3556, %v3557
      %v3559 = vrot.slane %v1700, 1
      %v3560 = vrot.slane %v1705, 1
      %v3561 = vsel %vm1091, %v3559, %v3560
      %v3562 = vrot.slane %v1710, 1
      %v3563 = vrot.slane %v1715, 1
      %v3564 = vsel %vm1091, %v3562, %v3563
      %v3565 = vrot.slane %v1720, 1
      %v3566 = vrot.slane %v1725, 1
      %v3567 = vsel %vm1091, %v3565, %v3566
      %v3568 = vrot.slane %v1730, 1
      %v3569 = vrot.slane %v1735, 1
      %v3570 = vsel %vm1091, %v3568, %v3569
      %v3571 = vrot.slane %v1740, 1
      %v3572 = vrot.slane %v1745, 1
      %v3573 = vsel %vm1091, %v3571, %v3572
      %v3574 = vrot.slane %v1750, 1
      %v3575 = vrot.slane %v1755, 1
      %v3576 = vsel %vm1091, %v3574, %v3575
      %v3577 = vrot.slane %v1760, 1
      %v3578 = vrot.slane %v1765, 1
      %v3579 = vsel %vm1091, %v3577, %v3578
      %v3580 = vrot.slane %v1770, 1
      %v3581 = vrot.slane %v1775, 1
      %v3582 = vsel %vm1091, %v3580, %v3581
      %v3583 = vrot.slane %v1780, 1
      %v3584 = vrot.slane %v1785, 1
      %v3585 = vsel %vm1091, %v3583, %v3584
      %v3586 = vrot.slane %v1790, 1
      %v3587 = vrot.slane %v1795, 1
      %v3588 = vsel %vm1091, %v3586, %v3587
      %v3589 = vrot.slane %v1800, 1
      %v3590 = vrot.slane %v1805, 1
      %v3591 = vsel %vm1091, %v3589, %v3590
      %v3592 = vrot.slane %v1810, 1
      %v3593 = vrot.slane %v1815, 1
      %v3594 = vsel %vm1091, %v3592, %v3593
      %v3595 = vrot.slane %v1820, 1
      %v3596 = vrot.slane %v1825, 1
      %v3597 = vsel %vm1091, %v3595, %v3596
      %v3598 = vrot.slane %v1830, 1
      %v3599 = vrot.slane %v1835, 1
      %v3600 = vsel %vm1091, %v3598, %v3599
      %v3601 = vrot.slane %v1840, 1
      %v3602 = vrot.slane %v1845, 1
      %v3603 = vsel %vm1091, %v3601, %v3602
      %v3604 = vrot.slane %v1850, 1
      %v3605 = vrot.slane %v1855, 1
      %v3606 = vsel %vm1091, %v3604, %v3605
      %v3667 = vadd.f32 %v3487, %v3547
      %v3668 = vadd.f32 %v3488, %v3549
      %v3669 = vadd.f32 %v3489, %v3548
      %v3670 = vadd.f32 %v3490, %v3550
      %v3671 = vadd.f32 %v3491, %v3552
      %v3672 = vadd.f32 %v3492, %v3551
      %v3673 = vadd.f32 %v3493, %v3553
      %v3674 = vadd.f32 %v3494, %v3555
      %v3675 = vadd.f32 %v3495, %v3554
      %v3676 = vadd.f32 %v3496, %v3556
      %v3677 = vadd.f32 %v3497, %v3558
      %v3678 = vadd.f32 %v3498, %v3557
      %v3679 = vadd.f32 %v3499, %v3559
      %v3680 = vadd.f32 %v3500, %v3561
      %v3681 = vadd.f32 %v3501, %v3560
      %v3682 = vadd.f32 %v3502, %v3562
      %v3683 = vadd.f32 %v3503, %v3564
      %v3684 = vadd.f32 %v3504, %v3563
      %v3685 = vadd.f32 %v3505, %v3565
      %v3686 = vadd.f32 %v3506, %v3567
      %v3687 = vadd.f32 %v3507, %v3566
      %v3688 = vadd.f32 %v3508, %v3568
      %v3689 = vadd.f32 %v3509, %v3570
      %v3690 = vadd.f32 %v3510, %v3569
      %v3691 = vadd.f32 %v3511, %v3571
      %v3692 = vadd.f32 %v3512, %v3573
      %v3693 = vadd.f32 %v3513, %v3572
      %v3694 = vadd.f32 %v3514, %v3574
      %v3695 = vadd.f32 %v3515, %v3576
      %v3696 = vadd.f32 %v3516, %v3575
      %v3697 = vadd.f32 %v3517, %v3577
      %v3698 = vadd.f32 %v3518, %v3579
      %v3699 = vadd.f32 %v3519, %v3578
      %v3700 = vadd.f32 %v3520, %v3580
      %v3701 = vadd.f32 %v3521, %v3582
      %v3702 = vadd.f32 %v3522, %v3581
      %v3703 = vadd.f32 %v3523, %v3583
      %v3704 = vadd.f32 %v3524, %v3585
      %v3705 = vadd.f32 %v3525, %v3584
      %v3706 = vadd.f32 %v3526, %v3586
      %v3707 = vadd.f32 %v3527, %v3588
      %v3708 = vadd.f32 %v3528, %v3587
      %v3709 = vadd.f32 %v3529, %v3589
      %v3710 = vadd.f32 %v3530, %v3591
      %v3711 = vadd.f32 %v3531, %v3590
      %v3712 = vadd.f32 %v3532, %v3592
      %v3713 = vadd.f32 %v3533, %v3594
      %v3714 = vadd.f32 %v3534, %v3593
      %v3715 = vadd.f32 %v3535, %v3595
      %v3716 = vadd.f32 %v3536, %v3597
      %v3717 = vadd.f32 %v3537, %v3596
      %v3718 = vadd.f32 %v3538, %v3598
      %v3719 = vadd.f32 %v3539, %v3600
      %v3720 = vadd.f32 %v3540, %v3599
      %v3721 = vadd.f32 %v3541, %v3601
      %v3722 = vadd.f32 %v3542, %v3603
      %v3723 = vadd.f32 %v3543, %v3602
      %v3724 = vadd.f32 %v3544, %v3604
      %v3725 = vadd.f32 %v3545, %v3606
      %v3726 = vadd.f32 %v3546, %v3605
      %vm3727 = vcmask 162823
      %3728 = vst.msk [vmem:[%s2037 + $0x1] sm:$0x80] %vm3727, %v3667
      %3729 = vst.msk [vmem:[%s2037 + $0x9] sm:$0xff] %vm1912, %v3668
      %vm3730 = vcmask 161792
      %3731 = vst.msk [vmem:[%s2037 + $0x11] sm:$0x7f] %vm3730, %v3669
      %3732 = vst.msk [vmem:[%s2037 + $0x21] sm:$0x80] %vm3727, %v3670
      %3733 = vst.msk [vmem:[%s2037 + $0x29] sm:$0xff] %vm1912, %v3671
      %3734 = vst.msk [vmem:[%s2037 + $0x31] sm:$0x7f] %vm3730, %v3672
      %3735 = vst.msk [vmem:[%s2037 + $0x41] sm:$0x80] %vm3727, %v3673
      %3736 = vst.msk [vmem:[%s2037 + $0x49] sm:$0xff] %vm1912, %v3674
      %3737 = vst.msk [vmem:[%s2037 + $0x51] sm:$0x7f] %vm3730, %v3675
      %3738 = vst.msk [vmem:[%s2037 + $0x61] sm:$0x80] %vm3727, %v3676
      %3739 = vst.msk [vmem:[%s2037 + $0x69] sm:$0xff] %vm1912, %v3677
      %3740 = vst.msk [vmem:[%s2037 + $0x71] sm:$0x7f] %vm3730, %v3678
      %3741 = vst.msk [vmem:[%s2037 + $0x81] sm:$0x80] %vm3727, %v3679
      %3742 = vst.msk [vmem:[%s2037 + $0x89] sm:$0xff] %vm1912, %v3680
      %3743 = vst.msk [vmem:[%s2037 + $0x91] sm:$0x7f] %vm3730, %v3681
      %3744 = vst.msk [vmem:[%s2037 + $0xa1] sm:$0x80] %vm3727, %v3682
      %3745 = vst.msk [vmem:[%s2037 + $0xa9] sm:$0xff] %vm1912, %v3683
      %3746 = vst.msk [vmem:[%s2037 + $0xb1] sm:$0x7f] %vm3730, %v3684
      %3747 = vst.msk [vmem:[%s2037 + $0xc1] sm:$0x80] %vm3727, %v3685
      %3748 = vst.msk [vmem:[%s2037 + $0xc9] sm:$0xff] %vm1912, %v3686
      %3749 = vst.msk [vmem:[%s2037 + $0xd1] sm:$0x7f] %vm3730, %v3687
      %3750 = vst.msk [vmem:[%s2037 + $0xe1] sm:$0x80] %vm3727, %v3688
      %3751 = vst.msk [vmem:[%s2037 + $0xe9] sm:$0xff] %vm1912, %v3689
      %3752 = vst.msk [vmem:[%s2037 + $0xf1] sm:$0x7f] %vm3730, %v3690
      %3753 = vst.msk [vmem:[%s2037 + $0x101] sm:$0x80] %vm3727, %v3691
      %3754 = vst.msk [vmem:[%s2037 + $0x109] sm:$0xff] %vm1912, %v3692
      %3755 = vst.msk [vmem:[%s2037 + $0x111] sm:$0x7f] %vm3730, %v3693
      %3756 = vst.msk [vmem:[%s2037 + $0x121] sm:$0x80] %vm3727, %v3694
      %3757 = vst.msk [vmem:[%s2037 + $0x129] sm:$0xff] %vm1912, %v3695
      %3758 = vst.msk [vmem:[%s2037 + $0x131] sm:$0x7f] %vm3730, %v3696
      %3759 = vst.msk [vmem:[%s2037 + $0x141] sm:$0x80] %vm3727, %v3697
      %3760 = vst.msk [vmem:[%s2037 + $0x149] sm:$0xff] %vm1912, %v3698
      %3761 = vst.msk [vmem:[%s2037 + $0x151] sm:$0x7f] %vm3730, %v3699
      %3762 = vst.msk [vmem:[%s2037 + $0x161] sm:$0x80] %vm3727, %v3700
      %3763 = vst.msk [vmem:[%s2037 + $0x169] sm:$0xff] %vm1912, %v3701
      %3764 = vst.msk [vmem:[%s2037 + $0x171] sm:$0x7f] %vm3730, %v3702
      %3765 = vst.msk [vmem:[%s2037 + $0x181] sm:$0x80] %vm3727, %v3703
      %3766 = vst.msk [vmem:[%s2037 + $0x189] sm:$0xff] %vm1912, %v3704
      %3767 = vst.msk [vmem:[%s2037 + $0x191] sm:$0x7f] %vm3730, %v3705
      %3768 = vst.msk [vmem:[%s2037 + $0x1a1] sm:$0x80] %vm3727, %v3706
      %3769 = vst.msk [vmem:[%s2037 + $0x1a9] sm:$0xff] %vm1912, %v3707
      %3770 = vst.msk [vmem:[%s2037 + $0x1b1] sm:$0x7f] %vm3730, %v3708
      %3771 = vst.msk [vmem:[%s2037 + $0x1c1] sm:$0x80] %vm3727, %v3709
      %3772 = vst.msk [vmem:[%s2037 + $0x1c9] sm:$0xff] %vm1912, %v3710
      %3773 = vst.msk [vmem:[%s2037 + $0x1d1] sm:$0x7f] %vm3730, %v3711
      %3774 = vst.msk [vmem:[%s2037 + $0x1e1] sm:$0x80] %vm3727, %v3712
      %3775 = vst.msk [vmem:[%s2037 + $0x1e9] sm:$0xff] %vm1912, %v3713
      %3776 = vst.msk [vmem:[%s2037 + $0x1f1] sm:$0x7f] %vm3730, %v3714
      %3777 = vst.msk [vmem:[%s2037 + $0x201] sm:$0x80] %vm3727, %v3715
      %3778 = vst.msk [vmem:[%s2037 + $0x209] sm:$0xff] %vm1912, %v3716
      %3779 = vst.msk [vmem:[%s2037 + $0x211] sm:$0x7f] %vm3730, %v3717
      %3780 = vst.msk [vmem:[%s2037 + $0x221] sm:$0x80] %vm3727, %v3718
      %3781 = vst.msk [vmem:[%s2037 + $0x229] sm:$0xff] %vm1912, %v3719
      %3782 = vst.msk [vmem:[%s2037 + $0x231] sm:$0x7f] %vm3730, %v3720
      %3783 = vst.msk [vmem:[%s2037 + $0x241] sm:$0x80] %vm3727, %v3721
      %3784 = vst.msk [vmem:[%s2037 + $0x249] sm:$0xff] %vm1912, %v3722
      %3785 = vst.msk [vmem:[%s2037 + $0x251] sm:$0x7f] %vm3730, %v3723
      %3786 = vst.msk [vmem:[%s2037 + $0x261] sm:$0x80] %vm3727, %v3724
      %3787 = vst.msk [vmem:[%s2037 + $0x269] sm:$0xff] %vm1912, %v3725
      %3788 = vst.msk [vmem:[%s2037 + $0x271] sm:$0x7f] %vm3730, %v3726
      // Predicated region
      $region53: #{tpu_custom_call.1} parent=51 // pred_check
        %p3789 = pneg %p345
      $region54: #{tpu_custom_call.1} parent=51 // pred_check_branch
        %3791 = sbr.rel (%p3789) target = $region56
      $region55: #{tpu_custom_call.1} parent=51 // pred_region
        %3792 = vst.msk [vmem:[%s2037 + $0x8] sm:$0xff] %vm1912, 0.0
        %3793 = vst.msk [vmem:[%s2037 + $0x10] sm:$0xff] %vm1912, 0.0
        %3794 = vst.msk [vmem:[%s2037 + $0x28] sm:$0xff] %vm1912, 0.0
        %3795 = vst.msk [vmem:[%s2037 + $0x30] sm:$0xff] %vm1912, 0.0
        %s3796 = scalar_lea.vmem [#allocation2], 640
        %3797 = vst.msk [vmem:[%s3796 + $0x8] sm:$0xff] %vm1912, 0.0
        %3798 = vst.msk [vmem:[%s3796 + $0x10] sm:$0xff] %vm1912, 0.0
        %3799 = vst.msk [vmem:[%s3796 + $0x28] sm:$0xff] %vm1912, 0.0
        %3800 = vst.msk [vmem:[%s3796 + $0x30] sm:$0xff] %vm1912, 0.0
      $region56: #{tpu_custom_call.1} parent=51 // pred_fallthru
        _
      %v3801 = vld [vmem:[%s2037] sm:$0xff]
      %v3802 = vld [vmem:[%s2037 + $0x8] sm:$0xff]
      %v3803 = vld [vmem:[%s2037 + $0x10] sm:$0xff]
      %v3804 = vld [vmem:[%s2037 + $0x18] sm:$0xff]
      %v3805 = vld [vmem:[%s2037 + $0x20] sm:$0xff]
      %v3806 = vld [vmem:[%s2037 + $0x28] sm:$0xff]
      %v3807 = vld [vmem:[%s2037 + $0x30] sm:$0xff]
      %v3808 = vld [vmem:[%s2037 + $0x38] sm:$0xff]
      %v3809 = vld [vmem:[%s2037 + $0x40] sm:$0xff]
      %v3810 = vld [vmem:[%s2037 + $0x48] sm:$0xff]
      %v3811 = vld [vmem:[%s2037 + $0x50] sm:$0xff]
      %v3812 = vld [vmem:[%s2037 + $0x58] sm:$0xff]
      %v3813 = vld [vmem:[%s2037 + $0x60] sm:$0xff]
      %v3814 = vld [vmem:[%s2037 + $0x68] sm:$0xff]
      %v3815 = vld [vmem:[%s2037 + $0x70] sm:$0xff]
      %v3816 = vld [vmem:[%s2037 + $0x78] sm:$0xff]
      %v3817 = vld [vmem:[%s2037 + $0x80] sm:$0xff]
      %v3818 = vld [vmem:[%s2037 + $0x88] sm:$0xff]
      %v3819 = vld [vmem:[%s2037 + $0x90] sm:$0xff]
      %v3820 = vld [vmem:[%s2037 + $0x98] sm:$0xff]
      %v3821 = vld [vmem:[%s2037 + $0xa0] sm:$0xff]
      %v3822 = vld [vmem:[%s2037 + $0xa8] sm:$0xff]
      %v3823 = vld [vmem:[%s2037 + $0xb0] sm:$0xff]
      %v3824 = vld [vmem:[%s2037 + $0xb8] sm:$0xff]
      %v3825 = vld [vmem:[%s2037 + $0xc0] sm:$0xff]
      %v3826 = vld [vmem:[%s2037 + $0xc8] sm:$0xff]
      %v3827 = vld [vmem:[%s2037 + $0xd0] sm:$0xff]
      %v3828 = vld [vmem:[%s2037 + $0xd8] sm:$0xff]
      %v3829 = vld [vmem:[%s2037 + $0xe0] sm:$0xff]
      %v3830 = vld [vmem:[%s2037 + $0xe8] sm:$0xff]
      %v3831 = vld [vmem:[%s2037 + $0xf0] sm:$0xff]
      %v3832 = vld [vmem:[%s2037 + $0xf8] sm:$0xff]
      %v3833 = vld [vmem:[%s2037 + $0x100] sm:$0xff]
      %v3834 = vld [vmem:[%s2037 + $0x108] sm:$0xff]
      %v3835 = vld [vmem:[%s2037 + $0x110] sm:$0xff]
      %v3836 = vld [vmem:[%s2037 + $0x118] sm:$0xff]
      %v3837 = vld [vmem:[%s2037 + $0x120] sm:$0xff]
      %v3838 = vld [vmem:[%s2037 + $0x128] sm:$0xff]
      %v3839 = vld [vmem:[%s2037 + $0x130] sm:$0xff]
      %v3840 = vld [vmem:[%s2037 + $0x138] sm:$0xff]
      %v3841 = vld [vmem:[%s2037 + $0x140] sm:$0xff]
      %v3842 = vld [vmem:[%s2037 + $0x148] sm:$0xff]
      %v3843 = vld [vmem:[%s2037 + $0x150] sm:$0xff]
      %v3844 = vld [vmem:[%s2037 + $0x158] sm:$0xff]
      %v3845 = vld [vmem:[%s2037 + $0x160] sm:$0xff]
      %v3846 = vld [vmem:[%s2037 + $0x168] sm:$0xff]
      %v3847 = vld [vmem:[%s2037 + $0x170] sm:$0xff]
      %v3848 = vld [vmem:[%s2037 + $0x178] sm:$0xff]
      %v3849 = vld [vmem:[%s2037 + $0x180] sm:$0xff]
      %v3850 = vld [vmem:[%s2037 + $0x188] sm:$0xff]
      %v3851 = vld [vmem:[%s2037 + $0x190] sm:$0xff]
      %v3852 = vld [vmem:[%s2037 + $0x198] sm:$0xff]
      %v3853 = vld [vmem:[%s2037 + $0x1a0] sm:$0xff]
      %v3854 = vld [vmem:[%s2037 + $0x1a8] sm:$0xff]
      %v3855 = vld [vmem:[%s2037 + $0x1b0] sm:$0xff]
      %v3856 = vld [vmem:[%s2037 + $0x1b8] sm:$0xff]
      %v3857 = vld [vmem:[%s2037 + $0x1c0] sm:$0xff]
      %v3858 = vld [vmem:[%s2037 + $0x1c8] sm:$0xff]
      %v3859 = vld [vmem:[%s2037 + $0x1d0] sm:$0xff]
      %v3860 = vld [vmem:[%s2037 + $0x1d8] sm:$0xff]
      %v3861 = vld [vmem:[%s2037 + $0x1e0] sm:$0xff]
      %v3862 = vld [vmem:[%s2037 + $0x1e8] sm:$0xff]
      %v3863 = vld [vmem:[%s2037 + $0x1f0] sm:$0xff]
      %v3864 = vld [vmem:[%s2037 + $0x1f8] sm:$0xff]
      %v3865 = vld [vmem:[%s2037 + $0x200] sm:$0xff]
      %v3866 = vld [vmem:[%s2037 + $0x208] sm:$0xff]
      %v3867 = vld [vmem:[%s2037 + $0x210] sm:$0xff]
      %v3868 = vld [vmem:[%s2037 + $0x218] sm:$0xff]
      %v3869 = vld [vmem:[%s2037 + $0x220] sm:$0xff]
      %v3870 = vld [vmem:[%s2037 + $0x228] sm:$0xff]
      %v3871 = vld [vmem:[%s2037 + $0x230] sm:$0xff]
      %v3872 = vld [vmem:[%s2037 + $0x238] sm:$0xff]
      %v3873 = vld [vmem:[%s2118] sm:$0xff]
      %v3874 = vld [vmem:[%s2118 + $0x8] sm:$0xff]
      %v3875 = vld [vmem:[%s2118 + $0x10] sm:$0xff]
      %v3876 = vld [vmem:[%s2118 + $0x18] sm:$0xff]
      %v3877 = vld [vmem:[%s2118 + $0x20] sm:$0xff]
      %v3878 = vld [vmem:[%s2118 + $0x28] sm:$0xff]
      %v3879 = vld [vmem:[%s2118 + $0x30] sm:$0xff]
      %v3880 = vld [vmem:[%s2118 + $0x38] sm:$0xff]
      %v3881 = vld [vmem:[%s2118 + $0x40] sm:$0xff]
      %v3882 = vld [vmem:[%s2118 + $0x48] sm:$0xff]
      %v3883 = vld [vmem:[%s2118 + $0x50] sm:$0xff]
      %v3884 = vld [vmem:[%s2118 + $0x58] sm:$0xff]
      %v3885 = vld [vmem:[%s2118 + $0x60] sm:$0xff]
      %v3886 = vld [vmem:[%s2118 + $0x68] sm:$0xff]
      %v3887 = vld [vmem:[%s2118 + $0x70] sm:$0xff]
      %v3888 = vld [vmem:[%s2118 + $0x78] sm:$0xff]
      %v3889 = vld [vmem:[%s2118 + $0x80] sm:$0xff]
      %v3890 = vld [vmem:[%s2118 + $0x88] sm:$0xff]
      %v3891 = vld [vmem:[%s2118 + $0x90] sm:$0xff]
      %v3892 = vld [vmem:[%s2118 + $0x98] sm:$0xff]
      %v3893 = vld [vmem:[%s2118 + $0xa0] sm:$0xff]
      %v3894 = vld [vmem:[%s2118 + $0xa8] sm:$0xff]
      %v3895 = vld [vmem:[%s2118 + $0xb0] sm:$0xff]
      %v3896 = vld [vmem:[%s2118 + $0xb8] sm:$0xff]
      %v3897 = vld [vmem:[%s2118 + $0xc0] sm:$0xff]
      %v3898 = vld [vmem:[%s2118 + $0xc8] sm:$0xff]
      %v3899 = vld [vmem:[%s2118 + $0xd0] sm:$0xff]
      %v3900 = vld [vmem:[%s2118 + $0xd8] sm:$0xff]
      %v3901 = vld [vmem:[%s2118 + $0xe0] sm:$0xff]
      %v3902 = vld [vmem:[%s2118 + $0xe8] sm:$0xff]
      %v3903 = vld [vmem:[%s2118 + $0xf0] sm:$0xff]
      %v3904 = vld [vmem:[%s2118 + $0xf8] sm:$0xff]
      %v3905 = vld [vmem:[%s2118 + $0x100] sm:$0xff]
      %v3906 = vld [vmem:[%s2118 + $0x108] sm:$0xff]
      %v3907 = vld [vmem:[%s2118 + $0x110] sm:$0xff]
      %v3908 = vld [vmem:[%s2118 + $0x118] sm:$0xff]
      %v3909 = vld [vmem:[%s2118 + $0x120] sm:$0xff]
      %v3910 = vld [vmem:[%s2118 + $0x128] sm:$0xff]
      %v3911 = vld [vmem:[%s2118 + $0x130] sm:$0xff]
      %v3912 = vld [vmem:[%s2118 + $0x138] sm:$0xff]
      %v3913 = vld [vmem:[%s2118 + $0x140] sm:$0xff]
      %v3914 = vld [vmem:[%s2118 + $0x148] sm:$0xff]
      %v3915 = vld [vmem:[%s2118 + $0x150] sm:$0xff]
      %v3916 = vld [vmem:[%s2118 + $0x158] sm:$0xff]
      %v3917 = vld [vmem:[%s2118 + $0x160] sm:$0xff]
      %v3918 = vld [vmem:[%s2118 + $0x168] sm:$0xff]
      %v3919 = vld [vmem:[%s2118 + $0x170] sm:$0xff]
      %v3920 = vld [vmem:[%s2118 + $0x178] sm:$0xff]
      %v3921 = vld [vmem:[%s2118 + $0x180] sm:$0xff]
      %v3922 = vld [vmem:[%s2118 + $0x188] sm:$0xff]
      %v3923 = vld [vmem:[%s2118 + $0x190] sm:$0xff]
      %v3924 = vld [vmem:[%s2118 + $0x198] sm:$0xff]
      %v3925 = vld [vmem:[%s2118 + $0x1a0] sm:$0xff]
      %v3926 = vld [vmem:[%s2118 + $0x1a8] sm:$0xff]
      %v3927 = vld [vmem:[%s2118 + $0x1b0] sm:$0xff]
      %v3928 = vld [vmem:[%s2118 + $0x1b8] sm:$0xff]
      %v3929 = vld [vmem:[%s2118 + $0x1c0] sm:$0xff]
      %v3930 = vld [vmem:[%s2118 + $0x1c8] sm:$0xff]
      %v3931 = vld [vmem:[%s2118 + $0x1d0] sm:$0xff]
      %v3932 = vld [vmem:[%s2118 + $0x1d8] sm:$0xff]
      %v3933 = vld [vmem:[%s2118 + $0x1e0] sm:$0xff]
      %v3934 = vld [vmem:[%s2118 + $0x1e8] sm:$0xff]
      %v3935 = vld [vmem:[%s2118 + $0x1f0] sm:$0xff]
      %v3936 = vld [vmem:[%s2118 + $0x1f8] sm:$0xff]
      %v3937 = vld [vmem:[%s2118 + $0x200] sm:$0xff]
      %v3938 = vld [vmem:[%s2118 + $0x208] sm:$0xff]
      %v3939 = vld [vmem:[%s2118 + $0x210] sm:$0xff]
      %v3940 = vld [vmem:[%s2118 + $0x218] sm:$0xff]
      %v3941 = vld [vmem:[%s2118 + $0x220] sm:$0xff]
      %v3942 = vld [vmem:[%s2118 + $0x228] sm:$0xff]
      %v3943 = vld [vmem:[%s2118 + $0x230] sm:$0xff]
      %v3944 = vld [vmem:[%s2118 + $0x238] sm:$0xff]
      %s3945 = scalar_lea.vmem [#allocation2], 128
      %v3946 = vld [vmem:[%s3945] sm:$0xff]
      %v3947 = vld [vmem:[%s3945 + $0x8] sm:$0xff]
      %v3948 = vld [vmem:[%s3945 + $0x10] sm:$0xff]
      %v3949 = vld [vmem:[%s3945 + $0x18] sm:$0xff]
      %v3950 = vld [vmem:[%s3945 + $0x20] sm:$0xff]
      %v3951 = vld [vmem:[%s3945 + $0x28] sm:$0xff]
      %v3952 = vld [vmem:[%s3945 + $0x30] sm:$0xff]
      %v3953 = vld [vmem:[%s3945 + $0x38] sm:$0xff]
      %v3954 = vld [vmem:[%s3945 + $0x40] sm:$0xff]
      %v3955 = vld [vmem:[%s3945 + $0x48] sm:$0xff]
      %v3956 = vld [vmem:[%s3945 + $0x50] sm:$0xff]
      %v3957 = vld [vmem:[%s3945 + $0x58] sm:$0xff]
      %v3958 = vld [vmem:[%s3945 + $0x60] sm:$0xff]
      %v3959 = vld [vmem:[%s3945 + $0x68] sm:$0xff]
      %v3960 = vld [vmem:[%s3945 + $0x70] sm:$0xff]
      %v3961 = vld [vmem:[%s3945 + $0x78] sm:$0xff]
      %v3962 = vld [vmem:[%s3945 + $0x80] sm:$0xff]
      %v3963 = vld [vmem:[%s3945 + $0x88] sm:$0xff]
      %v3964 = vld [vmem:[%s3945 + $0x90] sm:$0xff]
      %v3965 = vld [vmem:[%s3945 + $0x98] sm:$0xff]
      %v3966 = vld [vmem:[%s3945 + $0xa0] sm:$0xff]
      %v3967 = vld [vmem:[%s3945 + $0xa8] sm:$0xff]
      %v3968 = vld [vmem:[%s3945 + $0xb0] sm:$0xff]
      %v3969 = vld [vmem:[%s3945 + $0xb8] sm:$0xff]
      %v3970 = vld [vmem:[%s3945 + $0xc0] sm:$0xff]
      %v3971 = vld [vmem:[%s3945 + $0xc8] sm:$0xff]
      %v3972 = vld [vmem:[%s3945 + $0xd0] sm:$0xff]
      %v3973 = vld [vmem:[%s3945 + $0xd8] sm:$0xff]
      %v3974 = vld [vmem:[%s3945 + $0xe0] sm:$0xff]
      %v3975 = vld [vmem:[%s3945 + $0xe8] sm:$0xff]
      %v3976 = vld [vmem:[%s3945 + $0xf0] sm:$0xff]
      %v3977 = vld [vmem:[%s3945 + $0xf8] sm:$0xff]
      %v3978 = vld [vmem:[%s3945 + $0x100] sm:$0xff]
      %v3979 = vld [vmem:[%s3945 + $0x108] sm:$0xff]
      %v3980 = vld [vmem:[%s3945 + $0x110] sm:$0xff]
      %v3981 = vld [vmem:[%s3945 + $0x118] sm:$0xff]
      %v3982 = vld [vmem:[%s3945 + $0x120] sm:$0xff]
      %v3983 = vld [vmem:[%s3945 + $0x128] sm:$0xff]
      %v3984 = vld [vmem:[%s3945 + $0x130] sm:$0xff]
      %v3985 = vld [vmem:[%s3945 + $0x138] sm:$0xff]
      %v3986 = vld [vmem:[%s3945 + $0x140] sm:$0xff]
      %v3987 = vld [vmem:[%s3945 + $0x148] sm:$0xff]
      %v3988 = vld [vmem:[%s3945 + $0x150] sm:$0xff]
      %v3989 = vld [vmem:[%s3945 + $0x158] sm:$0xff]
      %v3990 = vld [vmem:[%s3945 + $0x160] sm:$0xff]
      %v3991 = vld [vmem:[%s3945 + $0x168] sm:$0xff]
      %v3992 = vld [vmem:[%s3945 + $0x170] sm:$0xff]
      %v3993 = vld [vmem:[%s3945 + $0x178] sm:$0xff]
      %v3994 = vld [vmem:[%s3945 + $0x180] sm:$0xff]
      %v3995 = vld [vmem:[%s3945 + $0x188] sm:$0xff]
      %v3996 = vld [vmem:[%s3945 + $0x190] sm:$0xff]
      %v3997 = vld [vmem:[%s3945 + $0x198] sm:$0xff]
      %v3998 = vld [vmem:[%s3945 + $0x1a0] sm:$0xff]
      %v3999 = vld [vmem:[%s3945 + $0x1a8] sm:$0xff]
      %v4000 = vld [vmem:[%s3945 + $0x1b0] sm:$0xff]
      %v4001 = vld [vmem:[%s3945 + $0x1b8] sm:$0xff]
      %v4002 = vld [vmem:[%s3945 + $0x1c0] sm:$0xff]
      %v4003 = vld [vmem:[%s3945 + $0x1c8] sm:$0xff]
      %v4004 = vld [vmem:[%s3945 + $0x1d0] sm:$0xff]
      %v4005 = vld [vmem:[%s3945 + $0x1d8] sm:$0xff]
      %v4006 = vld [vmem:[%s3945 + $0x1e0] sm:$0xff]
      %v4007 = vld [vmem:[%s3945 + $0x1e8] sm:$0xff]
      %v4008 = vld [vmem:[%s3945 + $0x1f0] sm:$0xff]
      %v4009 = vld [vmem:[%s3945 + $0x1f8] sm:$0xff]
      %v4010 = vld [vmem:[%s3945 + $0x200] sm:$0xff]
      %v4011 = vld [vmem:[%s3945 + $0x208] sm:$0xff]
      %v4012 = vld [vmem:[%s3945 + $0x210] sm:$0xff]
      %v4013 = vld [vmem:[%s3945 + $0x218] sm:$0xff]
      %v4014 = vld [vmem:[%s3945 + $0x220] sm:$0xff]
      %v4015 = vld [vmem:[%s3945 + $0x228] sm:$0xff]
      %v4016 = vld [vmem:[%s3945 + $0x230] sm:$0xff]
      %v4017 = vld [vmem:[%s3945 + $0x238] sm:$0xff]
      %v4018 = vld [vmem:[%s3] sm:$0x1]
      %v4019 = vlaneseq
      %v4020 = vshrl.u32 %v4019, 7
      %v4021 = vsub.s32 0, %v4020
      %v4022 = vrot.slane %v4018, %v4021
      %v4023 = vmul.f32 %v3801, %v4022
      %v4024 = vmul.f32 %v3802, %v4022
      %v4025 = vmul.f32 %v3803, %v4022
      %v4026 = vmul.f32 %v3805, %v4022
      %v4027 = vmul.f32 %v3806, %v4022
      %v4028 = vmul.f32 %v3807, %v4022
      %v4029 = vmul.f32 %v3809, %v4022
      %v4030 = vmul.f32 %v3810, %v4022
      %v4031 = vmul.f32 %v3811, %v4022
      %v4032 = vmul.f32 %v3813, %v4022
      %v4033 = vmul.f32 %v3814, %v4022
      %v4034 = vmul.f32 %v3815, %v4022
      %v4035 = vmul.f32 %v3817, %v4022
      %v4036 = vmul.f32 %v3818, %v4022
      %v4037 = vmul.f32 %v3819, %v4022
      %v4038 = vmul.f32 %v3821, %v4022
      %v4039 = vmul.f32 %v3822, %v4022
      %v4040 = vmul.f32 %v3823, %v4022
      %v4041 = vmul.f32 %v3825, %v4022
      %v4042 = vmul.f32 %v3826, %v4022
      %v4043 = vmul.f32 %v3827, %v4022
      %v4044 = vmul.f32 %v3829, %v4022
      %v4045 = vmul.f32 %v3830, %v4022
      %v4046 = vmul.f32 %v3831, %v4022
      %v4047 = vmul.f32 %v3833, %v4022
      %v4048 = vmul.f32 %v3834, %v4022
      %v4049 = vmul.f32 %v3835, %v4022
      %v4050 = vmul.f32 %v3837, %v4022
      %v4051 = vmul.f32 %v3838, %v4022
      %v4052 = vmul.f32 %v3839, %v4022
      %v4053 = vmul.f32 %v3841, %v4022
      %v4054 = vmul.f32 %v3842, %v4022
      %v4055 = vmul.f32 %v3843, %v4022
      %v4056 = vmul.f32 %v3845, %v4022
      %v4057 = vmul.f32 %v3846, %v4022
      %v4058 = vmul.f32 %v3847, %v4022
      %v4059 = vmul.f32 %v3849, %v4022
      %v4060 = vmul.f32 %v3850, %v4022
      %v4061 = vmul.f32 %v3851, %v4022
      %v4062 = vmul.f32 %v3853, %v4022
      %v4063 = vmul.f32 %v3854, %v4022
      %v4064 = vmul.f32 %v3855, %v4022
      %v4065 = vmul.f32 %v3857, %v4022
      %v4066 = vmul.f32 %v3858, %v4022
      %v4067 = vmul.f32 %v3859, %v4022
      %v4068 = vmul.f32 %v3861, %v4022
      %v4069 = vmul.f32 %v3862, %v4022
      %v4070 = vmul.f32 %v3863, %v4022
      %v4071 = vmul.f32 %v3865, %v4022
      %v4072 = vmul.f32 %v3866, %v4022
      %v4073 = vmul.f32 %v3867, %v4022
      %v4074 = vmul.f32 %v3869, %v4022
      %v4075 = vmul.f32 %v3870, %v4022
      %v4076 = vmul.f32 %v3871, %v4022
      %s4077 = scalar_lea.vmem %s3, 4
      %v4078 = vld [vmem:[%s4077] sm:$0x1]
      %v4079 = vlaneseq
      %v4080 = vshrl.u32 %v4079, 7
      %v4081 = vsub.s32 0, %v4080
      %v4082 = vrot.slane %v4078, %v4081
      %v4083 = vmul.f32 %v3873, %v4082
      %v4084 = vmul.f32 %v3874, %v4082
      %v4085 = vmul.f32 %v3875, %v4082
      %v4086 = vmul.f32 %v3877, %v4082
      %v4087 = vmul.f32 %v3878, %v4082
      %v4088 = vmul.f32 %v3879, %v4082
      %v4089 = vmul.f32 %v3881, %v4082
      %v4090 = vmul.f32 %v3882, %v4082
      %v4091 = vmul.f32 %v3883, %v4082
      %v4092 = vmul.f32 %v3885, %v4082
      %v4093 = vmul.f32 %v3886, %v4082
      %v4094 = vmul.f32 %v3887, %v4082
      %v4095 = vmul.f32 %v3889, %v4082
      %v4096 = vmul.f32 %v3890, %v4082
      %v4097 = vmul.f32 %v3891, %v4082
      %v4098 = vmul.f32 %v3893, %v4082
      %v4099 = vmul.f32 %v3894, %v4082
      %v4100 = vmul.f32 %v3895, %v4082
      %v4101 = vmul.f32 %v3897, %v4082
      %v4102 = vmul.f32 %v3898, %v4082
      %v4103 = vmul.f32 %v3899, %v4082
      %v4104 = vmul.f32 %v3901, %v4082
      %v4105 = vmul.f32 %v3902, %v4082
      %v4106 = vmul.f32 %v3903, %v4082
      %v4107 = vmul.f32 %v3905, %v4082
      %v4108 = vmul.f32 %v3906, %v4082
      %v4109 = vmul.f32 %v3907, %v4082
      %v4110 = vmul.f32 %v3909, %v4082
      %v4111 = vmul.f32 %v3910, %v4082
      %v4112 = vmul.f32 %v3911, %v4082
      %v4113 = vmul.f32 %v3913, %v4082
      %v4114 = vmul.f32 %v3914, %v4082
      %v4115 = vmul.f32 %v3915, %v4082
      %v4116 = vmul.f32 %v3917, %v4082
      %v4117 = vmul.f32 %v3918, %v4082
      %v4118 = vmul.f32 %v3919, %v4082
      %v4119 = vmul.f32 %v3921, %v4082
      %v4120 = vmul.f32 %v3922, %v4082
      %v4121 = vmul.f32 %v3923, %v4082
      %v4122 = vmul.f32 %v3925, %v4082
      %v4123 = vmul.f32 %v3926, %v4082
      %v4124 = vmul.f32 %v3927, %v4082
      %v4125 = vmul.f32 %v3929, %v4082
      %v4126 = vmul.f32 %v3930, %v4082
      %v4127 = vmul.f32 %v3931, %v4082
      %v4128 = vmul.f32 %v3933, %v4082
      %v4129 = vmul.f32 %v3934, %v4082
      %v4130 = vmul.f32 %v3935, %v4082
      %v4131 = vmul.f32 %v3937, %v4082
      %v4132 = vmul.f32 %v3938, %v4082
      %v4133 = vmul.f32 %v3939, %v4082
      %v4134 = vmul.f32 %v3941, %v4082
      %v4135 = vmul.f32 %v3942, %v4082
      %v4136 = vmul.f32 %v3943, %v4082
      %v4137 = vadd.f32 %v4023, %v4083
      %v4138 = vadd.f32 %v4024, %v4084
      %v4139 = vadd.f32 %v4025, %v4085
      %v4140 = vadd.f32 %v4026, %v4086
      %v4141 = vadd.f32 %v4027, %v4087
      %v4142 = vadd.f32 %v4028, %v4088
      %v4143 = vadd.f32 %v4029, %v4089
      %v4144 = vadd.f32 %v4030, %v4090
      %v4145 = vadd.f32 %v4031, %v4091
      %v4146 = vadd.f32 %v4032, %v4092
      %v4147 = vadd.f32 %v4033, %v4093
      %v4148 = vadd.f32 %v4034, %v4094
      %v4149 = vadd.f32 %v4035, %v4095
      %v4150 = vadd.f32 %v4036, %v4096
      %v4151 = vadd.f32 %v4037, %v4097
      %v4152 = vadd.f32 %v4038, %v4098
      %v4153 = vadd.f32 %v4039, %v4099
      %v4154 = vadd.f32 %v4040, %v4100
      %v4155 = vadd.f32 %v4041, %v4101
      %v4156 = vadd.f32 %v4042, %v4102
      %v4157 = vadd.f32 %v4043, %v4103
      %v4158 = vadd.f32 %v4044, %v4104
      %v4159 = vadd.f32 %v4045, %v4105
      %v4160 = vadd.f32 %v4046, %v4106
      %v4161 = vadd.f32 %v4047, %v4107
      %v4162 = vadd.f32 %v4048, %v4108
      %v4163 = vadd.f32 %v4049, %v4109
      %v4164 = vadd.f32 %v4050, %v4110
      %v4165 = vadd.f32 %v4051, %v4111
      %v4166 = vadd.f32 %v4052, %v4112
      %v4167 = vadd.f32 %v4053, %v4113
      %v4168 = vadd.f32 %v4054, %v4114
      %v4169 = vadd.f32 %v4055, %v4115
      %v4170 = vadd.f32 %v4056, %v4116
      %v4171 = vadd.f32 %v4057, %v4117
      %v4172 = vadd.f32 %v4058, %v4118
      %v4173 = vadd.f32 %v4059, %v4119
      %v4174 = vadd.f32 %v4060, %v4120
      %v4175 = vadd.f32 %v4061, %v4121
      %v4176 = vadd.f32 %v4062, %v4122
      %v4177 = vadd.f32 %v4063, %v4123
      %v4178 = vadd.f32 %v4064, %v4124
      %v4179 = vadd.f32 %v4065, %v4125
      %v4180 = vadd.f32 %v4066, %v4126
      %v4181 = vadd.f32 %v4067, %v4127
      %v4182 = vadd.f32 %v4068, %v4128
      %v4183 = vadd.f32 %v4069, %v4129
      %v4184 = vadd.f32 %v4070, %v4130
      %v4185 = vadd.f32 %v4071, %v4131
      %v4186 = vadd.f32 %v4072, %v4132
      %v4187 = vadd.f32 %v4073, %v4133
      %v4188 = vadd.f32 %v4074, %v4134
      %v4189 = vadd.f32 %v4075, %v4135
      %v4190 = vadd.f32 %v4076, %v4136
      %s4191 = scalar_lea.vmem %s3, 8
      %v4192 = vld [vmem:[%s4191] sm:$0x1]
      %v4193 = vlaneseq
      %v4194 = vshrl.u32 %v4193, 7
      %v4195 = vsub.s32 0, %v4194
      %v4196 = vrot.slane %v4192, %v4195
      %v4197 = vmul.f32 %v3946, %v4196
      %v4198 = vmul.f32 %v3947, %v4196
      %v4199 = vmul.f32 %v3948, %v4196
      %v4200 = vmul.f32 %v3950, %v4196
      %v4201 = vmul.f32 %v3951, %v4196
      %v4202 = vmul.f32 %v3952, %v4196
      %v4203 = vmul.f32 %v3954, %v4196
      %v4204 = vmul.f32 %v3955, %v4196
      %v4205 = vmul.f32 %v3956, %v4196
      %v4206 = vmul.f32 %v3958, %v4196
      %v4207 = vmul.f32 %v3959, %v4196
      %v4208 = vmul.f32 %v3960, %v4196
      %v4209 = vmul.f32 %v3962, %v4196
      %v4210 = vmul.f32 %v3963, %v4196
      %v4211 = vmul.f32 %v3964, %v4196
      %v4212 = vmul.f32 %v3966, %v4196
      %v4213 = vmul.f32 %v3967, %v4196
      %v4214 = vmul.f32 %v3968, %v4196
      %v4215 = vmul.f32 %v3970, %v4196
      %v4216 = vmul.f32 %v3971, %v4196
      %v4217 = vmul.f32 %v3972, %v4196
      %v4218 = vmul.f32 %v3974, %v4196
      %v4219 = vmul.f32 %v3975, %v4196
      %v4220 = vmul.f32 %v3976, %v4196
      %v4221 = vmul.f32 %v3978, %v4196
      %v4222 = vmul.f32 %v3979, %v4196
      %v4223 = vmul.f32 %v3980, %v4196
      %v4224 = vmul.f32 %v3982, %v4196
      %v4225 = vmul.f32 %v3983, %v4196
      %v4226 = vmul.f32 %v3984, %v4196
      %v4227 = vmul.f32 %v3986, %v4196
      %v4228 = vmul.f32 %v3987, %v4196
      %v4229 = vmul.f32 %v3988, %v4196
      %v4230 = vmul.f32 %v3990, %v4196
      %v4231 = vmul.f32 %v3991, %v4196
      %v4232 = vmul.f32 %v3992, %v4196
      %v4233 = vmul.f32 %v3994, %v4196
      %v4234 = vmul.f32 %v3995, %v4196
      %v4235 = vmul.f32 %v3996, %v4196
      %v4236 = vmul.f32 %v3998, %v4196
      %v4237 = vmul.f32 %v3999, %v4196
      %v4238 = vmul.f32 %v4000, %v4196
      %v4239 = vmul.f32 %v4002, %v4196
      %v4240 = vmul.f32 %v4003, %v4196
      %v4241 = vmul.f32 %v4004, %v4196
      %v4242 = vmul.f32 %v4006, %v4196
      %v4243 = vmul.f32 %v4007, %v4196
      %v4244 = vmul.f32 %v4008, %v4196
      %v4245 = vmul.f32 %v4010, %v4196
      %v4246 = vmul.f32 %v4011, %v4196
      %v4247 = vmul.f32 %v4012, %v4196
      %v4248 = vmul.f32 %v4014, %v4196
      %v4249 = vmul.f32 %v4015, %v4196
      %v4250 = vmul.f32 %v4016, %v4196
      %v4251 = vadd.f32 %v4137, %v4197
      %v4252 = vadd.f32 %v4138, %v4198
      %v4253 = vadd.f32 %v4139, %v4199
      %v4254 = vadd.f32 %v4140, %v4200
      %v4255 = vadd.f32 %v4141, %v4201
      %v4256 = vadd.f32 %v4142, %v4202
      %v4257 = vadd.f32 %v4143, %v4203
      %v4258 = vadd.f32 %v4144, %v4204
      %v4259 = vadd.f32 %v4145, %v4205
      %v4260 = vadd.f32 %v4146, %v4206
      %v4261 = vadd.f32 %v4147, %v4207
      %v4262 = vadd.f32 %v4148, %v4208
      %v4263 = vadd.f32 %v4149, %v4209
      %v4264 = vadd.f32 %v4150, %v4210
      %v4265 = vadd.f32 %v4151, %v4211
      %v4266 = vadd.f32 %v4152, %v4212
      %v4267 = vadd.f32 %v4153, %v4213
      %v4268 = vadd.f32 %v4154, %v4214
      %v4269 = vadd.f32 %v4155, %v4215
      %v4270 = vadd.f32 %v4156, %v4216
      %v4271 = vadd.f32 %v4157, %v4217
      %v4272 = vadd.f32 %v4158, %v4218
      %v4273 = vadd.f32 %v4159, %v4219
      %v4274 = vadd.f32 %v4160, %v4220
      %v4275 = vadd.f32 %v4161, %v4221
      %v4276 = vadd.f32 %v4162, %v4222
      %v4277 = vadd.f32 %v4163, %v4223
      %v4278 = vadd.f32 %v4164, %v4224
      %v4279 = vadd.f32 %v4165, %v4225
      %v4280 = vadd.f32 %v4166, %v4226
      %v4281 = vadd.f32 %v4167, %v4227
      %v4282 = vadd.f32 %v4168, %v4228
      %v4283 = vadd.f32 %v4169, %v4229
      %v4284 = vadd.f32 %v4170, %v4230
      %v4285 = vadd.f32 %v4171, %v4231
      %v4286 = vadd.f32 %v4172, %v4232
      %v4287 = vadd.f32 %v4173, %v4233
      %v4288 = vadd.f32 %v4174, %v4234
      %v4289 = vadd.f32 %v4175, %v4235
      %v4290 = vadd.f32 %v4176, %v4236
      %v4291 = vadd.f32 %v4177, %v4237
      %v4292 = vadd.f32 %v4178, %v4238
      %v4293 = vadd.f32 %v4179, %v4239
      %v4294 = vadd.f32 %v4180, %v4240
      %v4295 = vadd.f32 %v4181, %v4241
      %v4296 = vadd.f32 %v4182, %v4242
      %v4297 = vadd.f32 %v4183, %v4243
      %v4298 = vadd.f32 %v4184, %v4244
      %v4299 = vadd.f32 %v4185, %v4245
      %v4300 = vadd.f32 %v4186, %v4246
      %v4301 = vadd.f32 %v4187, %v4247
      %v4302 = vadd.f32 %v4188, %v4248
      %v4303 = vadd.f32 %v4189, %v4249
      %v4304 = vadd.f32 %v4190, %v4250
      %v4305 = vld [vmem:[%s3 + $0x1] sm:$0x1]
      %v4306 = vlaneseq
      %v4307 = vshrl.u32 %v4306, 7
      %v4308 = vsub.s32 0, %v4307
      %v4309 = vrot.slane %v4305, %v4308
      %v4310 = vmul.f32 %v3802, %v4309
      %v4311 = vmul.f32 %v3803, %v4309
      %v4312 = vmul.f32 %v3806, %v4309
      %v4313 = vmul.f32 %v3807, %v4309
      %v4314 = vmul.f32 %v3810, %v4309
      %v4315 = vmul.f32 %v3811, %v4309
      %v4316 = vmul.f32 %v3814, %v4309
      %v4317 = vmul.f32 %v3815, %v4309
      %v4318 = vmul.f32 %v3818, %v4309
      %v4319 = vmul.f32 %v3819, %v4309
      %v4320 = vmul.f32 %v3822, %v4309
      %v4321 = vmul.f32 %v3823, %v4309
      %v4322 = vmul.f32 %v3826, %v4309
      %v4323 = vmul.f32 %v3827, %v4309
      %v4324 = vmul.f32 %v3830, %v4309
      %v4325 = vmul.f32 %v3831, %v4309
      %v4326 = vmul.f32 %v3834, %v4309
      %v4327 = vmul.f32 %v3835, %v4309
      %v4328 = vmul.f32 %v3838, %v4309
      %v4329 = vmul.f32 %v3839, %v4309
      %v4330 = vmul.f32 %v3842, %v4309
      %v4331 = vmul.f32 %v3843, %v4309
      %v4332 = vmul.f32 %v3846, %v4309
      %v4333 = vmul.f32 %v3847, %v4309
      %v4334 = vmul.f32 %v3850, %v4309
      %v4335 = vmul.f32 %v3851, %v4309
      %v4336 = vmul.f32 %v3854, %v4309
      %v4337 = vmul.f32 %v3855, %v4309
      %v4338 = vmul.f32 %v3858, %v4309
      %v4339 = vmul.f32 %v3859, %v4309
      %v4340 = vmul.f32 %v3862, %v4309
      %v4341 = vmul.f32 %v3863, %v4309
      %v4342 = vmul.f32 %v3866, %v4309
      %v4343 = vmul.f32 %v3867, %v4309
      %v4344 = vmul.f32 %v3870, %v4309
      %v4345 = vmul.f32 %v3871, %v4309
      %v4346 = vld [vmem:[%s4077 + $0x1] sm:$0x1]
      %v4347 = vlaneseq
      %v4348 = vshrl.u32 %v4347, 7
      %v4349 = vsub.s32 0, %v4348
      %v4350 = vrot.slane %v4346, %v4349
      %v4351 = vmul.f32 %v3874, %v4350
      %v4352 = vmul.f32 %v3875, %v4350
      %v4353 = vmul.f32 %v3878, %v4350
      %v4354 = vmul.f32 %v3879, %v4350
      %v4355 = vmul.f32 %v3882, %v4350
      %v4356 = vmul.f32 %v3883, %v4350
      %v4357 = vmul.f32 %v3886, %v4350
      %v4358 = vmul.f32 %v3887, %v4350
      %v4359 = vmul.f32 %v3890, %v4350
      %v4360 = vmul.f32 %v3891, %v4350
      %v4361 = vmul.f32 %v3894, %v4350
      %v4362 = vmul.f32 %v3895, %v4350
      %v4363 = vmul.f32 %v3898, %v4350
      %v4364 = vmul.f32 %v3899, %v4350
      %v4365 = vmul.f32 %v3902, %v4350
      %v4366 = vmul.f32 %v3903, %v4350
      %v4367 = vmul.f32 %v3906, %v4350
      %v4368 = vmul.f32 %v3907, %v4350
      %v4369 = vmul.f32 %v3910, %v4350
      %v4370 = vmul.f32 %v3911, %v4350
      %v4371 = vmul.f32 %v3914, %v4350
      %v4372 = vmul.f32 %v3915, %v4350
      %v4373 = vmul.f32 %v3918, %v4350
      %v4374 = vmul.f32 %v3919, %v4350
      %v4375 = vmul.f32 %v3922, %v4350
      %v4376 = vmul.f32 %v3923, %v4350
      %v4377 = vmul.f32 %v3926, %v4350
      %v4378 = vmul.f32 %v3927, %v4350
      %v4379 = vmul.f32 %v3930, %v4350
      %v4380 = vmul.f32 %v3931, %v4350
      %v4381 = vmul.f32 %v3934, %v4350
      %v4382 = vmul.f32 %v3935, %v4350
      %v4383 = vmul.f32 %v3938, %v4350
      %v4384 = vmul.f32 %v3939, %v4350
      %v4385 = vmul.f32 %v3942, %v4350
      %v4386 = vmul.f32 %v3943, %v4350
      %v4387 = vadd.f32 %v4310, %v4351
      %v4388 = vadd.f32 %v4311, %v4352
      %v4389 = vadd.f32 %v4312, %v4353
      %v4390 = vadd.f32 %v4313, %v4354
      %v4391 = vadd.f32 %v4314, %v4355
      %v4392 = vadd.f32 %v4315, %v4356
      %v4393 = vadd.f32 %v4316, %v4357
      %v4394 = vadd.f32 %v4317, %v4358
      %v4395 = vadd.f32 %v4318, %v4359
      %v4396 = vadd.f32 %v4319, %v4360
      %v4397 = vadd.f32 %v4320, %v4361
      %v4398 = vadd.f32 %v4321, %v4362
      %v4399 = vadd.f32 %v4322, %v4363
      %v4400 = vadd.f32 %v4323, %v4364
      %v4401 = vadd.f32 %v4324, %v4365
      %v4402 = vadd.f32 %v4325, %v4366
      %v4403 = vadd.f32 %v4326, %v4367
      %v4404 = vadd.f32 %v4327, %v4368
      %v4405 = vadd.f32 %v4328, %v4369
      %v4406 = vadd.f32 %v4329, %v4370
      %v4407 = vadd.f32 %v4330, %v4371
      %v4408 = vadd.f32 %v4331, %v4372
      %v4409 = vadd.f32 %v4332, %v4373
      %v4410 = vadd.f32 %v4333, %v4374
      %v4411 = vadd.f32 %v4334, %v4375
      %v4412 = vadd.f32 %v4335, %v4376
      %v4413 = vadd.f32 %v4336, %v4377
      %v4414 = vadd.f32 %v4337, %v4378
      %v4415 = vadd.f32 %v4338, %v4379
      %v4416 = vadd.f32 %v4339, %v4380
      %v4417 = vadd.f32 %v4340, %v4381
      %v4418 = vadd.f32 %v4341, %v4382
      %v4419 = vadd.f32 %v4342, %v4383
      %v4420 = vadd.f32 %v4343, %v4384
      %v4421 = vadd.f32 %v4344, %v4385
      %v4422 = vadd.f32 %v4345, %v4386
      %v4423 = vld [vmem:[%s4191 + $0x1] sm:$0x1]
      %v4424 = vlaneseq
      %v4425 = vshrl.u32 %v4424, 7
      %v4426 = vsub.s32 0, %v4425
      %v4427 = vrot.slane %v4423, %v4426
      %v4428 = vmul.f32 %v3947, %v4427
      %v4429 = vmul.f32 %v3948, %v4427
      %v4430 = vmul.f32 %v3951, %v4427
      %v4431 = vmul.f32 %v3952, %v4427
      %v4432 = vmul.f32 %v3955, %v4427
      %v4433 = vmul.f32 %v3956, %v4427
      %v4434 = vmul.f32 %v3959, %v4427
      %v4435 = vmul.f32 %v3960, %v4427
      %v4436 = vmul.f32 %v3963, %v4427
      %v4437 = vmul.f32 %v3964, %v4427
      %v4438 = vmul.f32 %v3967, %v4427
      %v4439 = vmul.f32 %v3968, %v4427
      %v4440 = vmul.f32 %v3971, %v4427
      %v4441 = vmul.f32 %v3972, %v4427
      %v4442 = vmul.f32 %v3975, %v4427
      %v4443 = vmul.f32 %v3976, %v4427
      %v4444 = vmul.f32 %v3979, %v4427
      %v4445 = vmul.f32 %v3980, %v4427
      %v4446 = vmul.f32 %v3983, %v4427
      %v4447 = vmul.f32 %v3984, %v4427
      %v4448 = vmul.f32 %v3987, %v4427
      %v4449 = vmul.f32 %v3988, %v4427
      %v4450 = vmul.f32 %v3991, %v4427
      %v4451 = vmul.f32 %v3992, %v4427
      %v4452 = vmul.f32 %v3995, %v4427
      %v4453 = vmul.f32 %v3996, %v4427
      %v4454 = vmul.f32 %v3999, %v4427
      %v4455 = vmul.f32 %v4000, %v4427
      %v4456 = vmul.f32 %v4003, %v4427
      %v4457 = vmul.f32 %v4004, %v4427
      %v4458 = vmul.f32 %v4007, %v4427
      %v4459 = vmul.f32 %v4008, %v4427
      %v4460 = vmul.f32 %v4011, %v4427
      %v4461 = vmul.f32 %v4012, %v4427
      %v4462 = vmul.f32 %v4015, %v4427
      %v4463 = vmul.f32 %v4016, %v4427
      %v4464 = vadd.f32 %v4387, %v4428
      %v4465 = vadd.f32 %v4388, %v4429
      %v4466 = vadd.f32 %v4389, %v4430
      %v4467 = vadd.f32 %v4390, %v4431
      %v4468 = vadd.f32 %v4391, %v4432
      %v4469 = vadd.f32 %v4392, %v4433
      %v4470 = vadd.f32 %v4393, %v4434
      %v4471 = vadd.f32 %v4394, %v4435
      %v4472 = vadd.f32 %v4395, %v4436
      %v4473 = vadd.f32 %v4396, %v4437
      %v4474 = vadd.f32 %v4397, %v4438
      %v4475 = vadd.f32 %v4398, %v4439
      %v4476 = vadd.f32 %v4399, %v4440
      %v4477 = vadd.f32 %v4400, %v4441
      %v4478 = vadd.f32 %v4401, %v4442
      %v4479 = vadd.f32 %v4402, %v4443
      %v4480 = vadd.f32 %v4403, %v4444
      %v4481 = vadd.f32 %v4404, %v4445
      %v4482 = vadd.f32 %v4405, %v4446
      %v4483 = vadd.f32 %v4406, %v4447
      %v4484 = vadd.f32 %v4407, %v4448
      %v4485 = vadd.f32 %v4408, %v4449
      %v4486 = vadd.f32 %v4409, %v4450
      %v4487 = vadd.f32 %v4410, %v4451
      %v4488 = vadd.f32 %v4411, %v4452
      %v4489 = vadd.f32 %v4412, %v4453
      %v4490 = vadd.f32 %v4413, %v4454
      %v4491 = vadd.f32 %v4414, %v4455
      %v4492 = vadd.f32 %v4415, %v4456
      %v4493 = vadd.f32 %v4416, %v4457
      %v4494 = vadd.f32 %v4417, %v4458
      %v4495 = vadd.f32 %v4418, %v4459
      %v4496 = vadd.f32 %v4419, %v4460
      %v4497 = vadd.f32 %v4420, %v4461
      %v4498 = vadd.f32 %v4421, %v4462
      %v4499 = vadd.f32 %v4422, %v4463
      %v4536 = vrot.slane %v4464, 1
      %v4537 = vrot.slane %v4465, 1
      %v4538 = vsel %vm1091, %v4536, %v4537
      %v4539 = vrot.slane %v4466, 1
      %v4540 = vrot.slane %v4467, 1
      %v4541 = vsel %vm1091, %v4539, %v4540
      %v4542 = vrot.slane %v4468, 1
      %v4543 = vrot.slane %v4469, 1
      %v4544 = vsel %vm1091, %v4542, %v4543
      %v4545 = vrot.slane %v4470, 1
      %v4546 = vrot.slane %v4471, 1
      %v4547 = vsel %vm1091, %v4545, %v4546
      %v4548 = vrot.slane %v4472, 1
      %v4549 = vrot.slane %v4473, 1
      %v4550 = vsel %vm1091, %v4548, %v4549
      %v4551 = vrot.slane %v4474, 1
      %v4552 = vrot.slane %v4475, 1
      %v4553 = vsel %vm1091, %v4551, %v4552
      %v4554 = vrot.slane %v4476, 1
      %v4555 = vrot.slane %v4477, 1
      %v4556 = vsel %vm1091, %v4554, %v4555
      %v4557 = vrot.slane %v4478, 1
      %v4558 = vrot.slane %v4479, 1
      %v4559 = vsel %vm1091, %v4557, %v4558
      %v4560 = vrot.slane %v4480, 1
      %v4561 = vrot.slane %v4481, 1
      %v4562 = vsel %vm1091, %v4560, %v4561
      %v4563 = vrot.slane %v4482, 1
      %v4564 = vrot.slane %v4483, 1
      %v4565 = vsel %vm1091, %v4563, %v4564
      %v4566 = vrot.slane %v4484, 1
      %v4567 = vrot.slane %v4485, 1
      %v4568 = vsel %vm1091, %v4566, %v4567
      %v4569 = vrot.slane %v4486, 1
      %v4570 = vrot.slane %v4487, 1
      %v4571 = vsel %vm1091, %v4569, %v4570
      %v4572 = vrot.slane %v4488, 1
      %v4573 = vrot.slane %v4489, 1
      %v4574 = vsel %vm1091, %v4572, %v4573
      %v4575 = vrot.slane %v4490, 1
      %v4576 = vrot.slane %v4491, 1
      %v4577 = vsel %vm1091, %v4575, %v4576
      %v4578 = vrot.slane %v4492, 1
      %v4579 = vrot.slane %v4493, 1
      %v4580 = vsel %vm1091, %v4578, %v4579
      %v4581 = vrot.slane %v4494, 1
      %v4582 = vrot.slane %v4495, 1
      %v4583 = vsel %vm1091, %v4581, %v4582
      %v4584 = vrot.slane %v4496, 1
      %v4585 = vrot.slane %v4497, 1
      %v4586 = vsel %vm1091, %v4584, %v4585
      %v4587 = vrot.slane %v4498, 1
      %v4588 = vrot.slane %v4499, 1
      %v4589 = vsel %vm1091, %v4587, %v4588
      %v4644 = vadd.f32 %v4251, %v4536
      %v4645 = vadd.f32 %v4252, %v4538
      %v4646 = vadd.f32 %v4253, %v4537
      %v4647 = vadd.f32 %v4254, %v4539
      %v4648 = vadd.f32 %v4255, %v4541
      %v4649 = vadd.f32 %v4256, %v4540
      %v4650 = vadd.f32 %v4257, %v4542
      %v4651 = vadd.f32 %v4258, %v4544
      %v4652 = vadd.f32 %v4259, %v4543
      %v4653 = vadd.f32 %v4260, %v4545
      %v4654 = vadd.f32 %v4261, %v4547
      %v4655 = vadd.f32 %v4262, %v4546
      %v4656 = vadd.f32 %v4263, %v4548
      %v4657 = vadd.f32 %v4264, %v4550
      %v4658 = vadd.f32 %v4265, %v4549
      %v4659 = vadd.f32 %v4266, %v4551
      %v4660 = vadd.f32 %v4267, %v4553
      %v4661 = vadd.f32 %v4268, %v4552
      %v4662 = vadd.f32 %v4269, %v4554
      %v4663 = vadd.f32 %v4270, %v4556
      %v4664 = vadd.f32 %v4271, %v4555
      %v4665 = vadd.f32 %v4272, %v4557
      %v4666 = vadd.f32 %v4273, %v4559
      %v4667 = vadd.f32 %v4274, %v4558
      %v4668 = vadd.f32 %v4275, %v4560
      %v4669 = vadd.f32 %v4276, %v4562
      %v4670 = vadd.f32 %v4277, %v4561
      %v4671 = vadd.f32 %v4278, %v4563
      %v4672 = vadd.f32 %v4279, %v4565
      %v4673 = vadd.f32 %v4280, %v4564
      %v4674 = vadd.f32 %v4281, %v4566
      %v4675 = vadd.f32 %v4282, %v4568
      %v4676 = vadd.f32 %v4283, %v4567
      %v4677 = vadd.f32 %v4284, %v4569
      %v4678 = vadd.f32 %v4285, %v4571
      %v4679 = vadd.f32 %v4286, %v4570
      %v4680 = vadd.f32 %v4287, %v4572
      %v4681 = vadd.f32 %v4288, %v4574
      %v4682 = vadd.f32 %v4289, %v4573
      %v4683 = vadd.f32 %v4290, %v4575
      %v4684 = vadd.f32 %v4291, %v4577
      %v4685 = vadd.f32 %v4292, %v4576
      %v4686 = vadd.f32 %v4293, %v4578
      %v4687 = vadd.f32 %v4294, %v4580
      %v4688 = vadd.f32 %v4295, %v4579
      %v4689 = vadd.f32 %v4296, %v4581
      %v4690 = vadd.f32 %v4297, %v4583
      %v4691 = vadd.f32 %v4298, %v4582
      %v4692 = vadd.f32 %v4299, %v4584
      %v4693 = vadd.f32 %v4300, %v4586
      %v4694 = vadd.f32 %v4301, %v4585
      %v4695 = vadd.f32 %v4302, %v4587
      %v4696 = vadd.f32 %v4303, %v4589
      %v4697 = vadd.f32 %v4304, %v4588
      %v4698 = vld [vmem:[%s3 + $0x2] sm:$0x1]
      %v4699 = vlaneseq
      %v4700 = vshrl.u32 %v4699, 7
      %v4701 = vsub.s32 0, %v4700
      %v4702 = vrot.slane %v4698, %v4701
      %v4703 = vmul.f32 %v3802, %v4702
      %v4704 = vmul.f32 %v3803, %v4702
      %v4705 = vmul.f32 %v3804, %v4702
      %v4706 = vmul.f32 %v3806, %v4702
      %v4707 = vmul.f32 %v3807, %v4702
      %v4708 = vmul.f32 %v3808, %v4702
      %v4709 = vmul.f32 %v3810, %v4702
      %v4710 = vmul.f32 %v3811, %v4702
      %v4711 = vmul.f32 %v3812, %v4702
      %v4712 = vmul.f32 %v3814, %v4702
      %v4713 = vmul.f32 %v3815, %v4702
      %v4714 = vmul.f32 %v3816, %v4702
      %v4715 = vmul.f32 %v3818, %v4702
      %v4716 = vmul.f32 %v3819, %v4702
      %v4717 = vmul.f32 %v3820, %v4702
      %v4718 = vmul.f32 %v3822, %v4702
      %v4719 = vmul.f32 %v3823, %v4702
      %v4720 = vmul.f32 %v3824, %v4702
      %v4721 = vmul.f32 %v3826, %v4702
      %v4722 = vmul.f32 %v3827, %v4702
      %v4723 = vmul.f32 %v3828, %v4702
      %v4724 = vmul.f32 %v3830, %v4702
      %v4725 = vmul.f32 %v3831, %v4702
      %v4726 = vmul.f32 %v3832, %v4702
      %v4727 = vmul.f32 %v3834, %v4702
      %v4728 = vmul.f32 %v3835, %v4702
      %v4729 = vmul.f32 %v3836, %v4702
      %v4730 = vmul.f32 %v3838, %v4702
      %v4731 = vmul.f32 %v3839, %v4702
      %v4732 = vmul.f32 %v3840, %v4702
      %v4733 = vmul.f32 %v3842, %v4702
      %v4734 = vmul.f32 %v3843, %v4702
      %v4735 = vmul.f32 %v3844, %v4702
      %v4736 = vmul.f32 %v3846, %v4702
      %v4737 = vmul.f32 %v3847, %v4702
      %v4738 = vmul.f32 %v3848, %v4702
      %v4739 = vmul.f32 %v3850, %v4702
      %v4740 = vmul.f32 %v3851, %v4702
      %v4741 = vmul.f32 %v3852, %v4702
      %v4742 = vmul.f32 %v3854, %v4702
      %v4743 = vmul.f32 %v3855, %v4702
      %v4744 = vmul.f32 %v3856, %v4702
      %v4745 = vmul.f32 %v3858, %v4702
      %v4746 = vmul.f32 %v3859, %v4702
      %v4747 = vmul.f32 %v3860, %v4702
      %v4748 = vmul.f32 %v3862, %v4702
      %v4749 = vmul.f32 %v3863, %v4702
      %v4750 = vmul.f32 %v3864, %v4702
      %v4751 = vmul.f32 %v3866, %v4702
      %v4752 = vmul.f32 %v3867, %v4702
      %v4753 = vmul.f32 %v3868, %v4702
      %v4754 = vmul.f32 %v3870, %v4702
      %v4755 = vmul.f32 %v3871, %v4702
      %v4756 = vmul.f32 %v3872, %v4702
      %v4757 = vld [vmem:[%s4077 + $0x2] sm:$0x1]
      %v4758 = vlaneseq
      %v4759 = vshrl.u32 %v4758, 7
      %v4760 = vsub.s32 0, %v4759
      %v4761 = vrot.slane %v4757, %v4760
      %v4762 = vmul.f32 %v3874, %v4761
      %v4763 = vmul.f32 %v3875, %v4761
      %v4764 = vmul.f32 %v3876, %v4761
      %v4765 = vmul.f32 %v3878, %v4761
      %v4766 = vmul.f32 %v3879, %v4761
      %v4767 = vmul.f32 %v3880, %v4761
      %v4768 = vmul.f32 %v3882, %v4761
      %v4769 = vmul.f32 %v3883, %v4761
      %v4770 = vmul.f32 %v3884, %v4761
      %v4771 = vmul.f32 %v3886, %v4761
      %v4772 = vmul.f32 %v3887, %v4761
      %v4773 = vmul.f32 %v3888, %v4761
      %v4774 = vmul.f32 %v3890, %v4761
      %v4775 = vmul.f32 %v3891, %v4761
      %v4776 = vmul.f32 %v3892, %v4761
      %v4777 = vmul.f32 %v3894, %v4761
      %v4778 = vmul.f32 %v3895, %v4761
      %v4779 = vmul.f32 %v3896, %v4761
      %v4780 = vmul.f32 %v3898, %v4761
      %v4781 = vmul.f32 %v3899, %v4761
      %v4782 = vmul.f32 %v3900, %v4761
      %v4783 = vmul.f32 %v3902, %v4761
      %v4784 = vmul.f32 %v3903, %v4761
      %v4785 = vmul.f32 %v3904, %v4761
      %v4786 = vmul.f32 %v3906, %v4761
      %v4787 = vmul.f32 %v3907, %v4761
      %v4788 = vmul.f32 %v3908, %v4761
      %v4789 = vmul.f32 %v3910, %v4761
      %v4790 = vmul.f32 %v3911, %v4761
      %v4791 = vmul.f32 %v3912, %v4761
      %v4792 = vmul.f32 %v3914, %v4761
      %v4793 = vmul.f32 %v3915, %v4761
      %v4794 = vmul.f32 %v3916, %v4761
      %v4795 = vmul.f32 %v3918, %v4761
      %v4796 = vmul.f32 %v3919, %v4761
      %v4797 = vmul.f32 %v3920, %v4761
      %v4798 = vmul.f32 %v3922, %v4761
      %v4799 = vmul.f32 %v3923, %v4761
      %v4800 = vmul.f32 %v3924, %v4761
      %v4801 = vmul.f32 %v3926, %v4761
      %v4802 = vmul.f32 %v3927, %v4761
      %v4803 = vmul.f32 %v3928, %v4761
      %v4804 = vmul.f32 %v3930, %v4761
      %v4805 = vmul.f32 %v3931, %v4761
      %v4806 = vmul.f32 %v3932, %v4761
      %v4807 = vmul.f32 %v3934, %v4761
      %v4808 = vmul.f32 %v3935, %v4761
      %v4809 = vmul.f32 %v3936, %v4761
      %v4810 = vmul.f32 %v3938, %v4761
      %v4811 = vmul.f32 %v3939, %v4761
      %v4812 = vmul.f32 %v3940, %v4761
      %v4813 = vmul.f32 %v3942, %v4761
      %v4814 = vmul.f32 %v3943, %v4761
      %v4815 = vmul.f32 %v3944, %v4761
      %v4816 = vadd.f32 %v4703, %v4762
      %v4817 = vadd.f32 %v4704, %v4763
      %v4818 = vadd.f32 %v4705, %v4764
      %v4819 = vadd.f32 %v4706, %v4765
      %v4820 = vadd.f32 %v4707, %v4766
      %v4821 = vadd.f32 %v4708, %v4767
      %v4822 = vadd.f32 %v4709, %v4768
      %v4823 = vadd.f32 %v4710, %v4769
      %v4824 = vadd.f32 %v4711, %v4770
      %v4825 = vadd.f32 %v4712, %v4771
      %v4826 = vadd.f32 %v4713, %v4772
      %v4827 = vadd.f32 %v4714, %v4773
      %v4828 = vadd.f32 %v4715, %v4774
      %v4829 = vadd.f32 %v4716, %v4775
      %v4830 = vadd.f32 %v4717, %v4776
      %v4831 = vadd.f32 %v4718, %v4777
      %v4832 = vadd.f32 %v4719, %v4778
      %v4833 = vadd.f32 %v4720, %v4779
      %v4834 = vadd.f32 %v4721, %v4780
      %v4835 = vadd.f32 %v4722, %v4781
      %v4836 = vadd.f32 %v4723, %v4782
      %v4837 = vadd.f32 %v4724, %v4783
      %v4838 = vadd.f32 %v4725, %v4784
      %v4839 = vadd.f32 %v4726, %v4785
      %v4840 = vadd.f32 %v4727, %v4786
      %v4841 = vadd.f32 %v4728, %v4787
      %v4842 = vadd.f32 %v4729, %v4788
      %v4843 = vadd.f32 %v4730, %v4789
      %v4844 = vadd.f32 %v4731, %v4790
      %v4845 = vadd.f32 %v4732, %v4791
      %v4846 = vadd.f32 %v4733, %v4792
      %v4847 = vadd.f32 %v4734, %v4793
      %v4848 = vadd.f32 %v4735, %v4794
      %v4849 = vadd.f32 %v4736, %v4795
      %v4850 = vadd.f32 %v4737, %v4796
      %v4851 = vadd.f32 %v4738, %v4797
      %v4852 = vadd.f32 %v4739, %v4798
      %v4853 = vadd.f32 %v4740, %v4799
      %v4854 = vadd.f32 %v4741, %v4800
      %v4855 = vadd.f32 %v4742, %v4801
      %v4856 = vadd.f32 %v4743, %v4802
      %v4857 = vadd.f32 %v4744, %v4803
      %v4858 = vadd.f32 %v4745, %v4804
      %v4859 = vadd.f32 %v4746, %v4805
      %v4860 = vadd.f32 %v4747, %v4806
      %v4861 = vadd.f32 %v4748, %v4807
      %v4862 = vadd.f32 %v4749, %v4808
      %v4863 = vadd.f32 %v4750, %v4809
      %v4864 = vadd.f32 %v4751, %v4810
      %v4865 = vadd.f32 %v4752, %v4811
      %v4866 = vadd.f32 %v4753, %v4812
      %v4867 = vadd.f32 %v4754, %v4813
      %v4868 = vadd.f32 %v4755, %v4814
      %v4869 = vadd.f32 %v4756, %v4815
      %v4870 = vld [vmem:[%s4191 + $0x2] sm:$0x1]
      %v4871 = vlaneseq
      %v4872 = vshrl.u32 %v4871, 7
      %v4873 = vsub.s32 0, %v4872
      %v4874 = vrot.slane %v4870, %v4873
      %v4875 = vmul.f32 %v3947, %v4874
      %v4876 = vmul.f32 %v3948, %v4874
      %v4877 = vmul.f32 %v3949, %v4874
      %v4878 = vmul.f32 %v3951, %v4874
      %v4879 = vmul.f32 %v3952, %v4874
      %v4880 = vmul.f32 %v3953, %v4874
      %v4881 = vmul.f32 %v3955, %v4874
      %v4882 = vmul.f32 %v3956, %v4874
      %v4883 = vmul.f32 %v3957, %v4874
      %v4884 = vmul.f32 %v3959, %v4874
      %v4885 = vmul.f32 %v3960, %v4874
      %v4886 = vmul.f32 %v3961, %v4874
      %v4887 = vmul.f32 %v3963, %v4874
      %v4888 = vmul.f32 %v3964, %v4874
      %v4889 = vmul.f32 %v3965, %v4874
      %v4890 = vmul.f32 %v3967, %v4874
      %v4891 = vmul.f32 %v3968, %v4874
      %v4892 = vmul.f32 %v3969, %v4874
      %v4893 = vmul.f32 %v3971, %v4874
      %v4894 = vmul.f32 %v3972, %v4874
      %v4895 = vmul.f32 %v3973, %v4874
      %v4896 = vmul.f32 %v3975, %v4874
      %v4897 = vmul.f32 %v3976, %v4874
      %v4898 = vmul.f32 %v3977, %v4874
      %v4899 = vmul.f32 %v3979, %v4874
      %v4900 = vmul.f32 %v3980, %v4874
      %v4901 = vmul.f32 %v3981, %v4874
      %v4902 = vmul.f32 %v3983, %v4874
      %v4903 = vmul.f32 %v3984, %v4874
      %v4904 = vmul.f32 %v3985, %v4874
      %v4905 = vmul.f32 %v3987, %v4874
      %v4906 = vmul.f32 %v3988, %v4874
      %v4907 = vmul.f32 %v3989, %v4874
      %v4908 = vmul.f32 %v3991, %v4874
      %v4909 = vmul.f32 %v3992, %v4874
      %v4910 = vmul.f32 %v3993, %v4874
      %v4911 = vmul.f32 %v3995, %v4874
      %v4912 = vmul.f32 %v3996, %v4874
      %v4913 = vmul.f32 %v3997, %v4874
      %v4914 = vmul.f32 %v3999, %v4874
      %v4915 = vmul.f32 %v4000, %v4874
      %v4916 = vmul.f32 %v4001, %v4874
      %v4917 = vmul.f32 %v4003, %v4874
      %v4918 = vmul.f32 %v4004, %v4874
      %v4919 = vmul.f32 %v4005, %v4874
      %v4920 = vmul.f32 %v4007, %v4874
      %v4921 = vmul.f32 %v4008, %v4874
      %v4922 = vmul.f32 %v4009, %v4874
      %v4923 = vmul.f32 %v4011, %v4874
      %v4924 = vmul.f32 %v4012, %v4874
      %v4925 = vmul.f32 %v4013, %v4874
      %v4926 = vmul.f32 %v4015, %v4874
      %v4927 = vmul.f32 %v4016, %v4874
      %v4928 = vmul.f32 %v4017, %v4874
      %v4929 = vadd.f32 %v4816, %v4875
      %v4930 = vadd.f32 %v4817, %v4876
      %v4931 = vadd.f32 %v4818, %v4877
      %v4932 = vadd.f32 %v4819, %v4878
      %v4933 = vadd.f32 %v4820, %v4879
      %v4934 = vadd.f32 %v4821, %v4880
      %v4935 = vadd.f32 %v4822, %v4881
      %v4936 = vadd.f32 %v4823, %v4882
      %v4937 = vadd.f32 %v4824, %v4883
      %v4938 = vadd.f32 %v4825, %v4884
      %v4939 = vadd.f32 %v4826, %v4885
      %v4940 = vadd.f32 %v4827, %v4886
      %v4941 = vadd.f32 %v4828, %v4887
      %v4942 = vadd.f32 %v4829, %v4888
      %v4943 = vadd.f32 %v4830, %v4889
      %v4944 = vadd.f32 %v4831, %v4890
      %v4945 = vadd.f32 %v4832, %v4891
      %v4946 = vadd.f32 %v4833, %v4892
      %v4947 = vadd.f32 %v4834, %v4893
      %v4948 = vadd.f32 %v4835, %v4894
      %v4949 = vadd.f32 %v4836, %v4895
      %v4950 = vadd.f32 %v4837, %v4896
      %v4951 = vadd.f32 %v4838, %v4897
      %v4952 = vadd.f32 %v4839, %v4898
      %v4953 = vadd.f32 %v4840, %v4899
      %v4954 = vadd.f32 %v4841, %v4900
      %v4955 = vadd.f32 %v4842, %v4901
      %v4956 = vadd.f32 %v4843, %v4902
      %v4957 = vadd.f32 %v4844, %v4903
      %v4958 = vadd.f32 %v4845, %v4904
      %v4959 = vadd.f32 %v4846, %v4905
      %v4960 = vadd.f32 %v4847, %v4906
      %v4961 = vadd.f32 %v4848, %v4907
      %v4962 = vadd.f32 %v4849, %v4908
      %v4963 = vadd.f32 %v4850, %v4909
      %v4964 = vadd.f32 %v4851, %v4910
      %v4965 = vadd.f32 %v4852, %v4911
      %v4966 = vadd.f32 %v4853, %v4912
      %v4967 = vadd.f32 %v4854, %v4913
      %v4968 = vadd.f32 %v4855, %v4914
      %v4969 = vadd.f32 %v4856, %v4915
      %v4970 = vadd.f32 %v4857, %v4916
      %v4971 = vadd.f32 %v4858, %v4917
      %v4972 = vadd.f32 %v4859, %v4918
      %v4973 = vadd.f32 %v4860, %v4919
      %v4974 = vadd.f32 %v4861, %v4920
      %v4975 = vadd.f32 %v4862, %v4921
      %v4976 = vadd.f32 %v4863, %v4922
      %v4977 = vadd.f32 %v4864, %v4923
      %v4978 = vadd.f32 %v4865, %v4924
      %v4979 = vadd.f32 %v4866, %v4925
      %v4980 = vadd.f32 %v4867, %v4926
      %v4981 = vadd.f32 %v4868, %v4927
      %v4982 = vadd.f32 %v4869, %v4928
      %v5037 = vrot.slane %v4929, 2
      %v5038 = vrot.slane %v4930, 2
      %v5039 = vsel %vm3326, %v5037, %v5038
      %v5040 = vrot.slane %v4931, 2
      %v5041 = vsel %vm3326, %v5038, %v5040
      %v5042 = vrot.slane %v4932, 2
      %v5043 = vrot.slane %v4933, 2
      %v5044 = vsel %vm3326, %v5042, %v5043
      %v5045 = vrot.slane %v4934, 2
      %v5046 = vsel %vm3326, %v5043, %v5045
      %v5047 = vrot.slane %v4935, 2
      %v5048 = vrot.slane %v4936, 2
      %v5049 = vsel %vm3326, %v5047, %v5048
      %v5050 = vrot.slane %v4937, 2
      %v5051 = vsel %vm3326, %v5048, %v5050
      %v5052 = vrot.slane %v4938, 2
      %v5053 = vrot.slane %v4939, 2
      %v5054 = vsel %vm3326, %v5052, %v5053
      %v5055 = vrot.slane %v4940, 2
      %v5056 = vsel %vm3326, %v5053, %v5055
      %v5057 = vrot.slane %v4941, 2
      %v5058 = vrot.slane %v4942, 2
      %v5059 = vsel %vm3326, %v5057, %v5058
      %v5060 = vrot.slane %v4943, 2
      %v5061 = vsel %vm3326, %v5058, %v5060
      %v5062 = vrot.slane %v4944, 2
      %v5063 = vrot.slane %v4945, 2
      %v5064 = vsel %vm3326, %v5062, %v5063
      %v5065 = vrot.slane %v4946, 2
      %v5066 = vsel %vm3326, %v5063, %v5065
      %v5067 = vrot.slane %v4947, 2
      %v5068 = vrot.slane %v4948, 2
      %v5069 = vsel %vm3326, %v5067, %v5068
      %v5070 = vrot.slane %v4949, 2
      %v5071 = vsel %vm3326, %v5068, %v5070
      %v5072 = vrot.slane %v4950, 2
      %v5073 = vrot.slane %v4951, 2
      %v5074 = vsel %vm3326, %v5072, %v5073
      %v5075 = vrot.slane %v4952, 2
      %v5076 = vsel %vm3326, %v5073, %v5075
      %v5077 = vrot.slane %v4953, 2
      %v5078 = vrot.slane %v4954, 2
      %v5079 = vsel %vm3326, %v5077, %v5078
      %v5080 = vrot.slane %v4955, 2
      %v5081 = vsel %vm3326, %v5078, %v5080
      %v5082 = vrot.slane %v4956, 2
      %v5083 = vrot.slane %v4957, 2
      %v5084 = vsel %vm3326, %v5082, %v5083
      %v5085 = vrot.slane %v4958, 2
      %v5086 = vsel %vm3326, %v5083, %v5085
      %v5087 = vrot.slane %v4959, 2
      %v5088 = vrot.slane %v4960, 2
      %v5089 = vsel %vm3326, %v5087, %v5088
      %v5090 = vrot.slane %v4961, 2
      %v5091 = vsel %vm3326, %v5088, %v5090
      %v5092 = vrot.slane %v4962, 2
      %v5093 = vrot.slane %v4963, 2
      %v5094 = vsel %vm3326, %v5092, %v5093
      %v5095 = vrot.slane %v4964, 2
      %v5096 = vsel %vm3326, %v5093, %v5095
      %v5097 = vrot.slane %v4965, 2
      %v5098 = vrot.slane %v4966, 2
      %v5099 = vsel %vm3326, %v5097, %v5098
      %v5100 = vrot.slane %v4967, 2
      %v5101 = vsel %vm3326, %v5098, %v5100
      %v5102 = vrot.slane %v4968, 2
      %v5103 = vrot.slane %v4969, 2
      %v5104 = vsel %vm3326, %v5102, %v5103
      %v5105 = vrot.slane %v4970, 2
      %v5106 = vsel %vm3326, %v5103, %v5105
      %v5107 = vrot.slane %v4971, 2
      %v5108 = vrot.slane %v4972, 2
      %v5109 = vsel %vm3326, %v5107, %v5108
      %v5110 = vrot.slane %v4973, 2
      %v5111 = vsel %vm3326, %v5108, %v5110
      %v5112 = vrot.slane %v4974, 2
      %v5113 = vrot.slane %v4975, 2
      %v5114 = vsel %vm3326, %v5112, %v5113
      %v5115 = vrot.slane %v4976, 2
      %v5116 = vsel %vm3326, %v5113, %v5115
      %v5117 = vrot.slane %v4977, 2
      %v5118 = vrot.slane %v4978, 2
      %v5119 = vsel %vm3326, %v5117, %v5118
      %v5120 = vrot.slane %v4979, 2
      %v5121 = vsel %vm3326, %v5118, %v5120
      %v5122 = vrot.slane %v4980, 2
      %v5123 = vrot.slane %v4981, 2
      %v5124 = vsel %vm3326, %v5122, %v5123
      %v5125 = vrot.slane %v4982, 2
      %v5126 = vsel %vm3326, %v5123, %v5125
      %v5181 = vadd.f32 %v4644, %v5037
      %v5182 = vadd.f32 %v4645, %v5039
      %v5183 = vadd.f32 %v4646, %v5041
      %v5184 = vadd.f32 %v4647, %v5042
      %v5185 = vadd.f32 %v4648, %v5044
      %v5186 = vadd.f32 %v4649, %v5046
      %v5187 = vadd.f32 %v4650, %v5047
      %v5188 = vadd.f32 %v4651, %v5049
      %v5189 = vadd.f32 %v4652, %v5051
      %v5190 = vadd.f32 %v4653, %v5052
      %v5191 = vadd.f32 %v4654, %v5054
      %v5192 = vadd.f32 %v4655, %v5056
      %v5193 = vadd.f32 %v4656, %v5057
      %v5194 = vadd.f32 %v4657, %v5059
      %v5195 = vadd.f32 %v4658, %v5061
      %v5196 = vadd.f32 %v4659, %v5062
      %v5197 = vadd.f32 %v4660, %v5064
      %v5198 = vadd.f32 %v4661, %v5066
      %v5199 = vadd.f32 %v4662, %v5067
      %v5200 = vadd.f32 %v4663, %v5069
      %v5201 = vadd.f32 %v4664, %v5071
      %v5202 = vadd.f32 %v4665, %v5072
      %v5203 = vadd.f32 %v4666, %v5074
      %v5204 = vadd.f32 %v4667, %v5076
      %v5205 = vadd.f32 %v4668, %v5077
      %v5206 = vadd.f32 %v4669, %v5079
      %v5207 = vadd.f32 %v4670, %v5081
      %v5208 = vadd.f32 %v4671, %v5082
      %v5209 = vadd.f32 %v4672, %v5084
      %v5210 = vadd.f32 %v4673, %v5086
      %v5211 = vadd.f32 %v4674, %v5087
      %v5212 = vadd.f32 %v4675, %v5089
      %v5213 = vadd.f32 %v4676, %v5091
      %v5214 = vadd.f32 %v4677, %v5092
      %v5215 = vadd.f32 %v4678, %v5094
      %v5216 = vadd.f32 %v4679, %v5096
      %v5217 = vadd.f32 %v4680, %v5097
      %v5218 = vadd.f32 %v4681, %v5099
      %v5219 = vadd.f32 %v4682, %v5101
      %v5220 = vadd.f32 %v4683, %v5102
      %v5221 = vadd.f32 %v4684, %v5104
      %v5222 = vadd.f32 %v4685, %v5106
      %v5223 = vadd.f32 %v4686, %v5107
      %v5224 = vadd.f32 %v4687, %v5109
      %v5225 = vadd.f32 %v4688, %v5111
      %v5226 = vadd.f32 %v4689, %v5112
      %v5227 = vadd.f32 %v4690, %v5114
      %v5228 = vadd.f32 %v4691, %v5116
      %v5229 = vadd.f32 %v4692, %v5117
      %v5230 = vadd.f32 %v4693, %v5119
      %v5231 = vadd.f32 %v4694, %v5121
      %v5232 = vadd.f32 %v4695, %v5122
      %v5233 = vadd.f32 %v4696, %v5124
      %v5234 = vadd.f32 %v4697, %v5126
      %5235 = vst.msk [vmem:[%s2118 + $0x1] sm:$0x80] %vm3727, %v5181
      %5236 = vst.msk [vmem:[%s2118 + $0x9] sm:$0xff] %vm1912, %v5182
      %5237 = vst.msk [vmem:[%s2118 + $0x11] sm:$0x7f] %vm3730, %v5183
      %5238 = vst.msk [vmem:[%s2118 + $0x21] sm:$0x80] %vm3727, %v5184
      %5239 = vst.msk [vmem:[%s2118 + $0x29] sm:$0xff] %vm1912, %v5185
      %5240 = vst.msk [vmem:[%s2118 + $0x31] sm:$0x7f] %vm3730, %v5186
      %5241 = vst.msk [vmem:[%s2118 + $0x41] sm:$0x80] %vm3727, %v5187
      %5242 = vst.msk [vmem:[%s2118 + $0x49] sm:$0xff] %vm1912, %v5188
      %5243 = vst.msk [vmem:[%s2118 + $0x51] sm:$0x7f] %vm3730, %v5189
      %5244 = vst.msk [vmem:[%s2118 + $0x61] sm:$0x80] %vm3727, %v5190
      %5245 = vst.msk [vmem:[%s2118 + $0x69] sm:$0xff] %vm1912, %v5191
      %5246 = vst.msk [vmem:[%s2118 + $0x71] sm:$0x7f] %vm3730, %v5192
      %5247 = vst.msk [vmem:[%s2118 + $0x81] sm:$0x80] %vm3727, %v5193
      %5248 = vst.msk [vmem:[%s2118 + $0x89] sm:$0xff] %vm1912, %v5194
      %5249 = vst.msk [vmem:[%s2118 + $0x91] sm:$0x7f] %vm3730, %v5195
      %5250 = vst.msk [vmem:[%s2118 + $0xa1] sm:$0x80] %vm3727, %v5196
      %5251 = vst.msk [vmem:[%s2118 + $0xa9] sm:$0xff] %vm1912, %v5197
      %5252 = vst.msk [vmem:[%s2118 + $0xb1] sm:$0x7f] %vm3730, %v5198
      %5253 = vst.msk [vmem:[%s2118 + $0xc1] sm:$0x80] %vm3727, %v5199
      %5254 = vst.msk [vmem:[%s2118 + $0xc9] sm:$0xff] %vm1912, %v5200
      %5255 = vst.msk [vmem:[%s2118 + $0xd1] sm:$0x7f] %vm3730, %v5201
      %5256 = vst.msk [vmem:[%s2118 + $0xe1] sm:$0x80] %vm3727, %v5202
      %5257 = vst.msk [vmem:[%s2118 + $0xe9] sm:$0xff] %vm1912, %v5203
      %5258 = vst.msk [vmem:[%s2118 + $0xf1] sm:$0x7f] %vm3730, %v5204
      %5259 = vst.msk [vmem:[%s2118 + $0x101] sm:$0x80] %vm3727, %v5205
      %5260 = vst.msk [vmem:[%s2118 + $0x109] sm:$0xff] %vm1912, %v5206
      %5261 = vst.msk [vmem:[%s2118 + $0x111] sm:$0x7f] %vm3730, %v5207
      %5262 = vst.msk [vmem:[%s2118 + $0x121] sm:$0x80] %vm3727, %v5208
      %5263 = vst.msk [vmem:[%s2118 + $0x129] sm:$0xff] %vm1912, %v5209
      %5264 = vst.msk [vmem:[%s2118 + $0x131] sm:$0x7f] %vm3730, %v5210
      %5265 = vst.msk [vmem:[%s2118 + $0x141] sm:$0x80] %vm3727, %v5211
      %5266 = vst.msk [vmem:[%s2118 + $0x149] sm:$0xff] %vm1912, %v5212
      %5267 = vst.msk [vmem:[%s2118 + $0x151] sm:$0x7f] %vm3730, %v5213
      %5268 = vst.msk [vmem:[%s2118 + $0x161] sm:$0x80] %vm3727, %v5214
      %5269 = vst.msk [vmem:[%s2118 + $0x169] sm:$0xff] %vm1912, %v5215
      %5270 = vst.msk [vmem:[%s2118 + $0x171] sm:$0x7f] %vm3730, %v5216
      %5271 = vst.msk [vmem:[%s2118 + $0x181] sm:$0x80] %vm3727, %v5217
      %5272 = vst.msk [vmem:[%s2118 + $0x189] sm:$0xff] %vm1912, %v5218
      %5273 = vst.msk [vmem:[%s2118 + $0x191] sm:$0x7f] %vm3730, %v5219
      %5274 = vst.msk [vmem:[%s2118 + $0x1a1] sm:$0x80] %vm3727, %v5220
      %5275 = vst.msk [vmem:[%s2118 + $0x1a9] sm:$0xff] %vm1912, %v5221
      %5276 = vst.msk [vmem:[%s2118 + $0x1b1] sm:$0x7f] %vm3730, %v5222
      %5277 = vst.msk [vmem:[%s2118 + $0x1c1] sm:$0x80] %vm3727, %v5223
      %5278 = vst.msk [vmem:[%s2118 + $0x1c9] sm:$0xff] %vm1912, %v5224
      %5279 = vst.msk [vmem:[%s2118 + $0x1d1] sm:$0x7f] %vm3730, %v5225
      %5280 = vst.msk [vmem:[%s2118 + $0x1e1] sm:$0x80] %vm3727, %v5226
      %5281 = vst.msk [vmem:[%s2118 + $0x1e9] sm:$0xff] %vm1912, %v5227
      %5282 = vst.msk [vmem:[%s2118 + $0x1f1] sm:$0x7f] %vm3730, %v5228
      %5283 = vst.msk [vmem:[%s2118 + $0x201] sm:$0x80] %vm3727, %v5229
      %5284 = vst.msk [vmem:[%s2118 + $0x209] sm:$0xff] %vm1912, %v5230
      %5285 = vst.msk [vmem:[%s2118 + $0x211] sm:$0x7f] %vm3730, %v5231
      %5286 = vst.msk [vmem:[%s2118 + $0x221] sm:$0x80] %vm3727, %v5232
      %5287 = vst.msk [vmem:[%s2118 + $0x229] sm:$0xff] %vm1912, %v5233
      %5288 = vst.msk [vmem:[%s2118 + $0x231] sm:$0x7f] %vm3730, %v5234
      // Predicated region
      $region57: #{tpu_custom_call.1} parent=51 // pred_check
        %p5289 = pneg %p345
      $region58: #{tpu_custom_call.1} parent=51 // pred_check_branch
        %5291 = sbr.rel (%p5289) target = $region60
      $region59: #{tpu_custom_call.1} parent=51 // pred_region
        %5292 = vst.msk [vmem:[%s2118 + $0x8] sm:$0xff] %vm1912, 0.0
        %5293 = vst.msk [vmem:[%s2118 + $0x10] sm:$0xff] %vm1912, 0.0
        %s5294 = scalar_lea.vmem [#allocation2], 640
        %5295 = vst.msk [vmem:[%s5294 + $0x8] sm:$0xff] %vm1912, 0.0
        %5296 = vst.msk [vmem:[%s5294 + $0x10] sm:$0xff] %vm1912, 0.0
      $region60: #{tpu_custom_call.1} parent=51 // pred_fallthru
        _
      %v5297 = vld [vmem:[%s2118] sm:$0xff]
      %v5298 = vld [vmem:[%s2118 + $0x8] sm:$0xff]
      %v5299 = vld [vmem:[%s2118 + $0x10] sm:$0xff]
      %v5300 = vld [vmem:[%s2118 + $0x18] sm:$0xff]
      %v5301 = vld [vmem:[%s2118 + $0x20] sm:$0xff]
      %v5302 = vld [vmem:[%s2118 + $0x28] sm:$0xff]
      %v5303 = vld [vmem:[%s2118 + $0x30] sm:$0xff]
      %v5304 = vld [vmem:[%s2118 + $0x38] sm:$0xff]
      %v5305 = vld [vmem:[%s2118 + $0x40] sm:$0xff]
      %v5306 = vld [vmem:[%s2118 + $0x48] sm:$0xff]
      %v5307 = vld [vmem:[%s2118 + $0x50] sm:$0xff]
      %v5308 = vld [vmem:[%s2118 + $0x58] sm:$0xff]
      %v5309 = vld [vmem:[%s2118 + $0x60] sm:$0xff]
      %v5310 = vld [vmem:[%s2118 + $0x68] sm:$0xff]
      %v5311 = vld [vmem:[%s2118 + $0x70] sm:$0xff]
      %v5312 = vld [vmem:[%s2118 + $0x78] sm:$0xff]
      %v5313 = vld [vmem:[%s2118 + $0x80] sm:$0xff]
      %v5314 = vld [vmem:[%s2118 + $0x88] sm:$0xff]
      %v5315 = vld [vmem:[%s2118 + $0x90] sm:$0xff]
      %v5316 = vld [vmem:[%s2118 + $0x98] sm:$0xff]
      %v5317 = vld [vmem:[%s2118 + $0xa0] sm:$0xff]
      %v5318 = vld [vmem:[%s2118 + $0xa8] sm:$0xff]
      %v5319 = vld [vmem:[%s2118 + $0xb0] sm:$0xff]
      %v5320 = vld [vmem:[%s2118 + $0xb8] sm:$0xff]
      %v5321 = vld [vmem:[%s2118 + $0xc0] sm:$0xff]
      %v5322 = vld [vmem:[%s2118 + $0xc8] sm:$0xff]
      %v5323 = vld [vmem:[%s2118 + $0xd0] sm:$0xff]
      %v5324 = vld [vmem:[%s2118 + $0xd8] sm:$0xff]
      %v5325 = vld [vmem:[%s2118 + $0xe0] sm:$0xff]
      %v5326 = vld [vmem:[%s2118 + $0xe8] sm:$0xff]
      %v5327 = vld [vmem:[%s2118 + $0xf0] sm:$0xff]
      %v5328 = vld [vmem:[%s2118 + $0xf8] sm:$0xff]
      %v5329 = vld [vmem:[%s2118 + $0x100] sm:$0xff]
      %v5330 = vld [vmem:[%s2118 + $0x108] sm:$0xff]
      %v5331 = vld [vmem:[%s2118 + $0x110] sm:$0xff]
      %v5332 = vld [vmem:[%s2118 + $0x118] sm:$0xff]
      %v5333 = vld [vmem:[%s2118 + $0x120] sm:$0xff]
      %v5334 = vld [vmem:[%s2118 + $0x128] sm:$0xff]
      %v5335 = vld [vmem:[%s2118 + $0x130] sm:$0xff]
      %v5336 = vld [vmem:[%s2118 + $0x138] sm:$0xff]
      %v5337 = vld [vmem:[%s2118 + $0x140] sm:$0xff]
      %v5338 = vld [vmem:[%s2118 + $0x148] sm:$0xff]
      %v5339 = vld [vmem:[%s2118 + $0x150] sm:$0xff]
      %v5340 = vld [vmem:[%s2118 + $0x158] sm:$0xff]
      %v5341 = vld [vmem:[%s2118 + $0x160] sm:$0xff]
      %v5342 = vld [vmem:[%s2118 + $0x168] sm:$0xff]
      %v5343 = vld [vmem:[%s2118 + $0x170] sm:$0xff]
      %v5344 = vld [vmem:[%s2118 + $0x178] sm:$0xff]
      %v5345 = vld [vmem:[%s2118 + $0x180] sm:$0xff]
      %v5346 = vld [vmem:[%s2118 + $0x188] sm:$0xff]
      %v5347 = vld [vmem:[%s2118 + $0x190] sm:$0xff]
      %v5348 = vld [vmem:[%s2118 + $0x198] sm:$0xff]
      %v5349 = vld [vmem:[%s2118 + $0x1a0] sm:$0xff]
      %v5350 = vld [vmem:[%s2118 + $0x1a8] sm:$0xff]
      %v5351 = vld [vmem:[%s2118 + $0x1b0] sm:$0xff]
      %v5352 = vld [vmem:[%s2118 + $0x1b8] sm:$0xff]
      %v5353 = vld [vmem:[%s2118 + $0x1c0] sm:$0xff]
      %v5354 = vld [vmem:[%s2118 + $0x1c8] sm:$0xff]
      %v5355 = vld [vmem:[%s2118 + $0x1d0] sm:$0xff]
      %v5356 = vld [vmem:[%s2118 + $0x1d8] sm:$0xff]
      %v5357 = vld [vmem:[%s2118 + $0x1e0] sm:$0xff]
      %v5358 = vld [vmem:[%s2118 + $0x1e8] sm:$0xff]
      %v5359 = vld [vmem:[%s2118 + $0x1f0] sm:$0xff]
      %v5360 = vld [vmem:[%s2118 + $0x1f8] sm:$0xff]
      %v5361 = vld [vmem:[%s3945] sm:$0xff]
      %v5362 = vld [vmem:[%s3945 + $0x8] sm:$0xff]
      %v5363 = vld [vmem:[%s3945 + $0x10] sm:$0xff]
      %v5364 = vld [vmem:[%s3945 + $0x18] sm:$0xff]
      %v5365 = vld [vmem:[%s3945 + $0x20] sm:$0xff]
      %v5366 = vld [vmem:[%s3945 + $0x28] sm:$0xff]
      %v5367 = vld [vmem:[%s3945 + $0x30] sm:$0xff]
      %v5368 = vld [vmem:[%s3945 + $0x38] sm:$0xff]
      %v5369 = vld [vmem:[%s3945 + $0x40] sm:$0xff]
      %v5370 = vld [vmem:[%s3945 + $0x48] sm:$0xff]
      %v5371 = vld [vmem:[%s3945 + $0x50] sm:$0xff]
      %v5372 = vld [vmem:[%s3945 + $0x58] sm:$0xff]
      %v5373 = vld [vmem:[%s3945 + $0x60] sm:$0xff]
      %v5374 = vld [vmem:[%s3945 + $0x68] sm:$0xff]
      %v5375 = vld [vmem:[%s3945 + $0x70] sm:$0xff]
      %v5376 = vld [vmem:[%s3945 + $0x78] sm:$0xff]
      %v5377 = vld [vmem:[%s3945 + $0x80] sm:$0xff]
      %v5378 = vld [vmem:[%s3945 + $0x88] sm:$0xff]
      %v5379 = vld [vmem:[%s3945 + $0x90] sm:$0xff]
      %v5380 = vld [vmem:[%s3945 + $0x98] sm:$0xff]
      %v5381 = vld [vmem:[%s3945 + $0xa0] sm:$0xff]
      %v5382 = vld [vmem:[%s3945 + $0xa8] sm:$0xff]
      %v5383 = vld [vmem:[%s3945 + $0xb0] sm:$0xff]
      %v5384 = vld [vmem:[%s3945 + $0xb8] sm:$0xff]
      %v5385 = vld [vmem:[%s3945 + $0xc0] sm:$0xff]
      %v5386 = vld [vmem:[%s3945 + $0xc8] sm:$0xff]
      %v5387 = vld [vmem:[%s3945 + $0xd0] sm:$0xff]
      %v5388 = vld [vmem:[%s3945 + $0xd8] sm:$0xff]
      %v5389 = vld [vmem:[%s3945 + $0xe0] sm:$0xff]
      %v5390 = vld [vmem:[%s3945 + $0xe8] sm:$0xff]
      %v5391 = vld [vmem:[%s3945 + $0xf0] sm:$0xff]
      %v5392 = vld [vmem:[%s3945 + $0xf8] sm:$0xff]
      %v5393 = vld [vmem:[%s3945 + $0x100] sm:$0xff]
      %v5394 = vld [vmem:[%s3945 + $0x108] sm:$0xff]
      %v5395 = vld [vmem:[%s3945 + $0x110] sm:$0xff]
      %v5396 = vld [vmem:[%s3945 + $0x118] sm:$0xff]
      %v5397 = vld [vmem:[%s3945 + $0x120] sm:$0xff]
      %v5398 = vld [vmem:[%s3945 + $0x128] sm:$0xff]
      %v5399 = vld [vmem:[%s3945 + $0x130] sm:$0xff]
      %v5400 = vld [vmem:[%s3945 + $0x138] sm:$0xff]
      %v5401 = vld [vmem:[%s3945 + $0x140] sm:$0xff]
      %v5402 = vld [vmem:[%s3945 + $0x148] sm:$0xff]
      %v5403 = vld [vmem:[%s3945 + $0x150] sm:$0xff]
      %v5404 = vld [vmem:[%s3945 + $0x158] sm:$0xff]
      %v5405 = vld [vmem:[%s3945 + $0x160] sm:$0xff]
      %v5406 = vld [vmem:[%s3945 + $0x168] sm:$0xff]
      %v5407 = vld [vmem:[%s3945 + $0x170] sm:$0xff]
      %v5408 = vld [vmem:[%s3945 + $0x178] sm:$0xff]
      %v5409 = vld [vmem:[%s3945 + $0x180] sm:$0xff]
      %v5410 = vld [vmem:[%s3945 + $0x188] sm:$0xff]
      %v5411 = vld [vmem:[%s3945 + $0x190] sm:$0xff]
      %v5412 = vld [vmem:[%s3945 + $0x198] sm:$0xff]
      %v5413 = vld [vmem:[%s3945 + $0x1a0] sm:$0xff]
      %v5414 = vld [vmem:[%s3945 + $0x1a8] sm:$0xff]
      %v5415 = vld [vmem:[%s3945 + $0x1b0] sm:$0xff]
      %v5416 = vld [vmem:[%s3945 + $0x1b8] sm:$0xff]
      %v5417 = vld [vmem:[%s3945 + $0x1c0] sm:$0xff]
      %v5418 = vld [vmem:[%s3945 + $0x1c8] sm:$0xff]
      %v5419 = vld [vmem:[%s3945 + $0x1d0] sm:$0xff]
      %v5420 = vld [vmem:[%s3945 + $0x1d8] sm:$0xff]
      %v5421 = vld [vmem:[%s3945 + $0x1e0] sm:$0xff]
      %v5422 = vld [vmem:[%s3945 + $0x1e8] sm:$0xff]
      %v5423 = vld [vmem:[%s3945 + $0x1f0] sm:$0xff]
      %v5424 = vld [vmem:[%s3945 + $0x1f8] sm:$0xff]
      %s5425 = scalar_lea.vmem [#allocation2], 160
      %v5426 = vld [vmem:[%s5425] sm:$0xff]
      %v5427 = vld [vmem:[%s5425 + $0x8] sm:$0xff]
      %v5428 = vld [vmem:[%s5425 + $0x10] sm:$0xff]
      %v5429 = vld [vmem:[%s5425 + $0x18] sm:$0xff]
      %v5430 = vld [vmem:[%s5425 + $0x20] sm:$0xff]
      %v5431 = vld [vmem:[%s5425 + $0x28] sm:$0xff]
      %v5432 = vld [vmem:[%s5425 + $0x30] sm:$0xff]
      %v5433 = vld [vmem:[%s5425 + $0x38] sm:$0xff]
      %v5434 = vld [vmem:[%s5425 + $0x40] sm:$0xff]
      %v5435 = vld [vmem:[%s5425 + $0x48] sm:$0xff]
      %v5436 = vld [vmem:[%s5425 + $0x50] sm:$0xff]
      %v5437 = vld [vmem:[%s5425 + $0x58] sm:$0xff]
      %v5438 = vld [vmem:[%s5425 + $0x60] sm:$0xff]
      %v5439 = vld [vmem:[%s5425 + $0x68] sm:$0xff]
      %v5440 = vld [vmem:[%s5425 + $0x70] sm:$0xff]
      %v5441 = vld [vmem:[%s5425 + $0x78] sm:$0xff]
      %v5442 = vld [vmem:[%s5425 + $0x80] sm:$0xff]
      %v5443 = vld [vmem:[%s5425 + $0x88] sm:$0xff]
      %v5444 = vld [vmem:[%s5425 + $0x90] sm:$0xff]
      %v5445 = vld [vmem:[%s5425 + $0x98] sm:$0xff]
      %v5446 = vld [vmem:[%s5425 + $0xa0] sm:$0xff]
      %v5447 = vld [vmem:[%s5425 + $0xa8] sm:$0xff]
      %v5448 = vld [vmem:[%s5425 + $0xb0] sm:$0xff]
      %v5449 = vld [vmem:[%s5425 + $0xb8] sm:$0xff]
      %v5450 = vld [vmem:[%s5425 + $0xc0] sm:$0xff]
      %v5451 = vld [vmem:[%s5425 + $0xc8] sm:$0xff]
      %v5452 = vld [vmem:[%s5425 + $0xd0] sm:$0xff]
      %v5453 = vld [vmem:[%s5425 + $0xd8] sm:$0xff]
      %v5454 = vld [vmem:[%s5425 + $0xe0] sm:$0xff]
      %v5455 = vld [vmem:[%s5425 + $0xe8] sm:$0xff]
      %v5456 = vld [vmem:[%s5425 + $0xf0] sm:$0xff]
      %v5457 = vld [vmem:[%s5425 + $0xf8] sm:$0xff]
      %v5458 = vld [vmem:[%s5425 + $0x100] sm:$0xff]
      %v5459 = vld [vmem:[%s5425 + $0x108] sm:$0xff]
      %v5460 = vld [vmem:[%s5425 + $0x110] sm:$0xff]
      %v5461 = vld [vmem:[%s5425 + $0x118] sm:$0xff]
      %v5462 = vld [vmem:[%s5425 + $0x120] sm:$0xff]
      %v5463 = vld [vmem:[%s5425 + $0x128] sm:$0xff]
      %v5464 = vld [vmem:[%s5425 + $0x130] sm:$0xff]
      %v5465 = vld [vmem:[%s5425 + $0x138] sm:$0xff]
      %v5466 = vld [vmem:[%s5425 + $0x140] sm:$0xff]
      %v5467 = vld [vmem:[%s5425 + $0x148] sm:$0xff]
      %v5468 = vld [vmem:[%s5425 + $0x150] sm:$0xff]
      %v5469 = vld [vmem:[%s5425 + $0x158] sm:$0xff]
      %v5470 = vld [vmem:[%s5425 + $0x160] sm:$0xff]
      %v5471 = vld [vmem:[%s5425 + $0x168] sm:$0xff]
      %v5472 = vld [vmem:[%s5425 + $0x170] sm:$0xff]
      %v5473 = vld [vmem:[%s5425 + $0x178] sm:$0xff]
      %v5474 = vld [vmem:[%s5425 + $0x180] sm:$0xff]
      %v5475 = vld [vmem:[%s5425 + $0x188] sm:$0xff]
      %v5476 = vld [vmem:[%s5425 + $0x190] sm:$0xff]
      %v5477 = vld [vmem:[%s5425 + $0x198] sm:$0xff]
      %v5478 = vld [vmem:[%s5425 + $0x1a0] sm:$0xff]
      %v5479 = vld [vmem:[%s5425 + $0x1a8] sm:$0xff]
      %v5480 = vld [vmem:[%s5425 + $0x1b0] sm:$0xff]
      %v5481 = vld [vmem:[%s5425 + $0x1b8] sm:$0xff]
      %v5482 = vld [vmem:[%s5425 + $0x1c0] sm:$0xff]
      %v5483 = vld [vmem:[%s5425 + $0x1c8] sm:$0xff]
      %v5484 = vld [vmem:[%s5425 + $0x1d0] sm:$0xff]
      %v5485 = vld [vmem:[%s5425 + $0x1d8] sm:$0xff]
      %v5486 = vld [vmem:[%s5425 + $0x1e0] sm:$0xff]
      %v5487 = vld [vmem:[%s5425 + $0x1e8] sm:$0xff]
      %v5488 = vld [vmem:[%s5425 + $0x1f0] sm:$0xff]
      %v5489 = vld [vmem:[%s5425 + $0x1f8] sm:$0xff]
      %v5490 = vld [vmem:[%s4] sm:$0x1]
      %v5491 = vlaneseq
      %v5492 = vshrl.u32 %v5491, 7
      %v5493 = vsub.s32 0, %v5492
      %v5494 = vrot.slane %v5490, %v5493
      %v5495 = vmul.f32 %v5297, %v5494
      %v5496 = vmul.f32 %v5298, %v5494
      %v5497 = vmul.f32 %v5299, %v5494
      %v5498 = vmul.f32 %v5301, %v5494
      %v5499 = vmul.f32 %v5302, %v5494
      %v5500 = vmul.f32 %v5303, %v5494
      %v5501 = vmul.f32 %v5305, %v5494
      %v5502 = vmul.f32 %v5306, %v5494
      %v5503 = vmul.f32 %v5307, %v5494
      %v5504 = vmul.f32 %v5309, %v5494
      %v5505 = vmul.f32 %v5310, %v5494
      %v5506 = vmul.f32 %v5311, %v5494
      %v5507 = vmul.f32 %v5313, %v5494
      %v5508 = vmul.f32 %v5314, %v5494
      %v5509 = vmul.f32 %v5315, %v5494
      %v5510 = vmul.f32 %v5317, %v5494
      %v5511 = vmul.f32 %v5318, %v5494
      %v5512 = vmul.f32 %v5319, %v5494
      %v5513 = vmul.f32 %v5321, %v5494
      %v5514 = vmul.f32 %v5322, %v5494
      %v5515 = vmul.f32 %v5323, %v5494
      %v5516 = vmul.f32 %v5325, %v5494
      %v5517 = vmul.f32 %v5326, %v5494
      %v5518 = vmul.f32 %v5327, %v5494
      %v5519 = vmul.f32 %v5329, %v5494
      %v5520 = vmul.f32 %v5330, %v5494
      %v5521 = vmul.f32 %v5331, %v5494
      %v5522 = vmul.f32 %v5333, %v5494
      %v5523 = vmul.f32 %v5334, %v5494
      %v5524 = vmul.f32 %v5335, %v5494
      %v5525 = vmul.f32 %v5337, %v5494
      %v5526 = vmul.f32 %v5338, %v5494
      %v5527 = vmul.f32 %v5339, %v5494
      %v5528 = vmul.f32 %v5341, %v5494
      %v5529 = vmul.f32 %v5342, %v5494
      %v5530 = vmul.f32 %v5343, %v5494
      %v5531 = vmul.f32 %v5345, %v5494
      %v5532 = vmul.f32 %v5346, %v5494
      %v5533 = vmul.f32 %v5347, %v5494
      %v5534 = vmul.f32 %v5349, %v5494
      %v5535 = vmul.f32 %v5350, %v5494
      %v5536 = vmul.f32 %v5351, %v5494
      %v5537 = vmul.f32 %v5353, %v5494
      %v5538 = vmul.f32 %v5354, %v5494
      %v5539 = vmul.f32 %v5355, %v5494
      %v5540 = vmul.f32 %v5357, %v5494
      %v5541 = vmul.f32 %v5358, %v5494
      %v5542 = vmul.f32 %v5359, %v5494
      %s5543 = scalar_lea.vmem %s4, 4
      %v5544 = vld [vmem:[%s5543] sm:$0x1]
      %v5545 = vlaneseq
      %v5546 = vshrl.u32 %v5545, 7
      %v5547 = vsub.s32 0, %v5546
      %v5548 = vrot.slane %v5544, %v5547
      %v5549 = vmul.f32 %v5361, %v5548
      %v5550 = vmul.f32 %v5362, %v5548
      %v5551 = vmul.f32 %v5363, %v5548
      %v5552 = vmul.f32 %v5365, %v5548
      %v5553 = vmul.f32 %v5366, %v5548
      %v5554 = vmul.f32 %v5367, %v5548
      %v5555 = vmul.f32 %v5369, %v5548
      %v5556 = vmul.f32 %v5370, %v5548
      %v5557 = vmul.f32 %v5371, %v5548
      %v5558 = vmul.f32 %v5373, %v5548
      %v5559 = vmul.f32 %v5374, %v5548
      %v5560 = vmul.f32 %v5375, %v5548
      %v5561 = vmul.f32 %v5377, %v5548
      %v5562 = vmul.f32 %v5378, %v5548
      %v5563 = vmul.f32 %v5379, %v5548
      %v5564 = vmul.f32 %v5381, %v5548
      %v5565 = vmul.f32 %v5382, %v5548
      %v5566 = vmul.f32 %v5383, %v5548
      %v5567 = vmul.f32 %v5385, %v5548
      %v5568 = vmul.f32 %v5386, %v5548
      %v5569 = vmul.f32 %v5387, %v5548
      %v5570 = vmul.f32 %v5389, %v5548
      %v5571 = vmul.f32 %v5390, %v5548
      %v5572 = vmul.f32 %v5391, %v5548
      %v5573 = vmul.f32 %v5393, %v5548
      %v5574 = vmul.f32 %v5394, %v5548
      %v5575 = vmul.f32 %v5395, %v5548
      %v5576 = vmul.f32 %v5397, %v5548
      %v5577 = vmul.f32 %v5398, %v5548
      %v5578 = vmul.f32 %v5399, %v5548
      %v5579 = vmul.f32 %v5401, %v5548
      %v5580 = vmul.f32 %v5402, %v5548
      %v5581 = vmul.f32 %v5403, %v5548
      %v5582 = vmul.f32 %v5405, %v5548
      %v5583 = vmul.f32 %v5406, %v5548
      %v5584 = vmul.f32 %v5407, %v5548
      %v5585 = vmul.f32 %v5409, %v5548
      %v5586 = vmul.f32 %v5410, %v5548
      %v5587 = vmul.f32 %v5411, %v5548
      %v5588 = vmul.f32 %v5413, %v5548
      %v5589 = vmul.f32 %v5414, %v5548
      %v5590 = vmul.f32 %v5415, %v5548
      %v5591 = vmul.f32 %v5417, %v5548
      %v5592 = vmul.f32 %v5418, %v5548
      %v5593 = vmul.f32 %v5419, %v5548
      %v5594 = vmul.f32 %v5421, %v5548
      %v5595 = vmul.f32 %v5422, %v5548
      %v5596 = vmul.f32 %v5423, %v5548
      %v5597 = vadd.f32 %v5495, %v5549
      %v5598 = vadd.f32 %v5496, %v5550
      %v5599 = vadd.f32 %v5497, %v5551
      %v5600 = vadd.f32 %v5498, %v5552
      %v5601 = vadd.f32 %v5499, %v5553
      %v5602 = vadd.f32 %v5500, %v5554
      %v5603 = vadd.f32 %v5501, %v5555
      %v5604 = vadd.f32 %v5502, %v5556
      %v5605 = vadd.f32 %v5503, %v5557
      %v5606 = vadd.f32 %v5504, %v5558
      %v5607 = vadd.f32 %v5505, %v5559
      %v5608 = vadd.f32 %v5506, %v5560
      %v5609 = vadd.f32 %v5507, %v5561
      %v5610 = vadd.f32 %v5508, %v5562
      %v5611 = vadd.f32 %v5509, %v5563
      %v5612 = vadd.f32 %v5510, %v5564
      %v5613 = vadd.f32 %v5511, %v5565
      %v5614 = vadd.f32 %v5512, %v5566
      %v5615 = vadd.f32 %v5513, %v5567
      %v5616 = vadd.f32 %v5514, %v5568
      %v5617 = vadd.f32 %v5515, %v5569
      %v5618 = vadd.f32 %v5516, %v5570
      %v5619 = vadd.f32 %v5517, %v5571
      %v5620 = vadd.f32 %v5518, %v5572
      %v5621 = vadd.f32 %v5519, %v5573
      %v5622 = vadd.f32 %v5520, %v5574
      %v5623 = vadd.f32 %v5521, %v5575
      %v5624 = vadd.f32 %v5522, %v5576
      %v5625 = vadd.f32 %v5523, %v5577
      %v5626 = vadd.f32 %v5524, %v5578
      %v5627 = vadd.f32 %v5525, %v5579
      %v5628 = vadd.f32 %v5526, %v5580
      %v5629 = vadd.f32 %v5527, %v5581
      %v5630 = vadd.f32 %v5528, %v5582
      %v5631 = vadd.f32 %v5529, %v5583
      %v5632 = vadd.f32 %v5530, %v5584
      %v5633 = vadd.f32 %v5531, %v5585
      %v5634 = vadd.f32 %v5532, %v5586
      %v5635 = vadd.f32 %v5533, %v5587
      %v5636 = vadd.f32 %v5534, %v5588
      %v5637 = vadd.f32 %v5535, %v5589
      %v5638 = vadd.f32 %v5536, %v5590
      %v5639 = vadd.f32 %v5537, %v5591
      %v5640 = vadd.f32 %v5538, %v5592
      %v5641 = vadd.f32 %v5539, %v5593
      %v5642 = vadd.f32 %v5540, %v5594
      %v5643 = vadd.f32 %v5541, %v5595
      %v5644 = vadd.f32 %v5542, %v5596
      %s5645 = scalar_lea.vmem %s4, 8
      %v5646 = vld [vmem:[%s5645] sm:$0x1]
      %v5647 = vlaneseq
      %v5648 = vshrl.u32 %v5647, 7
      %v5649 = vsub.s32 0, %v5648
      %v5650 = vrot.slane %v5646, %v5649
      %v5651 = vmul.f32 %v5426, %v5650
      %v5652 = vmul.f32 %v5427, %v5650
      %v5653 = vmul.f32 %v5428, %v5650
      %v5654 = vmul.f32 %v5430, %v5650
      %v5655 = vmul.f32 %v5431, %v5650
      %v5656 = vmul.f32 %v5432, %v5650
      %v5657 = vmul.f32 %v5434, %v5650
      %v5658 = vmul.f32 %v5435, %v5650
      %v5659 = vmul.f32 %v5436, %v5650
      %v5660 = vmul.f32 %v5438, %v5650
      %v5661 = vmul.f32 %v5439, %v5650
      %v5662 = vmul.f32 %v5440, %v5650
      %v5663 = vmul.f32 %v5442, %v5650
      %v5664 = vmul.f32 %v5443, %v5650
      %v5665 = vmul.f32 %v5444, %v5650
      %v5666 = vmul.f32 %v5446, %v5650
      %v5667 = vmul.f32 %v5447, %v5650
      %v5668 = vmul.f32 %v5448, %v5650
      %v5669 = vmul.f32 %v5450, %v5650
      %v5670 = vmul.f32 %v5451, %v5650
      %v5671 = vmul.f32 %v5452, %v5650
      %v5672 = vmul.f32 %v5454, %v5650
      %v5673 = vmul.f32 %v5455, %v5650
      %v5674 = vmul.f32 %v5456, %v5650
      %v5675 = vmul.f32 %v5458, %v5650
      %v5676 = vmul.f32 %v5459, %v5650
      %v5677 = vmul.f32 %v5460, %v5650
      %v5678 = vmul.f32 %v5462, %v5650
      %v5679 = vmul.f32 %v5463, %v5650
      %v5680 = vmul.f32 %v5464, %v5650
      %v5681 = vmul.f32 %v5466, %v5650
      %v5682 = vmul.f32 %v5467, %v5650
      %v5683 = vmul.f32 %v5468, %v5650
      %v5684 = vmul.f32 %v5470, %v5650
      %v5685 = vmul.f32 %v5471, %v5650
      %v5686 = vmul.f32 %v5472, %v5650
      %v5687 = vmul.f32 %v5474, %v5650
      %v5688 = vmul.f32 %v5475, %v5650
      %v5689 = vmul.f32 %v5476, %v5650
      %v5690 = vmul.f32 %v5478, %v5650
      %v5691 = vmul.f32 %v5479, %v5650
      %v5692 = vmul.f32 %v5480, %v5650
      %v5693 = vmul.f32 %v5482, %v5650
      %v5694 = vmul.f32 %v5483, %v5650
      %v5695 = vmul.f32 %v5484, %v5650
      %v5696 = vmul.f32 %v5486, %v5650
      %v5697 = vmul.f32 %v5487, %v5650
      %v5698 = vmul.f32 %v5488, %v5650
      %v5699 = vadd.f32 %v5597, %v5651
      %v5700 = vadd.f32 %v5598, %v5652
      %v5701 = vadd.f32 %v5599, %v5653
      %v5702 = vadd.f32 %v5600, %v5654
      %v5703 = vadd.f32 %v5601, %v5655
      %v5704 = vadd.f32 %v5602, %v5656
      %v5705 = vadd.f32 %v5603, %v5657
      %v5706 = vadd.f32 %v5604, %v5658
      %v5707 = vadd.f32 %v5605, %v5659
      %v5708 = vadd.f32 %v5606, %v5660
      %v5709 = vadd.f32 %v5607, %v5661
      %v5710 = vadd.f32 %v5608, %v5662
      %v5711 = vadd.f32 %v5609, %v5663
      %v5712 = vadd.f32 %v5610, %v5664
      %v5713 = vadd.f32 %v5611, %v5665
      %v5714 = vadd.f32 %v5612, %v5666
      %v5715 = vadd.f32 %v5613, %v5667
      %v5716 = vadd.f32 %v5614, %v5668
      %v5717 = vadd.f32 %v5615, %v5669
      %v5718 = vadd.f32 %v5616, %v5670
      %v5719 = vadd.f32 %v5617, %v5671
      %v5720 = vadd.f32 %v5618, %v5672
      %v5721 = vadd.f32 %v5619, %v5673
      %v5722 = vadd.f32 %v5620, %v5674
      %v5723 = vadd.f32 %v5621, %v5675
      %v5724 = vadd.f32 %v5622, %v5676
      %v5725 = vadd.f32 %v5623, %v5677
      %v5726 = vadd.f32 %v5624, %v5678
      %v5727 = vadd.f32 %v5625, %v5679
      %v5728 = vadd.f32 %v5626, %v5680
      %v5729 = vadd.f32 %v5627, %v5681
      %v5730 = vadd.f32 %v5628, %v5682
      %v5731 = vadd.f32 %v5629, %v5683
      %v5732 = vadd.f32 %v5630, %v5684
      %v5733 = vadd.f32 %v5631, %v5685
      %v5734 = vadd.f32 %v5632, %v5686
      %v5735 = vadd.f32 %v5633, %v5687
      %v5736 = vadd.f32 %v5634, %v5688
      %v5737 = vadd.f32 %v5635, %v5689
      %v5738 = vadd.f32 %v5636, %v5690
      %v5739 = vadd.f32 %v5637, %v5691
      %v5740 = vadd.f32 %v5638, %v5692
      %v5741 = vadd.f32 %v5639, %v5693
      %v5742 = vadd.f32 %v5640, %v5694
      %v5743 = vadd.f32 %v5641, %v5695
      %v5744 = vadd.f32 %v5642, %v5696
      %v5745 = vadd.f32 %v5643, %v5697
      %v5746 = vadd.f32 %v5644, %v5698
      %v5747 = vld [vmem:[%s4 + $0x1] sm:$0x1]
      %v5748 = vlaneseq
      %v5749 = vshrl.u32 %v5748, 7
      %v5750 = vsub.s32 0, %v5749
      %v5751 = vrot.slane %v5747, %v5750
      %v5752 = vmul.f32 %v5298, %v5751
      %v5753 = vmul.f32 %v5299, %v5751
      %v5754 = vmul.f32 %v5302, %v5751
      %v5755 = vmul.f32 %v5303, %v5751
      %v5756 = vmul.f32 %v5306, %v5751
      %v5757 = vmul.f32 %v5307, %v5751
      %v5758 = vmul.f32 %v5310, %v5751
      %v5759 = vmul.f32 %v5311, %v5751
      %v5760 = vmul.f32 %v5314, %v5751
      %v5761 = vmul.f32 %v5315, %v5751
      %v5762 = vmul.f32 %v5318, %v5751
      %v5763 = vmul.f32 %v5319, %v5751
      %v5764 = vmul.f32 %v5322, %v5751
      %v5765 = vmul.f32 %v5323, %v5751
      %v5766 = vmul.f32 %v5326, %v5751
      %v5767 = vmul.f32 %v5327, %v5751
      %v5768 = vmul.f32 %v5330, %v5751
      %v5769 = vmul.f32 %v5331, %v5751
      %v5770 = vmul.f32 %v5334, %v5751
      %v5771 = vmul.f32 %v5335, %v5751
      %v5772 = vmul.f32 %v5338, %v5751
      %v5773 = vmul.f32 %v5339, %v5751
      %v5774 = vmul.f32 %v5342, %v5751
      %v5775 = vmul.f32 %v5343, %v5751
      %v5776 = vmul.f32 %v5346, %v5751
      %v5777 = vmul.f32 %v5347, %v5751
      %v5778 = vmul.f32 %v5350, %v5751
      %v5779 = vmul.f32 %v5351, %v5751
      %v5780 = vmul.f32 %v5354, %v5751
      %v5781 = vmul.f32 %v5355, %v5751
      %v5782 = vmul.f32 %v5358, %v5751
      %v5783 = vmul.f32 %v5359, %v5751
      %v5784 = vld [vmem:[%s5543 + $0x1] sm:$0x1]
      %v5785 = vlaneseq
      %v5786 = vshrl.u32 %v5785, 7
      %v5787 = vsub.s32 0, %v5786
      %v5788 = vrot.slane %v5784, %v5787
      %v5789 = vmul.f32 %v5362, %v5788
      %v5790 = vmul.f32 %v5363, %v5788
      %v5791 = vmul.f32 %v5366, %v5788
      %v5792 = vmul.f32 %v5367, %v5788
      %v5793 = vmul.f32 %v5370, %v5788
      %v5794 = vmul.f32 %v5371, %v5788
      %v5795 = vmul.f32 %v5374, %v5788
      %v5796 = vmul.f32 %v5375, %v5788
      %v5797 = vmul.f32 %v5378, %v5788
      %v5798 = vmul.f32 %v5379, %v5788
      %v5799 = vmul.f32 %v5382, %v5788
      %v5800 = vmul.f32 %v5383, %v5788
      %v5801 = vmul.f32 %v5386, %v5788
      %v5802 = vmul.f32 %v5387, %v5788
      %v5803 = vmul.f32 %v5390, %v5788
      %v5804 = vmul.f32 %v5391, %v5788
      %v5805 = vmul.f32 %v5394, %v5788
      %v5806 = vmul.f32 %v5395, %v5788
      %v5807 = vmul.f32 %v5398, %v5788
      %v5808 = vmul.f32 %v5399, %v5788
      %v5809 = vmul.f32 %v5402, %v5788
      %v5810 = vmul.f32 %v5403, %v5788
      %v5811 = vmul.f32 %v5406, %v5788
      %v5812 = vmul.f32 %v5407, %v5788
      %v5813 = vmul.f32 %v5410, %v5788
      %v5814 = vmul.f32 %v5411, %v5788
      %v5815 = vmul.f32 %v5414, %v5788
      %v5816 = vmul.f32 %v5415, %v5788
      %v5817 = vmul.f32 %v5418, %v5788
      %v5818 = vmul.f32 %v5419, %v5788
      %v5819 = vmul.f32 %v5422, %v5788
      %v5820 = vmul.f32 %v5423, %v5788
      %v5821 = vadd.f32 %v5752, %v5789
      %v5822 = vadd.f32 %v5753, %v5790
      %v5823 = vadd.f32 %v5754, %v5791
      %v5824 = vadd.f32 %v5755, %v5792
      %v5825 = vadd.f32 %v5756, %v5793
      %v5826 = vadd.f32 %v5757, %v5794
      %v5827 = vadd.f32 %v5758, %v5795
      %v5828 = vadd.f32 %v5759, %v5796
      %v5829 = vadd.f32 %v5760, %v5797
      %v5830 = vadd.f32 %v5761, %v5798
      %v5831 = vadd.f32 %v5762, %v5799
      %v5832 = vadd.f32 %v5763, %v5800
      %v5833 = vadd.f32 %v5764, %v5801
      %v5834 = vadd.f32 %v5765, %v5802
      %v5835 = vadd.f32 %v5766, %v5803
      %v5836 = vadd.f32 %v5767, %v5804
      %v5837 = vadd.f32 %v5768, %v5805
      %v5838 = vadd.f32 %v5769, %v5806
      %v5839 = vadd.f32 %v5770, %v5807
      %v5840 = vadd.f32 %v5771, %v5808
      %v5841 = vadd.f32 %v5772, %v5809
      %v5842 = vadd.f32 %v5773, %v5810
      %v5843 = vadd.f32 %v5774, %v5811
      %v5844 = vadd.f32 %v5775, %v5812
      %v5845 = vadd.f32 %v5776, %v5813
      %v5846 = vadd.f32 %v5777, %v5814
      %v5847 = vadd.f32 %v5778, %v5815
      %v5848 = vadd.f32 %v5779, %v5816
      %v5849 = vadd.f32 %v5780, %v5817
      %v5850 = vadd.f32 %v5781, %v5818
      %v5851 = vadd.f32 %v5782, %v5819
      %v5852 = vadd.f32 %v5783, %v5820
      %v5853 = vld [vmem:[%s5645 + $0x1] sm:$0x1]
      %v5854 = vlaneseq
      %v5855 = vshrl.u32 %v5854, 7
      %v5856 = vsub.s32 0, %v5855
      %v5857 = vrot.slane %v5853, %v5856
      %v5858 = vmul.f32 %v5427, %v5857
      %v5859 = vmul.f32 %v5428, %v5857
      %v5860 = vmul.f32 %v5431, %v5857
      %v5861 = vmul.f32 %v5432, %v5857
      %v5862 = vmul.f32 %v5435, %v5857
      %v5863 = vmul.f32 %v5436, %v5857
      %v5864 = vmul.f32 %v5439, %v5857
      %v5865 = vmul.f32 %v5440, %v5857
      %v5866 = vmul.f32 %v5443, %v5857
      %v5867 = vmul.f32 %v5444, %v5857
      %v5868 = vmul.f32 %v5447, %v5857
      %v5869 = vmul.f32 %v5448, %v5857
      %v5870 = vmul.f32 %v5451, %v5857
      %v5871 = vmul.f32 %v5452, %v5857
      %v5872 = vmul.f32 %v5455, %v5857
      %v5873 = vmul.f32 %v5456, %v5857
      %v5874 = vmul.f32 %v5459, %v5857
      %v5875 = vmul.f32 %v5460, %v5857
      %v5876 = vmul.f32 %v5463, %v5857
      %v5877 = vmul.f32 %v5464, %v5857
      %v5878 = vmul.f32 %v5467, %v5857
      %v5879 = vmul.f32 %v5468, %v5857
      %v5880 = vmul.f32 %v5471, %v5857
      %v5881 = vmul.f32 %v5472, %v5857
      %v5882 = vmul.f32 %v5475, %v5857
      %v5883 = vmul.f32 %v5476, %v5857
      %v5884 = vmul.f32 %v5479, %v5857
      %v5885 = vmul.f32 %v5480, %v5857
      %v5886 = vmul.f32 %v5483, %v5857
      %v5887 = vmul.f32 %v5484, %v5857
      %v5888 = vmul.f32 %v5487, %v5857
      %v5889 = vmul.f32 %v5488, %v5857
      %v5890 = vadd.f32 %v5821, %v5858
      %v5891 = vadd.f32 %v5822, %v5859
      %v5892 = vadd.f32 %v5823, %v5860
      %v5893 = vadd.f32 %v5824, %v5861
      %v5894 = vadd.f32 %v5825, %v5862
      %v5895 = vadd.f32 %v5826, %v5863
      %v5896 = vadd.f32 %v5827, %v5864
      %v5897 = vadd.f32 %v5828, %v5865
      %v5898 = vadd.f32 %v5829, %v5866
      %v5899 = vadd.f32 %v5830, %v5867
      %v5900 = vadd.f32 %v5831, %v5868
      %v5901 = vadd.f32 %v5832, %v5869
      %v5902 = vadd.f32 %v5833, %v5870
      %v5903 = vadd.f32 %v5834, %v5871
      %v5904 = vadd.f32 %v5835, %v5872
      %v5905 = vadd.f32 %v5836, %v5873
      %v5906 = vadd.f32 %v5837, %v5874
      %v5907 = vadd.f32 %v5838, %v5875
      %v5908 = vadd.f32 %v5839, %v5876
      %v5909 = vadd.f32 %v5840, %v5877
      %v5910 = vadd.f32 %v5841, %v5878
      %v5911 = vadd.f32 %v5842, %v5879
      %v5912 = vadd.f32 %v5843, %v5880
      %v5913 = vadd.f32 %v5844, %v5881
      %v5914 = vadd.f32 %v5845, %v5882
      %v5915 = vadd.f32 %v5846, %v5883
      %v5916 = vadd.f32 %v5847, %v5884
      %v5917 = vadd.f32 %v5848, %v5885
      %v5918 = vadd.f32 %v5849, %v5886
      %v5919 = vadd.f32 %v5850, %v5887
      %v5920 = vadd.f32 %v5851, %v5888
      %v5921 = vadd.f32 %v5852, %v5889
      %v5954 = vrot.slane %v5890, 1
      %v5955 = vrot.slane %v5891, 1
      %v5956 = vsel %vm1091, %v5954, %v5955
      %v5957 = vrot.slane %v5892, 1
      %v5958 = vrot.slane %v5893, 1
      %v5959 = vsel %vm1091, %v5957, %v5958
      %v5960 = vrot.slane %v5894, 1
      %v5961 = vrot.slane %v5895, 1
      %v5962 = vsel %vm1091, %v5960, %v5961
      %v5963 = vrot.slane %v5896, 1
      %v5964 = vrot.slane %v5897, 1
      %v5965 = vsel %vm1091, %v5963, %v5964
      %v5966 = vrot.slane %v5898, 1
      %v5967 = vrot.slane %v5899, 1
      %v5968 = vsel %vm1091, %v5966, %v5967
      %v5969 = vrot.slane %v5900, 1
      %v5970 = vrot.slane %v5901, 1
      %v5971 = vsel %vm1091, %v5969, %v5970
      %v5972 = vrot.slane %v5902, 1
      %v5973 = vrot.slane %v5903, 1
      %v5974 = vsel %vm1091, %v5972, %v5973
      %v5975 = vrot.slane %v5904, 1
      %v5976 = vrot.slane %v5905, 1
      %v5977 = vsel %vm1091, %v5975, %v5976
      %v5978 = vrot.slane %v5906, 1
      %v5979 = vrot.slane %v5907, 1
      %v5980 = vsel %vm1091, %v5978, %v5979
      %v5981 = vrot.slane %v5908, 1
      %v5982 = vrot.slane %v5909, 1
      %v5983 = vsel %vm1091, %v5981, %v5982
      %v5984 = vrot.slane %v5910, 1
      %v5985 = vrot.slane %v5911, 1
      %v5986 = vsel %vm1091, %v5984, %v5985
      %v5987 = vrot.slane %v5912, 1
      %v5988 = vrot.slane %v5913, 1
      %v5989 = vsel %vm1091, %v5987, %v5988
      %v5990 = vrot.slane %v5914, 1
      %v5991 = vrot.slane %v5915, 1
      %v5992 = vsel %vm1091, %v5990, %v5991
      %v5993 = vrot.slane %v5916, 1
      %v5994 = vrot.slane %v5917, 1
      %v5995 = vsel %vm1091, %v5993, %v5994
      %v5996 = vrot.slane %v5918, 1
      %v5997 = vrot.slane %v5919, 1
      %v5998 = vsel %vm1091, %v5996, %v5997
      %v5999 = vrot.slane %v5920, 1
      %v6000 = vrot.slane %v5921, 1
      %v6001 = vsel %vm1091, %v5999, %v6000
      %v6050 = vadd.f32 %v5699, %v5954
      %v6051 = vadd.f32 %v5700, %v5956
      %v6052 = vadd.f32 %v5701, %v5955
      %v6053 = vadd.f32 %v5702, %v5957
      %v6054 = vadd.f32 %v5703, %v5959
      %v6055 = vadd.f32 %v5704, %v5958
      %v6056 = vadd.f32 %v5705, %v5960
      %v6057 = vadd.f32 %v5706, %v5962
      %v6058 = vadd.f32 %v5707, %v5961
      %v6059 = vadd.f32 %v5708, %v5963
      %v6060 = vadd.f32 %v5709, %v5965
      %v6061 = vadd.f32 %v5710, %v5964
      %v6062 = vadd.f32 %v5711, %v5966
      %v6063 = vadd.f32 %v5712, %v5968
      %v6064 = vadd.f32 %v5713, %v5967
      %v6065 = vadd.f32 %v5714, %v5969
      %v6066 = vadd.f32 %v5715, %v5971
      %v6067 = vadd.f32 %v5716, %v5970
      %v6068 = vadd.f32 %v5717, %v5972
      %v6069 = vadd.f32 %v5718, %v5974
      %v6070 = vadd.f32 %v5719, %v5973
      %v6071 = vadd.f32 %v5720, %v5975
      %v6072 = vadd.f32 %v5721, %v5977
      %v6073 = vadd.f32 %v5722, %v5976
      %v6074 = vadd.f32 %v5723, %v5978
      %v6075 = vadd.f32 %v5724, %v5980
      %v6076 = vadd.f32 %v5725, %v5979
      %v6077 = vadd.f32 %v5726, %v5981
      %v6078 = vadd.f32 %v5727, %v5983
      %v6079 = vadd.f32 %v5728, %v5982
      %v6080 = vadd.f32 %v5729, %v5984
      %v6081 = vadd.f32 %v5730, %v5986
      %v6082 = vadd.f32 %v5731, %v5985
      %v6083 = vadd.f32 %v5732, %v5987
      %v6084 = vadd.f32 %v5733, %v5989
      %v6085 = vadd.f32 %v5734, %v5988
      %v6086 = vadd.f32 %v5735, %v5990
      %v6087 = vadd.f32 %v5736, %v5992
      %v6088 = vadd.f32 %v5737, %v5991
      %v6089 = vadd.f32 %v5738, %v5993
      %v6090 = vadd.f32 %v5739, %v5995
      %v6091 = vadd.f32 %v5740, %v5994
      %v6092 = vadd.f32 %v5741, %v5996
      %v6093 = vadd.f32 %v5742, %v5998
      %v6094 = vadd.f32 %v5743, %v5997
      %v6095 = vadd.f32 %v5744, %v5999
      %v6096 = vadd.f32 %v5745, %v6001
      %v6097 = vadd.f32 %v5746, %v6000
      %v6098 = vld [vmem:[%s4 + $0x2] sm:$0x1]
      %v6099 = vlaneseq
      %v6100 = vshrl.u32 %v6099, 7
      %v6101 = vsub.s32 0, %v6100
      %v6102 = vrot.slane %v6098, %v6101
      %v6103 = vmul.f32 %v5298, %v6102
      %v6104 = vmul.f32 %v5299, %v6102
      %v6105 = vmul.f32 %v5300, %v6102
      %v6106 = vmul.f32 %v5302, %v6102
      %v6107 = vmul.f32 %v5303, %v6102
      %v6108 = vmul.f32 %v5304, %v6102
      %v6109 = vmul.f32 %v5306, %v6102
      %v6110 = vmul.f32 %v5307, %v6102
      %v6111 = vmul.f32 %v5308, %v6102
      %v6112 = vmul.f32 %v5310, %v6102
      %v6113 = vmul.f32 %v5311, %v6102
      %v6114 = vmul.f32 %v5312, %v6102
      %v6115 = vmul.f32 %v5314, %v6102
      %v6116 = vmul.f32 %v5315, %v6102
      %v6117 = vmul.f32 %v5316, %v6102
      %v6118 = vmul.f32 %v5318, %v6102
      %v6119 = vmul.f32 %v5319, %v6102
      %v6120 = vmul.f32 %v5320, %v6102
      %v6121 = vmul.f32 %v5322, %v6102
      %v6122 = vmul.f32 %v5323, %v6102
      %v6123 = vmul.f32 %v5324, %v6102
      %v6124 = vmul.f32 %v5326, %v6102
      %v6125 = vmul.f32 %v5327, %v6102
      %v6126 = vmul.f32 %v5328, %v6102
      %v6127 = vmul.f32 %v5330, %v6102
      %v6128 = vmul.f32 %v5331, %v6102
      %v6129 = vmul.f32 %v5332, %v6102
      %v6130 = vmul.f32 %v5334, %v6102
      %v6131 = vmul.f32 %v5335, %v6102
      %v6132 = vmul.f32 %v5336, %v6102
      %v6133 = vmul.f32 %v5338, %v6102
      %v6134 = vmul.f32 %v5339, %v6102
      %v6135 = vmul.f32 %v5340, %v6102
      %v6136 = vmul.f32 %v5342, %v6102
      %v6137 = vmul.f32 %v5343, %v6102
      %v6138 = vmul.f32 %v5344, %v6102
      %v6139 = vmul.f32 %v5346, %v6102
      %v6140 = vmul.f32 %v5347, %v6102
      %v6141 = vmul.f32 %v5348, %v6102
      %v6142 = vmul.f32 %v5350, %v6102
      %v6143 = vmul.f32 %v5351, %v6102
      %v6144 = vmul.f32 %v5352, %v6102
      %v6145 = vmul.f32 %v5354, %v6102
      %v6146 = vmul.f32 %v5355, %v6102
      %v6147 = vmul.f32 %v5356, %v6102
      %v6148 = vmul.f32 %v5358, %v6102
      %v6149 = vmul.f32 %v5359, %v6102
      %v6150 = vmul.f32 %v5360, %v6102
      %v6151 = vld [vmem:[%s5543 + $0x2] sm:$0x1]
      %v6152 = vlaneseq
      %v6153 = vshrl.u32 %v6152, 7
      %v6154 = vsub.s32 0, %v6153
      %v6155 = vrot.slane %v6151, %v6154
      %v6156 = vmul.f32 %v5362, %v6155
      %v6157 = vmul.f32 %v5363, %v6155
      %v6158 = vmul.f32 %v5364, %v6155
      %v6159 = vmul.f32 %v5366, %v6155
      %v6160 = vmul.f32 %v5367, %v6155
      %v6161 = vmul.f32 %v5368, %v6155
      %v6162 = vmul.f32 %v5370, %v6155
      %v6163 = vmul.f32 %v5371, %v6155
      %v6164 = vmul.f32 %v5372, %v6155
      %v6165 = vmul.f32 %v5374, %v6155
      %v6166 = vmul.f32 %v5375, %v6155
      %v6167 = vmul.f32 %v5376, %v6155
      %v6168 = vmul.f32 %v5378, %v6155
      %v6169 = vmul.f32 %v5379, %v6155
      %v6170 = vmul.f32 %v5380, %v6155
      %v6171 = vmul.f32 %v5382, %v6155
      %v6172 = vmul.f32 %v5383, %v6155
      %v6173 = vmul.f32 %v5384, %v6155
      %v6174 = vmul.f32 %v5386, %v6155
      %v6175 = vmul.f32 %v5387, %v6155
      %v6176 = vmul.f32 %v5388, %v6155
      %v6177 = vmul.f32 %v5390, %v6155
      %v6178 = vmul.f32 %v5391, %v6155
      %v6179 = vmul.f32 %v5392, %v6155
      %v6180 = vmul.f32 %v5394, %v6155
      %v6181 = vmul.f32 %v5395, %v6155
      %v6182 = vmul.f32 %v5396, %v6155
      %v6183 = vmul.f32 %v5398, %v6155
      %v6184 = vmul.f32 %v5399, %v6155
      %v6185 = vmul.f32 %v5400, %v6155
      %v6186 = vmul.f32 %v5402, %v6155
      %v6187 = vmul.f32 %v5403, %v6155
      %v6188 = vmul.f32 %v5404, %v6155
      %v6189 = vmul.f32 %v5406, %v6155
      %v6190 = vmul.f32 %v5407, %v6155
      %v6191 = vmul.f32 %v5408, %v6155
      %v6192 = vmul.f32 %v5410, %v6155
      %v6193 = vmul.f32 %v5411, %v6155
      %v6194 = vmul.f32 %v5412, %v6155
      %v6195 = vmul.f32 %v5414, %v6155
      %v6196 = vmul.f32 %v5415, %v6155
      %v6197 = vmul.f32 %v5416, %v6155
      %v6198 = vmul.f32 %v5418, %v6155
      %v6199 = vmul.f32 %v5419, %v6155
      %v6200 = vmul.f32 %v5420, %v6155
      %v6201 = vmul.f32 %v5422, %v6155
      %v6202 = vmul.f32 %v5423, %v6155
      %v6203 = vmul.f32 %v5424, %v6155
      %v6204 = vadd.f32 %v6103, %v6156
      %v6205 = vadd.f32 %v6104, %v6157
      %v6206 = vadd.f32 %v6105, %v6158
      %v6207 = vadd.f32 %v6106, %v6159
      %v6208 = vadd.f32 %v6107, %v6160
      %v6209 = vadd.f32 %v6108, %v6161
      %v6210 = vadd.f32 %v6109, %v6162
      %v6211 = vadd.f32 %v6110, %v6163
      %v6212 = vadd.f32 %v6111, %v6164
      %v6213 = vadd.f32 %v6112, %v6165
      %v6214 = vadd.f32 %v6113, %v6166
      %v6215 = vadd.f32 %v6114, %v6167
      %v6216 = vadd.f32 %v6115, %v6168
      %v6217 = vadd.f32 %v6116, %v6169
      %v6218 = vadd.f32 %v6117, %v6170
      %v6219 = vadd.f32 %v6118, %v6171
      %v6220 = vadd.f32 %v6119, %v6172
      %v6221 = vadd.f32 %v6120, %v6173
      %v6222 = vadd.f32 %v6121, %v6174
      %v6223 = vadd.f32 %v6122, %v6175
      %v6224 = vadd.f32 %v6123, %v6176
      %v6225 = vadd.f32 %v6124, %v6177
      %v6226 = vadd.f32 %v6125, %v6178
      %v6227 = vadd.f32 %v6126, %v6179
      %v6228 = vadd.f32 %v6127, %v6180
      %v6229 = vadd.f32 %v6128, %v6181
      %v6230 = vadd.f32 %v6129, %v6182
      %v6231 = vadd.f32 %v6130, %v6183
      %v6232 = vadd.f32 %v6131, %v6184
      %v6233 = vadd.f32 %v6132, %v6185
      %v6234 = vadd.f32 %v6133, %v6186
      %v6235 = vadd.f32 %v6134, %v6187
      %v6236 = vadd.f32 %v6135, %v6188
      %v6237 = vadd.f32 %v6136, %v6189
      %v6238 = vadd.f32 %v6137, %v6190
      %v6239 = vadd.f32 %v6138, %v6191
      %v6240 = vadd.f32 %v6139, %v6192
      %v6241 = vadd.f32 %v6140, %v6193
      %v6242 = vadd.f32 %v6141, %v6194
      %v6243 = vadd.f32 %v6142, %v6195
      %v6244 = vadd.f32 %v6143, %v6196
      %v6245 = vadd.f32 %v6144, %v6197
      %v6246 = vadd.f32 %v6145, %v6198
      %v6247 = vadd.f32 %v6146, %v6199
      %v6248 = vadd.f32 %v6147, %v6200
      %v6249 = vadd.f32 %v6148, %v6201
      %v6250 = vadd.f32 %v6149, %v6202
      %v6251 = vadd.f32 %v6150, %v6203
      %v6252 = vld [vmem:[%s5645 + $0x2] sm:$0x1]
      %v6253 = vlaneseq
      %v6254 = vshrl.u32 %v6253, 7
      %v6255 = vsub.s32 0, %v6254
      %v6256 = vrot.slane %v6252, %v6255
      %v6257 = vmul.f32 %v5427, %v6256
      %v6258 = vmul.f32 %v5428, %v6256
      %v6259 = vmul.f32 %v5429, %v6256
      %v6260 = vmul.f32 %v5431, %v6256
      %v6261 = vmul.f32 %v5432, %v6256
      %v6262 = vmul.f32 %v5433, %v6256
      %v6263 = vmul.f32 %v5435, %v6256
      %v6264 = vmul.f32 %v5436, %v6256
      %v6265 = vmul.f32 %v5437, %v6256
      %v6266 = vmul.f32 %v5439, %v6256
      %v6267 = vmul.f32 %v5440, %v6256
      %v6268 = vmul.f32 %v5441, %v6256
      %v6269 = vmul.f32 %v5443, %v6256
      %v6270 = vmul.f32 %v5444, %v6256
      %v6271 = vmul.f32 %v5445, %v6256
      %v6272 = vmul.f32 %v5447, %v6256
      %v6273 = vmul.f32 %v5448, %v6256
      %v6274 = vmul.f32 %v5449, %v6256
      %v6275 = vmul.f32 %v5451, %v6256
      %v6276 = vmul.f32 %v5452, %v6256
      %v6277 = vmul.f32 %v5453, %v6256
      %v6278 = vmul.f32 %v5455, %v6256
      %v6279 = vmul.f32 %v5456, %v6256
      %v6280 = vmul.f32 %v5457, %v6256
      %v6281 = vmul.f32 %v5459, %v6256
      %v6282 = vmul.f32 %v5460, %v6256
      %v6283 = vmul.f32 %v5461, %v6256
      %v6284 = vmul.f32 %v5463, %v6256
      %v6285 = vmul.f32 %v5464, %v6256
      %v6286 = vmul.f32 %v5465, %v6256
      %v6287 = vmul.f32 %v5467, %v6256
      %v6288 = vmul.f32 %v5468, %v6256
      %v6289 = vmul.f32 %v5469, %v6256
      %v6290 = vmul.f32 %v5471, %v6256
      %v6291 = vmul.f32 %v5472, %v6256
      %v6292 = vmul.f32 %v5473, %v6256
      %v6293 = vmul.f32 %v5475, %v6256
      %v6294 = vmul.f32 %v5476, %v6256
      %v6295 = vmul.f32 %v5477, %v6256
      %v6296 = vmul.f32 %v5479, %v6256
      %v6297 = vmul.f32 %v5480, %v6256
      %v6298 = vmul.f32 %v5481, %v6256
      %v6299 = vmul.f32 %v5483, %v6256
      %v6300 = vmul.f32 %v5484, %v6256
      %v6301 = vmul.f32 %v5485, %v6256
      %v6302 = vmul.f32 %v5487, %v6256
      %v6303 = vmul.f32 %v5488, %v6256
      %v6304 = vmul.f32 %v5489, %v6256
      %v6305 = vadd.f32 %v6204, %v6257
      %v6306 = vadd.f32 %v6205, %v6258
      %v6307 = vadd.f32 %v6206, %v6259
      %v6308 = vadd.f32 %v6207, %v6260
      %v6309 = vadd.f32 %v6208, %v6261
      %v6310 = vadd.f32 %v6209, %v6262
      %v6311 = vadd.f32 %v6210, %v6263
      %v6312 = vadd.f32 %v6211, %v6264
      %v6313 = vadd.f32 %v6212, %v6265
      %v6314 = vadd.f32 %v6213, %v6266
      %v6315 = vadd.f32 %v6214, %v6267
      %v6316 = vadd.f32 %v6215, %v6268
      %v6317 = vadd.f32 %v6216, %v6269
      %v6318 = vadd.f32 %v6217, %v6270
      %v6319 = vadd.f32 %v6218, %v6271
      %v6320 = vadd.f32 %v6219, %v6272
      %v6321 = vadd.f32 %v6220, %v6273
      %v6322 = vadd.f32 %v6221, %v6274
      %v6323 = vadd.f32 %v6222, %v6275
      %v6324 = vadd.f32 %v6223, %v6276
      %v6325 = vadd.f32 %v6224, %v6277
      %v6326 = vadd.f32 %v6225, %v6278
      %v6327 = vadd.f32 %v6226, %v6279
      %v6328 = vadd.f32 %v6227, %v6280
      %v6329 = vadd.f32 %v6228, %v6281
      %v6330 = vadd.f32 %v6229, %v6282
      %v6331 = vadd.f32 %v6230, %v6283
      %v6332 = vadd.f32 %v6231, %v6284
      %v6333 = vadd.f32 %v6232, %v6285
      %v6334 = vadd.f32 %v6233, %v6286
      %v6335 = vadd.f32 %v6234, %v6287
      %v6336 = vadd.f32 %v6235, %v6288
      %v6337 = vadd.f32 %v6236, %v6289
      %v6338 = vadd.f32 %v6237, %v6290
      %v6339 = vadd.f32 %v6238, %v6291
      %v6340 = vadd.f32 %v6239, %v6292
      %v6341 = vadd.f32 %v6240, %v6293
      %v6342 = vadd.f32 %v6241, %v6294
      %v6343 = vadd.f32 %v6242, %v6295
      %v6344 = vadd.f32 %v6243, %v6296
      %v6345 = vadd.f32 %v6244, %v6297
      %v6346 = vadd.f32 %v6245, %v6298
      %v6347 = vadd.f32 %v6246, %v6299
      %v6348 = vadd.f32 %v6247, %v6300
      %v6349 = vadd.f32 %v6248, %v6301
      %v6350 = vadd.f32 %v6249, %v6302
      %v6351 = vadd.f32 %v6250, %v6303
      %v6352 = vadd.f32 %v6251, %v6304
      %v6401 = vrot.slane %v6305, 2
      %v6402 = vrot.slane %v6306, 2
      %v6403 = vsel %vm3326, %v6401, %v6402
      %v6404 = vrot.slane %v6307, 2
      %v6405 = vsel %vm3326, %v6402, %v6404
      %v6406 = vrot.slane %v6308, 2
      %v6407 = vrot.slane %v6309, 2
      %v6408 = vsel %vm3326, %v6406, %v6407
      %v6409 = vrot.slane %v6310, 2
      %v6410 = vsel %vm3326, %v6407, %v6409
      %v6411 = vrot.slane %v6311, 2
      %v6412 = vrot.slane %v6312, 2
      %v6413 = vsel %vm3326, %v6411, %v6412
      %v6414 = vrot.slane %v6313, 2
      %v6415 = vsel %vm3326, %v6412, %v6414
      %v6416 = vrot.slane %v6314, 2
      %v6417 = vrot.slane %v6315, 2
      %v6418 = vsel %vm3326, %v6416, %v6417
      %v6419 = vrot.slane %v6316, 2
      %v6420 = vsel %vm3326, %v6417, %v6419
      %v6421 = vrot.slane %v6317, 2
      %v6422 = vrot.slane %v6318, 2
      %v6423 = vsel %vm3326, %v6421, %v6422
      %v6424 = vrot.slane %v6319, 2
      %v6425 = vsel %vm3326, %v6422, %v6424
      %v6426 = vrot.slane %v6320, 2
      %v6427 = vrot.slane %v6321, 2
      %v6428 = vsel %vm3326, %v6426, %v6427
      %v6429 = vrot.slane %v6322, 2
      %v6430 = vsel %vm3326, %v6427, %v6429
      %v6431 = vrot.slane %v6323, 2
      %v6432 = vrot.slane %v6324, 2
      %v6433 = vsel %vm3326, %v6431, %v6432
      %v6434 = vrot.slane %v6325, 2
      %v6435 = vsel %vm3326, %v6432, %v6434
      %v6436 = vrot.slane %v6326, 2
      %v6437 = vrot.slane %v6327, 2
      %v6438 = vsel %vm3326, %v6436, %v6437
      %v6439 = vrot.slane %v6328, 2
      %v6440 = vsel %vm3326, %v6437, %v6439
      %v6441 = vrot.slane %v6329, 2
      %v6442 = vrot.slane %v6330, 2
      %v6443 = vsel %vm3326, %v6441, %v6442
      %v6444 = vrot.slane %v6331, 2
      %v6445 = vsel %vm3326, %v6442, %v6444
      %v6446 = vrot.slane %v6332, 2
      %v6447 = vrot.slane %v6333, 2
      %v6448 = vsel %vm3326, %v6446, %v6447
      %v6449 = vrot.slane %v6334, 2
      %v6450 = vsel %vm3326, %v6447, %v6449
      %v6451 = vrot.slane %v6335, 2
      %v6452 = vrot.slane %v6336, 2
      %v6453 = vsel %vm3326, %v6451, %v6452
      %v6454 = vrot.slane %v6337, 2
      %v6455 = vsel %vm3326, %v6452, %v6454
      %v6456 = vrot.slane %v6338, 2
      %v6457 = vrot.slane %v6339, 2
      %v6458 = vsel %vm3326, %v6456, %v6457
      %v6459 = vrot.slane %v6340, 2
      %v6460 = vsel %vm3326, %v6457, %v6459
      %v6461 = vrot.slane %v6341, 2
      %v6462 = vrot.slane %v6342, 2
      %v6463 = vsel %vm3326, %v6461, %v6462
      %v6464 = vrot.slane %v6343, 2
      %v6465 = vsel %vm3326, %v6462, %v6464
      %v6466 = vrot.slane %v6344, 2
      %v6467 = vrot.slane %v6345, 2
      %v6468 = vsel %vm3326, %v6466, %v6467
      %v6469 = vrot.slane %v6346, 2
      %v6470 = vsel %vm3326, %v6467, %v6469
      %v6471 = vrot.slane %v6347, 2
      %v6472 = vrot.slane %v6348, 2
      %v6473 = vsel %vm3326, %v6471, %v6472
      %v6474 = vrot.slane %v6349, 2
      %v6475 = vsel %vm3326, %v6472, %v6474
      %v6476 = vrot.slane %v6350, 2
      %v6477 = vrot.slane %v6351, 2
      %v6478 = vsel %vm3326, %v6476, %v6477
      %v6479 = vrot.slane %v6352, 2
      %v6480 = vsel %vm3326, %v6477, %v6479
      %v6529 = vadd.f32 %v6050, %v6401
      %v6530 = vadd.f32 %v6051, %v6403
      %v6531 = vadd.f32 %v6052, %v6405
      %v6532 = vadd.f32 %v6053, %v6406
      %v6533 = vadd.f32 %v6054, %v6408
      %v6534 = vadd.f32 %v6055, %v6410
      %v6535 = vadd.f32 %v6056, %v6411
      %v6536 = vadd.f32 %v6057, %v6413
      %v6537 = vadd.f32 %v6058, %v6415
      %v6538 = vadd.f32 %v6059, %v6416
      %v6539 = vadd.f32 %v6060, %v6418
      %v6540 = vadd.f32 %v6061, %v6420
      %v6541 = vadd.f32 %v6062, %v6421
      %v6542 = vadd.f32 %v6063, %v6423
      %v6543 = vadd.f32 %v6064, %v6425
      %v6544 = vadd.f32 %v6065, %v6426
      %v6545 = vadd.f32 %v6066, %v6428
      %v6546 = vadd.f32 %v6067, %v6430
      %v6547 = vadd.f32 %v6068, %v6431
      %v6548 = vadd.f32 %v6069, %v6433
      %v6549 = vadd.f32 %v6070, %v6435
      %v6550 = vadd.f32 %v6071, %v6436
      %v6551 = vadd.f32 %v6072, %v6438
      %v6552 = vadd.f32 %v6073, %v6440
      %v6553 = vadd.f32 %v6074, %v6441
      %v6554 = vadd.f32 %v6075, %v6443
      %v6555 = vadd.f32 %v6076, %v6445
      %v6556 = vadd.f32 %v6077, %v6446
      %v6557 = vadd.f32 %v6078, %v6448
      %v6558 = vadd.f32 %v6079, %v6450
      %v6559 = vadd.f32 %v6080, %v6451
      %v6560 = vadd.f32 %v6081, %v6453
      %v6561 = vadd.f32 %v6082, %v6455
      %v6562 = vadd.f32 %v6083, %v6456
      %v6563 = vadd.f32 %v6084, %v6458
      %v6564 = vadd.f32 %v6085, %v6460
      %v6565 = vadd.f32 %v6086, %v6461
      %v6566 = vadd.f32 %v6087, %v6463
      %v6567 = vadd.f32 %v6088, %v6465
      %v6568 = vadd.f32 %v6089, %v6466
      %v6569 = vadd.f32 %v6090, %v6468
      %v6570 = vadd.f32 %v6091, %v6470
      %v6571 = vadd.f32 %v6092, %v6471
      %v6572 = vadd.f32 %v6093, %v6473
      %v6573 = vadd.f32 %v6094, %v6475
      %v6574 = vadd.f32 %v6095, %v6476
      %v6575 = vadd.f32 %v6096, %v6478
      %v6576 = vadd.f32 %v6097, %v6480
      %vm6577 = vcmask 1041408
      %v6578 = vrot.slane %v1603, 6
      %v6579 = vrot.slane %v1604, 6
      %v6580 = vsel %vm6577, %v6578, %v6579
      %v6581 = vrot.slane %v1605, 6
      %v6582 = vrot.slane %v1606, 6
      %v6583 = vsel %vm6577, %v6581, %v6582
      %v6584 = vrot.slane %v1607, 6
      %v6585 = vrot.slane %v1608, 6
      %v6586 = vsel %vm6577, %v6584, %v6585
      %v6587 = vrot.slane %v1609, 6
      %v6588 = vrot.slane %v1610, 6
      %v6589 = vsel %vm6577, %v6587, %v6588
      %v6590 = vrot.slane %v1611, 6
      %v6591 = vrot.slane %v1612, 6
      %v6592 = vsel %vm6577, %v6590, %v6591
      %v6593 = vrot.slane %v1613, 6
      %v6594 = vrot.slane %v1614, 6
      %v6595 = vsel %vm6577, %v6593, %v6594
      %v6596 = vrot.slane %v1615, 6
      %v6597 = vrot.slane %v1616, 6
      %v6598 = vsel %vm6577, %v6596, %v6597
      %v6599 = vrot.slane %v1617, 6
      %v6600 = vrot.slane %v1618, 6
      %v6601 = vsel %vm6577, %v6599, %v6600
      %v6602 = vrot.slane %v1619, 6
      %v6603 = vrot.slane %v1620, 6
      %v6604 = vsel %vm6577, %v6602, %v6603
      %v6605 = vrot.slane %v1621, 6
      %v6606 = vrot.slane %v1622, 6
      %v6607 = vsel %vm6577, %v6605, %v6606
      %v6608 = vrot.slane %v1623, 6
      %v6609 = vrot.slane %v1624, 6
      %v6610 = vsel %vm6577, %v6608, %v6609
      %v6611 = vrot.slane %v1625, 6
      %v6612 = vrot.slane %v1626, 6
      %v6613 = vsel %vm6577, %v6611, %v6612
      %v6614 = vrot.slane %v1627, 6
      %v6615 = vrot.slane %v1628, 6
      %v6616 = vsel %vm6577, %v6614, %v6615
      %v6617 = vrot.slane %v1629, 6
      %v6618 = vrot.slane %v1630, 6
      %v6619 = vsel %vm6577, %v6617, %v6618
      %v6620 = vrot.slane %v1631, 6
      %v6621 = vrot.slane %v1632, 6
      %v6622 = vsel %vm6577, %v6620, %v6621
      %v6623 = vrot.slane %v1633, 6
      %v6624 = vrot.slane %v1634, 6
      %v6625 = vsel %vm6577, %v6623, %v6624
      %v6626 = vrot.slane %v1635, 6
      %v6627 = vrot.slane %v1636, 6
      %v6628 = vsel %vm6577, %v6626, %v6627
      %v6629 = vrot.slane %v1637, 6
      %v6630 = vrot.slane %v1638, 6
      %v6631 = vsel %vm6577, %v6629, %v6630
      %6632 = vrot.lane.b32.xlu0 %v6578, 108
      %v6633 = vpop.permute.xlu0 %6632
      %6634 = vrot.lane.b32.xlu0 %v6580, 108
      %v6635 = vpop.permute.xlu0 %6634
      %6636 = vrot.lane.b32.xlu0 %v6581, 108
      %v6637 = vpop.permute.xlu0 %6636
      %6638 = vrot.lane.b32.xlu0 %v6583, 108
      %v6639 = vpop.permute.xlu0 %6638
      %6640 = vrot.lane.b32.xlu0 %v6584, 108
      %v6641 = vpop.permute.xlu0 %6640
      %6642 = vrot.lane.b32.xlu0 %v6586, 108
      %v6643 = vpop.permute.xlu0 %6642
      %6644 = vrot.lane.b32.xlu0 %v6587, 108
      %v6645 = vpop.permute.xlu0 %6644
      %6646 = vrot.lane.b32.xlu0 %v6589, 108
      %v6647 = vpop.permute.xlu0 %6646
      %6648 = vrot.lane.b32.xlu0 %v6590, 108
      %v6649 = vpop.permute.xlu0 %6648
      %6650 = vrot.lane.b32.xlu0 %v6592, 108
      %v6651 = vpop.permute.xlu0 %6650
      %6652 = vrot.lane.b32.xlu0 %v6593, 108
      %v6653 = vpop.permute.xlu0 %6652
      %6654 = vrot.lane.b32.xlu0 %v6595, 108
      %v6655 = vpop.permute.xlu0 %6654
      %6656 = vrot.lane.b32.xlu0 %v6596, 108
      %v6657 = vpop.permute.xlu0 %6656
      %6658 = vrot.lane.b32.xlu0 %v6598, 108
      %v6659 = vpop.permute.xlu0 %6658
      %6660 = vrot.lane.b32.xlu0 %v6599, 108
      %v6661 = vpop.permute.xlu0 %6660
      %6662 = vrot.lane.b32.xlu0 %v6601, 108
      %v6663 = vpop.permute.xlu0 %6662
      %6664 = vrot.lane.b32.xlu0 %v6602, 108
      %v6665 = vpop.permute.xlu0 %6664
      %6666 = vrot.lane.b32.xlu0 %v6604, 108
      %v6667 = vpop.permute.xlu0 %6666
      %6668 = vrot.lane.b32.xlu0 %v6605, 108
      %v6669 = vpop.permute.xlu0 %6668
      %6670 = vrot.lane.b32.xlu0 %v6607, 108
      %v6671 = vpop.permute.xlu0 %6670
      %6672 = vrot.lane.b32.xlu0 %v6608, 108
      %v6673 = vpop.permute.xlu0 %6672
      %6674 = vrot.lane.b32.xlu0 %v6610, 108
      %v6675 = vpop.permute.xlu0 %6674
      %6676 = vrot.lane.b32.xlu0 %v6611, 108
      %v6677 = vpop.permute.xlu0 %6676
      %6678 = vrot.lane.b32.xlu0 %v6613, 108
      %v6679 = vpop.permute.xlu0 %6678
      %6680 = vrot.lane.b32.xlu0 %v6614, 108
      %v6681 = vpop.permute.xlu0 %6680
      %6682 = vrot.lane.b32.xlu0 %v6616, 108
      %v6683 = vpop.permute.xlu0 %6682
      %6684 = vrot.lane.b32.xlu0 %v6617, 108
      %v6685 = vpop.permute.xlu0 %6684
      %6686 = vrot.lane.b32.xlu0 %v6619, 108
      %v6687 = vpop.permute.xlu0 %6686
      %6688 = vrot.lane.b32.xlu0 %v6620, 108
      %v6689 = vpop.permute.xlu0 %6688
      %6690 = vrot.lane.b32.xlu0 %v6622, 108
      %v6691 = vpop.permute.xlu0 %6690
      %6692 = vrot.lane.b32.xlu0 %v6623, 108
      %v6693 = vpop.permute.xlu0 %6692
      %6694 = vrot.lane.b32.xlu0 %v6625, 108
      %v6695 = vpop.permute.xlu0 %6694
      %6696 = vrot.lane.b32.xlu0 %v6626, 108
      %v6697 = vpop.permute.xlu0 %6696
      %6698 = vrot.lane.b32.xlu0 %v6628, 108
      %v6699 = vpop.permute.xlu0 %6698
      %6700 = vrot.lane.b32.xlu0 %v6629, 108
      %v6701 = vpop.permute.xlu0 %6700
      %6702 = vrot.lane.b32.xlu0 %v6631, 108
      %v6703 = vpop.permute.xlu0 %6702
      %v6740 = vsel %vm6577, 0.0, %v6633
      %v6741 = vsel %vm6577, 0.0, %v6637
      %v6742 = vsel %vm6577, 0.0, %v6641
      %v6743 = vsel %vm6577, 0.0, %v6645
      %v6744 = vsel %vm6577, 0.0, %v6649
      %v6745 = vsel %vm6577, 0.0, %v6653
      %v6746 = vsel %vm6577, 0.0, %v6657
      %v6747 = vsel %vm6577, 0.0, %v6661
      %v6748 = vsel %vm6577, 0.0, %v6665
      %v6749 = vsel %vm6577, 0.0, %v6669
      %v6750 = vsel %vm6577, 0.0, %v6673
      %v6751 = vsel %vm6577, 0.0, %v6677
      %v6752 = vsel %vm6577, 0.0, %v6681
      %v6753 = vsel %vm6577, 0.0, %v6685
      %v6754 = vsel %vm6577, 0.0, %v6689
      %v6755 = vsel %vm6577, 0.0, %v6693
      %v6756 = vsel %vm6577, 0.0, %v6697
      %v6757 = vsel %vm6577, 0.0, %v6701
      %v6758 = vrot.slane %v1603, 2
      %v6759 = vrot.slane %v1604, 2
      %v6760 = vsel %vm3326, %v6758, %v6759
      %v6761 = vrot.slane %v1605, 2
      %v6762 = vrot.slane %v1606, 2
      %v6763 = vsel %vm3326, %v6761, %v6762
      %v6764 = vrot.slane %v1607, 2
      %v6765 = vrot.slane %v1608, 2
      %v6766 = vsel %vm3326, %v6764, %v6765
      %v6767 = vrot.slane %v1609, 2
      %v6768 = vrot.slane %v1610, 2
      %v6769 = vsel %vm3326, %v6767, %v6768
      %v6770 = vrot.slane %v1611, 2
      %v6771 = vrot.slane %v1612, 2
      %v6772 = vsel %vm3326, %v6770, %v6771
      %v6773 = vrot.slane %v1613, 2
      %v6774 = vrot.slane %v1614, 2
      %v6775 = vsel %vm3326, %v6773, %v6774
      %v6776 = vrot.slane %v1615, 2
      %v6777 = vrot.slane %v1616, 2
      %v6778 = vsel %vm3326, %v6776, %v6777
      %v6779 = vrot.slane %v1617, 2
      %v6780 = vrot.slane %v1618, 2
      %v6781 = vsel %vm3326, %v6779, %v6780
      %v6782 = vrot.slane %v1619, 2
      %v6783 = vrot.slane %v1620, 2
      %v6784 = vsel %vm3326, %v6782, %v6783
      %v6785 = vrot.slane %v1621, 2
      %v6786 = vrot.slane %v1622, 2
      %v6787 = vsel %vm3326, %v6785, %v6786
      %v6788 = vrot.slane %v1623, 2
      %v6789 = vrot.slane %v1624, 2
      %v6790 = vsel %vm3326, %v6788, %v6789
      %v6791 = vrot.slane %v1625, 2
      %v6792 = vrot.slane %v1626, 2
      %v6793 = vsel %vm3326, %v6791, %v6792
      %v6794 = vrot.slane %v1627, 2
      %v6795 = vrot.slane %v1628, 2
      %v6796 = vsel %vm3326, %v6794, %v6795
      %v6797 = vrot.slane %v1629, 2
      %v6798 = vrot.slane %v1630, 2
      %v6799 = vsel %vm3326, %v6797, %v6798
      %v6800 = vrot.slane %v1631, 2
      %v6801 = vrot.slane %v1632, 2
      %v6802 = vsel %vm3326, %v6800, %v6801
      %v6803 = vrot.slane %v1633, 2
      %v6804 = vrot.slane %v1634, 2
      %v6805 = vsel %vm3326, %v6803, %v6804
      %v6806 = vrot.slane %v1635, 2
      %v6807 = vrot.slane %v1636, 2
      %v6808 = vsel %vm3326, %v6806, %v6807
      %v6809 = vrot.slane %v1637, 2
      %v6810 = vrot.slane %v1638, 2
      %v6811 = vsel %vm3326, %v6809, %v6810
      %v6830 = vsel %vm3326, %v6759, 0.0
      %v6831 = vsel %vm3326, %v6762, 0.0
      %v6832 = vsel %vm3326, %v6765, 0.0
      %v6833 = vsel %vm3326, %v6768, 0.0
      %v6834 = vsel %vm3326, %v6771, 0.0
      %v6835 = vsel %vm3326, %v6774, 0.0
      %v6836 = vsel %vm3326, %v6777, 0.0
      %v6837 = vsel %vm3326, %v6780, 0.0
      %v6838 = vsel %vm3326, %v6783, 0.0
      %v6839 = vsel %vm3326, %v6786, 0.0
      %v6840 = vsel %vm3326, %v6789, 0.0
      %v6841 = vsel %vm3326, %v6792, 0.0
      %v6842 = vsel %vm3326, %v6795, 0.0
      %v6843 = vsel %vm3326, %v6798, 0.0
      %v6844 = vsel %vm3326, %v6801, 0.0
      %v6845 = vsel %vm3326, %v6804, 0.0
      %v6846 = vsel %vm3326, %v6807, 0.0
      %v6847 = vsel %vm3326, %v6810, 0.0
      %v6848 = vrot.slane %v1639, 6
      %v6849 = vrot.slane %v1640, 6
      %v6850 = vsel %vm6577, %v6848, %v6849
      %v6851 = vrot.slane %v1641, 6
      %v6852 = vrot.slane %v1642, 6
      %v6853 = vsel %vm6577, %v6851, %v6852
      %6854 = vrot.lane.b32.xlu0 %v6848, 108
      %v6855 = vpop.permute.xlu0 %6854
      %6856 = vrot.lane.b32.xlu0 %v6850, 108
      %v6857 = vpop.permute.xlu0 %6856
      %6858 = vrot.lane.b32.xlu0 %v6851, 108
      %v6859 = vpop.permute.xlu0 %6858
      %6860 = vrot.lane.b32.xlu0 %v6853, 108
      %v6861 = vpop.permute.xlu0 %6860
      %v6864 = vsel %vm6577, 0.0, %v6855
      %v6865 = vsel %vm6577, 0.0, %v6859
      %v6866 = vrot.slane %v1639, 2
      %v6867 = vrot.slane %v1640, 2
      %v6868 = vsel %vm3326, %v6866, %v6867
      %v6869 = vrot.slane %v1641, 2
      %v6870 = vrot.slane %v1642, 2
      %v6871 = vsel %vm3326, %v6869, %v6870
      %v6874 = vsel %vm3326, %v6867, 0.0
      %v6875 = vsel %vm3326, %v6870, 0.0
      %v6876 = vrot.slane %v1643, 6
      %v6877 = vrot.slane %v1644, 6
      %v6878 = vsel %vm6577, %v6876, %v6877
      %v6879 = vrot.slane %v1645, 6
      %v6880 = vrot.slane %v1646, 6
      %v6881 = vsel %vm6577, %v6879, %v6880
      %6882 = vrot.lane.b32.xlu0 %v6876, 108
      %v6883 = vpop.permute.xlu0 %6882
      %6884 = vrot.lane.b32.xlu0 %v6878, 108
      %v6885 = vpop.permute.xlu0 %6884
      %6886 = vrot.lane.b32.xlu0 %v6879, 108
      %v6887 = vpop.permute.xlu0 %6886
      %6888 = vrot.lane.b32.xlu0 %v6881, 108
      %v6889 = vpop.permute.xlu0 %6888
      %v6892 = vsel %vm6577, 0.0, %v6883
      %v6893 = vsel %vm6577, 0.0, %v6887
      %v6894 = vrot.slane %v1643, 2
      %v6895 = vrot.slane %v1644, 2
      %v6896 = vsel %vm3326, %v6894, %v6895
      %v6897 = vrot.slane %v1645, 2
      %v6898 = vrot.slane %v1646, 2
      %v6899 = vsel %vm3326, %v6897, %v6898
      %v6902 = vsel %vm3326, %v6895, 0.0
      %v6903 = vsel %vm3326, %v6898, 0.0
      %6904 = vrot.lane.b32.xlu0 %v1603, 109
      %v6905 = vpop.permute.xlu0 %6904
      %6906 = vrot.lane.b32.xlu0 %v1604, 109
      %v6907 = vpop.permute.xlu0 %6906
      %6908 = vrot.lane.b32.xlu0 %v1605, 109
      %v6909 = vpop.permute.xlu0 %6908
      %6910 = vrot.lane.b32.xlu0 %v1606, 109
      %v6911 = vpop.permute.xlu0 %6910
      %6912 = vrot.lane.b32.xlu0 %v1607, 109
      %v6913 = vpop.permute.xlu0 %6912
      %6914 = vrot.lane.b32.xlu0 %v1608, 109
      %v6915 = vpop.permute.xlu0 %6914
      %6916 = vrot.lane.b32.xlu0 %v1609, 109
      %v6917 = vpop.permute.xlu0 %6916
      %6918 = vrot.lane.b32.xlu0 %v1610, 109
      %v6919 = vpop.permute.xlu0 %6918
      %6920 = vrot.lane.b32.xlu0 %v1611, 109
      %v6921 = vpop.permute.xlu0 %6920
      %6922 = vrot.lane.b32.xlu0 %v1612, 109
      %v6923 = vpop.permute.xlu0 %6922
      %6924 = vrot.lane.b32.xlu0 %v1613, 109
      %v6925 = vpop.permute.xlu0 %6924
      %6926 = vrot.lane.b32.xlu0 %v1614, 109
      %v6927 = vpop.permute.xlu0 %6926
      %6928 = vrot.lane.b32.xlu0 %v1615, 109
      %v6929 = vpop.permute.xlu0 %6928
      %6930 = vrot.lane.b32.xlu0 %v1616, 109
      %v6931 = vpop.permute.xlu0 %6930
      %6932 = vrot.lane.b32.xlu0 %v1617, 109
      %v6933 = vpop.permute.xlu0 %6932
      %6934 = vrot.lane.b32.xlu0 %v1618, 109
      %v6935 = vpop.permute.xlu0 %6934
      %6936 = vrot.lane.b32.xlu0 %v1619, 109
      %v6937 = vpop.permute.xlu0 %6936
      %6938 = vrot.lane.b32.xlu0 %v1620, 109
      %v6939 = vpop.permute.xlu0 %6938
      %6940 = vrot.lane.b32.xlu0 %v1621, 109
      %v6941 = vpop.permute.xlu0 %6940
      %6942 = vrot.lane.b32.xlu0 %v1622, 109
      %v6943 = vpop.permute.xlu0 %6942
      %6944 = vrot.lane.b32.xlu0 %v1623, 109
      %v6945 = vpop.permute.xlu0 %6944
      %6946 = vrot.lane.b32.xlu0 %v1624, 109
      %v6947 = vpop.permute.xlu0 %6946
      %6948 = vrot.lane.b32.xlu0 %v1625, 109
      %v6949 = vpop.permute.xlu0 %6948
      %6950 = vrot.lane.b32.xlu0 %v1626, 109
      %v6951 = vpop.permute.xlu0 %6950
      %6952 = vrot.lane.b32.xlu0 %v1627, 109
      %v6953 = vpop.permute.xlu0 %6952
      %6954 = vrot.lane.b32.xlu0 %v1628, 109
      %v6955 = vpop.permute.xlu0 %6954
      %6956 = vrot.lane.b32.xlu0 %v1629, 109
      %v6957 = vpop.permute.xlu0 %6956
      %6958 = vrot.lane.b32.xlu0 %v1630, 109
      %v6959 = vpop.permute.xlu0 %6958
      %6960 = vrot.lane.b32.xlu0 %v1631, 109
      %v6961 = vpop.permute.xlu0 %6960
      %6962 = vrot.lane.b32.xlu0 %v1632, 109
      %v6963 = vpop.permute.xlu0 %6962
      %6964 = vrot.lane.b32.xlu0 %v1633, 109
      %v6965 = vpop.permute.xlu0 %6964
      %6966 = vrot.lane.b32.xlu0 %v1634, 109
      %v6967 = vpop.permute.xlu0 %6966
      %6968 = vrot.lane.b32.xlu0 %v1635, 109
      %v6969 = vpop.permute.xlu0 %6968
      %6970 = vrot.lane.b32.xlu0 %v1636, 109
      %v6971 = vpop.permute.xlu0 %6970
      %6972 = vrot.lane.b32.xlu0 %v1637, 109
      %v6973 = vpop.permute.xlu0 %6972
      %6974 = vrot.lane.b32.xlu0 %v1638, 109
      %v6975 = vpop.permute.xlu0 %6974
      %7030 = vrot.lane.b32.xlu0 %v6760, 110
      %v7031 = vpop.permute.xlu0 %7030
      %7032 = vrot.lane.b32.xlu0 %v6830, 110
      %v7033 = vpop.permute.xlu0 %7032
      %7034 = vrot.lane.b32.xlu0 %v6763, 110
      %v7035 = vpop.permute.xlu0 %7034
      %7036 = vrot.lane.b32.xlu0 %v6831, 110
      %v7037 = vpop.permute.xlu0 %7036
      %7038 = vrot.lane.b32.xlu0 %v6766, 110
      %v7039 = vpop.permute.xlu0 %7038
      %7040 = vrot.lane.b32.xlu0 %v6832, 110
      %v7041 = vpop.permute.xlu0 %7040
      %7042 = vrot.lane.b32.xlu0 %v6769, 110
      %v7043 = vpop.permute.xlu0 %7042
      %7044 = vrot.lane.b32.xlu0 %v6833, 110
      %v7045 = vpop.permute.xlu0 %7044
      %7046 = vrot.lane.b32.xlu0 %v6772, 110
      %v7047 = vpop.permute.xlu0 %7046
      %7048 = vrot.lane.b32.xlu0 %v6834, 110
      %v7049 = vpop.permute.xlu0 %7048
      %7050 = vrot.lane.b32.xlu0 %v6775, 110
      %v7051 = vpop.permute.xlu0 %7050
      %7052 = vrot.lane.b32.xlu0 %v6835, 110
      %v7053 = vpop.permute.xlu0 %7052
      %7054 = vrot.lane.b32.xlu0 %v6778, 110
      %v7055 = vpop.permute.xlu0 %7054
      %7056 = vrot.lane.b32.xlu0 %v6836, 110
      %v7057 = vpop.permute.xlu0 %7056
      %7058 = vrot.lane.b32.xlu0 %v6781, 110
      %v7059 = vpop.permute.xlu0 %7058
      %7060 = vrot.lane.b32.xlu0 %v6837, 110
      %v7061 = vpop.permute.xlu0 %7060
      %7062 = vrot.lane.b32.xlu0 %v6784, 110
      %v7063 = vpop.permute.xlu0 %7062
      %7064 = vrot.lane.b32.xlu0 %v6838, 110
      %v7065 = vpop.permute.xlu0 %7064
      %7066 = vrot.lane.b32.xlu0 %v6787, 110
      %v7067 = vpop.permute.xlu0 %7066
      %7068 = vrot.lane.b32.xlu0 %v6839, 110
      %v7069 = vpop.permute.xlu0 %7068
      %7070 = vrot.lane.b32.xlu0 %v6790, 110
      %v7071 = vpop.permute.xlu0 %7070
      %7072 = vrot.lane.b32.xlu0 %v6840, 110
      %v7073 = vpop.permute.xlu0 %7072
      %7074 = vrot.lane.b32.xlu0 %v6793, 110
      %v7075 = vpop.permute.xlu0 %7074
      %7076 = vrot.lane.b32.xlu0 %v6841, 110
      %v7077 = vpop.permute.xlu0 %7076
      %7078 = vrot.lane.b32.xlu0 %v6796, 110
      %v7079 = vpop.permute.xlu0 %7078
      %7080 = vrot.lane.b32.xlu0 %v6842, 110
      %v7081 = vpop.permute.xlu0 %7080
      %7082 = vrot.lane.b32.xlu0 %v6799, 110
      %v7083 = vpop.permute.xlu0 %7082
      %7084 = vrot.lane.b32.xlu0 %v6843, 110
      %v7085 = vpop.permute.xlu0 %7084
      %7086 = vrot.lane.b32.xlu0 %v6802, 110
      %v7087 = vpop.permute.xlu0 %7086
      %7088 = vrot.lane.b32.xlu0 %v6844, 110
      %v7089 = vpop.permute.xlu0 %7088
      %7090 = vrot.lane.b32.xlu0 %v6805, 110
      %v7091 = vpop.permute.xlu0 %7090
      %7092 = vrot.lane.b32.xlu0 %v6845, 110
      %v7093 = vpop.permute.xlu0 %7092
      %7094 = vrot.lane.b32.xlu0 %v6808, 110
      %v7095 = vpop.permute.xlu0 %7094
      %7096 = vrot.lane.b32.xlu0 %v6846, 110
      %v7097 = vpop.permute.xlu0 %7096
      %7098 = vrot.lane.b32.xlu0 %v6811, 110
      %v7099 = vpop.permute.xlu0 %7098
      %7100 = vrot.lane.b32.xlu0 %v6847, 110
      %v7101 = vpop.permute.xlu0 %7100
      %7156 = vrot.lane.b32.xlu0 %v6742, 3
      %v7157 = vpop.permute.xlu0 %7156
      %7158 = vrot.lane.b32.xlu0 %v6643, 3
      %v7159 = vpop.permute.xlu0 %7158
      %7160 = vrot.lane.b32.xlu0 %v6743, 3
      %v7161 = vpop.permute.xlu0 %7160
      %7162 = vrot.lane.b32.xlu0 %v6647, 3
      %v7163 = vpop.permute.xlu0 %7162
      %7164 = vrot.lane.b32.xlu0 %v6744, 3
      %v7165 = vpop.permute.xlu0 %7164
      %7166 = vrot.lane.b32.xlu0 %v6651, 3
      %v7167 = vpop.permute.xlu0 %7166
      %7168 = vrot.lane.b32.xlu0 %v6745, 3
      %v7169 = vpop.permute.xlu0 %7168
      %7170 = vrot.lane.b32.xlu0 %v6655, 3
      %v7171 = vpop.permute.xlu0 %7170
      %7172 = vrot.lane.b32.xlu0 %v6746, 3
      %v7173 = vpop.permute.xlu0 %7172
      %7174 = vrot.lane.b32.xlu0 %v6659, 3
      %v7175 = vpop.permute.xlu0 %7174
      %7176 = vrot.lane.b32.xlu0 %v6747, 3
      %v7177 = vpop.permute.xlu0 %7176
      %7178 = vrot.lane.b32.xlu0 %v6663, 3
      %v7179 = vpop.permute.xlu0 %7178
      %7180 = vrot.lane.b32.xlu0 %v6748, 3
      %v7181 = vpop.permute.xlu0 %7180
      %7182 = vrot.lane.b32.xlu0 %v6667, 3
      %v7183 = vpop.permute.xlu0 %7182
      %7184 = vrot.lane.b32.xlu0 %v6749, 3
      %v7185 = vpop.permute.xlu0 %7184
      %7186 = vrot.lane.b32.xlu0 %v6671, 3
      %v7187 = vpop.permute.xlu0 %7186
      %7188 = vrot.lane.b32.xlu0 %v6750, 3
      %v7189 = vpop.permute.xlu0 %7188
      %7190 = vrot.lane.b32.xlu0 %v6675, 3
      %v7191 = vpop.permute.xlu0 %7190
      %7192 = vrot.lane.b32.xlu0 %v6751, 3
      %v7193 = vpop.permute.xlu0 %7192
      %7194 = vrot.lane.b32.xlu0 %v6679, 3
      %v7195 = vpop.permute.xlu0 %7194
      %7196 = vrot.lane.b32.xlu0 %v6752, 3
      %v7197 = vpop.permute.xlu0 %7196
      %7198 = vrot.lane.b32.xlu0 %v6683, 3
      %v7199 = vpop.permute.xlu0 %7198
      %7200 = vrot.lane.b32.xlu0 %v6753, 3
      %v7201 = vpop.permute.xlu0 %7200
      %7202 = vrot.lane.b32.xlu0 %v6687, 3
      %v7203 = vpop.permute.xlu0 %7202
      %7204 = vrot.lane.b32.xlu0 %v6754, 3
      %v7205 = vpop.permute.xlu0 %7204
      %7206 = vrot.lane.b32.xlu0 %v6691, 3
      %v7207 = vpop.permute.xlu0 %7206
      %7208 = vrot.lane.b32.xlu0 %v6755, 3
      %v7209 = vpop.permute.xlu0 %7208
      %7210 = vrot.lane.b32.xlu0 %v6695, 3
      %v7211 = vpop.permute.xlu0 %7210
      %7212 = vrot.lane.b32.xlu0 %v6756, 3
      %v7213 = vpop.permute.xlu0 %7212
      %7214 = vrot.lane.b32.xlu0 %v6699, 3
      %v7215 = vpop.permute.xlu0 %7214
      %7216 = vrot.lane.b32.xlu0 %v6757, 3
      %v7217 = vpop.permute.xlu0 %7216
      %7218 = vrot.lane.b32.xlu0 %v6703, 3
      %v7219 = vpop.permute.xlu0 %7218
      %7220 = vrot.lane.b32.xlu0 %v6864, 3
      %v7221 = vpop.permute.xlu0 %7220
      %7222 = vrot.lane.b32.xlu0 %v6857, 3
      %v7223 = vpop.permute.xlu0 %7222
      %7224 = vrot.lane.b32.xlu0 %v6865, 3
      %v7225 = vpop.permute.xlu0 %7224
      %7226 = vrot.lane.b32.xlu0 %v6861, 3
      %v7227 = vpop.permute.xlu0 %7226
      %7264 = vrot.lane.b32.xlu0 %v1607, 112
      %v7265 = vpop.permute.xlu0 %7264
      %7266 = vrot.lane.b32.xlu0 %v1608, 112
      %v7267 = vpop.permute.xlu0 %7266
      %7268 = vrot.lane.b32.xlu0 %v1609, 112
      %v7269 = vpop.permute.xlu0 %7268
      %7270 = vrot.lane.b32.xlu0 %v1610, 112
      %v7271 = vpop.permute.xlu0 %7270
      %7272 = vrot.lane.b32.xlu0 %v1611, 112
      %v7273 = vpop.permute.xlu0 %7272
      %7274 = vrot.lane.b32.xlu0 %v1612, 112
      %v7275 = vpop.permute.xlu0 %7274
      %7276 = vrot.lane.b32.xlu0 %v1613, 112
      %v7277 = vpop.permute.xlu0 %7276
      %7278 = vrot.lane.b32.xlu0 %v1614, 112
      %v7279 = vpop.permute.xlu0 %7278
      %7280 = vrot.lane.b32.xlu0 %v1615, 112
      %v7281 = vpop.permute.xlu0 %7280
      %7282 = vrot.lane.b32.xlu0 %v1616, 112
      %v7283 = vpop.permute.xlu0 %7282
      %7284 = vrot.lane.b32.xlu0 %v1617, 112
      %v7285 = vpop.permute.xlu0 %7284
      %7286 = vrot.lane.b32.xlu0 %v1618, 112
      %v7287 = vpop.permute.xlu0 %7286
      %7288 = vrot.lane.b32.xlu0 %v1619, 112
      %v7289 = vpop.permute.xlu0 %7288
      %7290 = vrot.lane.b32.xlu0 %v1620, 112
      %v7291 = vpop.permute.xlu0 %7290
      %7292 = vrot.lane.b32.xlu0 %v1621, 112
      %v7293 = vpop.permute.xlu0 %7292
      %7294 = vrot.lane.b32.xlu0 %v1622, 112
      %v7295 = vpop.permute.xlu0 %7294
      %7296 = vrot.lane.b32.xlu0 %v1623, 112
      %v7297 = vpop.permute.xlu0 %7296
      %7298 = vrot.lane.b32.xlu0 %v1624, 112
      %v7299 = vpop.permute.xlu0 %7298
      %7300 = vrot.lane.b32.xlu0 %v1625, 112
      %v7301 = vpop.permute.xlu0 %7300
      %7302 = vrot.lane.b32.xlu0 %v1626, 112
      %v7303 = vpop.permute.xlu0 %7302
      %7304 = vrot.lane.b32.xlu0 %v1627, 112
      %v7305 = vpop.permute.xlu0 %7304
      %7306 = vrot.lane.b32.xlu0 %v1628, 112
      %v7307 = vpop.permute.xlu0 %7306
      %7308 = vrot.lane.b32.xlu0 %v1629, 112
      %v7309 = vpop.permute.xlu0 %7308
      %7310 = vrot.lane.b32.xlu0 %v1630, 112
      %v7311 = vpop.permute.xlu0 %7310
      %7312 = vrot.lane.b32.xlu0 %v1631, 112
      %v7313 = vpop.permute.xlu0 %7312
      %7314 = vrot.lane.b32.xlu0 %v1632, 112
      %v7315 = vpop.permute.xlu0 %7314
      %7316 = vrot.lane.b32.xlu0 %v1633, 112
      %v7317 = vpop.permute.xlu0 %7316
      %7318 = vrot.lane.b32.xlu0 %v1634, 112
      %v7319 = vpop.permute.xlu0 %7318
      %7320 = vrot.lane.b32.xlu0 %v1635, 112
      %v7321 = vpop.permute.xlu0 %7320
      %7322 = vrot.lane.b32.xlu0 %v1636, 112
      %v7323 = vpop.permute.xlu0 %7322
      %7324 = vrot.lane.b32.xlu0 %v1637, 112
      %v7325 = vpop.permute.xlu0 %7324
      %7326 = vrot.lane.b32.xlu0 %v1638, 112
      %v7327 = vpop.permute.xlu0 %7326
      %7328 = vrot.lane.b32.xlu0 %v1639, 112
      %v7329 = vpop.permute.xlu0 %7328
      %7330 = vrot.lane.b32.xlu0 %v1640, 112
      %v7331 = vpop.permute.xlu0 %7330
      %7332 = vrot.lane.b32.xlu0 %v1641, 112
      %v7333 = vpop.permute.xlu0 %7332
      %7334 = vrot.lane.b32.xlu0 %v1642, 112
      %v7335 = vpop.permute.xlu0 %7334
      %7374 = vrot.lane.b32.xlu0 %v6766, 113
      %v7375 = vpop.permute.xlu0 %7374
      %7376 = vrot.lane.b32.xlu0 %v6832, 113
      %v7377 = vpop.permute.xlu0 %7376
      %7378 = vrot.lane.b32.xlu0 %v6769, 113
      %v7379 = vpop.permute.xlu0 %7378
      %7380 = vrot.lane.b32.xlu0 %v6833, 113
      %v7381 = vpop.permute.xlu0 %7380
      %7382 = vrot.lane.b32.xlu0 %v6772, 113
      %v7383 = vpop.permute.xlu0 %7382
      %7384 = vrot.lane.b32.xlu0 %v6834, 113
      %v7385 = vpop.permute.xlu0 %7384
      %7386 = vrot.lane.b32.xlu0 %v6775, 113
      %v7387 = vpop.permute.xlu0 %7386
      %7388 = vrot.lane.b32.xlu0 %v6835, 113
      %v7389 = vpop.permute.xlu0 %7388
      %7390 = vrot.lane.b32.xlu0 %v6778, 113
      %v7391 = vpop.permute.xlu0 %7390
      %7392 = vrot.lane.b32.xlu0 %v6836, 113
      %v7393 = vpop.permute.xlu0 %7392
      %7394 = vrot.lane.b32.xlu0 %v6781, 113
      %v7395 = vpop.permute.xlu0 %7394
      %7396 = vrot.lane.b32.xlu0 %v6837, 113
      %v7397 = vpop.permute.xlu0 %7396
      %7398 = vrot.lane.b32.xlu0 %v6784, 113
      %v7399 = vpop.permute.xlu0 %7398
      %7400 = vrot.lane.b32.xlu0 %v6838, 113
      %v7401 = vpop.permute.xlu0 %7400
      %7402 = vrot.lane.b32.xlu0 %v6787, 113
      %v7403 = vpop.permute.xlu0 %7402
      %7404 = vrot.lane.b32.xlu0 %v6839, 113
      %v7405 = vpop.permute.xlu0 %7404
      %7406 = vrot.lane.b32.xlu0 %v6790, 113
      %v7407 = vpop.permute.xlu0 %7406
      %7408 = vrot.lane.b32.xlu0 %v6840, 113
      %v7409 = vpop.permute.xlu0 %7408
      %7410 = vrot.lane.b32.xlu0 %v6793, 113
      %v7411 = vpop.permute.xlu0 %7410
      %7412 = vrot.lane.b32.xlu0 %v6841, 113
      %v7413 = vpop.permute.xlu0 %7412
      %7414 = vrot.lane.b32.xlu0 %v6796, 113
      %v7415 = vpop.permute.xlu0 %7414
      %7416 = vrot.lane.b32.xlu0 %v6842, 113
      %v7417 = vpop.permute.xlu0 %7416
      %7418 = vrot.lane.b32.xlu0 %v6799, 113
      %v7419 = vpop.permute.xlu0 %7418
      %7420 = vrot.lane.b32.xlu0 %v6843, 113
      %v7421 = vpop.permute.xlu0 %7420
      %7422 = vrot.lane.b32.xlu0 %v6802, 113
      %v7423 = vpop.permute.xlu0 %7422
      %7424 = vrot.lane.b32.xlu0 %v6844, 113
      %v7425 = vpop.permute.xlu0 %7424
      %7426 = vrot.lane.b32.xlu0 %v6805, 113
      %v7427 = vpop.permute.xlu0 %7426
      %7428 = vrot.lane.b32.xlu0 %v6845, 113
      %v7429 = vpop.permute.xlu0 %7428
      %7430 = vrot.lane.b32.xlu0 %v6808, 113
      %v7431 = vpop.permute.xlu0 %7430
      %7432 = vrot.lane.b32.xlu0 %v6846, 113
      %v7433 = vpop.permute.xlu0 %7432
      %7434 = vrot.lane.b32.xlu0 %v6811, 113
      %v7435 = vpop.permute.xlu0 %7434
      %7436 = vrot.lane.b32.xlu0 %v6847, 113
      %v7437 = vpop.permute.xlu0 %7436
      %7438 = vrot.lane.b32.xlu0 %v6868, 113
      %v7439 = vpop.permute.xlu0 %7438
      %7440 = vrot.lane.b32.xlu0 %v6874, 113
      %v7441 = vpop.permute.xlu0 %7440
      %7442 = vrot.lane.b32.xlu0 %v6871, 113
      %v7443 = vpop.permute.xlu0 %7442
      %7444 = vrot.lane.b32.xlu0 %v6875, 113
      %v7445 = vpop.permute.xlu0 %7444
      %7484 = vrot.lane.b32.xlu0 %v6744, 6
      %v7485 = vpop.permute.xlu0 %7484
      %7486 = vrot.lane.b32.xlu0 %v6651, 6
      %v7487 = vpop.permute.xlu0 %7486
      %7488 = vrot.lane.b32.xlu0 %v6745, 6
      %v7489 = vpop.permute.xlu0 %7488
      %7490 = vrot.lane.b32.xlu0 %v6655, 6
      %v7491 = vpop.permute.xlu0 %7490
      %7492 = vrot.lane.b32.xlu0 %v6746, 6
      %v7493 = vpop.permute.xlu0 %7492
      %7494 = vrot.lane.b32.xlu0 %v6659, 6
      %v7495 = vpop.permute.xlu0 %7494
      %7496 = vrot.lane.b32.xlu0 %v6747, 6
      %v7497 = vpop.permute.xlu0 %7496
      %7498 = vrot.lane.b32.xlu0 %v6663, 6
      %v7499 = vpop.permute.xlu0 %7498
      %7500 = vrot.lane.b32.xlu0 %v6748, 6
      %v7501 = vpop.permute.xlu0 %7500
      %7502 = vrot.lane.b32.xlu0 %v6667, 6
      %v7503 = vpop.permute.xlu0 %7502
      %7504 = vrot.lane.b32.xlu0 %v6749, 6
      %v7505 = vpop.permute.xlu0 %7504
      %7506 = vrot.lane.b32.xlu0 %v6671, 6
      %v7507 = vpop.permute.xlu0 %7506
      %7508 = vrot.lane.b32.xlu0 %v6750, 6
      %v7509 = vpop.permute.xlu0 %7508
      %7510 = vrot.lane.b32.xlu0 %v6675, 6
      %v7511 = vpop.permute.xlu0 %7510
      %7512 = vrot.lane.b32.xlu0 %v6751, 6
      %v7513 = vpop.permute.xlu0 %7512
      %7514 = vrot.lane.b32.xlu0 %v6679, 6
      %v7515 = vpop.permute.xlu0 %7514
      %7516 = vrot.lane.b32.xlu0 %v6752, 6
      %v7517 = vpop.permute.xlu0 %7516
      %7518 = vrot.lane.b32.xlu0 %v6683, 6
      %v7519 = vpop.permute.xlu0 %7518
      %7520 = vrot.lane.b32.xlu0 %v6753, 6
      %v7521 = vpop.permute.xlu0 %7520
      %7522 = vrot.lane.b32.xlu0 %v6687, 6
      %v7523 = vpop.permute.xlu0 %7522
      %7524 = vrot.lane.b32.xlu0 %v6754, 6
      %v7525 = vpop.permute.xlu0 %7524
      %7526 = vrot.lane.b32.xlu0 %v6691, 6
      %v7527 = vpop.permute.xlu0 %7526
      %7528 = vrot.lane.b32.xlu0 %v6755, 6
      %v7529 = vpop.permute.xlu0 %7528
      %7530 = vrot.lane.b32.xlu0 %v6695, 6
      %v7531 = vpop.permute.xlu0 %7530
      %7532 = vrot.lane.b32.xlu0 %v6756, 6
      %v7533 = vpop.permute.xlu0 %7532
      %7534 = vrot.lane.b32.xlu0 %v6699, 6
      %v7535 = vpop.permute.xlu0 %7534
      %7536 = vrot.lane.b32.xlu0 %v6757, 6
      %v7537 = vpop.permute.xlu0 %7536
      %7538 = vrot.lane.b32.xlu0 %v6703, 6
      %v7539 = vpop.permute.xlu0 %7538
      %7540 = vrot.lane.b32.xlu0 %v6864, 6
      %v7541 = vpop.permute.xlu0 %7540
      %7542 = vrot.lane.b32.xlu0 %v6857, 6
      %v7543 = vpop.permute.xlu0 %7542
      %7544 = vrot.lane.b32.xlu0 %v6865, 6
      %v7545 = vpop.permute.xlu0 %7544
      %7546 = vrot.lane.b32.xlu0 %v6861, 6
      %v7547 = vpop.permute.xlu0 %7546
      %7548 = vrot.lane.b32.xlu0 %v6892, 6
      %v7549 = vpop.permute.xlu0 %7548
      %7550 = vrot.lane.b32.xlu0 %v6885, 6
      %v7551 = vpop.permute.xlu0 %7550
      %7552 = vrot.lane.b32.xlu0 %v6893, 6
      %v7553 = vpop.permute.xlu0 %7552
      %7554 = vrot.lane.b32.xlu0 %v6889, 6
      %v7555 = vpop.permute.xlu0 %7554
      %7592 = vrot.lane.b32.xlu0 %v1611, 115
      %v7593 = vpop.permute.xlu0 %7592
      %7594 = vrot.lane.b32.xlu0 %v1612, 115
      %v7595 = vpop.permute.xlu0 %7594
      %7596 = vrot.lane.b32.xlu0 %v1613, 115
      %v7597 = vpop.permute.xlu0 %7596
      %7598 = vrot.lane.b32.xlu0 %v1614, 115
      %v7599 = vpop.permute.xlu0 %7598
      %7600 = vrot.lane.b32.xlu0 %v1615, 115
      %v7601 = vpop.permute.xlu0 %7600
      %7602 = vrot.lane.b32.xlu0 %v1616, 115
      %v7603 = vpop.permute.xlu0 %7602
      %7604 = vrot.lane.b32.xlu0 %v1617, 115
      %v7605 = vpop.permute.xlu0 %7604
      %7606 = vrot.lane.b32.xlu0 %v1618, 115
      %v7607 = vpop.permute.xlu0 %7606
      %7608 = vrot.lane.b32.xlu0 %v1619, 115
      %v7609 = vpop.permute.xlu0 %7608
      %7610 = vrot.lane.b32.xlu0 %v1620, 115
      %v7611 = vpop.permute.xlu0 %7610
      %7612 = vrot.lane.b32.xlu0 %v1621, 115
      %v7613 = vpop.permute.xlu0 %7612
      %7614 = vrot.lane.b32.xlu0 %v1622, 115
      %v7615 = vpop.permute.xlu0 %7614
      %7616 = vrot.lane.b32.xlu0 %v1623, 115
      %v7617 = vpop.permute.xlu0 %7616
      %7618 = vrot.lane.b32.xlu0 %v1624, 115
      %v7619 = vpop.permute.xlu0 %7618
      %7620 = vrot.lane.b32.xlu0 %v1625, 115
      %v7621 = vpop.permute.xlu0 %7620
      %7622 = vrot.lane.b32.xlu0 %v1626, 115
      %v7623 = vpop.permute.xlu0 %7622
      %7624 = vrot.lane.b32.xlu0 %v1627, 115
      %v7625 = vpop.permute.xlu0 %7624
      %7626 = vrot.lane.b32.xlu0 %v1628, 115
      %v7627 = vpop.permute.xlu0 %7626
      %7628 = vrot.lane.b32.xlu0 %v1629, 115
      %v7629 = vpop.permute.xlu0 %7628
      %7630 = vrot.lane.b32.xlu0 %v1630, 115
      %v7631 = vpop.permute.xlu0 %7630
      %7632 = vrot.lane.b32.xlu0 %v1631, 115
      %v7633 = vpop.permute.xlu0 %7632
      %7634 = vrot.lane.b32.xlu0 %v1632, 115
      %v7635 = vpop.permute.xlu0 %7634
      %7636 = vrot.lane.b32.xlu0 %v1633, 115
      %v7637 = vpop.permute.xlu0 %7636
      %7638 = vrot.lane.b32.xlu0 %v1634, 115
      %v7639 = vpop.permute.xlu0 %7638
      %7640 = vrot.lane.b32.xlu0 %v1635, 115
      %v7641 = vpop.permute.xlu0 %7640
      %7642 = vrot.lane.b32.xlu0 %v1636, 115
      %v7643 = vpop.permute.xlu0 %7642
      %7644 = vrot.lane.b32.xlu0 %v1637, 115
      %v7645 = vpop.permute.xlu0 %7644
      %7646 = vrot.lane.b32.xlu0 %v1638, 115
      %v7647 = vpop.permute.xlu0 %7646
      %7648 = vrot.lane.b32.xlu0 %v1639, 115
      %v7649 = vpop.permute.xlu0 %7648
      %7650 = vrot.lane.b32.xlu0 %v1640, 115
      %v7651 = vpop.permute.xlu0 %7650
      %7652 = vrot.lane.b32.xlu0 %v1641, 115
      %v7653 = vpop.permute.xlu0 %7652
      %7654 = vrot.lane.b32.xlu0 %v1642, 115
      %v7655 = vpop.permute.xlu0 %7654
      %7656 = vrot.lane.b32.xlu0 %v1643, 115
      %v7657 = vpop.permute.xlu0 %7656
      %7658 = vrot.lane.b32.xlu0 %v1644, 115
      %v7659 = vpop.permute.xlu0 %7658
      %7660 = vrot.lane.b32.xlu0 %v1645, 115
      %v7661 = vpop.permute.xlu0 %7660
      %7662 = vrot.lane.b32.xlu0 %v1646, 115
      %v7663 = vpop.permute.xlu0 %7662
      %7702 = vrot.lane.b32.xlu0 %v6772, 116
      %v7703 = vpop.permute.xlu0 %7702
      %7704 = vrot.lane.b32.xlu0 %v6834, 116
      %v7705 = vpop.permute.xlu0 %7704
      %7706 = vrot.lane.b32.xlu0 %v6775, 116
      %v7707 = vpop.permute.xlu0 %7706
      %7708 = vrot.lane.b32.xlu0 %v6835, 116
      %v7709 = vpop.permute.xlu0 %7708
      %7710 = vrot.lane.b32.xlu0 %v6778, 116
      %v7711 = vpop.permute.xlu0 %7710
      %7712 = vrot.lane.b32.xlu0 %v6836, 116
      %v7713 = vpop.permute.xlu0 %7712
      %7714 = vrot.lane.b32.xlu0 %v6781, 116
      %v7715 = vpop.permute.xlu0 %7714
      %7716 = vrot.lane.b32.xlu0 %v6837, 116
      %v7717 = vpop.permute.xlu0 %7716
      %7718 = vrot.lane.b32.xlu0 %v6784, 116
      %v7719 = vpop.permute.xlu0 %7718
      %7720 = vrot.lane.b32.xlu0 %v6838, 116
      %v7721 = vpop.permute.xlu0 %7720
      %7722 = vrot.lane.b32.xlu0 %v6787, 116
      %v7723 = vpop.permute.xlu0 %7722
      %7724 = vrot.lane.b32.xlu0 %v6839, 116
      %v7725 = vpop.permute.xlu0 %7724
      %7726 = vrot.lane.b32.xlu0 %v6790, 116
      %v7727 = vpop.permute.xlu0 %7726
      %7728 = vrot.lane.b32.xlu0 %v6840, 116
      %v7729 = vpop.permute.xlu0 %7728
      %7730 = vrot.lane.b32.xlu0 %v6793, 116
      %v7731 = vpop.permute.xlu0 %7730
      %7732 = vrot.lane.b32.xlu0 %v6841, 116
      %v7733 = vpop.permute.xlu0 %7732
      %7734 = vrot.lane.b32.xlu0 %v6796, 116
      %v7735 = vpop.permute.xlu0 %7734
      %7736 = vrot.lane.b32.xlu0 %v6842, 116
      %v7737 = vpop.permute.xlu0 %7736
      %7738 = vrot.lane.b32.xlu0 %v6799, 116
      %v7739 = vpop.permute.xlu0 %7738
      %7740 = vrot.lane.b32.xlu0 %v6843, 116
      %v7741 = vpop.permute.xlu0 %7740
      %7742 = vrot.lane.b32.xlu0 %v6802, 116
      %v7743 = vpop.permute.xlu0 %7742
      %7744 = vrot.lane.b32.xlu0 %v6844, 116
      %v7745 = vpop.permute.xlu0 %7744
      %7746 = vrot.lane.b32.xlu0 %v6805, 116
      %v7747 = vpop.permute.xlu0 %7746
      %7748 = vrot.lane.b32.xlu0 %v6845, 116
      %v7749 = vpop.permute.xlu0 %7748
      %7750 = vrot.lane.b32.xlu0 %v6808, 116
      %v7751 = vpop.permute.xlu0 %7750
      %7752 = vrot.lane.b32.xlu0 %v6846, 116
      %v7753 = vpop.permute.xlu0 %7752
      %7754 = vrot.lane.b32.xlu0 %v6811, 116
      %v7755 = vpop.permute.xlu0 %7754
      %7756 = vrot.lane.b32.xlu0 %v6847, 116
      %v7757 = vpop.permute.xlu0 %7756
      %7758 = vrot.lane.b32.xlu0 %v6868, 116
      %v7759 = vpop.permute.xlu0 %7758
      %7760 = vrot.lane.b32.xlu0 %v6874, 116
      %v7761 = vpop.permute.xlu0 %7760
      %7762 = vrot.lane.b32.xlu0 %v6871, 116
      %v7763 = vpop.permute.xlu0 %7762
      %7764 = vrot.lane.b32.xlu0 %v6875, 116
      %v7765 = vpop.permute.xlu0 %7764
      %7766 = vrot.lane.b32.xlu0 %v6896, 116
      %v7767 = vpop.permute.xlu0 %7766
      %7768 = vrot.lane.b32.xlu0 %v6902, 116
      %v7769 = vpop.permute.xlu0 %7768
      %7770 = vrot.lane.b32.xlu0 %v6899, 116
      %v7771 = vpop.permute.xlu0 %7770
      %7772 = vrot.lane.b32.xlu0 %v6903, 116
      %v7773 = vpop.permute.xlu0 %7772
      %vm7810 = vcmask 7168
      %v7811 = vsel %vm7810, %v6740, %v6905
      %v7812 = vsel %vm7810, %v6635, %v6907
      %v7813 = vsel %vm7810, %v6741, %v6909
      %v7814 = vsel %vm7810, %v6639, %v6911
      %v7815 = vsel %vm7810, %v6742, %v6913
      %v7816 = vsel %vm7810, %v6643, %v6915
      %v7817 = vsel %vm7810, %v6743, %v6917
      %v7818 = vsel %vm7810, %v6647, %v6919
      %v7819 = vsel %vm7810, %v6744, %v6921
      %v7820 = vsel %vm7810, %v6651, %v6923
      %v7821 = vsel %vm7810, %v6745, %v6925
      %v7822 = vsel %vm7810, %v6655, %v6927
      %v7823 = vsel %vm7810, %v6746, %v6929
      %v7824 = vsel %vm7810, %v6659, %v6931
      %v7825 = vsel %vm7810, %v6747, %v6933
      %v7826 = vsel %vm7810, %v6663, %v6935
      %v7827 = vsel %vm7810, %v6748, %v6937
      %v7828 = vsel %vm7810, %v6667, %v6939
      %v7829 = vsel %vm7810, %v6749, %v6941
      %v7830 = vsel %vm7810, %v6671, %v6943
      %v7831 = vsel %vm7810, %v6750, %v6945
      %v7832 = vsel %vm7810, %v6675, %v6947
      %v7833 = vsel %vm7810, %v6751, %v6949
      %v7834 = vsel %vm7810, %v6679, %v6951
      %v7835 = vsel %vm7810, %v6752, %v6953
      %v7836 = vsel %vm7810, %v6683, %v6955
      %v7837 = vsel %vm7810, %v6753, %v6957
      %v7838 = vsel %vm7810, %v6687, %v6959
      %v7839 = vsel %vm7810, %v6754, %v6961
      %v7840 = vsel %vm7810, %v6691, %v6963
      %v7841 = vsel %vm7810, %v6755, %v6965
      %v7842 = vsel %vm7810, %v6695, %v6967
      %v7843 = vsel %vm7810, %v6756, %v6969
      %v7844 = vsel %vm7810, %v6699, %v6971
      %v7845 = vsel %vm7810, %v6757, %v6973
      %v7846 = vsel %vm7810, %v6703, %v6975
      %vm7847 = vcmask 15360
      %v7848 = vsel %vm7847, %v7811, %v7031
      %v7849 = vsel %vm7847, %v7812, %v7033
      %v7850 = vsel %vm7847, %v7813, %v7035
      %v7851 = vsel %vm7847, %v7814, %v7037
      %v7852 = vsel %vm7847, %v7815, %v7039
      %v7853 = vsel %vm7847, %v7816, %v7041
      %v7854 = vsel %vm7847, %v7817, %v7043
      %v7855 = vsel %vm7847, %v7818, %v7045
      %v7856 = vsel %vm7847, %v7819, %v7047
      %v7857 = vsel %vm7847, %v7820, %v7049
      %v7858 = vsel %vm7847, %v7821, %v7051
      %v7859 = vsel %vm7847, %v7822, %v7053
      %v7860 = vsel %vm7847, %v7823, %v7055
      %v7861 = vsel %vm7847, %v7824, %v7057
      %v7862 = vsel %vm7847, %v7825, %v7059
      %v7863 = vsel %vm7847, %v7826, %v7061
      %v7864 = vsel %vm7847, %v7827, %v7063
      %v7865 = vsel %vm7847, %v7828, %v7065
      %v7866 = vsel %vm7847, %v7829, %v7067
      %v7867 = vsel %vm7847, %v7830, %v7069
      %v7868 = vsel %vm7847, %v7831, %v7071
      %v7869 = vsel %vm7847, %v7832, %v7073
      %v7870 = vsel %vm7847, %v7833, %v7075
      %v7871 = vsel %vm7847, %v7834, %v7077
      %v7872 = vsel %vm7847, %v7835, %v7079
      %v7873 = vsel %vm7847, %v7836, %v7081
      %v7874 = vsel %vm7847, %v7837, %v7083
      %v7875 = vsel %vm7847, %v7838, %v7085
      %v7876 = vsel %vm7847, %v7839, %v7087
      %v7877 = vsel %vm7847, %v7840, %v7089
      %v7878 = vsel %vm7847, %v7841, %v7091
      %v7879 = vsel %vm7847, %v7842, %v7093
      %v7880 = vsel %vm7847, %v7843, %v7095
      %v7881 = vsel %vm7847, %v7844, %v7097
      %v7882 = vsel %vm7847, %v7845, %v7099
      %v7883 = vsel %vm7847, %v7846, %v7101
      %vm7884 = vcmask 23552
      %v7885 = vsel %vm7884, %v7848, %v7157
      %v7886 = vsel %vm7884, %v7849, %v7159
      %v7887 = vsel %vm7884, %v7850, %v7161
      %v7888 = vsel %vm7884, %v7851, %v7163
      %v7889 = vsel %vm7884, %v7852, %v7165
      %v7890 = vsel %vm7884, %v7853, %v7167
      %v7891 = vsel %vm7884, %v7854, %v7169
      %v7892 = vsel %vm7884, %v7855, %v7171
      %v7893 = vsel %vm7884, %v7856, %v7173
      %v7894 = vsel %vm7884, %v7857, %v7175
      %v7895 = vsel %vm7884, %v7858, %v7177
      %v7896 = vsel %vm7884, %v7859, %v7179
      %v7897 = vsel %vm7884, %v7860, %v7181
      %v7898 = vsel %vm7884, %v7861, %v7183
      %v7899 = vsel %vm7884, %v7862, %v7185
      %v7900 = vsel %vm7884, %v7863, %v7187
      %v7901 = vsel %vm7884, %v7864, %v7189
      %v7902 = vsel %vm7884, %v7865, %v7191
      %v7903 = vsel %vm7884, %v7866, %v7193
      %v7904 = vsel %vm7884, %v7867, %v7195
      %v7905 = vsel %vm7884, %v7868, %v7197
      %v7906 = vsel %vm7884, %v7869, %v7199
      %v7907 = vsel %vm7884, %v7870, %v7201
      %v7908 = vsel %vm7884, %v7871, %v7203
      %v7909 = vsel %vm7884, %v7872, %v7205
      %v7910 = vsel %vm7884, %v7873, %v7207
      %v7911 = vsel %vm7884, %v7874, %v7209
      %v7912 = vsel %vm7884, %v7875, %v7211
      %v7913 = vsel %vm7884, %v7876, %v7213
      %v7914 = vsel %vm7884, %v7877, %v7215
      %v7915 = vsel %vm7884, %v7878, %v7217
      %v7916 = vsel %vm7884, %v7879, %v7219
      %v7917 = vsel %vm7884, %v7880, %v7221
      %v7918 = vsel %vm7884, %v7881, %v7223
      %v7919 = vsel %vm7884, %v7882, %v7225
      %v7920 = vsel %vm7884, %v7883, %v7227
      %v7921 = vsel %vm444, %v7885, %v7265
      %v7922 = vsel %vm444, %v7886, %v7267
      %v7923 = vsel %vm444, %v7887, %v7269
      %v7924 = vsel %vm444, %v7888, %v7271
      %v7925 = vsel %vm444, %v7889, %v7273
      %v7926 = vsel %vm444, %v7890, %v7275
      %v7927 = vsel %vm444, %v7891, %v7277
      %v7928 = vsel %vm444, %v7892, %v7279
      %v7929 = vsel %vm444, %v7893, %v7281
      %v7930 = vsel %vm444, %v7894, %v7283
      %v7931 = vsel %vm444, %v7895, %v7285
      %v7932 = vsel %vm444, %v7896, %v7287
      %v7933 = vsel %vm444, %v7897, %v7289
      %v7934 = vsel %vm444, %v7898, %v7291
      %v7935 = vsel %vm444, %v7899, %v7293
      %v7936 = vsel %vm444, %v7900, %v7295
      %v7937 = vsel %vm444, %v7901, %v7297
      %v7938 = vsel %vm444, %v7902, %v7299
      %v7939 = vsel %vm444, %v7903, %v7301
      %v7940 = vsel %vm444, %v7904, %v7303
      %v7941 = vsel %vm444, %v7905, %v7305
      %v7942 = vsel %vm444, %v7906, %v7307
      %v7943 = vsel %vm444, %v7907, %v7309
      %v7944 = vsel %vm444, %v7908, %v7311
      %v7945 = vsel %vm444, %v7909, %v7313
      %v7946 = vsel %vm444, %v7910, %v7315
      %v7947 = vsel %vm444, %v7911, %v7317
      %v7948 = vsel %vm444, %v7912, %v7319
      %v7949 = vsel %vm444, %v7913, %v7321
      %v7950 = vsel %vm444, %v7914, %v7323
      %v7951 = vsel %vm444, %v7915, %v7325
      %v7952 = vsel %vm444, %v7916, %v7327
      %v7953 = vsel %vm444, %v7917, %v7329
      %v7954 = vsel %vm444, %v7918, %v7331
      %v7955 = vsel %vm444, %v7919, %v7333
      %v7956 = vsel %vm444, %v7920, %v7335
      %vm7957 = vcmask 39936
      %v7958 = vsel %vm7957, %v7921, %v7375
      %v7959 = vsel %vm7957, %v7922, %v7377
      %v7960 = vsel %vm7957, %v7923, %v7379
      %v7961 = vsel %vm7957, %v7924, %v7381
      %v7962 = vsel %vm7957, %v7925, %v7383
      %v7963 = vsel %vm7957, %v7926, %v7385
      %v7964 = vsel %vm7957, %v7927, %v7387
      %v7965 = vsel %vm7957, %v7928, %v7389
      %v7966 = vsel %vm7957, %v7929, %v7391
      %v7967 = vsel %vm7957, %v7930, %v7393
      %v7968 = vsel %vm7957, %v7931, %v7395
      %v7969 = vsel %vm7957, %v7932, %v7397
      %v7970 = vsel %vm7957, %v7933, %v7399
      %v7971 = vsel %vm7957, %v7934, %v7401
      %v7972 = vsel %vm7957, %v7935, %v7403
      %v7973 = vsel %vm7957, %v7936, %v7405
      %v7974 = vsel %vm7957, %v7937, %v7407
      %v7975 = vsel %vm7957, %v7938, %v7409
      %v7976 = vsel %vm7957, %v7939, %v7411
      %v7977 = vsel %vm7957, %v7940, %v7413
      %v7978 = vsel %vm7957, %v7941, %v7415
      %v7979 = vsel %vm7957, %v7942, %v7417
      %v7980 = vsel %vm7957, %v7943, %v7419
      %v7981 = vsel %vm7957, %v7944, %v7421
      %v7982 = vsel %vm7957, %v7945, %v7423
      %v7983 = vsel %vm7957, %v7946, %v7425
      %v7984 = vsel %vm7957, %v7947, %v7427
      %v7985 = vsel %vm7957, %v7948, %v7429
      %v7986 = vsel %vm7957, %v7949, %v7431
      %v7987 = vsel %vm7957, %v7950, %v7433
      %v7988 = vsel %vm7957, %v7951, %v7435
      %v7989 = vsel %vm7957, %v7952, %v7437
      %v7990 = vsel %vm7957, %v7953, %v7439
      %v7991 = vsel %vm7957, %v7954, %v7441
      %v7992 = vsel %vm7957, %v7955, %v7443
      %v7993 = vsel %vm7957, %v7956, %v7445
      %vm7994 = vcmask 48128
      %v7995 = vsel %vm7994, %v7958, %v7485
      %v7996 = vsel %vm7994, %v7959, %v7487
      %v7997 = vsel %vm7994, %v7960, %v7489
      %v7998 = vsel %vm7994, %v7961, %v7491
      %v7999 = vsel %vm7994, %v7962, %v7493
      %v8000 = vsel %vm7994, %v7963, %v7495
      %v8001 = vsel %vm7994, %v7964, %v7497
      %v8002 = vsel %vm7994, %v7965, %v7499
      %v8003 = vsel %vm7994, %v7966, %v7501
      %v8004 = vsel %vm7994, %v7967, %v7503
      %v8005 = vsel %vm7994, %v7968, %v7505
      %v8006 = vsel %vm7994, %v7969, %v7507
      %v8007 = vsel %vm7994, %v7970, %v7509
      %v8008 = vsel %vm7994, %v7971, %v7511
      %v8009 = vsel %vm7994, %v7972, %v7513
      %v8010 = vsel %vm7994, %v7973, %v7515
      %v8011 = vsel %vm7994, %v7974, %v7517
      %v8012 = vsel %vm7994, %v7975, %v7519
      %v8013 = vsel %vm7994, %v7976, %v7521
      %v8014 = vsel %vm7994, %v7977, %v7523
      %v8015 = vsel %vm7994, %v7978, %v7525
      %v8016 = vsel %vm7994, %v7979, %v7527
      %v8017 = vsel %vm7994, %v7980, %v7529
      %v8018 = vsel %vm7994, %v7981, %v7531
      %v8019 = vsel %vm7994, %v7982, %v7533
      %v8020 = vsel %vm7994, %v7983, %v7535
      %v8021 = vsel %vm7994, %v7984, %v7537
      %v8022 = vsel %vm7994, %v7985, %v7539
      %v8023 = vsel %vm7994, %v7986, %v7541
      %v8024 = vsel %vm7994, %v7987, %v7543
      %v8025 = vsel %vm7994, %v7988, %v7545
      %v8026 = vsel %vm7994, %v7989, %v7547
      %v8027 = vsel %vm7994, %v7990, %v7549
      %v8028 = vsel %vm7994, %v7991, %v7551
      %v8029 = vsel %vm7994, %v7992, %v7553
      %v8030 = vsel %vm7994, %v7993, %v7555
      %vm8031 = vcmask 56320
      %v8032 = vsel %vm8031, %v7995, %v7593
      %v8033 = vsel %vm8031, %v7996, %v7595
      %v8034 = vsel %vm8031, %v7997, %v7597
      %v8035 = vsel %vm8031, %v7998, %v7599
      %v8036 = vsel %vm8031, %v7999, %v7601
      %v8037 = vsel %vm8031, %v8000, %v7603
      %v8038 = vsel %vm8031, %v8001, %v7605
      %v8039 = vsel %vm8031, %v8002, %v7607
      %v8040 = vsel %vm8031, %v8003, %v7609
      %v8041 = vsel %vm8031, %v8004, %v7611
      %v8042 = vsel %vm8031, %v8005, %v7613
      %v8043 = vsel %vm8031, %v8006, %v7615
      %v8044 = vsel %vm8031, %v8007, %v7617
      %v8045 = vsel %vm8031, %v8008, %v7619
      %v8046 = vsel %vm8031, %v8009, %v7621
      %v8047 = vsel %vm8031, %v8010, %v7623
      %v8048 = vsel %vm8031, %v8011, %v7625
      %v8049 = vsel %vm8031, %v8012, %v7627
      %v8050 = vsel %vm8031, %v8013, %v7629
      %v8051 = vsel %vm8031, %v8014, %v7631
      %v8052 = vsel %vm8031, %v8015, %v7633
      %v8053 = vsel %vm8031, %v8016, %v7635
      %v8054 = vsel %vm8031, %v8017, %v7637
      %v8055 = vsel %vm8031, %v8018, %v7639
      %v8056 = vsel %vm8031, %v8019, %v7641
      %v8057 = vsel %vm8031, %v8020, %v7643
      %v8058 = vsel %vm8031, %v8021, %v7645
      %v8059 = vsel %vm8031, %v8022, %v7647
      %v8060 = vsel %vm8031, %v8023, %v7649
      %v8061 = vsel %vm8031, %v8024, %v7651
      %v8062 = vsel %vm8031, %v8025, %v7653
      %v8063 = vsel %vm8031, %v8026, %v7655
      %v8064 = vsel %vm8031, %v8027, %v7657
      %v8065 = vsel %vm8031, %v8028, %v7659
      %v8066 = vsel %vm8031, %v8029, %v7661
      %v8067 = vsel %vm8031, %v8030, %v7663
      %vm8068 = vcmask 64512
      %v8069 = vsel %vm8068, %v8032, %v7703
      %v8070 = vsel %vm8068, %v8033, %v7705
      %v8071 = vsel %vm8068, %v8034, %v7707
      %v8072 = vsel %vm8068, %v8035, %v7709
      %v8073 = vsel %vm8068, %v8036, %v7711
      %v8074 = vsel %vm8068, %v8037, %v7713
      %v8075 = vsel %vm8068, %v8038, %v7715
      %v8076 = vsel %vm8068, %v8039, %v7717
      %v8077 = vsel %vm8068, %v8040, %v7719
      %v8078 = vsel %vm8068, %v8041, %v7721
      %v8079 = vsel %vm8068, %v8042, %v7723
      %v8080 = vsel %vm8068, %v8043, %v7725
      %v8081 = vsel %vm8068, %v8044, %v7727
      %v8082 = vsel %vm8068, %v8045, %v7729
      %v8083 = vsel %vm8068, %v8046, %v7731
      %v8084 = vsel %vm8068, %v8047, %v7733
      %v8085 = vsel %vm8068, %v8048, %v7735
      %v8086 = vsel %vm8068, %v8049, %v7737
      %v8087 = vsel %vm8068, %v8050, %v7739
      %v8088 = vsel %vm8068, %v8051, %v7741
      %v8089 = vsel %vm8068, %v8052, %v7743
      %v8090 = vsel %vm8068, %v8053, %v7745
      %v8091 = vsel %vm8068, %v8054, %v7747
      %v8092 = vsel %vm8068, %v8055, %v7749
      %v8093 = vsel %vm8068, %v8056, %v7751
      %v8094 = vsel %vm8068, %v8057, %v7753
      %v8095 = vsel %vm8068, %v8058, %v7755
      %v8096 = vsel %vm8068, %v8059, %v7757
      %v8097 = vsel %vm8068, %v8060, %v7759
      %v8098 = vsel %vm8068, %v8061, %v7761
      %v8099 = vsel %vm8068, %v8062, %v7763
      %v8100 = vsel %vm8068, %v8063, %v7765
      %v8101 = vsel %vm8068, %v8064, %v7767
      %v8102 = vsel %vm8068, %v8065, %v7769
      %v8103 = vsel %vm8068, %v8066, %v7771
      %v8104 = vsel %vm8068, %v8067, %v7773
      %v8105 = vld [vmem:[%s6] sm:$0xff]
      %v8106 = vld [vmem:[%s6 + $0x8] sm:$0x1]
      %vm8107 = vcmask 72704
      %v8109 = vsel %vm8107, %v8069, 0
      %v8112 = vsel %vm8107, %v8070, 0
      %v8115 = vsel %vm8107, %v8071, 0
      %v8118 = vsel %vm8107, %v8072, 0
      %v8121 = vsel %vm8107, %v8073, 0
      %v8124 = vsel %vm8107, %v8074, 0
      %v8127 = vsel %vm8107, %v8075, 0
      %v8130 = vsel %vm8107, %v8076, 0
      %v8133 = vsel %vm8107, %v8077, 0
      %v8136 = vsel %vm8107, %v8078, 0
      %v8139 = vsel %vm8107, %v8079, 0
      %v8142 = vsel %vm8107, %v8080, 0
      %v8145 = vsel %vm8107, %v8081, 0
      %v8148 = vsel %vm8107, %v8082, 0
      %v8151 = vsel %vm8107, %v8083, 0
      %v8154 = vsel %vm8107, %v8084, 0
      %v8157 = vsel %vm8107, %v8085, 0
      %v8160 = vsel %vm8107, %v8086, 0
      %v8163 = vsel %vm8107, %v8087, 0
      %v8166 = vsel %vm8107, %v8088, 0
      %v8169 = vsel %vm8107, %v8089, 0
      %v8172 = vsel %vm8107, %v8090, 0
      %v8175 = vsel %vm8107, %v8091, 0
      %v8178 = vsel %vm8107, %v8092, 0
      %v8181 = vsel %vm8107, %v8093, 0
      %v8184 = vsel %vm8107, %v8094, 0
      %v8187 = vsel %vm8107, %v8095, 0
      %v8190 = vsel %vm8107, %v8096, 0
      %v8193 = vsel %vm8107, %v8097, 0
      %v8196 = vsel %vm8107, %v8098, 0
      %v8199 = vsel %vm8107, %v8099, 0
      %v8202 = vsel %vm8107, %v8100, 0
      %v8205 = vsel %vm8107, %v8101, 0
      %v8208 = vsel %vm8107, %v8102, 0
      %v8211 = vsel %vm8107, %v8103, 0
      %v8214 = vsel %vm8107, %v8104, 0
      %v8217 = vsel %vm946, %v8106, 0
      %8219 = vmatprep.subr.mxu0 0.0
      %8220 = vmatpush1.msra.mxu0 0.0
      %8221 = vmatprep.subr.mxu0 0.0
      %8222 = vmatpush1.msra.mxu0 0.0
      %8223 = vmatprep.subr.mxu0 0.0
      %8224 = vmatpush1.msra.mxu0 0.0
      %8225 = vmatprep.subr.mxu0 0.0
      %8226 = vmatpush1.msra.mxu0 0.0
      %8227 = vmatprep.subr.mxu0 0.0
      %8228 = vmatpush1.msra.mxu0 0.0
      %8229 = vmatprep.subr.mxu0 0.0
      %8230 = vmatpush1.msra.mxu0 0.0
      %8231 = vmatprep.subr.mxu0 0.0
      %8232 = vmatpush1.msra.mxu0 0.0
      %8233 = vmatprep.subr.mxu0 0.0
      %8234 = vmatpush1.msra.mxu0 0.0
      %8235 = vmatprep.subr.mxu0 0.0
      %8236 = vmatpush1.msra.mxu0 0.0
      %8237 = vmatprep.subr.mxu0 0.0
      %8238 = vmatpush1.msra.mxu0 0.0
      %8239 = vmatprep.subr.mxu0 0.0
      %8240 = vmatpush1.msra.mxu0 0.0
      %8241 = vmatprep.subr.mxu0 0.0
      %8242 = vmatpush1.msra.mxu0 0.0
      %8243 = vmatprep.subr.mxu0 0.0
      %8244 = vmatpush1.msra.mxu0 0.0
      %8245 = vmatprep.subr.mxu0 0.0
      %8246 = vmatpush1.msra.mxu0 0.0
      %8247 = vmatprep.subr.mxu0 0.0
      %8248 = vmatpush1.msra.mxu0 %v8217
      %8249 = vmatprep.subr.mxu0 0.0
      %8250 = vmatpush1.msra.mxu0 %v8105
      %8251 = vmatprep.subr.mxu0 0.0
      %8252 = vmatpush2.msra.mxu0 0.0
      %8253 = vmatprep.subr.mxu0 0.0
      %8254 = vmatpush2.msra.mxu0 0.0
      %8255 = vmatprep.subr.mxu0 0.0
      %8256 = vmatpush2.msra.mxu0 0.0
      %8257 = vmatprep.subr.mxu0 0.0
      %8258 = vmatpush2.msra.mxu0 0.0
      %8259 = vmatprep.subr.mxu0 0.0
      %8260 = vmatpush2.msra.mxu0 0.0
      %8261 = vmatprep.subr.mxu0 0.0
      %8262 = vmatpush2.msra.mxu0 0.0
      %8263 = vmatprep.subr.mxu0 0.0
      %8264 = vmatpush2.msra.mxu0 0.0
      %8265 = vmatprep.subr.mxu0 0.0
      %8266 = vmatpush2.msra.mxu0 0.0
      %8267 = vmatprep.subr.mxu0 0.0
      %8268 = vmatpush2.msra.mxu0 0.0
      %8269 = vmatprep.subr.mxu0 0.0
      %8270 = vmatpush2.msra.mxu0 0.0
      %8271 = vmatprep.subr.mxu0 0.0
      %8272 = vmatpush2.msra.mxu0 0.0
      %8273 = vmatprep.subr.mxu0 0.0
      %8274 = vmatpush2.msra.mxu0 0.0
      %8275 = vmatprep.subr.mxu0 0.0
      %8276 = vmatpush2.msra.mxu0 0.0
      %8277 = vmatprep.subr.mxu0 0.0
      %8278 = vmatpush2.msra.mxu0 0.0
      %8279 = vmatprep.subr.mxu0 0.0
      %8280 = vmatpush2.msra.mxu0 0.0
      %8281 = vmatprep.subr.mxu0 0.0
      %8282 = vmatpush2.msra.mxu0 0.0
      %8283 = vmatprep.mubr.f32.mxu0 0.0
      %8284 = vmatmul.mubr.f32.gmra.mxu0 %v8109
      %v8285 = vpop.f32.mrf.mxu0
      %v8286 = vadd.f32 0.0, %v8285
      %v8287 = vpop.f32.mrf.mxu0
      %8288 = vmatprep.mubr.f32.mxu0 0.0
      %8289 = vmatmul.mubr.f32.gmra.mxu0 %v8112
      %v8290 = vpop.f32.mrf.mxu0
      %v8291 = vadd.f32 0.0, %v8290
      %v8292 = vpop.f32.mrf.mxu0
      %8293 = vmatprep.mubr.f32.mxu0 0.0
      %8294 = vmatmul.mubr.f32.gmra.mxu0 %v8115
      %v8295 = vpop.f32.mrf.mxu0
      %v8296 = vadd.f32 0.0, %v8295
      %v8297 = vpop.f32.mrf.mxu0
      %8298 = vmatprep.mubr.f32.mxu0 0.0
      %8299 = vmatmul.mubr.f32.gmra.mxu0 %v8118
      %v8300 = vpop.f32.mrf.mxu0
      %v8301 = vadd.f32 0.0, %v8300
      %v8302 = vpop.f32.mrf.mxu0
      %8303 = vmatprep.mubr.f32.mxu0 0.0
      %8304 = vmatmul.mubr.f32.gmra.mxu0 %v8121
      %v8305 = vpop.f32.mrf.mxu0
      %v8306 = vadd.f32 0.0, %v8305
      %v8307 = vpop.f32.mrf.mxu0
      %8308 = vmatprep.mubr.f32.mxu0 0.0
      %8309 = vmatmul.mubr.f32.gmra.mxu0 %v8124
      %v8310 = vpop.f32.mrf.mxu0
      %v8311 = vadd.f32 0.0, %v8310
      %v8312 = vpop.f32.mrf.mxu0
      %8313 = vmatprep.mubr.f32.mxu0 0.0
      %8314 = vmatmul.mubr.f32.gmra.mxu0 %v8127
      %v8315 = vpop.f32.mrf.mxu0
      %v8316 = vadd.f32 0.0, %v8315
      %v8317 = vpop.f32.mrf.mxu0
      %8318 = vmatprep.mubr.f32.mxu0 0.0
      %8319 = vmatmul.mubr.f32.gmra.mxu0 %v8130
      %v8320 = vpop.f32.mrf.mxu0
      %v8321 = vadd.f32 0.0, %v8320
      %v8322 = vpop.f32.mrf.mxu0
      %8323 = vmatprep.mubr.f32.mxu0 0.0
      %8324 = vmatmul.mubr.f32.gmra.mxu0 %v8133
      %v8325 = vpop.f32.mrf.mxu0
      %v8326 = vadd.f32 0.0, %v8325
      %v8327 = vpop.f32.mrf.mxu0
      %8328 = vmatprep.mubr.f32.mxu0 0.0
      %8329 = vmatmul.mubr.f32.gmra.mxu0 %v8136
      %v8330 = vpop.f32.mrf.mxu0
      %v8331 = vadd.f32 0.0, %v8330
      %v8332 = vpop.f32.mrf.mxu0
      %8333 = vmatprep.mubr.f32.mxu0 0.0
      %8334 = vmatmul.mubr.f32.gmra.mxu0 %v8139
      %v8335 = vpop.f32.mrf.mxu0
      %v8336 = vadd.f32 0.0, %v8335
      %v8337 = vpop.f32.mrf.mxu0
      %8338 = vmatprep.mubr.f32.mxu0 0.0
      %8339 = vmatmul.mubr.f32.gmra.mxu0 %v8142
      %v8340 = vpop.f32.mrf.mxu0
      %v8341 = vadd.f32 0.0, %v8340
      %v8342 = vpop.f32.mrf.mxu0
      %8343 = vmatprep.mubr.f32.mxu0 0.0
      %8344 = vmatmul.mubr.f32.gmra.mxu0 %v8145
      %v8345 = vpop.f32.mrf.mxu0
      %v8346 = vadd.f32 0.0, %v8345
      %v8347 = vpop.f32.mrf.mxu0
      %8348 = vmatprep.mubr.f32.mxu0 0.0
      %8349 = vmatmul.mubr.f32.gmra.mxu0 %v8148
      %v8350 = vpop.f32.mrf.mxu0
      %v8351 = vadd.f32 0.0, %v8350
      %v8352 = vpop.f32.mrf.mxu0
      %8353 = vmatprep.mubr.f32.mxu0 0.0
      %8354 = vmatmul.mubr.f32.gmra.mxu0 %v8151
      %v8355 = vpop.f32.mrf.mxu0
      %v8356 = vadd.f32 0.0, %v8355
      %v8357 = vpop.f32.mrf.mxu0
      %8358 = vmatprep.mubr.f32.mxu0 0.0
      %8359 = vmatmul.mubr.f32.gmra.mxu0 %v8154
      %v8360 = vpop.f32.mrf.mxu0
      %v8361 = vadd.f32 0.0, %v8360
      %v8362 = vpop.f32.mrf.mxu0
      %8363 = vmatprep.mubr.f32.mxu0 0.0
      %8364 = vmatmul.mubr.f32.gmra.mxu0 %v8157
      %v8365 = vpop.f32.mrf.mxu0
      %v8366 = vadd.f32 0.0, %v8365
      %v8367 = vpop.f32.mrf.mxu0
      %8368 = vmatprep.mubr.f32.mxu0 0.0
      %8369 = vmatmul.mubr.f32.gmra.mxu0 %v8160
      %v8370 = vpop.f32.mrf.mxu0
      %v8371 = vadd.f32 0.0, %v8370
      %v8372 = vpop.f32.mrf.mxu0
      %8373 = vmatprep.mubr.f32.mxu0 0.0
      %8374 = vmatmul.mubr.f32.gmra.mxu0 %v8163
      %v8375 = vpop.f32.mrf.mxu0
      %v8376 = vadd.f32 0.0, %v8375
      %v8377 = vpop.f32.mrf.mxu0
      %8378 = vmatprep.mubr.f32.mxu0 0.0
      %8379 = vmatmul.mubr.f32.gmra.mxu0 %v8166
      %v8380 = vpop.f32.mrf.mxu0
      %v8381 = vadd.f32 0.0, %v8380
      %v8382 = vpop.f32.mrf.mxu0
      %8383 = vmatprep.mubr.f32.mxu0 0.0
      %8384 = vmatmul.mubr.f32.gmra.mxu0 %v8169
      %v8385 = vpop.f32.mrf.mxu0
      %v8386 = vadd.f32 0.0, %v8385
      %v8387 = vpop.f32.mrf.mxu0
      %8388 = vmatprep.mubr.f32.mxu0 0.0
      %8389 = vmatmul.mubr.f32.gmra.mxu0 %v8172
      %v8390 = vpop.f32.mrf.mxu0
      %v8391 = vadd.f32 0.0, %v8390
      %v8392 = vpop.f32.mrf.mxu0
      %8393 = vmatprep.mubr.f32.mxu0 0.0
      %8394 = vmatmul.mubr.f32.gmra.mxu0 %v8175
      %v8395 = vpop.f32.mrf.mxu0
      %v8396 = vadd.f32 0.0, %v8395
      %v8397 = vpop.f32.mrf.mxu0
      %8398 = vmatprep.mubr.f32.mxu0 0.0
      %8399 = vmatmul.mubr.f32.gmra.mxu0 %v8178
      %v8400 = vpop.f32.mrf.mxu0
      %v8401 = vadd.f32 0.0, %v8400
      %v8402 = vpop.f32.mrf.mxu0
      %8403 = vmatprep.mubr.f32.mxu0 0.0
      %8404 = vmatmul.mubr.f32.gmra.mxu0 %v8181
      %v8405 = vpop.f32.mrf.mxu0
      %v8406 = vadd.f32 0.0, %v8405
      %v8407 = vpop.f32.mrf.mxu0
      %8408 = vmatprep.mubr.f32.mxu0 0.0
      %8409 = vmatmul.mubr.f32.gmra.mxu0 %v8184
      %v8410 = vpop.f32.mrf.mxu0
      %v8411 = vadd.f32 0.0, %v8410
      %v8412 = vpop.f32.mrf.mxu0
      %8413 = vmatprep.mubr.f32.mxu0 0.0
      %8414 = vmatmul.mubr.f32.gmra.mxu0 %v8187
      %v8415 = vpop.f32.mrf.mxu0
      %v8416 = vadd.f32 0.0, %v8415
      %v8417 = vpop.f32.mrf.mxu0
      %8418 = vmatprep.mubr.f32.mxu0 0.0
      %8419 = vmatmul.mubr.f32.gmra.mxu0 %v8190
      %v8420 = vpop.f32.mrf.mxu0
      %v8421 = vadd.f32 0.0, %v8420
      %v8422 = vpop.f32.mrf.mxu0
      %8423 = vmatprep.mubr.f32.mxu0 0.0
      %8424 = vmatmul.mubr.f32.gmra.mxu0 %v8193
      %v8425 = vpop.f32.mrf.mxu0
      %v8426 = vadd.f32 0.0, %v8425
      %v8427 = vpop.f32.mrf.mxu0
      %8428 = vmatprep.mubr.f32.mxu0 0.0
      %8429 = vmatmul.mubr.f32.gmra.mxu0 %v8196
      %v8430 = vpop.f32.mrf.mxu0
      %v8431 = vadd.f32 0.0, %v8430
      %v8432 = vpop.f32.mrf.mxu0
      %8433 = vmatprep.mubr.f32.mxu0 0.0
      %8434 = vmatmul.mubr.f32.gmra.mxu0 %v8199
      %v8435 = vpop.f32.mrf.mxu0
      %v8436 = vadd.f32 0.0, %v8435
      %v8437 = vpop.f32.mrf.mxu0
      %8438 = vmatprep.mubr.f32.mxu0 0.0
      %8439 = vmatmul.mubr.f32.gmra.mxu0 %v8202
      %v8440 = vpop.f32.mrf.mxu0
      %v8441 = vadd.f32 0.0, %v8440
      %v8442 = vpop.f32.mrf.mxu0
      %8443 = vmatprep.mubr.f32.mxu0 0.0
      %8444 = vmatmul.mubr.f32.gmra.mxu0 %v8205
      %v8445 = vpop.f32.mrf.mxu0
      %v8446 = vadd.f32 0.0, %v8445
      %v8447 = vpop.f32.mrf.mxu0
      %8448 = vmatprep.mubr.f32.mxu0 0.0
      %8449 = vmatmul.mubr.f32.gmra.mxu0 %v8208
      %v8450 = vpop.f32.mrf.mxu0
      %v8451 = vadd.f32 0.0, %v8450
      %v8452 = vpop.f32.mrf.mxu0
      %8453 = vmatprep.mubr.f32.mxu0 0.0
      %8454 = vmatmul.mubr.f32.gmra.mxu0 %v8211
      %v8455 = vpop.f32.mrf.mxu0
      %v8456 = vadd.f32 0.0, %v8455
      %v8457 = vpop.f32.mrf.mxu0
      %8458 = vmatprep.mubr.f32.mxu0 0.0
      %8459 = vmatmul.mubr.f32.gmra.mxu0 %v8214
      %v8460 = vpop.f32.mrf.mxu0
      %v8461 = vadd.f32 0.0, %v8460
      %v8462 = vpop.f32.mrf.mxu0
      %8463 = vdwg.mxu0
      %8464 = vst.msk [vmem:[%s2118 + $0x8] sm:$0xff] %vm1912, %v8286
      %8465 = vst.msk [vmem:[%s2118 + $0x10] sm:$0xff] %vm1912, %v8291
      %8466 = vst.msk [vmem:[%s2118 + $0x28] sm:$0xff] %vm1912, %v8296
      %8467 = vst.msk [vmem:[%s2118 + $0x30] sm:$0xff] %vm1912, %v8301
      %8468 = vst.msk [vmem:[%s2118 + $0x48] sm:$0xff] %vm1912, %v8306
      %8469 = vst.msk [vmem:[%s2118 + $0x50] sm:$0xff] %vm1912, %v8311
      %8470 = vst.msk [vmem:[%s2118 + $0x68] sm:$0xff] %vm1912, %v8316
      %8471 = vst.msk [vmem:[%s2118 + $0x70] sm:$0xff] %vm1912, %v8321
      %8472 = vst.msk [vmem:[%s2118 + $0x88] sm:$0xff] %vm1912, %v8326
      %8473 = vst.msk [vmem:[%s2118 + $0x90] sm:$0xff] %vm1912, %v8331
      %8474 = vst.msk [vmem:[%s2118 + $0xa8] sm:$0xff] %vm1912, %v8336
      %8475 = vst.msk [vmem:[%s2118 + $0xb0] sm:$0xff] %vm1912, %v8341
      %8476 = vst.msk [vmem:[%s2118 + $0xc8] sm:$0xff] %vm1912, %v8346
      %8477 = vst.msk [vmem:[%s2118 + $0xd0] sm:$0xff] %vm1912, %v8351
      %8478 = vst.msk [vmem:[%s2118 + $0xe8] sm:$0xff] %vm1912, %v8356
      %8479 = vst.msk [vmem:[%s2118 + $0xf0] sm:$0xff] %vm1912, %v8361
      %8480 = vst.msk [vmem:[%s2118 + $0x108] sm:$0xff] %vm1912, %v8366
      %8481 = vst.msk [vmem:[%s2118 + $0x110] sm:$0xff] %vm1912, %v8371
      %8482 = vst.msk [vmem:[%s2118 + $0x128] sm:$0xff] %vm1912, %v8376
      %8483 = vst.msk [vmem:[%s2118 + $0x130] sm:$0xff] %vm1912, %v8381
      %8484 = vst.msk [vmem:[%s2118 + $0x148] sm:$0xff] %vm1912, %v8386
      %8485 = vst.msk [vmem:[%s2118 + $0x150] sm:$0xff] %vm1912, %v8391
      %8486 = vst.msk [vmem:[%s2118 + $0x168] sm:$0xff] %vm1912, %v8396
      %8487 = vst.msk [vmem:[%s2118 + $0x170] sm:$0xff] %vm1912, %v8401
      %8488 = vst.msk [vmem:[%s2118 + $0x188] sm:$0xff] %vm1912, %v8406
      %8489 = vst.msk [vmem:[%s2118 + $0x190] sm:$0xff] %vm1912, %v8411
      %8490 = vst.msk [vmem:[%s2118 + $0x1a8] sm:$0xff] %vm1912, %v8416
      %8491 = vst.msk [vmem:[%s2118 + $0x1b0] sm:$0xff] %vm1912, %v8421
      %8492 = vst.msk [vmem:[%s2118 + $0x1c8] sm:$0xff] %vm1912, %v8426
      %8493 = vst.msk [vmem:[%s2118 + $0x1d0] sm:$0xff] %vm1912, %v8431
      %8494 = vst.msk [vmem:[%s2118 + $0x1e8] sm:$0xff] %vm1912, %v8436
      %8495 = vst.msk [vmem:[%s2118 + $0x1f0] sm:$0xff] %vm1912, %v8441
      %8496 = vst.msk [vmem:[%s2118 + $0x208] sm:$0xff] %vm1912, %v8446
      %8497 = vst.msk [vmem:[%s2118 + $0x210] sm:$0xff] %vm1912, %v8451
      %8498 = vst.msk [vmem:[%s2118 + $0x228] sm:$0xff] %vm1912, %v8456
      %8499 = vst.msk [vmem:[%s2118 + $0x230] sm:$0xff] %vm1912, %v8461
      // Predicated region
      $region61: #{tpu_custom_call.1} parent=51 // pred_check
        %p8500 = pneg %p345
      $region62: #{tpu_custom_call.1} parent=51 // pred_check_branch
        %8502 = sbr.rel (%p8500) target = $region64
      $region63: #{tpu_custom_call.1} parent=51 // pred_region
        %8503 = vst.msk [vmem:[%s2118 + $0x8] sm:$0xff] %vm1912, 0.0
        %8504 = vst.msk [vmem:[%s2118 + $0x10] sm:$0xff] %vm1912, 0.0
        %s8505 = scalar_lea.vmem [#allocation2], 640
        %8506 = vst.msk [vmem:[%s8505 + $0x8] sm:$0xff] %vm1912, 0.0
        %8507 = vst.msk [vmem:[%s8505 + $0x10] sm:$0xff] %vm1912, 0.0
      $region64: #{tpu_custom_call.1} parent=51 // pred_fallthru
        _
      %v8508 = vld [vmem:[%s2118] sm:$0xff]
      %v8509 = vld [vmem:[%s2118 + $0x8] sm:$0xff]
      %v8510 = vld [vmem:[%s2118 + $0x10] sm:$0xff]
      %v8511 = vld [vmem:[%s2118 + $0x18] sm:$0xff]
      %v8512 = vld [vmem:[%s2118 + $0x20] sm:$0xff]
      %v8513 = vld [vmem:[%s2118 + $0x28] sm:$0xff]
      %v8514 = vld [vmem:[%s2118 + $0x30] sm:$0xff]
      %v8515 = vld [vmem:[%s2118 + $0x38] sm:$0xff]
      %v8516 = vld [vmem:[%s2118 + $0x40] sm:$0xff]
      %v8517 = vld [vmem:[%s2118 + $0x48] sm:$0xff]
      %v8518 = vld [vmem:[%s2118 + $0x50] sm:$0xff]
      %v8519 = vld [vmem:[%s2118 + $0x58] sm:$0xff]
      %v8520 = vld [vmem:[%s2118 + $0x60] sm:$0xff]
      %v8521 = vld [vmem:[%s2118 + $0x68] sm:$0xff]
      %v8522 = vld [vmem:[%s2118 + $0x70] sm:$0xff]
      %v8523 = vld [vmem:[%s2118 + $0x78] sm:$0xff]
      %v8524 = vld [vmem:[%s2118 + $0x80] sm:$0xff]
      %v8525 = vld [vmem:[%s2118 + $0x88] sm:$0xff]
      %v8526 = vld [vmem:[%s2118 + $0x90] sm:$0xff]
      %v8527 = vld [vmem:[%s2118 + $0x98] sm:$0xff]
      %v8528 = vld [vmem:[%s2118 + $0xa0] sm:$0xff]
      %v8529 = vld [vmem:[%s2118 + $0xa8] sm:$0xff]
      %v8530 = vld [vmem:[%s2118 + $0xb0] sm:$0xff]
      %v8531 = vld [vmem:[%s2118 + $0xb8] sm:$0xff]
      %v8532 = vld [vmem:[%s2118 + $0xc0] sm:$0xff]
      %v8533 = vld [vmem:[%s2118 + $0xc8] sm:$0xff]
      %v8534 = vld [vmem:[%s2118 + $0xd0] sm:$0xff]
      %v8535 = vld [vmem:[%s2118 + $0xd8] sm:$0xff]
      %v8536 = vld [vmem:[%s2118 + $0xe0] sm:$0xff]
      %v8537 = vld [vmem:[%s2118 + $0xe8] sm:$0xff]
      %v8538 = vld [vmem:[%s2118 + $0xf0] sm:$0xff]
      %v8539 = vld [vmem:[%s2118 + $0xf8] sm:$0xff]
      %v8540 = vld [vmem:[%s2118 + $0x100] sm:$0xff]
      %v8541 = vld [vmem:[%s2118 + $0x108] sm:$0xff]
      %v8542 = vld [vmem:[%s2118 + $0x110] sm:$0xff]
      %v8543 = vld [vmem:[%s2118 + $0x118] sm:$0xff]
      %v8544 = vld [vmem:[%s2118 + $0x120] sm:$0xff]
      %v8545 = vld [vmem:[%s2118 + $0x128] sm:$0xff]
      %v8546 = vld [vmem:[%s2118 + $0x130] sm:$0xff]
      %v8547 = vld [vmem:[%s2118 + $0x138] sm:$0xff]
      %v8548 = vld [vmem:[%s2118 + $0x140] sm:$0xff]
      %v8549 = vld [vmem:[%s2118 + $0x148] sm:$0xff]
      %v8550 = vld [vmem:[%s2118 + $0x150] sm:$0xff]
      %v8551 = vld [vmem:[%s2118 + $0x158] sm:$0xff]
      %v8552 = vld [vmem:[%s2118 + $0x160] sm:$0xff]
      %v8553 = vld [vmem:[%s2118 + $0x168] sm:$0xff]
      %v8554 = vld [vmem:[%s2118 + $0x170] sm:$0xff]
      %v8555 = vld [vmem:[%s2118 + $0x178] sm:$0xff]
      %v8556 = vld [vmem:[%s2118 + $0x180] sm:$0xff]
      %v8557 = vld [vmem:[%s2118 + $0x188] sm:$0xff]
      %v8558 = vld [vmem:[%s2118 + $0x190] sm:$0xff]
      %v8559 = vld [vmem:[%s2118 + $0x198] sm:$0xff]
      %v8560 = vld [vmem:[%s2118 + $0x1a0] sm:$0xff]
      %v8561 = vld [vmem:[%s2118 + $0x1a8] sm:$0xff]
      %v8562 = vld [vmem:[%s2118 + $0x1b0] sm:$0xff]
      %v8563 = vld [vmem:[%s2118 + $0x1b8] sm:$0xff]
      %v8564 = vld [vmem:[%s2118 + $0x1c0] sm:$0xff]
      %v8565 = vld [vmem:[%s2118 + $0x1c8] sm:$0xff]
      %v8566 = vld [vmem:[%s2118 + $0x1d0] sm:$0xff]
      %v8567 = vld [vmem:[%s2118 + $0x1d8] sm:$0xff]
      %v8568 = vld [vmem:[%s2118 + $0x1e0] sm:$0xff]
      %v8569 = vld [vmem:[%s2118 + $0x1e8] sm:$0xff]
      %v8570 = vld [vmem:[%s2118 + $0x1f0] sm:$0xff]
      %v8571 = vld [vmem:[%s2118 + $0x1f8] sm:$0xff]
      %v8572 = vld [vmem:[%s3945] sm:$0xff]
      %v8573 = vld [vmem:[%s3945 + $0x8] sm:$0xff]
      %v8574 = vld [vmem:[%s3945 + $0x10] sm:$0xff]
      %v8575 = vld [vmem:[%s3945 + $0x18] sm:$0xff]
      %v8576 = vld [vmem:[%s3945 + $0x20] sm:$0xff]
      %v8577 = vld [vmem:[%s3945 + $0x28] sm:$0xff]
      %v8578 = vld [vmem:[%s3945 + $0x30] sm:$0xff]
      %v8579 = vld [vmem:[%s3945 + $0x38] sm:$0xff]
      %v8580 = vld [vmem:[%s3945 + $0x40] sm:$0xff]
      %v8581 = vld [vmem:[%s3945 + $0x48] sm:$0xff]
      %v8582 = vld [vmem:[%s3945 + $0x50] sm:$0xff]
      %v8583 = vld [vmem:[%s3945 + $0x58] sm:$0xff]
      %v8584 = vld [vmem:[%s3945 + $0x60] sm:$0xff]
      %v8585 = vld [vmem:[%s3945 + $0x68] sm:$0xff]
      %v8586 = vld [vmem:[%s3945 + $0x70] sm:$0xff]
      %v8587 = vld [vmem:[%s3945 + $0x78] sm:$0xff]
      %v8588 = vld [vmem:[%s3945 + $0x80] sm:$0xff]
      %v8589 = vld [vmem:[%s3945 + $0x88] sm:$0xff]
      %v8590 = vld [vmem:[%s3945 + $0x90] sm:$0xff]
      %v8591 = vld [vmem:[%s3945 + $0x98] sm:$0xff]
      %v8592 = vld [vmem:[%s3945 + $0xa0] sm:$0xff]
      %v8593 = vld [vmem:[%s3945 + $0xa8] sm:$0xff]
      %v8594 = vld [vmem:[%s3945 + $0xb0] sm:$0xff]
      %v8595 = vld [vmem:[%s3945 + $0xb8] sm:$0xff]
      %v8596 = vld [vmem:[%s3945 + $0xc0] sm:$0xff]
      %v8597 = vld [vmem:[%s3945 + $0xc8] sm:$0xff]
      %v8598 = vld [vmem:[%s3945 + $0xd0] sm:$0xff]
      %v8599 = vld [vmem:[%s3945 + $0xd8] sm:$0xff]
      %v8600 = vld [vmem:[%s3945 + $0xe0] sm:$0xff]
      %v8601 = vld [vmem:[%s3945 + $0xe8] sm:$0xff]
      %v8602 = vld [vmem:[%s3945 + $0xf0] sm:$0xff]
      %v8603 = vld [vmem:[%s3945 + $0xf8] sm:$0xff]
      %v8604 = vld [vmem:[%s3945 + $0x100] sm:$0xff]
      %v8605 = vld [vmem:[%s3945 + $0x108] sm:$0xff]
      %v8606 = vld [vmem:[%s3945 + $0x110] sm:$0xff]
      %v8607 = vld [vmem:[%s3945 + $0x118] sm:$0xff]
      %v8608 = vld [vmem:[%s3945 + $0x120] sm:$0xff]
      %v8609 = vld [vmem:[%s3945 + $0x128] sm:$0xff]
      %v8610 = vld [vmem:[%s3945 + $0x130] sm:$0xff]
      %v8611 = vld [vmem:[%s3945 + $0x138] sm:$0xff]
      %v8612 = vld [vmem:[%s3945 + $0x140] sm:$0xff]
      %v8613 = vld [vmem:[%s3945 + $0x148] sm:$0xff]
      %v8614 = vld [vmem:[%s3945 + $0x150] sm:$0xff]
      %v8615 = vld [vmem:[%s3945 + $0x158] sm:$0xff]
      %v8616 = vld [vmem:[%s3945 + $0x160] sm:$0xff]
      %v8617 = vld [vmem:[%s3945 + $0x168] sm:$0xff]
      %v8618 = vld [vmem:[%s3945 + $0x170] sm:$0xff]
      %v8619 = vld [vmem:[%s3945 + $0x178] sm:$0xff]
      %v8620 = vld [vmem:[%s3945 + $0x180] sm:$0xff]
      %v8621 = vld [vmem:[%s3945 + $0x188] sm:$0xff]
      %v8622 = vld [vmem:[%s3945 + $0x190] sm:$0xff]
      %v8623 = vld [vmem:[%s3945 + $0x198] sm:$0xff]
      %v8624 = vld [vmem:[%s3945 + $0x1a0] sm:$0xff]
      %v8625 = vld [vmem:[%s3945 + $0x1a8] sm:$0xff]
      %v8626 = vld [vmem:[%s3945 + $0x1b0] sm:$0xff]
      %v8627 = vld [vmem:[%s3945 + $0x1b8] sm:$0xff]
      %v8628 = vld [vmem:[%s3945 + $0x1c0] sm:$0xff]
      %v8629 = vld [vmem:[%s3945 + $0x1c8] sm:$0xff]
      %v8630 = vld [vmem:[%s3945 + $0x1d0] sm:$0xff]
      %v8631 = vld [vmem:[%s3945 + $0x1d8] sm:$0xff]
      %v8632 = vld [vmem:[%s3945 + $0x1e0] sm:$0xff]
      %v8633 = vld [vmem:[%s3945 + $0x1e8] sm:$0xff]
      %v8634 = vld [vmem:[%s3945 + $0x1f0] sm:$0xff]
      %v8635 = vld [vmem:[%s3945 + $0x1f8] sm:$0xff]
      %v8636 = vld [vmem:[%s5425] sm:$0xff]
      %v8637 = vld [vmem:[%s5425 + $0x8] sm:$0xff]
      %v8638 = vld [vmem:[%s5425 + $0x10] sm:$0xff]
      %v8639 = vld [vmem:[%s5425 + $0x18] sm:$0xff]
      %v8640 = vld [vmem:[%s5425 + $0x20] sm:$0xff]
      %v8641 = vld [vmem:[%s5425 + $0x28] sm:$0xff]
      %v8642 = vld [vmem:[%s5425 + $0x30] sm:$0xff]
      %v8643 = vld [vmem:[%s5425 + $0x38] sm:$0xff]
      %v8644 = vld [vmem:[%s5425 + $0x40] sm:$0xff]
      %v8645 = vld [vmem:[%s5425 + $0x48] sm:$0xff]
      %v8646 = vld [vmem:[%s5425 + $0x50] sm:$0xff]
      %v8647 = vld [vmem:[%s5425 + $0x58] sm:$0xff]
      %v8648 = vld [vmem:[%s5425 + $0x60] sm:$0xff]
      %v8649 = vld [vmem:[%s5425 + $0x68] sm:$0xff]
      %v8650 = vld [vmem:[%s5425 + $0x70] sm:$0xff]
      %v8651 = vld [vmem:[%s5425 + $0x78] sm:$0xff]
      %v8652 = vld [vmem:[%s5425 + $0x80] sm:$0xff]
      %v8653 = vld [vmem:[%s5425 + $0x88] sm:$0xff]
      %v8654 = vld [vmem:[%s5425 + $0x90] sm:$0xff]
      %v8655 = vld [vmem:[%s5425 + $0x98] sm:$0xff]
      %v8656 = vld [vmem:[%s5425 + $0xa0] sm:$0xff]
      %v8657 = vld [vmem:[%s5425 + $0xa8] sm:$0xff]
      %v8658 = vld [vmem:[%s5425 + $0xb0] sm:$0xff]
      %v8659 = vld [vmem:[%s5425 + $0xb8] sm:$0xff]
      %v8660 = vld [vmem:[%s5425 + $0xc0] sm:$0xff]
      %v8661 = vld [vmem:[%s5425 + $0xc8] sm:$0xff]
      %v8662 = vld [vmem:[%s5425 + $0xd0] sm:$0xff]
      %v8663 = vld [vmem:[%s5425 + $0xd8] sm:$0xff]
      %v8664 = vld [vmem:[%s5425 + $0xe0] sm:$0xff]
      %v8665 = vld [vmem:[%s5425 + $0xe8] sm:$0xff]
      %v8666 = vld [vmem:[%s5425 + $0xf0] sm:$0xff]
      %v8667 = vld [vmem:[%s5425 + $0xf8] sm:$0xff]
      %v8668 = vld [vmem:[%s5425 + $0x100] sm:$0xff]
      %v8669 = vld [vmem:[%s5425 + $0x108] sm:$0xff]
      %v8670 = vld [vmem:[%s5425 + $0x110] sm:$0xff]
      %v8671 = vld [vmem:[%s5425 + $0x118] sm:$0xff]
      %v8672 = vld [vmem:[%s5425 + $0x120] sm:$0xff]
      %v8673 = vld [vmem:[%s5425 + $0x128] sm:$0xff]
      %v8674 = vld [vmem:[%s5425 + $0x130] sm:$0xff]
      %v8675 = vld [vmem:[%s5425 + $0x138] sm:$0xff]
      %v8676 = vld [vmem:[%s5425 + $0x140] sm:$0xff]
      %v8677 = vld [vmem:[%s5425 + $0x148] sm:$0xff]
      %v8678 = vld [vmem:[%s5425 + $0x150] sm:$0xff]
      %v8679 = vld [vmem:[%s5425 + $0x158] sm:$0xff]
      %v8680 = vld [vmem:[%s5425 + $0x160] sm:$0xff]
      %v8681 = vld [vmem:[%s5425 + $0x168] sm:$0xff]
      %v8682 = vld [vmem:[%s5425 + $0x170] sm:$0xff]
      %v8683 = vld [vmem:[%s5425 + $0x178] sm:$0xff]
      %v8684 = vld [vmem:[%s5425 + $0x180] sm:$0xff]
      %v8685 = vld [vmem:[%s5425 + $0x188] sm:$0xff]
      %v8686 = vld [vmem:[%s5425 + $0x190] sm:$0xff]
      %v8687 = vld [vmem:[%s5425 + $0x198] sm:$0xff]
      %v8688 = vld [vmem:[%s5425 + $0x1a0] sm:$0xff]
      %v8689 = vld [vmem:[%s5425 + $0x1a8] sm:$0xff]
      %v8690 = vld [vmem:[%s5425 + $0x1b0] sm:$0xff]
      %v8691 = vld [vmem:[%s5425 + $0x1b8] sm:$0xff]
      %v8692 = vld [vmem:[%s5425 + $0x1c0] sm:$0xff]
      %v8693 = vld [vmem:[%s5425 + $0x1c8] sm:$0xff]
      %v8694 = vld [vmem:[%s5425 + $0x1d0] sm:$0xff]
      %v8695 = vld [vmem:[%s5425 + $0x1d8] sm:$0xff]
      %v8696 = vld [vmem:[%s5425 + $0x1e0] sm:$0xff]
      %v8697 = vld [vmem:[%s5425 + $0x1e8] sm:$0xff]
      %v8698 = vld [vmem:[%s5425 + $0x1f0] sm:$0xff]
      %v8699 = vld [vmem:[%s5425 + $0x1f8] sm:$0xff]
      %v8700 = vld [vmem:[%s5] sm:$0x1]
      %v8701 = vlaneseq
      %v8702 = vshrl.u32 %v8701, 7
      %v8703 = vsub.s32 0, %v8702
      %v8704 = vrot.slane %v8700, %v8703
      %v8705 = vmul.f32 %v8508, %v8704
      %v8706 = vmul.f32 %v8509, %v8704
      %v8707 = vmul.f32 %v8510, %v8704
      %v8708 = vmul.f32 %v8512, %v8704
      %v8709 = vmul.f32 %v8513, %v8704
      %v8710 = vmul.f32 %v8514, %v8704
      %v8711 = vmul.f32 %v8516, %v8704
      %v8712 = vmul.f32 %v8517, %v8704
      %v8713 = vmul.f32 %v8518, %v8704
      %v8714 = vmul.f32 %v8520, %v8704
      %v8715 = vmul.f32 %v8521, %v8704
      %v8716 = vmul.f32 %v8522, %v8704
      %v8717 = vmul.f32 %v8524, %v8704
      %v8718 = vmul.f32 %v8525, %v8704
      %v8719 = vmul.f32 %v8526, %v8704
      %v8720 = vmul.f32 %v8528, %v8704
      %v8721 = vmul.f32 %v8529, %v8704
      %v8722 = vmul.f32 %v8530, %v8704
      %v8723 = vmul.f32 %v8532, %v8704
      %v8724 = vmul.f32 %v8533, %v8704
      %v8725 = vmul.f32 %v8534, %v8704
      %v8726 = vmul.f32 %v8536, %v8704
      %v8727 = vmul.f32 %v8537, %v8704
      %v8728 = vmul.f32 %v8538, %v8704
      %v8729 = vmul.f32 %v8540, %v8704
      %v8730 = vmul.f32 %v8541, %v8704
      %v8731 = vmul.f32 %v8542, %v8704
      %v8732 = vmul.f32 %v8544, %v8704
      %v8733 = vmul.f32 %v8545, %v8704
      %v8734 = vmul.f32 %v8546, %v8704
      %v8735 = vmul.f32 %v8548, %v8704
      %v8736 = vmul.f32 %v8549, %v8704
      %v8737 = vmul.f32 %v8550, %v8704
      %v8738 = vmul.f32 %v8552, %v8704
      %v8739 = vmul.f32 %v8553, %v8704
      %v8740 = vmul.f32 %v8554, %v8704
      %v8741 = vmul.f32 %v8556, %v8704
      %v8742 = vmul.f32 %v8557, %v8704
      %v8743 = vmul.f32 %v8558, %v8704
      %v8744 = vmul.f32 %v8560, %v8704
      %v8745 = vmul.f32 %v8561, %v8704
      %v8746 = vmul.f32 %v8562, %v8704
      %v8747 = vmul.f32 %v8564, %v8704
      %v8748 = vmul.f32 %v8565, %v8704
      %v8749 = vmul.f32 %v8566, %v8704
      %v8750 = vmul.f32 %v8568, %v8704
      %v8751 = vmul.f32 %v8569, %v8704
      %v8752 = vmul.f32 %v8570, %v8704
      %s8753 = scalar_lea.vmem %s5, 4
      %v8754 = vld [vmem:[%s8753] sm:$0x1]
      %v8755 = vlaneseq
      %v8756 = vshrl.u32 %v8755, 7
      %v8757 = vsub.s32 0, %v8756
      %v8758 = vrot.slane %v8754, %v8757
      %v8759 = vmul.f32 %v8572, %v8758
      %v8760 = vmul.f32 %v8573, %v8758
      %v8761 = vmul.f32 %v8574, %v8758
      %v8762 = vmul.f32 %v8576, %v8758
      %v8763 = vmul.f32 %v8577, %v8758
      %v8764 = vmul.f32 %v8578, %v8758
      %v8765 = vmul.f32 %v8580, %v8758
      %v8766 = vmul.f32 %v8581, %v8758
      %v8767 = vmul.f32 %v8582, %v8758
      %v8768 = vmul.f32 %v8584, %v8758
      %v8769 = vmul.f32 %v8585, %v8758
      %v8770 = vmul.f32 %v8586, %v8758
      %v8771 = vmul.f32 %v8588, %v8758
      %v8772 = vmul.f32 %v8589, %v8758
      %v8773 = vmul.f32 %v8590, %v8758
      %v8774 = vmul.f32 %v8592, %v8758
      %v8775 = vmul.f32 %v8593, %v8758
      %v8776 = vmul.f32 %v8594, %v8758
      %v8777 = vmul.f32 %v8596, %v8758
      %v8778 = vmul.f32 %v8597, %v8758
      %v8779 = vmul.f32 %v8598, %v8758
      %v8780 = vmul.f32 %v8600, %v8758
      %v8781 = vmul.f32 %v8601, %v8758
      %v8782 = vmul.f32 %v8602, %v8758
      %v8783 = vmul.f32 %v8604, %v8758
      %v8784 = vmul.f32 %v8605, %v8758
      %v8785 = vmul.f32 %v8606, %v8758
      %v8786 = vmul.f32 %v8608, %v8758
      %v8787 = vmul.f32 %v8609, %v8758
      %v8788 = vmul.f32 %v8610, %v8758
      %v8789 = vmul.f32 %v8612, %v8758
      %v8790 = vmul.f32 %v8613, %v8758
      %v8791 = vmul.f32 %v8614, %v8758
      %v8792 = vmul.f32 %v8616, %v8758
      %v8793 = vmul.f32 %v8617, %v8758
      %v8794 = vmul.f32 %v8618, %v8758
      %v8795 = vmul.f32 %v8620, %v8758
      %v8796 = vmul.f32 %v8621, %v8758
      %v8797 = vmul.f32 %v8622, %v8758
      %v8798 = vmul.f32 %v8624, %v8758
      %v8799 = vmul.f32 %v8625, %v8758
      %v8800 = vmul.f32 %v8626, %v8758
      %v8801 = vmul.f32 %v8628, %v8758
      %v8802 = vmul.f32 %v8629, %v8758
      %v8803 = vmul.f32 %v8630, %v8758
      %v8804 = vmul.f32 %v8632, %v8758
      %v8805 = vmul.f32 %v8633, %v8758
      %v8806 = vmul.f32 %v8634, %v8758
      %v8807 = vadd.f32 %v8705, %v8759
      %v8808 = vadd.f32 %v8706, %v8760
      %v8809 = vadd.f32 %v8707, %v8761
      %v8810 = vadd.f32 %v8708, %v8762
      %v8811 = vadd.f32 %v8709, %v8763
      %v8812 = vadd.f32 %v8710, %v8764
      %v8813 = vadd.f32 %v8711, %v8765
      %v8814 = vadd.f32 %v8712, %v8766
      %v8815 = vadd.f32 %v8713, %v8767
      %v8816 = vadd.f32 %v8714, %v8768
      %v8817 = vadd.f32 %v8715, %v8769
      %v8818 = vadd.f32 %v8716, %v8770
      %v8819 = vadd.f32 %v8717, %v8771
      %v8820 = vadd.f32 %v8718, %v8772
      %v8821 = vadd.f32 %v8719, %v8773
      %v8822 = vadd.f32 %v8720, %v8774
      %v8823 = vadd.f32 %v8721, %v8775
      %v8824 = vadd.f32 %v8722, %v8776
      %v8825 = vadd.f32 %v8723, %v8777
      %v8826 = vadd.f32 %v8724, %v8778
      %v8827 = vadd.f32 %v8725, %v8779
      %v8828 = vadd.f32 %v8726, %v8780
      %v8829 = vadd.f32 %v8727, %v8781
      %v8830 = vadd.f32 %v8728, %v8782
      %v8831 = vadd.f32 %v8729, %v8783
      %v8832 = vadd.f32 %v8730, %v8784
      %v8833 = vadd.f32 %v8731, %v8785
      %v8834 = vadd.f32 %v8732, %v8786
      %v8835 = vadd.f32 %v8733, %v8787
      %v8836 = vadd.f32 %v8734, %v8788
      %v8837 = vadd.f32 %v8735, %v8789
      %v8838 = vadd.f32 %v8736, %v8790
      %v8839 = vadd.f32 %v8737, %v8791
      %v8840 = vadd.f32 %v8738, %v8792
      %v8841 = vadd.f32 %v8739, %v8793
      %v8842 = vadd.f32 %v8740, %v8794
      %v8843 = vadd.f32 %v8741, %v8795
      %v8844 = vadd.f32 %v8742, %v8796
      %v8845 = vadd.f32 %v8743, %v8797
      %v8846 = vadd.f32 %v8744, %v8798
      %v8847 = vadd.f32 %v8745, %v8799
      %v8848 = vadd.f32 %v8746, %v8800
      %v8849 = vadd.f32 %v8747, %v8801
      %v8850 = vadd.f32 %v8748, %v8802
      %v8851 = vadd.f32 %v8749, %v8803
      %v8852 = vadd.f32 %v8750, %v8804
      %v8853 = vadd.f32 %v8751, %v8805
      %v8854 = vadd.f32 %v8752, %v8806
      %s8855 = scalar_lea.vmem %s5, 8
      %v8856 = vld [vmem:[%s8855] sm:$0x1]
      %v8857 = vlaneseq
      %v8858 = vshrl.u32 %v8857, 7
      %v8859 = vsub.s32 0, %v8858
      %v8860 = vrot.slane %v8856, %v8859
      %v8861 = vmul.f32 %v8636, %v8860
      %v8862 = vmul.f32 %v8637, %v8860
      %v8863 = vmul.f32 %v8638, %v8860
      %v8864 = vmul.f32 %v8640, %v8860
      %v8865 = vmul.f32 %v8641, %v8860
      %v8866 = vmul.f32 %v8642, %v8860
      %v8867 = vmul.f32 %v8644, %v8860
      %v8868 = vmul.f32 %v8645, %v8860
      %v8869 = vmul.f32 %v8646, %v8860
      %v8870 = vmul.f32 %v8648, %v8860
      %v8871 = vmul.f32 %v8649, %v8860
      %v8872 = vmul.f32 %v8650, %v8860
      %v8873 = vmul.f32 %v8652, %v8860
      %v8874 = vmul.f32 %v8653, %v8860
      %v8875 = vmul.f32 %v8654, %v8860
      %v8876 = vmul.f32 %v8656, %v8860
      %v8877 = vmul.f32 %v8657, %v8860
      %v8878 = vmul.f32 %v8658, %v8860
      %v8879 = vmul.f32 %v8660, %v8860
      %v8880 = vmul.f32 %v8661, %v8860
      %v8881 = vmul.f32 %v8662, %v8860
      %v8882 = vmul.f32 %v8664, %v8860
      %v8883 = vmul.f32 %v8665, %v8860
      %v8884 = vmul.f32 %v8666, %v8860
      %v8885 = vmul.f32 %v8668, %v8860
      %v8886 = vmul.f32 %v8669, %v8860
      %v8887 = vmul.f32 %v8670, %v8860
      %v8888 = vmul.f32 %v8672, %v8860
      %v8889 = vmul.f32 %v8673, %v8860
      %v8890 = vmul.f32 %v8674, %v8860
      %v8891 = vmul.f32 %v8676, %v8860
      %v8892 = vmul.f32 %v8677, %v8860
      %v8893 = vmul.f32 %v8678, %v8860
      %v8894 = vmul.f32 %v8680, %v8860
      %v8895 = vmul.f32 %v8681, %v8860
      %v8896 = vmul.f32 %v8682, %v8860
      %v8897 = vmul.f32 %v8684, %v8860
      %v8898 = vmul.f32 %v8685, %v8860
      %v8899 = vmul.f32 %v8686, %v8860
      %v8900 = vmul.f32 %v8688, %v8860
      %v8901 = vmul.f32 %v8689, %v8860
      %v8902 = vmul.f32 %v8690, %v8860
      %v8903 = vmul.f32 %v8692, %v8860
      %v8904 = vmul.f32 %v8693, %v8860
      %v8905 = vmul.f32 %v8694, %v8860
      %v8906 = vmul.f32 %v8696, %v8860
      %v8907 = vmul.f32 %v8697, %v8860
      %v8908 = vmul.f32 %v8698, %v8860
      %v8909 = vadd.f32 %v8807, %v8861
      %v8910 = vadd.f32 %v8808, %v8862
      %v8911 = vadd.f32 %v8809, %v8863
      %v8912 = vadd.f32 %v8810, %v8864
      %v8913 = vadd.f32 %v8811, %v8865
      %v8914 = vadd.f32 %v8812, %v8866
      %v8915 = vadd.f32 %v8813, %v8867
      %v8916 = vadd.f32 %v8814, %v8868
      %v8917 = vadd.f32 %v8815, %v8869
      %v8918 = vadd.f32 %v8816, %v8870
      %v8919 = vadd.f32 %v8817, %v8871
      %v8920 = vadd.f32 %v8818, %v8872
      %v8921 = vadd.f32 %v8819, %v8873
      %v8922 = vadd.f32 %v8820, %v8874
      %v8923 = vadd.f32 %v8821, %v8875
      %v8924 = vadd.f32 %v8822, %v8876
      %v8925 = vadd.f32 %v8823, %v8877
      %v8926 = vadd.f32 %v8824, %v8878
      %v8927 = vadd.f32 %v8825, %v8879
      %v8928 = vadd.f32 %v8826, %v8880
      %v8929 = vadd.f32 %v8827, %v8881
      %v8930 = vadd.f32 %v8828, %v8882
      %v8931 = vadd.f32 %v8829, %v8883
      %v8932 = vadd.f32 %v8830, %v8884
      %v8933 = vadd.f32 %v8831, %v8885
      %v8934 = vadd.f32 %v8832, %v8886
      %v8935 = vadd.f32 %v8833, %v8887
      %v8936 = vadd.f32 %v8834, %v8888
      %v8937 = vadd.f32 %v8835, %v8889
      %v8938 = vadd.f32 %v8836, %v8890
      %v8939 = vadd.f32 %v8837, %v8891
      %v8940 = vadd.f32 %v8838, %v8892
      %v8941 = vadd.f32 %v8839, %v8893
      %v8942 = vadd.f32 %v8840, %v8894
      %v8943 = vadd.f32 %v8841, %v8895
      %v8944 = vadd.f32 %v8842, %v8896
      %v8945 = vadd.f32 %v8843, %v8897
      %v8946 = vadd.f32 %v8844, %v8898
      %v8947 = vadd.f32 %v8845, %v8899
      %v8948 = vadd.f32 %v8846, %v8900
      %v8949 = vadd.f32 %v8847, %v8901
      %v8950 = vadd.f32 %v8848, %v8902
      %v8951 = vadd.f32 %v8849, %v8903
      %v8952 = vadd.f32 %v8850, %v8904
      %v8953 = vadd.f32 %v8851, %v8905
      %v8954 = vadd.f32 %v8852, %v8906
      %v8955 = vadd.f32 %v8853, %v8907
      %v8956 = vadd.f32 %v8854, %v8908
      %v8957 = vld [vmem:[%s5 + $0x1] sm:$0x1]
      %v8958 = vlaneseq
      %v8959 = vshrl.u32 %v8958, 7
      %v8960 = vsub.s32 0, %v8959
      %v8961 = vrot.slane %v8957, %v8960
      %v8962 = vmul.f32 %v8509, %v8961
      %v8963 = vmul.f32 %v8510, %v8961
      %v8964 = vmul.f32 %v8513, %v8961
      %v8965 = vmul.f32 %v8514, %v8961
      %v8966 = vmul.f32 %v8517, %v8961
      %v8967 = vmul.f32 %v8518, %v8961
      %v8968 = vmul.f32 %v8521, %v8961
      %v8969 = vmul.f32 %v8522, %v8961
      %v8970 = vmul.f32 %v8525, %v8961
      %v8971 = vmul.f32 %v8526, %v8961
      %v8972 = vmul.f32 %v8529, %v8961
      %v8973 = vmul.f32 %v8530, %v8961
      %v8974 = vmul.f32 %v8533, %v8961
      %v8975 = vmul.f32 %v8534, %v8961
      %v8976 = vmul.f32 %v8537, %v8961
      %v8977 = vmul.f32 %v8538, %v8961
      %v8978 = vmul.f32 %v8541, %v8961
      %v8979 = vmul.f32 %v8542, %v8961
      %v8980 = vmul.f32 %v8545, %v8961
      %v8981 = vmul.f32 %v8546, %v8961
      %v8982 = vmul.f32 %v8549, %v8961
      %v8983 = vmul.f32 %v8550, %v8961
      %v8984 = vmul.f32 %v8553, %v8961
      %v8985 = vmul.f32 %v8554, %v8961
      %v8986 = vmul.f32 %v8557, %v8961
      %v8987 = vmul.f32 %v8558, %v8961
      %v8988 = vmul.f32 %v8561, %v8961
      %v8989 = vmul.f32 %v8562, %v8961
      %v8990 = vmul.f32 %v8565, %v8961
      %v8991 = vmul.f32 %v8566, %v8961
      %v8992 = vmul.f32 %v8569, %v8961
      %v8993 = vmul.f32 %v8570, %v8961
      %v8994 = vld [vmem:[%s8753 + $0x1] sm:$0x1]
      %v8995 = vlaneseq
      %v8996 = vshrl.u32 %v8995, 7
      %v8997 = vsub.s32 0, %v8996
      %v8998 = vrot.slane %v8994, %v8997
      %v8999 = vmul.f32 %v8573, %v8998
      %v9000 = vmul.f32 %v8574, %v8998
      %v9001 = vmul.f32 %v8577, %v8998
      %v9002 = vmul.f32 %v8578, %v8998
      %v9003 = vmul.f32 %v8581, %v8998
      %v9004 = vmul.f32 %v8582, %v8998
      %v9005 = vmul.f32 %v8585, %v8998
      %v9006 = vmul.f32 %v8586, %v8998
      %v9007 = vmul.f32 %v8589, %v8998
      %v9008 = vmul.f32 %v8590, %v8998
      %v9009 = vmul.f32 %v8593, %v8998
      %v9010 = vmul.f32 %v8594, %v8998
      %v9011 = vmul.f32 %v8597, %v8998
      %v9012 = vmul.f32 %v8598, %v8998
      %v9013 = vmul.f32 %v8601, %v8998
      %v9014 = vmul.f32 %v8602, %v8998
      %v9015 = vmul.f32 %v8605, %v8998
      %v9016 = vmul.f32 %v8606, %v8998
      %v9017 = vmul.f32 %v8609, %v8998
      %v9018 = vmul.f32 %v8610, %v8998
      %v9019 = vmul.f32 %v8613, %v8998
      %v9020 = vmul.f32 %v8614, %v8998
      %v9021 = vmul.f32 %v8617, %v8998
      %v9022 = vmul.f32 %v8618, %v8998
      %v9023 = vmul.f32 %v8621, %v8998
      %v9024 = vmul.f32 %v8622, %v8998
      %v9025 = vmul.f32 %v8625, %v8998
      %v9026 = vmul.f32 %v8626, %v8998
      %v9027 = vmul.f32 %v8629, %v8998
      %v9028 = vmul.f32 %v8630, %v8998
      %v9029 = vmul.f32 %v8633, %v8998
      %v9030 = vmul.f32 %v8634, %v8998
      %v9031 = vadd.f32 %v8962, %v8999
      %v9032 = vadd.f32 %v8963, %v9000
      %v9033 = vadd.f32 %v8964, %v9001
      %v9034 = vadd.f32 %v8965, %v9002
      %v9035 = vadd.f32 %v8966, %v9003
      %v9036 = vadd.f32 %v8967, %v9004
      %v9037 = vadd.f32 %v8968, %v9005
      %v9038 = vadd.f32 %v8969, %v9006
      %v9039 = vadd.f32 %v8970, %v9007
      %v9040 = vadd.f32 %v8971, %v9008
      %v9041 = vadd.f32 %v8972, %v9009
      %v9042 = vadd.f32 %v8973, %v9010
      %v9043 = vadd.f32 %v8974, %v9011
      %v9044 = vadd.f32 %v8975, %v9012
      %v9045 = vadd.f32 %v8976, %v9013
      %v9046 = vadd.f32 %v8977, %v9014
      %v9047 = vadd.f32 %v8978, %v9015
      %v9048 = vadd.f32 %v8979, %v9016
      %v9049 = vadd.f32 %v8980, %v9017
      %v9050 = vadd.f32 %v8981, %v9018
      %v9051 = vadd.f32 %v8982, %v9019
      %v9052 = vadd.f32 %v8983, %v9020
      %v9053 = vadd.f32 %v8984, %v9021
      %v9054 = vadd.f32 %v8985, %v9022
      %v9055 = vadd.f32 %v8986, %v9023
      %v9056 = vadd.f32 %v8987, %v9024
      %v9057 = vadd.f32 %v8988, %v9025
      %v9058 = vadd.f32 %v8989, %v9026
      %v9059 = vadd.f32 %v8990, %v9027
      %v9060 = vadd.f32 %v8991, %v9028
      %v9061 = vadd.f32 %v8992, %v9029
      %v9062 = vadd.f32 %v8993, %v9030
      %v9063 = vld [vmem:[%s8855 + $0x1] sm:$0x1]
      %v9064 = vlaneseq
      %v9065 = vshrl.u32 %v9064, 7
      %v9066 = vsub.s32 0, %v9065
      %v9067 = vrot.slane %v9063, %v9066
      %v9068 = vmul.f32 %v8637, %v9067
      %v9069 = vmul.f32 %v8638, %v9067
      %v9070 = vmul.f32 %v8641, %v9067
      %v9071 = vmul.f32 %v8642, %v9067
      %v9072 = vmul.f32 %v8645, %v9067
      %v9073 = vmul.f32 %v8646, %v9067
      %v9074 = vmul.f32 %v8649, %v9067
      %v9075 = vmul.f32 %v8650, %v9067
      %v9076 = vmul.f32 %v8653, %v9067
      %v9077 = vmul.f32 %v8654, %v9067
      %v9078 = vmul.f32 %v8657, %v9067
      %v9079 = vmul.f32 %v8658, %v9067
      %v9080 = vmul.f32 %v8661, %v9067
      %v9081 = vmul.f32 %v8662, %v9067
      %v9082 = vmul.f32 %v8665, %v9067
      %v9083 = vmul.f32 %v8666, %v9067
      %v9084 = vmul.f32 %v8669, %v9067
      %v9085 = vmul.f32 %v8670, %v9067
      %v9086 = vmul.f32 %v8673, %v9067
      %v9087 = vmul.f32 %v8674, %v9067
      %v9088 = vmul.f32 %v8677, %v9067
      %v9089 = vmul.f32 %v8678, %v9067
      %v9090 = vmul.f32 %v8681, %v9067
      %v9091 = vmul.f32 %v8682, %v9067
      %v9092 = vmul.f32 %v8685, %v9067
      %v9093 = vmul.f32 %v8686, %v9067
      %v9094 = vmul.f32 %v8689, %v9067
      %v9095 = vmul.f32 %v8690, %v9067
      %v9096 = vmul.f32 %v8693, %v9067
      %v9097 = vmul.f32 %v8694, %v9067
      %v9098 = vmul.f32 %v8697, %v9067
      %v9099 = vmul.f32 %v8698, %v9067
      %v9100 = vadd.f32 %v9031, %v9068
      %v9101 = vadd.f32 %v9032, %v9069
      %v9102 = vadd.f32 %v9033, %v9070
      %v9103 = vadd.f32 %v9034, %v9071
      %v9104 = vadd.f32 %v9035, %v9072
      %v9105 = vadd.f32 %v9036, %v9073
      %v9106 = vadd.f32 %v9037, %v9074
      %v9107 = vadd.f32 %v9038, %v9075
      %v9108 = vadd.f32 %v9039, %v9076
      %v9109 = vadd.f32 %v9040, %v9077
      %v9110 = vadd.f32 %v9041, %v9078
      %v9111 = vadd.f32 %v9042, %v9079
      %v9112 = vadd.f32 %v9043, %v9080
      %v9113 = vadd.f32 %v9044, %v9081
      %v9114 = vadd.f32 %v9045, %v9082
      %v9115 = vadd.f32 %v9046, %v9083
      %v9116 = vadd.f32 %v9047, %v9084
      %v9117 = vadd.f32 %v9048, %v9085
      %v9118 = vadd.f32 %v9049, %v9086
      %v9119 = vadd.f32 %v9050, %v9087
      %v9120 = vadd.f32 %v9051, %v9088
      %v9121 = vadd.f32 %v9052, %v9089
      %v9122 = vadd.f32 %v9053, %v9090
      %v9123 = vadd.f32 %v9054, %v9091
      %v9124 = vadd.f32 %v9055, %v9092
      %v9125 = vadd.f32 %v9056, %v9093
      %v9126 = vadd.f32 %v9057, %v9094
      %v9127 = vadd.f32 %v9058, %v9095
      %v9128 = vadd.f32 %v9059, %v9096
      %v9129 = vadd.f32 %v9060, %v9097
      %v9130 = vadd.f32 %v9061, %v9098
      %v9131 = vadd.f32 %v9062, %v9099
      %v9164 = vrot.slane %v9100, 1
      %v9165 = vrot.slane %v9101, 1
      %v9166 = vsel %vm1091, %v9164, %v9165
      %v9167 = vrot.slane %v9102, 1
      %v9168 = vrot.slane %v9103, 1
      %v9169 = vsel %vm1091, %v9167, %v9168
      %v9170 = vrot.slane %v9104, 1
      %v9171 = vrot.slane %v9105, 1
      %v9172 = vsel %vm1091, %v9170, %v9171
      %v9173 = vrot.slane %v9106, 1
      %v9174 = vrot.slane %v9107, 1
      %v9175 = vsel %vm1091, %v9173, %v9174
      %v9176 = vrot.slane %v9108, 1
      %v9177 = vrot.slane %v9109, 1
      %v9178 = vsel %vm1091, %v9176, %v9177
      %v9179 = vrot.slane %v9110, 1
      %v9180 = vrot.slane %v9111, 1
      %v9181 = vsel %vm1091, %v9179, %v9180
      %v9182 = vrot.slane %v9112, 1
      %v9183 = vrot.slane %v9113, 1
      %v9184 = vsel %vm1091, %v9182, %v9183
      %v9185 = vrot.slane %v9114, 1
      %v9186 = vrot.slane %v9115, 1
      %v9187 = vsel %vm1091, %v9185, %v9186
      %v9188 = vrot.slane %v9116, 1
      %v9189 = vrot.slane %v9117, 1
      %v9190 = vsel %vm1091, %v9188, %v9189
      %v9191 = vrot.slane %v9118, 1
      %v9192 = vrot.slane %v9119, 1
      %v9193 = vsel %vm1091, %v9191, %v9192
      %v9194 = vrot.slane %v9120, 1
      %v9195 = vrot.slane %v9121, 1
      %v9196 = vsel %vm1091, %v9194, %v9195
      %v9197 = vrot.slane %v9122, 1
      %v9198 = vrot.slane %v9123, 1
      %v9199 = vsel %vm1091, %v9197, %v9198
      %v9200 = vrot.slane %v9124, 1
      %v9201 = vrot.slane %v9125, 1
      %v9202 = vsel %vm1091, %v9200, %v9201
      %v9203 = vrot.slane %v9126, 1
      %v9204 = vrot.slane %v9127, 1
      %v9205 = vsel %vm1091, %v9203, %v9204
      %v9206 = vrot.slane %v9128, 1
      %v9207 = vrot.slane %v9129, 1
      %v9208 = vsel %vm1091, %v9206, %v9207
      %v9209 = vrot.slane %v9130, 1
      %v9210 = vrot.slane %v9131, 1
      %v9211 = vsel %vm1091, %v9209, %v9210
      %v9260 = vadd.f32 %v8909, %v9164
      %v9261 = vadd.f32 %v8910, %v9166
      %v9262 = vadd.f32 %v8911, %v9165
      %v9263 = vadd.f32 %v8912, %v9167
      %v9264 = vadd.f32 %v8913, %v9169
      %v9265 = vadd.f32 %v8914, %v9168
      %v9266 = vadd.f32 %v8915, %v9170
      %v9267 = vadd.f32 %v8916, %v9172
      %v9268 = vadd.f32 %v8917, %v9171
      %v9269 = vadd.f32 %v8918, %v9173
      %v9270 = vadd.f32 %v8919, %v9175
      %v9271 = vadd.f32 %v8920, %v9174
      %v9272 = vadd.f32 %v8921, %v9176
      %v9273 = vadd.f32 %v8922, %v9178
      %v9274 = vadd.f32 %v8923, %v9177
      %v9275 = vadd.f32 %v8924, %v9179
      %v9276 = vadd.f32 %v8925, %v9181
      %v9277 = vadd.f32 %v8926, %v9180
      %v9278 = vadd.f32 %v8927, %v9182
      %v9279 = vadd.f32 %v8928, %v9184
      %v9280 = vadd.f32 %v8929, %v9183
      %v9281 = vadd.f32 %v8930, %v9185
      %v9282 = vadd.f32 %v8931, %v9187
      %v9283 = vadd.f32 %v8932, %v9186
      %v9284 = vadd.f32 %v8933, %v9188
      %v9285 = vadd.f32 %v8934, %v9190
      %v9286 = vadd.f32 %v8935, %v9189
      %v9287 = vadd.f32 %v8936, %v9191
      %v9288 = vadd.f32 %v8937, %v9193
      %v9289 = vadd.f32 %v8938, %v9192
      %v9290 = vadd.f32 %v8939, %v9194
      %v9291 = vadd.f32 %v8940, %v9196
      %v9292 = vadd.f32 %v8941, %v9195
      %v9293 = vadd.f32 %v8942, %v9197
      %v9294 = vadd.f32 %v8943, %v9199
      %v9295 = vadd.f32 %v8944, %v9198
      %v9296 = vadd.f32 %v8945, %v9200
      %v9297 = vadd.f32 %v8946, %v9202
      %v9298 = vadd.f32 %v8947, %v9201
      %v9299 = vadd.f32 %v8948, %v9203
      %v9300 = vadd.f32 %v8949, %v9205
      %v9301 = vadd.f32 %v8950, %v9204
      %v9302 = vadd.f32 %v8951, %v9206
      %v9303 = vadd.f32 %v8952, %v9208
      %v9304 = vadd.f32 %v8953, %v9207
      %v9305 = vadd.f32 %v8954, %v9209
      %v9306 = vadd.f32 %v8955, %v9211
      %v9307 = vadd.f32 %v8956, %v9210
      %v9308 = vld [vmem:[%s5 + $0x2] sm:$0x1]
      %v9309 = vlaneseq
      %v9310 = vshrl.u32 %v9309, 7
      %v9311 = vsub.s32 0, %v9310
      %v9312 = vrot.slane %v9308, %v9311
      %v9313 = vmul.f32 %v8509, %v9312
      %v9314 = vmul.f32 %v8510, %v9312
      %v9315 = vmul.f32 %v8511, %v9312
      %v9316 = vmul.f32 %v8513, %v9312
      %v9317 = vmul.f32 %v8514, %v9312
      %v9318 = vmul.f32 %v8515, %v9312
      %v9319 = vmul.f32 %v8517, %v9312
      %v9320 = vmul.f32 %v8518, %v9312
      %v9321 = vmul.f32 %v8519, %v9312
      %v9322 = vmul.f32 %v8521, %v9312
      %v9323 = vmul.f32 %v8522, %v9312
      %v9324 = vmul.f32 %v8523, %v9312
      %v9325 = vmul.f32 %v8525, %v9312
      %v9326 = vmul.f32 %v8526, %v9312
      %v9327 = vmul.f32 %v8527, %v9312
      %v9328 = vmul.f32 %v8529, %v9312
      %v9329 = vmul.f32 %v8530, %v9312
      %v9330 = vmul.f32 %v8531, %v9312
      %v9331 = vmul.f32 %v8533, %v9312
      %v9332 = vmul.f32 %v8534, %v9312
      %v9333 = vmul.f32 %v8535, %v9312
      %v9334 = vmul.f32 %v8537, %v9312
      %v9335 = vmul.f32 %v8538, %v9312
      %v9336 = vmul.f32 %v8539, %v9312
      %v9337 = vmul.f32 %v8541, %v9312
      %v9338 = vmul.f32 %v8542, %v9312
      %v9339 = vmul.f32 %v8543, %v9312
      %v9340 = vmul.f32 %v8545, %v9312
      %v9341 = vmul.f32 %v8546, %v9312
      %v9342 = vmul.f32 %v8547, %v9312
      %v9343 = vmul.f32 %v8549, %v9312
      %v9344 = vmul.f32 %v8550, %v9312
      %v9345 = vmul.f32 %v8551, %v9312
      %v9346 = vmul.f32 %v8553, %v9312
      %v9347 = vmul.f32 %v8554, %v9312
      %v9348 = vmul.f32 %v8555, %v9312
      %v9349 = vmul.f32 %v8557, %v9312
      %v9350 = vmul.f32 %v8558, %v9312
      %v9351 = vmul.f32 %v8559, %v9312
      %v9352 = vmul.f32 %v8561, %v9312
      %v9353 = vmul.f32 %v8562, %v9312
      %v9354 = vmul.f32 %v8563, %v9312
      %v9355 = vmul.f32 %v8565, %v9312
      %v9356 = vmul.f32 %v8566, %v9312
      %v9357 = vmul.f32 %v8567, %v9312
      %v9358 = vmul.f32 %v8569, %v9312
      %v9359 = vmul.f32 %v8570, %v9312
      %v9360 = vmul.f32 %v8571, %v9312
      %v9361 = vld [vmem:[%s8753 + $0x2] sm:$0x1]
      %v9362 = vlaneseq
      %v9363 = vshrl.u32 %v9362, 7
      %v9364 = vsub.s32 0, %v9363
      %v9365 = vrot.slane %v9361, %v9364
      %v9366 = vmul.f32 %v8573, %v9365
      %v9367 = vmul.f32 %v8574, %v9365
      %v9368 = vmul.f32 %v8575, %v9365
      %v9369 = vmul.f32 %v8577, %v9365
      %v9370 = vmul.f32 %v8578, %v9365
      %v9371 = vmul.f32 %v8579, %v9365
      %v9372 = vmul.f32 %v8581, %v9365
      %v9373 = vmul.f32 %v8582, %v9365
      %v9374 = vmul.f32 %v8583, %v9365
      %v9375 = vmul.f32 %v8585, %v9365
      %v9376 = vmul.f32 %v8586, %v9365
      %v9377 = vmul.f32 %v8587, %v9365
      %v9378 = vmul.f32 %v8589, %v9365
      %v9379 = vmul.f32 %v8590, %v9365
      %v9380 = vmul.f32 %v8591, %v9365
      %v9381 = vmul.f32 %v8593, %v9365
      %v9382 = vmul.f32 %v8594, %v9365
      %v9383 = vmul.f32 %v8595, %v9365
      %v9384 = vmul.f32 %v8597, %v9365
      %v9385 = vmul.f32 %v8598, %v9365
      %v9386 = vmul.f32 %v8599, %v9365
      %v9387 = vmul.f32 %v8601, %v9365
      %v9388 = vmul.f32 %v8602, %v9365
      %v9389 = vmul.f32 %v8603, %v9365
      %v9390 = vmul.f32 %v8605, %v9365
      %v9391 = vmul.f32 %v8606, %v9365
      %v9392 = vmul.f32 %v8607, %v9365
      %v9393 = vmul.f32 %v8609, %v9365
      %v9394 = vmul.f32 %v8610, %v9365
      %v9395 = vmul.f32 %v8611, %v9365
      %v9396 = vmul.f32 %v8613, %v9365
      %v9397 = vmul.f32 %v8614, %v9365
      %v9398 = vmul.f32 %v8615, %v9365
      %v9399 = vmul.f32 %v8617, %v9365
      %v9400 = vmul.f32 %v8618, %v9365
      %v9401 = vmul.f32 %v8619, %v9365
      %v9402 = vmul.f32 %v8621, %v9365
      %v9403 = vmul.f32 %v8622, %v9365
      %v9404 = vmul.f32 %v8623, %v9365
      %v9405 = vmul.f32 %v8625, %v9365
      %v9406 = vmul.f32 %v8626, %v9365
      %v9407 = vmul.f32 %v8627, %v9365
      %v9408 = vmul.f32 %v8629, %v9365
      %v9409 = vmul.f32 %v8630, %v9365
      %v9410 = vmul.f32 %v8631, %v9365
      %v9411 = vmul.f32 %v8633, %v9365
      %v9412 = vmul.f32 %v8634, %v9365
      %v9413 = vmul.f32 %v8635, %v9365
      %v9414 = vadd.f32 %v9313, %v9366
      %v9415 = vadd.f32 %v9314, %v9367
      %v9416 = vadd.f32 %v9315, %v9368
      %v9417 = vadd.f32 %v9316, %v9369
      %v9418 = vadd.f32 %v9317, %v9370
      %v9419 = vadd.f32 %v9318, %v9371
      %v9420 = vadd.f32 %v9319, %v9372
      %v9421 = vadd.f32 %v9320, %v9373
      %v9422 = vadd.f32 %v9321, %v9374
      %v9423 = vadd.f32 %v9322, %v9375
      %v9424 = vadd.f32 %v9323, %v9376
      %v9425 = vadd.f32 %v9324, %v9377
      %v9426 = vadd.f32 %v9325, %v9378
      %v9427 = vadd.f32 %v9326, %v9379
      %v9428 = vadd.f32 %v9327, %v9380
      %v9429 = vadd.f32 %v9328, %v9381
      %v9430 = vadd.f32 %v9329, %v9382
      %v9431 = vadd.f32 %v9330, %v9383
      %v9432 = vadd.f32 %v9331, %v9384
      %v9433 = vadd.f32 %v9332, %v9385
      %v9434 = vadd.f32 %v9333, %v9386
      %v9435 = vadd.f32 %v9334, %v9387
      %v9436 = vadd.f32 %v9335, %v9388
      %v9437 = vadd.f32 %v9336, %v9389
      %v9438 = vadd.f32 %v9337, %v9390
      %v9439 = vadd.f32 %v9338, %v9391
      %v9440 = vadd.f32 %v9339, %v9392
      %v9441 = vadd.f32 %v9340, %v9393
      %v9442 = vadd.f32 %v9341, %v9394
      %v9443 = vadd.f32 %v9342, %v9395
      %v9444 = vadd.f32 %v9343, %v9396
      %v9445 = vadd.f32 %v9344, %v9397
      %v9446 = vadd.f32 %v9345, %v9398
      %v9447 = vadd.f32 %v9346, %v9399
      %v9448 = vadd.f32 %v9347, %v9400
      %v9449 = vadd.f32 %v9348, %v9401
      %v9450 = vadd.f32 %v9349, %v9402
      %v9451 = vadd.f32 %v9350, %v9403
      %v9452 = vadd.f32 %v9351, %v9404
      %v9453 = vadd.f32 %v9352, %v9405
      %v9454 = vadd.f32 %v9353, %v9406
      %v9455 = vadd.f32 %v9354, %v9407
      %v9456 = vadd.f32 %v9355, %v9408
      %v9457 = vadd.f32 %v9356, %v9409
      %v9458 = vadd.f32 %v9357, %v9410
      %v9459 = vadd.f32 %v9358, %v9411
      %v9460 = vadd.f32 %v9359, %v9412
      %v9461 = vadd.f32 %v9360, %v9413
      %v9462 = vld [vmem:[%s8855 + $0x2] sm:$0x1]
      %v9463 = vlaneseq
      %v9464 = vshrl.u32 %v9463, 7
      %v9465 = vsub.s32 0, %v9464
      %v9466 = vrot.slane %v9462, %v9465
      %v9467 = vmul.f32 %v8637, %v9466
      %v9468 = vmul.f32 %v8638, %v9466
      %v9469 = vmul.f32 %v8639, %v9466
      %v9470 = vmul.f32 %v8641, %v9466
      %v9471 = vmul.f32 %v8642, %v9466
      %v9472 = vmul.f32 %v8643, %v9466
      %v9473 = vmul.f32 %v8645, %v9466
      %v9474 = vmul.f32 %v8646, %v9466
      %v9475 = vmul.f32 %v8647, %v9466
      %v9476 = vmul.f32 %v8649, %v9466
      %v9477 = vmul.f32 %v8650, %v9466
      %v9478 = vmul.f32 %v8651, %v9466
      %v9479 = vmul.f32 %v8653, %v9466
      %v9480 = vmul.f32 %v8654, %v9466
      %v9481 = vmul.f32 %v8655, %v9466
      %v9482 = vmul.f32 %v8657, %v9466
      %v9483 = vmul.f32 %v8658, %v9466
      %v9484 = vmul.f32 %v8659, %v9466
      %v9485 = vmul.f32 %v8661, %v9466
      %v9486 = vmul.f32 %v8662, %v9466
      %v9487 = vmul.f32 %v8663, %v9466
      %v9488 = vmul.f32 %v8665, %v9466
      %v9489 = vmul.f32 %v8666, %v9466
      %v9490 = vmul.f32 %v8667, %v9466
      %v9491 = vmul.f32 %v8669, %v9466
      %v9492 = vmul.f32 %v8670, %v9466
      %v9493 = vmul.f32 %v8671, %v9466
      %v9494 = vmul.f32 %v8673, %v9466
      %v9495 = vmul.f32 %v8674, %v9466
      %v9496 = vmul.f32 %v8675, %v9466
      %v9497 = vmul.f32 %v8677, %v9466
      %v9498 = vmul.f32 %v8678, %v9466
      %v9499 = vmul.f32 %v8679, %v9466
      %v9500 = vmul.f32 %v8681, %v9466
      %v9501 = vmul.f32 %v8682, %v9466
      %v9502 = vmul.f32 %v8683, %v9466
      %v9503 = vmul.f32 %v8685, %v9466
      %v9504 = vmul.f32 %v8686, %v9466
      %v9505 = vmul.f32 %v8687, %v9466
      %v9506 = vmul.f32 %v8689, %v9466
      %v9507 = vmul.f32 %v8690, %v9466
      %v9508 = vmul.f32 %v8691, %v9466
      %v9509 = vmul.f32 %v8693, %v9466
      %v9510 = vmul.f32 %v8694, %v9466
      %v9511 = vmul.f32 %v8695, %v9466
      %v9512 = vmul.f32 %v8697, %v9466
      %v9513 = vmul.f32 %v8698, %v9466
      %v9514 = vmul.f32 %v8699, %v9466
      %v9515 = vadd.f32 %v9414, %v9467
      %v9516 = vadd.f32 %v9415, %v9468
      %v9517 = vadd.f32 %v9416, %v9469
      %v9518 = vadd.f32 %v9417, %v9470
      %v9519 = vadd.f32 %v9418, %v9471
      %v9520 = vadd.f32 %v9419, %v9472
      %v9521 = vadd.f32 %v9420, %v9473
      %v9522 = vadd.f32 %v9421, %v9474
      %v9523 = vadd.f32 %v9422, %v9475
      %v9524 = vadd.f32 %v9423, %v9476
      %v9525 = vadd.f32 %v9424, %v9477
      %v9526 = vadd.f32 %v9425, %v9478
      %v9527 = vadd.f32 %v9426, %v9479
      %v9528 = vadd.f32 %v9427, %v9480
      %v9529 = vadd.f32 %v9428, %v9481
      %v9530 = vadd.f32 %v9429, %v9482
      %v9531 = vadd.f32 %v9430, %v9483
      %v9532 = vadd.f32 %v9431, %v9484
      %v9533 = vadd.f32 %v9432, %v9485
      %v9534 = vadd.f32 %v9433, %v9486
      %v9535 = vadd.f32 %v9434, %v9487
      %v9536 = vadd.f32 %v9435, %v9488
      %v9537 = vadd.f32 %v9436, %v9489
      %v9538 = vadd.f32 %v9437, %v9490
      %v9539 = vadd.f32 %v9438, %v9491
      %v9540 = vadd.f32 %v9439, %v9492
      %v9541 = vadd.f32 %v9440, %v9493
      %v9542 = vadd.f32 %v9441, %v9494
      %v9543 = vadd.f32 %v9442, %v9495
      %v9544 = vadd.f32 %v9443, %v9496
      %v9545 = vadd.f32 %v9444, %v9497
      %v9546 = vadd.f32 %v9445, %v9498
      %v9547 = vadd.f32 %v9446, %v9499
      %v9548 = vadd.f32 %v9447, %v9500
      %v9549 = vadd.f32 %v9448, %v9501
      %v9550 = vadd.f32 %v9449, %v9502
      %v9551 = vadd.f32 %v9450, %v9503
      %v9552 = vadd.f32 %v9451, %v9504
      %v9553 = vadd.f32 %v9452, %v9505
      %v9554 = vadd.f32 %v9453, %v9506
      %v9555 = vadd.f32 %v9454, %v9507
      %v9556 = vadd.f32 %v9455, %v9508
      %v9557 = vadd.f32 %v9456, %v9509
      %v9558 = vadd.f32 %v9457, %v9510
      %v9559 = vadd.f32 %v9458, %v9511
      %v9560 = vadd.f32 %v9459, %v9512
      %v9561 = vadd.f32 %v9460, %v9513
      %v9562 = vadd.f32 %v9461, %v9514
      %v9611 = vrot.slane %v9515, 2
      %v9612 = vrot.slane %v9516, 2
      %v9613 = vsel %vm3326, %v9611, %v9612
      %v9614 = vrot.slane %v9517, 2
      %v9615 = vsel %vm3326, %v9612, %v9614
      %v9616 = vrot.slane %v9518, 2
      %v9617 = vrot.slane %v9519, 2
      %v9618 = vsel %vm3326, %v9616, %v9617
      %v9619 = vrot.slane %v9520, 2
      %v9620 = vsel %vm3326, %v9617, %v9619
      %v9621 = vrot.slane %v9521, 2
      %v9622 = vrot.slane %v9522, 2
      %v9623 = vsel %vm3326, %v9621, %v9622
      %v9624 = vrot.slane %v9523, 2
      %v9625 = vsel %vm3326, %v9622, %v9624
      %v9626 = vrot.slane %v9524, 2
      %v9627 = vrot.slane %v9525, 2
      %v9628 = vsel %vm3326, %v9626, %v9627
      %v9629 = vrot.slane %v9526, 2
      %v9630 = vsel %vm3326, %v9627, %v9629
      %v9631 = vrot.slane %v9527, 2
      %v9632 = vrot.slane %v9528, 2
      %v9633 = vsel %vm3326, %v9631, %v9632
      %v9634 = vrot.slane %v9529, 2
      %v9635 = vsel %vm3326, %v9632, %v9634
      %v9636 = vrot.slane %v9530, 2
      %v9637 = vrot.slane %v9531, 2
      %v9638 = vsel %vm3326, %v9636, %v9637
      %v9639 = vrot.slane %v9532, 2
      %v9640 = vsel %vm3326, %v9637, %v9639
      %v9641 = vrot.slane %v9533, 2
      %v9642 = vrot.slane %v9534, 2
      %v9643 = vsel %vm3326, %v9641, %v9642
      %v9644 = vrot.slane %v9535, 2
      %v9645 = vsel %vm3326, %v9642, %v9644
      %v9646 = vrot.slane %v9536, 2
      %v9647 = vrot.slane %v9537, 2
      %v9648 = vsel %vm3326, %v9646, %v9647
      %v9649 = vrot.slane %v9538, 2
      %v9650 = vsel %vm3326, %v9647, %v9649
      %v9651 = vrot.slane %v9539, 2
      %v9652 = vrot.slane %v9540, 2
      %v9653 = vsel %vm3326, %v9651, %v9652
      %v9654 = vrot.slane %v9541, 2
      %v9655 = vsel %vm3326, %v9652, %v9654
      %v9656 = vrot.slane %v9542, 2
      %v9657 = vrot.slane %v9543, 2
      %v9658 = vsel %vm3326, %v9656, %v9657
      %v9659 = vrot.slane %v9544, 2
      %v9660 = vsel %vm3326, %v9657, %v9659
      %v9661 = vrot.slane %v9545, 2
      %v9662 = vrot.slane %v9546, 2
      %v9663 = vsel %vm3326, %v9661, %v9662
      %v9664 = vrot.slane %v9547, 2
      %v9665 = vsel %vm3326, %v9662, %v9664
      %v9666 = vrot.slane %v9548, 2
      %v9667 = vrot.slane %v9549, 2
      %v9668 = vsel %vm3326, %v9666, %v9667
      %v9669 = vrot.slane %v9550, 2
      %v9670 = vsel %vm3326, %v9667, %v9669
      %v9671 = vrot.slane %v9551, 2
      %v9672 = vrot.slane %v9552, 2
      %v9673 = vsel %vm3326, %v9671, %v9672
      %v9674 = vrot.slane %v9553, 2
      %v9675 = vsel %vm3326, %v9672, %v9674
      %v9676 = vrot.slane %v9554, 2
      %v9677 = vrot.slane %v9555, 2
      %v9678 = vsel %vm3326, %v9676, %v9677
      %v9679 = vrot.slane %v9556, 2
      %v9680 = vsel %vm3326, %v9677, %v9679
      %v9681 = vrot.slane %v9557, 2
      %v9682 = vrot.slane %v9558, 2
      %v9683 = vsel %vm3326, %v9681, %v9682
      %v9684 = vrot.slane %v9559, 2
      %v9685 = vsel %vm3326, %v9682, %v9684
      %v9686 = vrot.slane %v9560, 2
      %v9687 = vrot.slane %v9561, 2
      %v9688 = vsel %vm3326, %v9686, %v9687
      %v9689 = vrot.slane %v9562, 2
      %v9690 = vsel %vm3326, %v9687, %v9689
      %v9739 = vadd.f32 %v9260, %v9611
      %v9740 = vadd.f32 %v9261, %v9613
      %v9741 = vadd.f32 %v9262, %v9615
      %v9742 = vadd.f32 %v9263, %v9616
      %v9743 = vadd.f32 %v9264, %v9618
      %v9744 = vadd.f32 %v9265, %v9620
      %v9745 = vadd.f32 %v9266, %v9621
      %v9746 = vadd.f32 %v9267, %v9623
      %v9747 = vadd.f32 %v9268, %v9625
      %v9748 = vadd.f32 %v9269, %v9626
      %v9749 = vadd.f32 %v9270, %v9628
      %v9750 = vadd.f32 %v9271, %v9630
      %v9751 = vadd.f32 %v9272, %v9631
      %v9752 = vadd.f32 %v9273, %v9633
      %v9753 = vadd.f32 %v9274, %v9635
      %v9754 = vadd.f32 %v9275, %v9636
      %v9755 = vadd.f32 %v9276, %v9638
      %v9756 = vadd.f32 %v9277, %v9640
      %v9757 = vadd.f32 %v9278, %v9641
      %v9758 = vadd.f32 %v9279, %v9643
      %v9759 = vadd.f32 %v9280, %v9645
      %v9760 = vadd.f32 %v9281, %v9646
      %v9761 = vadd.f32 %v9282, %v9648
      %v9762 = vadd.f32 %v9283, %v9650
      %v9763 = vadd.f32 %v9284, %v9651
      %v9764 = vadd.f32 %v9285, %v9653
      %v9765 = vadd.f32 %v9286, %v9655
      %v9766 = vadd.f32 %v9287, %v9656
      %v9767 = vadd.f32 %v9288, %v9658
      %v9768 = vadd.f32 %v9289, %v9660
      %v9769 = vadd.f32 %v9290, %v9661
      %v9770 = vadd.f32 %v9291, %v9663
      %v9771 = vadd.f32 %v9292, %v9665
      %v9772 = vadd.f32 %v9293, %v9666
      %v9773 = vadd.f32 %v9294, %v9668
      %v9774 = vadd.f32 %v9295, %v9670
      %v9775 = vadd.f32 %v9296, %v9671
      %v9776 = vadd.f32 %v9297, %v9673
      %v9777 = vadd.f32 %v9298, %v9675
      %v9778 = vadd.f32 %v9299, %v9676
      %v9779 = vadd.f32 %v9300, %v9678
      %v9780 = vadd.f32 %v9301, %v9680
      %v9781 = vadd.f32 %v9302, %v9681
      %v9782 = vadd.f32 %v9303, %v9683
      %v9783 = vadd.f32 %v9304, %v9685
      %v9784 = vadd.f32 %v9305, %v9686
      %v9785 = vadd.f32 %v9306, %v9688
      %v9786 = vadd.f32 %v9307, %v9690
      %v9787 = vadd.f32 %v6529, %v9739
      %v9788 = vadd.f32 %v6530, %v9740
      %v9789 = vadd.f32 %v6531, %v9741
      %v9790 = vadd.f32 %v6532, %v9742
      %v9791 = vadd.f32 %v6533, %v9743
      %v9792 = vadd.f32 %v6534, %v9744
      %v9793 = vadd.f32 %v6535, %v9745
      %v9794 = vadd.f32 %v6536, %v9746
      %v9795 = vadd.f32 %v6537, %v9747
      %v9796 = vadd.f32 %v6538, %v9748
      %v9797 = vadd.f32 %v6539, %v9749
      %v9798 = vadd.f32 %v6540, %v9750
      %v9799 = vadd.f32 %v6541, %v9751
      %v9800 = vadd.f32 %v6542, %v9752
      %v9801 = vadd.f32 %v6543, %v9753
      %v9802 = vadd.f32 %v6544, %v9754
      %v9803 = vadd.f32 %v6545, %v9755
      %v9804 = vadd.f32 %v6546, %v9756
      %v9805 = vadd.f32 %v6547, %v9757
      %v9806 = vadd.f32 %v6548, %v9758
      %v9807 = vadd.f32 %v6549, %v9759
      %v9808 = vadd.f32 %v6550, %v9760
      %v9809 = vadd.f32 %v6551, %v9761
      %v9810 = vadd.f32 %v6552, %v9762
      %v9811 = vadd.f32 %v6553, %v9763
      %v9812 = vadd.f32 %v6554, %v9764
      %v9813 = vadd.f32 %v6555, %v9765
      %v9814 = vadd.f32 %v6556, %v9766
      %v9815 = vadd.f32 %v6557, %v9767
      %v9816 = vadd.f32 %v6558, %v9768
      %v9817 = vadd.f32 %v6559, %v9769
      %v9818 = vadd.f32 %v6560, %v9770
      %v9819 = vadd.f32 %v6561, %v9771
      %v9820 = vadd.f32 %v6562, %v9772
      %v9821 = vadd.f32 %v6563, %v9773
      %v9822 = vadd.f32 %v6564, %v9774
      %v9823 = vadd.f32 %v6565, %v9775
      %v9824 = vadd.f32 %v6566, %v9776
      %v9825 = vadd.f32 %v6567, %v9777
      %v9826 = vadd.f32 %v6568, %v9778
      %v9827 = vadd.f32 %v6569, %v9779
      %v9828 = vadd.f32 %v6570, %v9780
      %v9829 = vadd.f32 %v6571, %v9781
      %v9830 = vadd.f32 %v6572, %v9782
      %v9831 = vadd.f32 %v6573, %v9783
      %v9832 = vadd.f32 %v6574, %v9784
      %v9833 = vadd.f32 %v6575, %v9785
      %v9834 = vadd.f32 %v6576, %v9786
      %v9867 = vrot.slane %v8296, 1
      %v9868 = vrot.slane %v8301, 1
      %v9869 = vsel %vm1091, %v9867, %v9868
      %v9870 = vrot.slane %v8306, 1
      %v9871 = vrot.slane %v8311, 1
      %v9872 = vsel %vm1091, %v9870, %v9871
      %v9873 = vrot.slane %v8316, 1
      %v9874 = vrot.slane %v8321, 1
      %v9875 = vsel %vm1091, %v9873, %v9874
      %v9876 = vrot.slane %v8326, 1
      %v9877 = vrot.slane %v8331, 1
      %v9878 = vsel %vm1091, %v9876, %v9877
      %v9879 = vrot.slane %v8336, 1
      %v9880 = vrot.slane %v8341, 1
      %v9881 = vsel %vm1091, %v9879, %v9880
      %v9882 = vrot.slane %v8346, 1
      %v9883 = vrot.slane %v8351, 1
      %v9884 = vsel %vm1091, %v9882, %v9883
      %v9885 = vrot.slane %v8356, 1
      %v9886 = vrot.slane %v8361, 1
      %v9887 = vsel %vm1091, %v9885, %v9886
      %v9888 = vrot.slane %v8366, 1
      %v9889 = vrot.slane %v8371, 1
      %v9890 = vsel %vm1091, %v9888, %v9889
      %v9891 = vrot.slane %v8376, 1
      %v9892 = vrot.slane %v8381, 1
      %v9893 = vsel %vm1091, %v9891, %v9892
      %v9894 = vrot.slane %v8386, 1
      %v9895 = vrot.slane %v8391, 1
      %v9896 = vsel %vm1091, %v9894, %v9895
      %v9897 = vrot.slane %v8396, 1
      %v9898 = vrot.slane %v8401, 1
      %v9899 = vsel %vm1091, %v9897, %v9898
      %v9900 = vrot.slane %v8406, 1
      %v9901 = vrot.slane %v8411, 1
      %v9902 = vsel %vm1091, %v9900, %v9901
      %v9903 = vrot.slane %v8416, 1
      %v9904 = vrot.slane %v8421, 1
      %v9905 = vsel %vm1091, %v9903, %v9904
      %v9906 = vrot.slane %v8426, 1
      %v9907 = vrot.slane %v8431, 1
      %v9908 = vsel %vm1091, %v9906, %v9907
      %v9909 = vrot.slane %v8436, 1
      %v9910 = vrot.slane %v8441, 1
      %v9911 = vsel %vm1091, %v9909, %v9910
      %v9912 = vrot.slane %v8446, 1
      %v9913 = vrot.slane %v8451, 1
      %v9914 = vsel %vm1091, %v9912, %v9913
      %v9963 = vadd.f32 %v9787, %v9867
      %v9964 = vadd.f32 %v9788, %v9869
      %v9965 = vadd.f32 %v9789, %v9868
      %v9966 = vadd.f32 %v9790, %v9870
      %v9967 = vadd.f32 %v9791, %v9872
      %v9968 = vadd.f32 %v9792, %v9871
      %v9969 = vadd.f32 %v9793, %v9873
      %v9970 = vadd.f32 %v9794, %v9875
      %v9971 = vadd.f32 %v9795, %v9874
      %v9972 = vadd.f32 %v9796, %v9876
      %v9973 = vadd.f32 %v9797, %v9878
      %v9974 = vadd.f32 %v9798, %v9877
      %v9975 = vadd.f32 %v9799, %v9879
      %v9976 = vadd.f32 %v9800, %v9881
      %v9977 = vadd.f32 %v9801, %v9880
      %v9978 = vadd.f32 %v9802, %v9882
      %v9979 = vadd.f32 %v9803, %v9884
      %v9980 = vadd.f32 %v9804, %v9883
      %v9981 = vadd.f32 %v9805, %v9885
      %v9982 = vadd.f32 %v9806, %v9887
      %v9983 = vadd.f32 %v9807, %v9886
      %v9984 = vadd.f32 %v9808, %v9888
      %v9985 = vadd.f32 %v9809, %v9890
      %v9986 = vadd.f32 %v9810, %v9889
      %v9987 = vadd.f32 %v9811, %v9891
      %v9988 = vadd.f32 %v9812, %v9893
      %v9989 = vadd.f32 %v9813, %v9892
      %v9990 = vadd.f32 %v9814, %v9894
      %v9991 = vadd.f32 %v9815, %v9896
      %v9992 = vadd.f32 %v9816, %v9895
      %v9993 = vadd.f32 %v9817, %v9897
      %v9994 = vadd.f32 %v9818, %v9899
      %v9995 = vadd.f32 %v9819, %v9898
      %v9996 = vadd.f32 %v9820, %v9900
      %v9997 = vadd.f32 %v9821, %v9902
      %v9998 = vadd.f32 %v9822, %v9901
      %v9999 = vadd.f32 %v9823, %v9903
      %v10000 = vadd.f32 %v9824, %v9905
      %v10001 = vadd.f32 %v9825, %v9904
      %v10002 = vadd.f32 %v9826, %v9906
      %v10003 = vadd.f32 %v9827, %v9908
      %v10004 = vadd.f32 %v9828, %v9907
      %v10005 = vadd.f32 %v9829, %v9909
      %v10006 = vadd.f32 %v9830, %v9911
      %v10007 = vadd.f32 %v9831, %v9910
      %v10008 = vadd.f32 %v9832, %v9912
      %v10009 = vadd.f32 %v9833, %v9914
      %v10010 = vadd.f32 %v9834, %v9913
      %v10059 = vrot.slane %v9963, 7
      %v10060 = vrot.slane %v9964, 7
      %v10061 = vsel %vm946, %v10059, %v10060
      %v10062 = vrot.slane %v9965, 7
      %v10063 = vsel %vm946, %v10060, %v10062
      %v10064 = vrot.slane %v9966, 7
      %v10065 = vrot.slane %v9967, 7
      %v10066 = vsel %vm946, %v10064, %v10065
      %v10067 = vrot.slane %v9968, 7
      %v10068 = vsel %vm946, %v10065, %v10067
      %v10069 = vrot.slane %v9969, 7
      %v10070 = vrot.slane %v9970, 7
      %v10071 = vsel %vm946, %v10069, %v10070
      %v10072 = vrot.slane %v9971, 7
      %v10073 = vsel %vm946, %v10070, %v10072
      %v10074 = vrot.slane %v9972, 7
      %v10075 = vrot.slane %v9973, 7
      %v10076 = vsel %vm946, %v10074, %v10075
      %v10077 = vrot.slane %v9974, 7
      %v10078 = vsel %vm946, %v10075, %v10077
      %v10079 = vrot.slane %v9975, 7
      %v10080 = vrot.slane %v9976, 7
      %v10081 = vsel %vm946, %v10079, %v10080
      %v10082 = vrot.slane %v9977, 7
      %v10083 = vsel %vm946, %v10080, %v10082
      %v10084 = vrot.slane %v9978, 7
      %v10085 = vrot.slane %v9979, 7
      %v10086 = vsel %vm946, %v10084, %v10085
      %v10087 = vrot.slane %v9980, 7
      %v10088 = vsel %vm946, %v10085, %v10087
      %v10089 = vrot.slane %v9981, 7
      %v10090 = vrot.slane %v9982, 7
      %v10091 = vsel %vm946, %v10089, %v10090
      %v10092 = vrot.slane %v9983, 7
      %v10093 = vsel %vm946, %v10090, %v10092
      %v10094 = vrot.slane %v9984, 7
      %v10095 = vrot.slane %v9985, 7
      %v10096 = vsel %vm946, %v10094, %v10095
      %v10097 = vrot.slane %v9986, 7
      %v10098 = vsel %vm946, %v10095, %v10097
      %v10099 = vrot.slane %v9987, 7
      %v10100 = vrot.slane %v9988, 7
      %v10101 = vsel %vm946, %v10099, %v10100
      %v10102 = vrot.slane %v9989, 7
      %v10103 = vsel %vm946, %v10100, %v10102
      %v10104 = vrot.slane %v9990, 7
      %v10105 = vrot.slane %v9991, 7
      %v10106 = vsel %vm946, %v10104, %v10105
      %v10107 = vrot.slane %v9992, 7
      %v10108 = vsel %vm946, %v10105, %v10107
      %v10109 = vrot.slane %v9993, 7
      %v10110 = vrot.slane %v9994, 7
      %v10111 = vsel %vm946, %v10109, %v10110
      %v10112 = vrot.slane %v9995, 7
      %v10113 = vsel %vm946, %v10110, %v10112
      %v10114 = vrot.slane %v9996, 7
      %v10115 = vrot.slane %v9997, 7
      %v10116 = vsel %vm946, %v10114, %v10115
      %v10117 = vrot.slane %v9998, 7
      %v10118 = vsel %vm946, %v10115, %v10117
      %v10119 = vrot.slane %v9999, 7
      %v10120 = vrot.slane %v10000, 7
      %v10121 = vsel %vm946, %v10119, %v10120
      %v10122 = vrot.slane %v10001, 7
      %v10123 = vsel %vm946, %v10120, %v10122
      %v10124 = vrot.slane %v10002, 7
      %v10125 = vrot.slane %v10003, 7
      %v10126 = vsel %vm946, %v10124, %v10125
      %v10127 = vrot.slane %v10004, 7
      %v10128 = vsel %vm946, %v10125, %v10127
      %v10129 = vrot.slane %v10005, 7
      %v10130 = vrot.slane %v10006, 7
      %v10131 = vsel %vm946, %v10129, %v10130
      %v10132 = vrot.slane %v10007, 7
      %v10133 = vsel %vm946, %v10130, %v10132
      %v10134 = vrot.slane %v10008, 7
      %v10135 = vrot.slane %v10009, 7
      %v10136 = vsel %vm946, %v10134, %v10135
      %v10137 = vrot.slane %v10010, 7
      %v10138 = vsel %vm946, %v10135, %v10137
      %v10139 = vld [vmem:[%s7] sm:$0xff]
      %v10140 = vld [vmem:[%s7 + $0x8] sm:$0xff]
      %v10141 = vld [vmem:[%s7 + $0x10] sm:$0xf]
      %v10142 = vsel %vm1912, %v10061, 0
      %v10144 = vsel %vm1912, %v10063, 0
      %v10146 = vsel %vm1912, %v10066, 0
      %v10148 = vsel %vm1912, %v10068, 0
      %v10150 = vsel %vm1912, %v10071, 0
      %v10152 = vsel %vm1912, %v10073, 0
      %v10154 = vsel %vm1912, %v10076, 0
      %v10156 = vsel %vm1912, %v10078, 0
      %v10158 = vsel %vm1912, %v10081, 0
      %v10160 = vsel %vm1912, %v10083, 0
      %v10162 = vsel %vm1912, %v10086, 0
      %v10164 = vsel %vm1912, %v10088, 0
      %v10166 = vsel %vm1912, %v10091, 0
      %v10168 = vsel %vm1912, %v10093, 0
      %v10170 = vsel %vm1912, %v10096, 0
      %v10172 = vsel %vm1912, %v10098, 0
      %v10174 = vsel %vm1912, %v10101, 0
      %v10176 = vsel %vm1912, %v10103, 0
      %v10178 = vsel %vm1912, %v10106, 0
      %v10180 = vsel %vm1912, %v10108, 0
      %v10182 = vsel %vm1912, %v10111, 0
      %v10184 = vsel %vm1912, %v10113, 0
      %v10186 = vsel %vm1912, %v10116, 0
      %v10188 = vsel %vm1912, %v10118, 0
      %v10190 = vsel %vm1912, %v10121, 0
      %v10192 = vsel %vm1912, %v10123, 0
      %v10194 = vsel %vm1912, %v10126, 0
      %v10196 = vsel %vm1912, %v10128, 0
      %v10198 = vsel %vm1912, %v10131, 0
      %v10200 = vsel %vm1912, %v10133, 0
      %v10202 = vsel %vm1912, %v10136, 0
      %v10204 = vsel %vm1912, %v10138, 0
      %v10207 = vsel %vm589, %v10141, 0
      %10209 = vmatprep.subr.mxu0 0.0
      %10210 = vmatpush1.msra.mxu0 0.0
      %10211 = vmatprep.subr.mxu0 0.0
      %10212 = vmatpush1.msra.mxu0 0.0
      %10213 = vmatprep.subr.mxu0 0.0
      %10214 = vmatpush1.msra.mxu0 0.0
      %10215 = vmatprep.subr.mxu0 0.0
      %10216 = vmatpush1.msra.mxu0 0.0
      %10217 = vmatprep.subr.mxu0 0.0
      %10218 = vmatpush1.msra.mxu0 0.0
      %10219 = vmatprep.subr.mxu0 0.0
      %10220 = vmatpush1.msra.mxu0 0.0
      %10221 = vmatprep.subr.mxu0 0.0
      %10222 = vmatpush1.msra.mxu0 0.0
      %10223 = vmatprep.subr.mxu0 0.0
      %10224 = vmatpush1.msra.mxu0 0.0
      %10225 = vmatprep.subr.mxu0 0.0
      %10226 = vmatpush1.msra.mxu0 0.0
      %10227 = vmatprep.subr.mxu0 0.0
      %10228 = vmatpush1.msra.mxu0 0.0
      %10229 = vmatprep.subr.mxu0 0.0
      %10230 = vmatpush1.msra.mxu0 0.0
      %10231 = vmatprep.subr.mxu0 0.0
      %10232 = vmatpush1.msra.mxu0 0.0
      %10233 = vmatprep.subr.mxu0 0.0
      %10234 = vmatpush1.msra.mxu0 0.0
      %10235 = vmatprep.subr.mxu0 0.0
      %10236 = vmatpush1.msra.mxu0 %v10207
      %10237 = vmatprep.subr.mxu0 0.0
      %10238 = vmatpush1.msra.mxu0 %v10140
      %10239 = vmatprep.subr.mxu0 0.0
      %10240 = vmatpush1.msra.mxu0 %v10139
      %10241 = vmatprep.subr.mxu0 0.0
      %10242 = vmatpush2.msra.mxu0 0.0
      %10243 = vmatprep.subr.mxu0 0.0
      %10244 = vmatpush2.msra.mxu0 0.0
      %10245 = vmatprep.subr.mxu0 0.0
      %10246 = vmatpush2.msra.mxu0 0.0
      %10247 = vmatprep.subr.mxu0 0.0
      %10248 = vmatpush2.msra.mxu0 0.0
      %10249 = vmatprep.subr.mxu0 0.0
      %10250 = vmatpush2.msra.mxu0 0.0
      %10251 = vmatprep.subr.mxu0 0.0
      %10252 = vmatpush2.msra.mxu0 0.0
      %10253 = vmatprep.subr.mxu0 0.0
      %10254 = vmatpush2.msra.mxu0 0.0
      %10255 = vmatprep.subr.mxu0 0.0
      %10256 = vmatpush2.msra.mxu0 0.0
      %10257 = vmatprep.subr.mxu0 0.0
      %10258 = vmatpush2.msra.mxu0 0.0
      %10259 = vmatprep.subr.mxu0 0.0
      %10260 = vmatpush2.msra.mxu0 0.0
      %10261 = vmatprep.subr.mxu0 0.0
      %10262 = vmatpush2.msra.mxu0 0.0
      %10263 = vmatprep.subr.mxu0 0.0
      %10264 = vmatpush2.msra.mxu0 0.0
      %10265 = vmatprep.subr.mxu0 0.0
      %10266 = vmatpush2.msra.mxu0 0.0
      %10267 = vmatprep.subr.mxu0 0.0
      %10268 = vmatpush2.msra.mxu0 0.0
      %10269 = vmatprep.subr.mxu0 0.0
      %10270 = vmatpush2.msra.mxu0 0.0
      %10271 = vmatprep.subr.mxu0 0.0
      %10272 = vmatpush2.msra.mxu0 0.0
      %10273 = vmatprep.mubr.f32.mxu0 0.0
      %10274 = vmatmul.mubr.f32.gmra.mxu0 %v10142
      %v10275 = vpop.f32.mrf.mxu0
      %v10276 = vadd.f32 0.0, %v10275
      %v10277 = vpop.f32.mrf.mxu0
      %10278 = vmatprep.mubr.f32.mxu0 0.0
      %10279 = vmatmul.mubr.f32.gmra.mxu0 %v10144
      %v10280 = vpop.f32.mrf.mxu0
      %v10281 = vadd.f32 0.0, %v10280
      %v10282 = vpop.f32.mrf.mxu0
      %10283 = vmatprep.mubr.f32.mxu0 0.0
      %10284 = vmatmul.mubr.f32.gmra.mxu0 %v10146
      %v10285 = vpop.f32.mrf.mxu0
      %v10286 = vadd.f32 0.0, %v10285
      %v10287 = vpop.f32.mrf.mxu0
      %10288 = vmatprep.mubr.f32.mxu0 0.0
      %10289 = vmatmul.mubr.f32.gmra.mxu0 %v10148
      %v10290 = vpop.f32.mrf.mxu0
      %v10291 = vadd.f32 0.0, %v10290
      %v10292 = vpop.f32.mrf.mxu0
      %10293 = vmatprep.mubr.f32.mxu0 0.0
      %10294 = vmatmul.mubr.f32.gmra.mxu0 %v10150
      %v10295 = vpop.f32.mrf.mxu0
      %v10296 = vadd.f32 0.0, %v10295
      %v10297 = vpop.f32.mrf.mxu0
      %10298 = vmatprep.mubr.f32.mxu0 0.0
      %10299 = vmatmul.mubr.f32.gmra.mxu0 %v10152
      %v10300 = vpop.f32.mrf.mxu0
      %v10301 = vadd.f32 0.0, %v10300
      %v10302 = vpop.f32.mrf.mxu0
      %10303 = vmatprep.mubr.f32.mxu0 0.0
      %10304 = vmatmul.mubr.f32.gmra.mxu0 %v10154
      %v10305 = vpop.f32.mrf.mxu0
      %v10306 = vadd.f32 0.0, %v10305
      %v10307 = vpop.f32.mrf.mxu0
      %10308 = vmatprep.mubr.f32.mxu0 0.0
      %10309 = vmatmul.mubr.f32.gmra.mxu0 %v10156
      %v10310 = vpop.f32.mrf.mxu0
      %v10311 = vadd.f32 0.0, %v10310
      %v10312 = vpop.f32.mrf.mxu0
      %10313 = vmatprep.mubr.f32.mxu0 0.0
      %10314 = vmatmul.mubr.f32.gmra.mxu0 %v10158
      %v10315 = vpop.f32.mrf.mxu0
      %v10316 = vadd.f32 0.0, %v10315
      %v10317 = vpop.f32.mrf.mxu0
      %10318 = vmatprep.mubr.f32.mxu0 0.0
      %10319 = vmatmul.mubr.f32.gmra.mxu0 %v10160
      %v10320 = vpop.f32.mrf.mxu0
      %v10321 = vadd.f32 0.0, %v10320
      %v10322 = vpop.f32.mrf.mxu0
      %10323 = vmatprep.mubr.f32.mxu0 0.0
      %10324 = vmatmul.mubr.f32.gmra.mxu0 %v10162
      %v10325 = vpop.f32.mrf.mxu0
      %v10326 = vadd.f32 0.0, %v10325
      %v10327 = vpop.f32.mrf.mxu0
      %10328 = vmatprep.mubr.f32.mxu0 0.0
      %10329 = vmatmul.mubr.f32.gmra.mxu0 %v10164
      %v10330 = vpop.f32.mrf.mxu0
      %v10331 = vadd.f32 0.0, %v10330
      %v10332 = vpop.f32.mrf.mxu0
      %10333 = vmatprep.mubr.f32.mxu0 0.0
      %10334 = vmatmul.mubr.f32.gmra.mxu0 %v10166
      %v10335 = vpop.f32.mrf.mxu0
      %v10336 = vadd.f32 0.0, %v10335
      %v10337 = vpop.f32.mrf.mxu0
      %10338 = vmatprep.mubr.f32.mxu0 0.0
      %10339 = vmatmul.mubr.f32.gmra.mxu0 %v10168
      %v10340 = vpop.f32.mrf.mxu0
      %v10341 = vadd.f32 0.0, %v10340
      %v10342 = vpop.f32.mrf.mxu0
      %10343 = vmatprep.mubr.f32.mxu0 0.0
      %10344 = vmatmul.mubr.f32.gmra.mxu0 %v10170
      %v10345 = vpop.f32.mrf.mxu0
      %v10346 = vadd.f32 0.0, %v10345
      %v10347 = vpop.f32.mrf.mxu0
      %10348 = vmatprep.mubr.f32.mxu0 0.0
      %10349 = vmatmul.mubr.f32.gmra.mxu0 %v10172
      %v10350 = vpop.f32.mrf.mxu0
      %v10351 = vadd.f32 0.0, %v10350
      %v10352 = vpop.f32.mrf.mxu0
      %10353 = vmatprep.mubr.f32.mxu0 0.0
      %10354 = vmatmul.mubr.f32.gmra.mxu0 %v10174
      %v10355 = vpop.f32.mrf.mxu0
      %v10356 = vadd.f32 0.0, %v10355
      %v10357 = vpop.f32.mrf.mxu0
      %10358 = vmatprep.mubr.f32.mxu0 0.0
      %10359 = vmatmul.mubr.f32.gmra.mxu0 %v10176
      %v10360 = vpop.f32.mrf.mxu0
      %v10361 = vadd.f32 0.0, %v10360
      %v10362 = vpop.f32.mrf.mxu0
      %10363 = vmatprep.mubr.f32.mxu0 0.0
      %10364 = vmatmul.mubr.f32.gmra.mxu0 %v10178
      %v10365 = vpop.f32.mrf.mxu0
      %v10366 = vadd.f32 0.0, %v10365
      %v10367 = vpop.f32.mrf.mxu0
      %10368 = vmatprep.mubr.f32.mxu0 0.0
      %10369 = vmatmul.mubr.f32.gmra.mxu0 %v10180
      %v10370 = vpop.f32.mrf.mxu0
      %v10371 = vadd.f32 0.0, %v10370
      %v10372 = vpop.f32.mrf.mxu0
      %10373 = vmatprep.mubr.f32.mxu0 0.0
      %10374 = vmatmul.mubr.f32.gmra.mxu0 %v10182
      %v10375 = vpop.f32.mrf.mxu0
      %v10376 = vadd.f32 0.0, %v10375
      %v10377 = vpop.f32.mrf.mxu0
      %10378 = vmatprep.mubr.f32.mxu0 0.0
      %10379 = vmatmul.mubr.f32.gmra.mxu0 %v10184
      %v10380 = vpop.f32.mrf.mxu0
      %v10381 = vadd.f32 0.0, %v10380
      %v10382 = vpop.f32.mrf.mxu0
      %10383 = vmatprep.mubr.f32.mxu0 0.0
      %10384 = vmatmul.mubr.f32.gmra.mxu0 %v10186
      %v10385 = vpop.f32.mrf.mxu0
      %v10386 = vadd.f32 0.0, %v10385
      %v10387 = vpop.f32.mrf.mxu0
      %10388 = vmatprep.mubr.f32.mxu0 0.0
      %10389 = vmatmul.mubr.f32.gmra.mxu0 %v10188
      %v10390 = vpop.f32.mrf.mxu0
      %v10391 = vadd.f32 0.0, %v10390
      %v10392 = vpop.f32.mrf.mxu0
      %10393 = vmatprep.mubr.f32.mxu0 0.0
      %10394 = vmatmul.mubr.f32.gmra.mxu0 %v10190
      %v10395 = vpop.f32.mrf.mxu0
      %v10396 = vadd.f32 0.0, %v10395
      %v10397 = vpop.f32.mrf.mxu0
      %10398 = vmatprep.mubr.f32.mxu0 0.0
      %10399 = vmatmul.mubr.f32.gmra.mxu0 %v10192
      %v10400 = vpop.f32.mrf.mxu0
      %v10401 = vadd.f32 0.0, %v10400
      %v10402 = vpop.f32.mrf.mxu0
      %10403 = vmatprep.mubr.f32.mxu0 0.0
      %10404 = vmatmul.mubr.f32.gmra.mxu0 %v10194
      %v10405 = vpop.f32.mrf.mxu0
      %v10406 = vadd.f32 0.0, %v10405
      %v10407 = vpop.f32.mrf.mxu0
      %10408 = vmatprep.mubr.f32.mxu0 0.0
      %10409 = vmatmul.mubr.f32.gmra.mxu0 %v10196
      %v10410 = vpop.f32.mrf.mxu0
      %v10411 = vadd.f32 0.0, %v10410
      %v10412 = vpop.f32.mrf.mxu0
      %10413 = vmatprep.mubr.f32.mxu0 0.0
      %10414 = vmatmul.mubr.f32.gmra.mxu0 %v10198
      %v10415 = vpop.f32.mrf.mxu0
      %v10416 = vadd.f32 0.0, %v10415
      %v10417 = vpop.f32.mrf.mxu0
      %10418 = vmatprep.mubr.f32.mxu0 0.0
      %10419 = vmatmul.mubr.f32.gmra.mxu0 %v10200
      %v10420 = vpop.f32.mrf.mxu0
      %v10421 = vadd.f32 0.0, %v10420
      %v10422 = vpop.f32.mrf.mxu0
      %10423 = vmatprep.mubr.f32.mxu0 0.0
      %10424 = vmatmul.mubr.f32.gmra.mxu0 %v10202
      %v10425 = vpop.f32.mrf.mxu0
      %v10426 = vadd.f32 0.0, %v10425
      %v10427 = vpop.f32.mrf.mxu0
      %10428 = vmatprep.mubr.f32.mxu0 0.0
      %10429 = vmatmul.mubr.f32.gmra.mxu0 %v10204
      %v10430 = vpop.f32.mrf.mxu0
      %v10431 = vadd.f32 0.0, %v10430
      %v10432 = vpop.f32.mrf.mxu0
      %10433 = vdwg.mxu0
      %10434 = vst.msk [vmem:[%s343] sm:$0xff] %vm444, %v10276
      %10435 = vst.msk [vmem:[%s343 + $0x8] sm:$0xff] %vm444, %v10281
      %10436 = vst.msk [vmem:[%s343 + $0x10] sm:$0xff] %vm444, %v10286
      %10437 = vst.msk [vmem:[%s343 + $0x18] sm:$0xff] %vm444, %v10291
      %10438 = vst.msk [vmem:[%s343 + $0x20] sm:$0xff] %vm444, %v10296
      %10439 = vst.msk [vmem:[%s343 + $0x28] sm:$0xff] %vm444, %v10301
      %10440 = vst.msk [vmem:[%s343 + $0x30] sm:$0xff] %vm444, %v10306
      %10441 = vst.msk [vmem:[%s343 + $0x38] sm:$0xff] %vm444, %v10311
      %10442 = vst.msk [vmem:[%s343 + $0x40] sm:$0xff] %vm444, %v10316
      %10443 = vst.msk [vmem:[%s343 + $0x48] sm:$0xff] %vm444, %v10321
      %10444 = vst.msk [vmem:[%s343 + $0x50] sm:$0xff] %vm444, %v10326
      %10445 = vst.msk [vmem:[%s343 + $0x58] sm:$0xff] %vm444, %v10331
      %10446 = vst.msk [vmem:[%s343 + $0x60] sm:$0xff] %vm444, %v10336
      %10447 = vst.msk [vmem:[%s343 + $0x68] sm:$0xff] %vm444, %v10341
      %10448 = vst.msk [vmem:[%s343 + $0x70] sm:$0xff] %vm444, %v10346
      %10449 = vst.msk [vmem:[%s343 + $0x78] sm:$0xff] %vm444, %v10351
      %10450 = vst.msk [vmem:[%s343 + $0x80] sm:$0xff] %vm444, %v10356
      %10451 = vst.msk [vmem:[%s343 + $0x88] sm:$0xff] %vm444, %v10361
      %10452 = vst.msk [vmem:[%s343 + $0x90] sm:$0xff] %vm444, %v10366
      %10453 = vst.msk [vmem:[%s343 + $0x98] sm:$0xff] %vm444, %v10371
      %10454 = vst.msk [vmem:[%s343 + $0xa0] sm:$0xff] %vm444, %v10376
      %10455 = vst.msk [vmem:[%s343 + $0xa8] sm:$0xff] %vm444, %v10381
      %10456 = vst.msk [vmem:[%s343 + $0xb0] sm:$0xff] %vm444, %v10386
      %10457 = vst.msk [vmem:[%s343 + $0xb8] sm:$0xff] %vm444, %v10391
      %10458 = vst.msk [vmem:[%s343 + $0xc0] sm:$0xff] %vm444, %v10396
      %10459 = vst.msk [vmem:[%s343 + $0xc8] sm:$0xff] %vm444, %v10401
      %10460 = vst.msk [vmem:[%s343 + $0xd0] sm:$0xff] %vm444, %v10406
      %10461 = vst.msk [vmem:[%s343 + $0xd8] sm:$0xff] %vm444, %v10411
      %10462 = vst.msk [vmem:[%s343 + $0xe0] sm:$0xff] %vm444, %v10416
      %10463 = vst.msk [vmem:[%s343 + $0xe8] sm:$0xff] %vm444, %v10421
      %10464 = vst.msk [vmem:[%s343 + $0xf0] sm:$0xff] %vm444, %v10426
      %10465 = vst.msk [vmem:[%s343 + $0xf8] sm:$0xff] %vm444, %v10431
      %s10466 = smul.u32 16, %s24
      %p10467 = scmp.lt.s32.totalorder %s23, 1
      %s10468 = scalar_select %p10467, %s23, 1
      %p10469 = scmp.lt.s32.totalorder %s10466, 15
      %s10470 = scalar_select %p10469, %s10466, 15
      %s10471 = smul.addr %s10470, 2
      %s10472 = smul.addr %s10468, 32
      %s10473 = sadd.s32 %s10471, %s10472
      %s10474 = smul.addr %s10473, 8
      %s10475 = scalar_lea.vmem %s8, %s10474
      // Predicated region
      $region65: #{tpu_custom_call.1} parent=51 // pred_check
        %p10476 = pneg %p226
      $region66: #{tpu_custom_call.1} parent=51 // pred_check_branch
        %10478 = sbr.rel (%p10476) target = $region68
      $region67: #{tpu_custom_call.1} parent=51 // pred_region
        %s10479 = smul.u32 16, %s24
      $region68: #{tpu_custom_call.1} parent=51 // pred_fallthru
        _
    $region52: #{tpu_custom_call.1} parent=5 // pred_fallthru
      _
    %p10480 = scmp.le.s32.totalorder 2, %s14
    // Predicated region
    $region69: #{tpu_custom_call.1} parent=5 // pred_check
      %p10481 = pneg %p10480
    $region70: #{tpu_custom_call.1} parent=5 // pred_check_branch
      %10483 = sbr.rel (%p10481) target = $region72
    $region71: #{tpu_custom_call.1} parent=5 // pred_region
      %s10484 = ssub.s32 %s14, 2
      // Predicated region
      $region73: #{tpu_custom_call.1} parent=71 // pred_check
        %p10485 = pneg %p232
      $region74: #{tpu_custom_call.1} parent=71 // pred_check_branch
        %10487 = sbr.rel (%p10485) target = $region76
      $region75: #{tpu_custom_call.1} parent=71 // pred_region
        %s10488 = smul.u32 16, %s26
        %p10489 = scmp.lt.s32.totalorder %s25, 1
        %s10490 = scalar_select %p10489, %s25, 1
        %p10491 = scmp.lt.s32.totalorder %s10488, 15
        %s10492 = scalar_select %p10491, %s10488, 15
        %s10493 = smul.addr %s10492, 2
        %s10494 = smul.addr %s10490, 32
        %s10495 = sadd.s32 %s10493, %s10494
        %s10496 = smul.addr %s10495, 8
        %s10497 = scalar_lea.vmem %s8, %s10496
      $region76: #{tpu_custom_call.1} parent=71 // pred_fallthru
        _
    $region72: #{tpu_custom_call.1} parent=5 // pred_fallthru
      _
  $region6: #{tpu_custom_call.1} parent=0 // loop_footer
    %s18 = sadd.s32 1, %s14
  $region7: #{tpu_custom_call.1} parent=0 // loop_footer_branch
    %13 = sbr.rel target = $region3
  $region8: #{tpu_custom_call.1} parent=0 // loop_exit
    _

</llo_original>
